<compile_context>
chip_gen: v6e
topology: v6e:2x2x1
jax: 0.10.0
libtpu: 0.0.40
codegen_flags: <defaults>
</compile_context>

<pallas_src>
import jax
import jax.numpy as jnp
from jax.experimental import pallas as pl
from jax.experimental.pallas import tpu as pltpu

_BN_EPS = 1e-5
_LANES = 128
_H1_BASE = 16          # lead rows of the conv2 slab (covers the single base-1 tap read)


def _round_up(n, m):
    return (n + m - 1) // m * m


def _fold_bn(gamma, beta, running_mean, running_var, eps=_BN_EPS):
    # BatchNorm2d in inference mode: fold running stats into scale/bias.
    scale = gamma / jnp.sqrt(running_var + eps)
    bias = beta - running_mean * scale
    return scale, bias


def _prep_weight_taps(w_hwio, c_pad):
    """(3,3,cin,cout) HWIO -> (9, C, C) bf16 taps, zero-padded channels, tap = 3*dy+dx."""
    kh, kw, cin, cout = w_hwio.shape
    w = jnp.pad(w_hwio, ((0, 0), (0, 0), (0, c_pad - cin), (0, c_pad - cout)))
    return w.reshape(kh * kw, c_pad, c_pad).astype(jnp.bfloat16)


def _prep_bn_vec(vec, c_pad):
    return jnp.pad(vec, (0, c_pad - vec.shape[0])).reshape(1, c_pad).astype(jnp.float32)


def _pick_strip_rows(h, w_padded, cap=32):
    """Largest divisor of H <= cap whose strip keeps the bf16 output block 16-aligned."""
    best = h                                     # single full-image strip is always legal
    for th in range(1, min(h, cap) + 1):
        if h % th == 0 and (th * w_padded) % 16 == 0:
            best = th
    return best


def _vmem_limit_bytes():
    # Use most of VMEM on 128 MiB parts, stay tight on v7x (64 MiB) automatically.
    try:
        cap = int(pltpu.get_tpu_info().vmem_capacity_bytes)
    except Exception:
        cap = 64 * 1024 * 1024                   # conservative (v7x-sized) fallback
    return int(cap * 0.7)


def basic_block_forward(x_nchw, params, *, strip_rows=None):
    """Pallas implementation of BasicBlock.forward (stride=1, downsample=None)."""
    # TODO(synk): stride > 1 and the optional `downsample` projection branch are not
    # implemented (the module defaults stride=1, downsample=None are assumed).
    x = jnp.transpose(x_nchw, (0, 2, 3, 1))                      # NCHW -> NHWC
    B, H, W, cin = x.shape
    planes = params["w1"].shape[-1]
    if cin != planes:
        raise NotImplementedError("residual without downsample needs inplanes == planes")

    # TODO(synk): channels are zero-padded up to 128 lanes for MXU density; for
    # planes <= 64 a W-packed lane layout would avoid the padding FLOPs/bytes.
    C = _round_up(max(cin, _LANES), _LANES)
    Wp = W + 2                                                   # 1-col zero halo each side

    TH = _pick_strip_rows(H, Wp) if strip_rows is None else int(strip_rows)
    if H % TH != 0:
        raise ValueError("strip_rows must divide H")
    n_strips = H // TH
    if n_strips > 1 and (TH * Wp) % 16 != 0:
        raise ValueError("strip_rows*(W+2) must be a multiple of 16 for bf16 output tiling")

    # Flattened spatial layout: row index = h*(W+2) + w, lanes = channels.
    L1 = (TH + 4) * Wp            # DMA'd input rows per strip (2-row halo both sides)
    M1 = (TH + 2) * Wp            # conv1 output rows (1-row halo both sides)
    M2 = TH * Wp                  # conv2 / block output rows
    NR1 = _round_up(L1 + 2, 16)   # +2: the last tap reads 2 rows past the strip data
    NR2 = _round_up(_H1_BASE + M1 + 2, 16)

    # Host-side one-time prep: zero halo, lane padding, bf16, flatten spatial.
    x_p = jnp.pad(x, ((0, 0), (2, 2), (1, 1), (0, C - cin))).astype(jnp.bfloat16)
    x_flat = x_p.reshape(B, (H + 4) * Wp, C)

    w1 = _prep_weight_taps(params["w1"], C)
    w2 = _prep_weight_taps(params["w2"], C)
    s1, b1 = _fold_bn(params["gamma1"], params["beta1"], params["mean1"], params["var1"])
    s2, b2 = _fold_bn(params["gamma2"], params["beta2"], params["mean2"], params["var2"])
    s1, b1, s2, b2 = (_prep_bn_vec(v, C) for v in (s1, b1, s2, b2))

    def kernel(x_hbm, w1_ref, s1_ref, b1_ref, w2_ref, s2_ref, b2_ref,
               o_ref, slab1, slab2, sems):
        b = pl.program_id(0)
        s = pl.program_id(1)
        n_s = pl.num_programs(1)
        slot = s % 2

        def strip_copy(s_idx, slot_idx):
            return pltpu.make_async_copy(
                x_hbm.at[b, pl.ds(s_idx * (TH * Wp), L1)],
                slab1.at[slot_idx, pl.ds(0, L1)],
                sems.at[slot_idx])

        # Prime at the first strip of every image; prefetch the next strip of the SAME
        # image (megacore-safe: the "arbitrary" strip axis is never split across cores).
        @pl.when(s == 0)
        def _():
            strip_copy(0, 0).start()

        @pl.when(s + 1 < n_s)
        def _():
            strip_copy(s + 1, 1 - slot).start()

        strip_copy(s, slot).wait()

        def conv3x3(load_patch, w_ref):
            acc = None
            for tap in range(9):
                dy, dx = divmod(tap, 3)
                d = jnp.dot(load_patch(dy, dx), w_ref[tap],
                            preferred_element_type=jnp.float32)
                acc = d if acc is None else acc + d
            return acc

        # ---- conv1 -> bn1 -> relu -------------------------------------------------
        acc1 = conv3x3(lambda dy, dx: slab1[slot, pl.ds(dy * Wp + dx, M1), :], w1_ref)
        # Zero the two wrap-around columns so they act as conv2's W zero-padding
        # (also kills any garbage from the 2 uninitialized tail-row reads).
        col = jax.lax.broadcasted_iota(jnp.int32, (M1, 1), 0) % Wp
        h1 = jnp.maximum(acc1 * s1_ref[...] + b1_ref[...], 0.0)
        h1 = jnp.where(col < W, h1, 0.0).astype(jnp.bfloat16)

        slab2[pl.ds(0, _H1_BASE), :] = jnp.zeros((_H1_BASE, C), jnp.bfloat16)
        slab2[pl.ds(_H1_BASE, M1), :] = h1

        @pl.when(s == 0)                      # top image boundary: conv2 pad row is zero
        def _():
            slab2[pl.ds(_H1_BASE, Wp), :] = jnp.zeros((Wp, C), jnp.bfloat16)

        @pl.when(s == n_s - 1)                # bottom image boundary
        def _():
            slab2[pl.ds(_H1_BASE + (TH + 1) * Wp, Wp), :] = jnp.zeros((Wp, C), jnp.bfloat16)

        # ---- conv2 -> bn2 -> (+identity) -> relu -----------------------------------
        acc2 = conv3x3(
            lambda dy, dx: slab2[pl.ds(_H1_BASE + dy * Wp + dx - 1, M2), :], w2_ref)
        ident = slab1[slot, pl.ds(2 * Wp + 1, M2), :].astype(jnp.float32)
        out = jnp.maximum(acc2 * s2_ref[...] + b2_ref[...] + ident, 0.0)
        o_ref[0] = out.astype(o_ref.dtype)

    const3 = lambda b, s: (0, 0, 0)
    const2 = lambda b, s: (0, 0)

    # Cost estimate on the *real* channel counts (not the 128-padded ones).
    flops = 2 * B * H * W * 9 * planes * (cin + planes)
    bytes_accessed = (B * H * W * (cin + planes) * 2
                      + 9 * planes * (cin + planes) * 2 + 4 * planes * 4)

    out_flat = pl.pallas_call(
        kernel,
        out_shape=jax.ShapeDtypeStruct((B, H * Wp, C), jnp.bfloat16),
        grid_spec=pltpu.PrefetchScalarGridSpec(
            num_scalar_prefetch=0,
            grid=(B, n_strips),
            in_specs=[
                pl.BlockSpec(memory_space=pl.ANY),        # x stays in HBM, manual halo DMA
                pl.BlockSpec((9, C, C), const3),          # w1 taps (constant -> no re-DMA)
                pl.BlockSpec((1, C), const2),             # bn1 scale
                pl.BlockSpec((1, C), const2),             # bn1 bias
                pl.BlockSpec((9, C, C), const3),          # w2 taps
                pl.BlockSpec((1, C), const2),             # bn2 scale
                pl.BlockSpec((1, C), const2),             # bn2 bias
            ],
            out_specs=pl.BlockSpec((1, TH * Wp, C), lambda b, s: (b, s, 0)),
            scratch_shapes=[
                pltpu.VMEM((2, NR1, C), jnp.bfloat16),    # double-buffered input strip slab
                pltpu.VMEM((NR2, C), jnp.bfloat16),       # conv2 input slab (h1, bf16)
                pltpu.SemaphoreType.DMA((2,)),
            ],
        ),
        compiler_params=pltpu.CompilerParams(
            dimension_semantics=("parallel", "arbitrary"),
            vmem_limit_bytes=_vmem_limit_bytes(),
        ),
        cost_estimate=pl.CostEstimate(flops=int(flops), transcendentals=0,
                                      bytes_accessed=int(bytes_accessed)),
    )(x_flat, w1, s1, b1, w2, s2, b2)

    out = out_flat.reshape(B, H, Wp, C)[:, :, :W, :planes]       # drop W / lane padding
    return jnp.transpose(out, (0, 3, 1, 2)).astype(jnp.float32)  # NHWC -> NCHW


def init_params(key, inplanes, planes):
    ks = jax.random.split(key, 10)
    # Conv weights stored HWIO: (3, 3, Cin, Cout), bias=False (as in conv3x3).
    w1 = jax.random.normal(ks[0], (3, 3, inplanes, planes), jnp.float32) \
        * (2.0 / (inplanes * 9)) ** 0.5
    w2 = jax.random.normal(ks[1], (3, 3, planes, planes), jnp.float32) \
        * (2.0 / (planes * 9)) ** 0.5
    return dict(
        w1=w1, w2=w2,
        gamma1=1.0 + 0.1 * jax.random.normal(ks[2], (planes,), jnp.float32),
        beta1=0.1 * jax.random.normal(ks[3], (planes,), jnp.float32),
        mean1=0.1 * jax.random.normal(ks[4], (planes,), jnp.float32),
        var1=jnp.abs(jax.random.normal(ks[5], (planes,), jnp.float32)) + 1.0,
        gamma2=1.0 + 0.1 * jax.random.normal(ks[6], (planes,), jnp.float32),
        beta2=0.1 * jax.random.normal(ks[7], (planes,), jnp.float32),
        mean2=0.1 * jax.random.normal(ks[8], (planes,), jnp.float32),
        var2=jnp.abs(jax.random.normal(ks[9], (planes,), jnp.float32)) + 1.0,
    )


def _reference_forward(x_nchw, params):
    """Pure-JAX reference (conv_general_dilated) for cross-checking the kernel."""
    def conv(x, w):
        return jax.lax.conv_general_dilated(
            x, w, window_strides=(1, 1), padding=((1, 1), (1, 1)),
            dimension_numbers=("NCHW", "HWIO", "NCHW"))

    def bn(x, gamma, beta, mean, var):
        s, b = _fold_bn(gamma, beta, mean, var)
        return x * s[None, :, None, None] + b[None, :, None, None]

    out = jnp.maximum(bn(conv(x_nchw, params["w1"]),
                         params["gamma1"], params["beta1"],
                         params["mean1"], params["var1"]), 0.0)
    out = bn(conv(out, params["w2"]),
             params["gamma2"], params["beta2"], params["mean2"], params["var2"])
    out = out + x_nchw
    return jnp.maximum(out, 0.0)


if __name__ == "__main__":
    key = jax.random.PRNGKey(0)
    kx, kp = jax.random.split(key)

    B, Cch, H, W = 2, 4, 16, 16          # inplanes == planes == 4, stride = 1
    x = jax.random.normal(kx, (B, Cch, H, W), jnp.float32)
    params = init_params(kp, Cch, Cch)

    # strip_rows=8 -> 2 strips per image so the halo-prefetch path is exercised.
    fwd = jax.jit(lambda xx, pp: basic_block_forward(xx, pp, strip_rows=8))
    out = jax.block_until_ready(fwd(x, params))

    assert out.shape == (B, Cch, H, W)
    ref = _reference_forward(x, params)
    # bf16 activations/weights with f32 accumulation -> bf16-level comparison tolerance.
    if not jnp.allclose(out, ref, rtol=5e-2, atol=5e-2):
        err = float(jnp.max(jnp.abs(out - ref)))
        raise AssertionError(f"Pallas BasicBlock output mismatch (max abs err {err})")
    print("KERNEL_OK")
</pallas_src>

<mosaic_0001>
module attributes {stable_mosaic.version = 11 : i64} {
  func.func @kernel(%arg0: i32, %arg1: i32, %arg2: memref<2x360x128xbf16, #tpu.memory_space<any>>, %arg3: memref<9x128x128xbf16, #tpu.memory_space<vmem>>, %arg4: memref<1x128xf32, #tpu.memory_space<vmem>>, %arg5: memref<1x128xf32, #tpu.memory_space<vmem>>, %arg6: memref<9x128x128xbf16, #tpu.memory_space<vmem>>, %arg7: memref<1x128xf32, #tpu.memory_space<vmem>>, %arg8: memref<1x128xf32, #tpu.memory_space<vmem>>, %arg9: memref<1x144x128xbf16, #tpu.memory_space<vmem>>, %arg10: memref<2x224x128xbf16, #tpu.memory_space<vmem>>, %arg11: memref<208x128xbf16, #tpu.memory_space<vmem>>, %arg12: memref<2x!tpu.dma_semaphore, #tpu.memory_space<semaphore_mem>>) attributes {dimension_semantics = [#tpu.dimension_semantics<parallel>, #tpu.dimension_semantics<arbitrary>], iteration_bounds = array<i64: 2, 2>, scalar_prefetch = 0 : i64, scratch_operands = 3 : i64, tpu.core_type = #tpu.core_type<tc>, window_params = [{}, {pipeline_mode = #tpu.pipeline_mode<synchronous>, transform_indices = @transform_1, window_bounds = array<i64: 9, 128, 128>}, {pipeline_mode = #tpu.pipeline_mode<synchronous>, transform_indices = @transform_2, window_bounds = array<i64: 1, 128>}, {pipeline_mode = #tpu.pipeline_mode<synchronous>, transform_indices = @transform_3, window_bounds = array<i64: 1, 128>}, {pipeline_mode = #tpu.pipeline_mode<synchronous>, transform_indices = @transform_4, window_bounds = array<i64: 9, 128, 128>}, {pipeline_mode = #tpu.pipeline_mode<synchronous>, transform_indices = @transform_5, window_bounds = array<i64: 1, 128>}, {pipeline_mode = #tpu.pipeline_mode<synchronous>, transform_indices = @transform_6, window_bounds = array<i64: 1, 128>}, {transform_indices = @transform_7, window_bounds = array<i64: 1, 144, 128>}]} {
    %c2_i32 = arith.constant 2 : i32
    %c0_i32 = arith.constant 0 : i32
    %0 = arith.cmpi eq, %c2_i32, %c0_i32 : i32
    %c1_i32 = arith.constant 1 : i32
    %1 = arith.select %0, %c1_i32, %c2_i32 : i32
    %2 = arith.remsi %arg1, %1 : i32
    %c0_i32_0 = arith.constant 0 : i32
    %3 = arith.cmpi ne, %2, %c0_i32_0 : i32
    %c0_i32_1 = arith.constant 0 : i32
    %4 = arith.cmpi slt, %2, %c0_i32_1 : i32
    %c0_i32_2 = arith.constant 0 : i32
    %5 = arith.cmpi slt, %1, %c0_i32_2 : i32
    %6 = arith.xori %4, %5 : i1
    %7 = arith.andi %6, %3 : i1
    %8 = arith.addi %2, %1 : i32
    %9 = arith.select %7, %8, %2 : i32
    %c0_i32_3 = arith.constant 0 : i32
    %10 = arith.cmpi eq, %arg1, %c0_i32_3 : i32
    %11 = arith.extui %10 : i1 to i32
    %c0_i32_4 = arith.constant 0 : i32
    %12 = arith.cmpi ne, %11, %c0_i32_4 : i32
    scf.if %12 {
      %c0_i32_124 = arith.constant 0 : i32
      %c0_i32_125 = arith.constant 0 : i32
      %c0_i32_126 = arith.constant 0 : i32
      %c0_i32_127 = arith.constant 0 : i32
      %188 = tpu.memref_slice %arg2[%arg0, %c0_i32_126, %c0_i32_127] : memref<2x360x128xbf16, #tpu.memory_space<any>> -> memref<1x216x128xbf16, #tpu.memory_space<any>>
      %189 = tpu.memref_squeeze %188 : memref<1x216x128xbf16, #tpu.memory_space<any>> -> memref<216x128xbf16, #tpu.memory_space<any>>
      %c0_i32_128 = arith.constant 0 : i32
      %c0_i32_129 = arith.constant 0 : i32
      %190 = tpu.memref_slice %arg10[%c0_i32_124, %c0_i32_128, %c0_i32_129] : memref<2x224x128xbf16, #tpu.memory_space<vmem>> -> memref<1x216x128xbf16, #tpu.memory_space<vmem>>
      %191 = tpu.memref_squeeze %190 : memref<1x216x128xbf16, #tpu.memory_space<vmem>> -> memref<216x128xbf16, #tpu.memory_space<vmem>>
      %192 = tpu.memref_slice %arg12[%c0_i32_125] : memref<2x!tpu.dma_semaphore, #tpu.memory_space<semaphore_mem>> -> memref<1x!tpu.dma_semaphore, #tpu.memory_space<semaphore_mem>>
      %193 = tpu.memref_squeeze %192 : memref<1x!tpu.dma_semaphore, #tpu.memory_space<semaphore_mem>> -> memref<!tpu.dma_semaphore, #tpu.memory_space<semaphore_mem>>
      tpu.enqueue_dma source(%189 : memref<216x128xbf16, #tpu.memory_space<any>>) target(%191 : memref<216x128xbf16, #tpu.memory_space<vmem>>) target_semaphore(%193 : memref<!tpu.dma_semaphore, #tpu.memory_space<semaphore_mem>>)
    } else {
    }
    %c1_i32_5 = arith.constant 1 : i32
    %13 = arith.addi %arg1, %c1_i32_5 : i32
    %c2_i32_6 = arith.constant 2 : i32
    %14 = arith.cmpi slt, %13, %c2_i32_6 : i32
    %15 = arith.extui %14 : i1 to i32
    %c0_i32_7 = arith.constant 0 : i32
    %16 = arith.cmpi ne, %15, %c0_i32_7 : i32
    scf.if %16 {
      %c1_i32_124 = arith.constant 1 : i32
      %188 = arith.addi %arg1, %c1_i32_124 : i32
      %c1_i32_125 = arith.constant 1 : i32
      %189 = arith.subi %c1_i32_125, %9 : i32
      %c144_i32_126 = arith.constant 144 : i32
      %190 = arith.muli %188, %c144_i32_126 : i32
      %c0_i32_127 = arith.constant 0 : i32
      %191 = tpu.memref_slice %arg2[%arg0, %190, %c0_i32_127] : memref<2x360x128xbf16, #tpu.memory_space<any>> -> memref<1x216x128xbf16, #tpu.memory_space<any>>
      %192 = tpu.memref_squeeze %191 : memref<1x216x128xbf16, #tpu.memory_space<any>> -> memref<216x128xbf16, #tpu.memory_space<any>>
      %c0_i32_128 = arith.constant 0 : i32
      %c0_i32_129 = arith.constant 0 : i32
      %193 = tpu.memref_slice %arg10[%189, %c0_i32_128, %c0_i32_129] : memref<2x224x128xbf16, #tpu.memory_space<vmem>> -> memref<1x216x128xbf16, #tpu.memory_space<vmem>>
      %194 = tpu.memref_squeeze %193 : memref<1x216x128xbf16, #tpu.memory_space<vmem>> -> memref<216x128xbf16, #tpu.memory_space<vmem>>
      %195 = tpu.memref_slice %arg12[%189] : memref<2x!tpu.dma_semaphore, #tpu.memory_space<semaphore_mem>> -> memref<1x!tpu.dma_semaphore, #tpu.memory_space<semaphore_mem>>
      %196 = tpu.memref_squeeze %195 : memref<1x!tpu.dma_semaphore, #tpu.memory_space<semaphore_mem>> -> memref<!tpu.dma_semaphore, #tpu.memory_space<semaphore_mem>>
      tpu.enqueue_dma source(%192 : memref<216x128xbf16, #tpu.memory_space<any>>) target(%194 : memref<216x128xbf16, #tpu.memory_space<vmem>>) target_semaphore(%196 : memref<!tpu.dma_semaphore, #tpu.memory_space<semaphore_mem>>)
    } else {
    }
    %c144_i32 = arith.constant 144 : i32
    %17 = arith.muli %arg1, %c144_i32 : i32
    %c0_i32_8 = arith.constant 0 : i32
    %18 = tpu.memref_slice %arg2[%arg0, %17, %c0_i32_8] : memref<2x360x128xbf16, #tpu.memory_space<any>> -> memref<1x216x128xbf16, #tpu.memory_space<any>>
    %19 = tpu.memref_squeeze %18 : memref<1x216x128xbf16, #tpu.memory_space<any>> -> memref<216x128xbf16, #tpu.memory_space<any>>
    %c0_i32_9 = arith.constant 0 : i32
    %c0_i32_10 = arith.constant 0 : i32
    %20 = tpu.memref_slice %arg10[%9, %c0_i32_9, %c0_i32_10] : memref<2x224x128xbf16, #tpu.memory_space<vmem>> -> memref<1x216x128xbf16, #tpu.memory_space<vmem>>
    %21 = tpu.memref_squeeze %20 : memref<1x216x128xbf16, #tpu.memory_space<vmem>> -> memref<216x128xbf16, #tpu.memory_space<vmem>>
    %22 = tpu.memref_slice %arg12[%9] : memref<2x!tpu.dma_semaphore, #tpu.memory_space<semaphore_mem>> -> memref<1x!tpu.dma_semaphore, #tpu.memory_space<semaphore_mem>>
    %23 = tpu.memref_squeeze %22 : memref<1x!tpu.dma_semaphore, #tpu.memory_space<semaphore_mem>> -> memref<!tpu.dma_semaphore, #tpu.memory_space<semaphore_mem>>
    tpu.wait_dma2 semaphore(%23 : memref<!tpu.dma_semaphore, #tpu.memory_space<semaphore_mem>>) src(%19 : memref<216x128xbf16, #tpu.memory_space<any>>) dst(%21 : memref<216x128xbf16, #tpu.memory_space<vmem>>)
    %24 = arith.index_cast %9 : i32 to index
    %c0 = arith.constant 0 : index
    %c0_11 = arith.constant 0 : index
    %25 = vector.load %arg10[%24, %c0, %c0_11] : memref<2x224x128xbf16, #tpu.memory_space<vmem>>, vector<1x180x128xbf16>
    %26 = vector.shape_cast %25 : vector<1x180x128xbf16> to vector<180x128xbf16>
    %c0_12 = arith.constant 0 : index
    %c0_13 = arith.constant 0 : index
    %c0_14 = arith.constant 0 : index
    %27 = vector.load %arg3[%c0_12, %c0_13, %c0_14] : memref<9x128x128xbf16, #tpu.memory_space<vmem>>, vector<1x128x128xbf16>
    %28 = vector.shape_cast %27 : vector<1x128x128xbf16> to vector<128x128xbf16>
    %cst = arith.constant dense<0.000000e+00> : vector<180x128xf32>
    %29 = tpu.matmul %26, %28, %cst {dimension_numbers = #tpu.dot_dimension_numbers<[1], [0], [0], [1], [0, 0, 1, 1], [], []>} : vector<180x128xbf16>, vector<128x128xbf16>, vector<180x128xf32> -> vector<180x128xf32>
    %30 = arith.index_cast %9 : i32 to index
    %c1 = arith.constant 1 : index
    %c0_15 = arith.constant 0 : index
    %31 = vector.load %arg10[%30, %c1, %c0_15] : memref<2x224x128xbf16, #tpu.memory_space<vmem>>, vector<1x180x128xbf16>
    %32 = vector.shape_cast %31 : vector<1x180x128xbf16> to vector<180x128xbf16>
    %c1_16 = arith.constant 1 : index
    %c0_17 = arith.constant 0 : index
    %c0_18 = arith.constant 0 : index
    %33 = vector.load %arg3[%c1_16, %c0_17, %c0_18] : memref<9x128x128xbf16, #tpu.memory_space<vmem>>, vector<1x128x128xbf16>
    %34 = vector.shape_cast %33 : vector<1x128x128xbf16> to vector<128x128xbf16>
    %cst_19 = arith.constant dense<0.000000e+00> : vector<180x128xf32>
    %35 = tpu.matmul %32, %34, %cst_19 {dimension_numbers = #tpu.dot_dimension_numbers<[1], [0], [0], [1], [0, 0, 1, 1], [], []>} : vector<180x128xbf16>, vector<128x128xbf16>, vector<180x128xf32> -> vector<180x128xf32>
    %36 = arith.addf %29, %35 : vector<180x128xf32>
    %37 = arith.index_cast %9 : i32 to index
    %c2 = arith.constant 2 : index
    %c0_20 = arith.constant 0 : index
    %38 = vector.load %arg10[%37, %c2, %c0_20] : memref<2x224x128xbf16, #tpu.memory_space<vmem>>, vector<1x180x128xbf16>
    %39 = vector.shape_cast %38 : vector<1x180x128xbf16> to vector<180x128xbf16>
    %c2_21 = arith.constant 2 : index
    %c0_22 = arith.constant 0 : index
    %c0_23 = arith.constant 0 : index
    %40 = vector.load %arg3[%c2_21, %c0_22, %c0_23] : memref<9x128x128xbf16, #tpu.memory_space<vmem>>, vector<1x128x128xbf16>
    %41 = vector.shape_cast %40 : vector<1x128x128xbf16> to vector<128x128xbf16>
    %cst_24 = arith.constant dense<0.000000e+00> : vector<180x128xf32>
    %42 = tpu.matmul %39, %41, %cst_24 {dimension_numbers = #tpu.dot_dimension_numbers<[1], [0], [0], [1], [0, 0, 1, 1], [], []>} : vector<180x128xbf16>, vector<128x128xbf16>, vector<180x128xf32> -> vector<180x128xf32>
    %43 = arith.addf %36, %42 : vector<180x128xf32>
    %44 = arith.index_cast %9 : i32 to index
    %c18 = arith.constant 18 : index
    %c0_25 = arith.constant 0 : index
    %45 = vector.load %arg10[%44, %c18, %c0_25] : memref<2x224x128xbf16, #tpu.memory_space<vmem>>, vector<1x180x128xbf16>
    %46 = vector.shape_cast %45 : vector<1x180x128xbf16> to vector<180x128xbf16>
    %c3 = arith.constant 3 : index
    %c0_26 = arith.constant 0 : index
    %c0_27 = arith.constant 0 : index
    %47 = vector.load %arg3[%c3, %c0_26, %c0_27] : memref<9x128x128xbf16, #tpu.memory_space<vmem>>, vector<1x128x128xbf16>
    %48 = vector.shape_cast %47 : vector<1x128x128xbf16> to vector<128x128xbf16>
    %cst_28 = arith.constant dense<0.000000e+00> : vector<180x128xf32>
    %49 = tpu.matmul %46, %48, %cst_28 {dimension_numbers = #tpu.dot_dimension_numbers<[1], [0], [0], [1], [0, 0, 1, 1], [], []>} : vector<180x128xbf16>, vector<128x128xbf16>, vector<180x128xf32> -> vector<180x128xf32>
    %50 = arith.addf %43, %49 : vector<180x128xf32>
    %51 = arith.index_cast %9 : i32 to index
    %c19 = arith.constant 19 : index
    %c0_29 = arith.constant 0 : index
    %52 = vector.load %arg10[%51, %c19, %c0_29] : memref<2x224x128xbf16, #tpu.memory_space<vmem>>, vector<1x180x128xbf16>
    %53 = vector.shape_cast %52 : vector<1x180x128xbf16> to vector<180x128xbf16>
    %c4 = arith.constant 4 : index
    %c0_30 = arith.constant 0 : index
    %c0_31 = arith.constant 0 : index
    %54 = vector.load %arg3[%c4, %c0_30, %c0_31] : memref<9x128x128xbf16, #tpu.memory_space<vmem>>, vector<1x128x128xbf16>
    %55 = vector.shape_cast %54 : vector<1x128x128xbf16> to vector<128x128xbf16>
    %cst_32 = arith.constant dense<0.000000e+00> : vector<180x128xf32>
    %56 = tpu.matmul %53, %55, %cst_32 {dimension_numbers = #tpu.dot_dimension_numbers<[1], [0], [0], [1], [0, 0, 1, 1], [], []>} : vector<180x128xbf16>, vector<128x128xbf16>, vector<180x128xf32> -> vector<180x128xf32>
    %57 = arith.addf %50, %56 : vector<180x128xf32>
    %58 = arith.index_cast %9 : i32 to index
    %c20 = arith.constant 20 : index
    %c0_33 = arith.constant 0 : index
    %59 = vector.load %arg10[%58, %c20, %c0_33] : memref<2x224x128xbf16, #tpu.memory_space<vmem>>, vector<1x180x128xbf16>
    %60 = vector.shape_cast %59 : vector<1x180x128xbf16> to vector<180x128xbf16>
    %c5 = arith.constant 5 : index
    %c0_34 = arith.constant 0 : index
    %c0_35 = arith.constant 0 : index
    %61 = vector.load %arg3[%c5, %c0_34, %c0_35] : memref<9x128x128xbf16, #tpu.memory_space<vmem>>, vector<1x128x128xbf16>
    %62 = vector.shape_cast %61 : vector<1x128x128xbf16> to vector<128x128xbf16>
    %cst_36 = arith.constant dense<0.000000e+00> : vector<180x128xf32>
    %63 = tpu.matmul %60, %62, %cst_36 {dimension_numbers = #tpu.dot_dimension_numbers<[1], [0], [0], [1], [0, 0, 1, 1], [], []>} : vector<180x128xbf16>, vector<128x128xbf16>, vector<180x128xf32> -> vector<180x128xf32>
    %64 = arith.addf %57, %63 : vector<180x128xf32>
    %65 = arith.index_cast %9 : i32 to index
    %c36 = arith.constant 36 : index
    %c0_37 = arith.constant 0 : index
    %66 = vector.load %arg10[%65, %c36, %c0_37] : memref<2x224x128xbf16, #tpu.memory_space<vmem>>, vector<1x180x128xbf16>
    %67 = vector.shape_cast %66 : vector<1x180x128xbf16> to vector<180x128xbf16>
    %c6 = arith.constant 6 : index
    %c0_38 = arith.constant 0 : index
    %c0_39 = arith.constant 0 : index
    %68 = vector.load %arg3[%c6, %c0_38, %c0_39] : memref<9x128x128xbf16, #tpu.memory_space<vmem>>, vector<1x128x128xbf16>
    %69 = vector.shape_cast %68 : vector<1x128x128xbf16> to vector<128x128xbf16>
    %cst_40 = arith.constant dense<0.000000e+00> : vector<180x128xf32>
    %70 = tpu.matmul %67, %69, %cst_40 {dimension_numbers = #tpu.dot_dimension_numbers<[1], [0], [0], [1], [0, 0, 1, 1], [], []>} : vector<180x128xbf16>, vector<128x128xbf16>, vector<180x128xf32> -> vector<180x128xf32>
    %71 = arith.addf %64, %70 : vector<180x128xf32>
    %72 = arith.index_cast %9 : i32 to index
    %c37 = arith.constant 37 : index
    %c0_41 = arith.constant 0 : index
    %73 = vector.load %arg10[%72, %c37, %c0_41] : memref<2x224x128xbf16, #tpu.memory_space<vmem>>, vector<1x180x128xbf16>
    %74 = vector.shape_cast %73 : vector<1x180x128xbf16> to vector<180x128xbf16>
    %c7 = arith.constant 7 : index
    %c0_42 = arith.constant 0 : index
    %c0_43 = arith.constant 0 : index
    %75 = vector.load %arg3[%c7, %c0_42, %c0_43] : memref<9x128x128xbf16, #tpu.memory_space<vmem>>, vector<1x128x128xbf16>
    %76 = vector.shape_cast %75 : vector<1x128x128xbf16> to vector<128x128xbf16>
    %cst_44 = arith.constant dense<0.000000e+00> : vector<180x128xf32>
    %77 = tpu.matmul %74, %76, %cst_44 {dimension_numbers = #tpu.dot_dimension_numbers<[1], [0], [0], [1], [0, 0, 1, 1], [], []>} : vector<180x128xbf16>, vector<128x128xbf16>, vector<180x128xf32> -> vector<180x128xf32>
    %78 = arith.addf %71, %77 : vector<180x128xf32>
    %79 = arith.index_cast %9 : i32 to index
    %c38 = arith.constant 38 : index
    %c0_45 = arith.constant 0 : index
    %80 = vector.load %arg10[%79, %c38, %c0_45] : memref<2x224x128xbf16, #tpu.memory_space<vmem>>, vector<1x180x128xbf16>
    %81 = vector.shape_cast %80 : vector<1x180x128xbf16> to vector<180x128xbf16>
    %c8 = arith.constant 8 : index
    %c0_46 = arith.constant 0 : index
    %c0_47 = arith.constant 0 : index
    %82 = vector.load %arg3[%c8, %c0_46, %c0_47] : memref<9x128x128xbf16, #tpu.memory_space<vmem>>, vector<1x128x128xbf16>
    %83 = vector.shape_cast %82 : vector<1x128x128xbf16> to vector<128x128xbf16>
    %cst_48 = arith.constant dense<0.000000e+00> : vector<180x128xf32>
    %84 = tpu.matmul %81, %83, %cst_48 {dimension_numbers = #tpu.dot_dimension_numbers<[1], [0], [0], [1], [0, 0, 1, 1], [], []>} : vector<180x128xbf16>, vector<128x128xbf16>, vector<180x128xf32> -> vector<180x128xf32>
    %85 = arith.addf %78, %84 : vector<180x128xf32>
    %86 = tpu.iota {dimensions = array<i32: 0>} : vector<180x1xi32>
    %c18_i32 = arith.constant 18 : i32
    %c0_i32_49 = arith.constant 0 : i32
    %87 = arith.cmpi eq, %c18_i32, %c0_i32_49 : i32
    %c1_i32_50 = arith.constant 1 : i32
    %88 = arith.select %87, %c1_i32_50, %c18_i32 : i32
    %89 = vector.broadcast %88 : i32 to vector<180x1xi32>
    %90 = arith.remsi %86, %89 : vector<180x1xi32>
    %c0_i32_51 = arith.constant 0 : i32
    %91 = vector.broadcast %c0_i32_51 : i32 to vector<180x1xi32>
    %92 = arith.cmpi ne, %90, %91 : vector<180x1xi32>
    %c0_i32_52 = arith.constant 0 : i32
    %93 = vector.broadcast %c0_i32_52 : i32 to vector<180x1xi32>
    %94 = arith.cmpi slt, %90, %93 : vector<180x1xi32>
    %c0_i32_53 = arith.constant 0 : i32
    %95 = arith.cmpi slt, %88, %c0_i32_53 : i32
    %96 = vector.broadcast %95 : i1 to vector<180x1xi1>
    %97 = vector.broadcast %96 : vector<180x1xi1> to vector<180x1xi1>
    %98 = arith.xori %94, %97 : vector<180x1xi1>
    %99 = arith.andi %98, %92 : vector<180x1xi1>
    %100 = vector.broadcast %88 : i32 to vector<180x1xi32>
    %101 = arith.addi %90, %100 : vector<180x1xi32>
    %102 = arith.select %99, %101, %90 : vector<180x1xi1>, vector<180x1xi32>
    %c0_54 = arith.constant 0 : index
    %c0_55 = arith.constant 0 : index
    %103 = vector.load %arg4[%c0_54, %c0_55] : memref<1x128xf32, #tpu.memory_space<vmem>>, vector<1x128xf32>
    %104 = vector.broadcast %103 : vector<1x128xf32> to vector<180x128xf32>
    %105 = arith.mulf %85, %104 : vector<180x128xf32>
    %c0_56 = arith.constant 0 : index
    %c0_57 = arith.constant 0 : index
    %106 = vector.load %arg5[%c0_56, %c0_57] : memref<1x128xf32, #tpu.memory_space<vmem>>, vector<1x128xf32>
    %107 = vector.broadcast %106 : vector<1x128xf32> to vector<180x128xf32>
    %108 = arith.addf %105, %107 : vector<180x128xf32>
    %cst_58 = arith.constant 0.000000e+00 : f32
    %109 = vector.broadcast %cst_58 : f32 to vector<180x128xf32>
    %110 = arith.maximumf %108, %109 : vector<180x128xf32>
    %c16_i32 = arith.constant 16 : i32
    %111 = vector.broadcast %c16_i32 : i32 to vector<180x1xi32>
    %112 = arith.cmpi slt, %102, %111 : vector<180x1xi32>
    %cst_59 = arith.constant 0.000000e+00 : f32
    %113 = vector.shape_cast %112 : vector<180x1xi1> to vector<180x1xi1>
    %114 = vector.broadcast %113 : vector<180x1xi1> to vector<180x128xi1>
    %115 = vector.broadcast %cst_59 : f32 to vector<180x128xf32>
    %116 = arith.select %114, %110, %115 : vector<180x128xi1>, vector<180x128xf32>
    %117 = arith.truncf %116 : vector<180x128xf32> to vector<180x128xbf16>
    %cst_60 = arith.constant 0.000000e+00 : bf16
    %118 = vector.broadcast %cst_60 : bf16 to vector<16x128xbf16>
    %c0_61 = arith.constant 0 : index
    %c0_62 = arith.constant 0 : index
    %119 = vector.load %arg11[%c0_61, %c0_62] : memref<208x128xbf16, #tpu.memory_space<vmem>>, vector<16x128xbf16>
    tpu.vector_store %arg11[%c0_61, %c0_62], %118 {strides = array<i32>} : memref<208x128xbf16, #tpu.memory_space<vmem>>, vector<16x128xbf16>,
    %c16 = arith.constant 16 : index
    %c0_63 = arith.constant 0 : index
    %120 = vector.load %arg11[%c16, %c0_63] : memref<208x128xbf16, #tpu.memory_space<vmem>>, vector<180x128xbf16>
    tpu.vector_store %arg11[%c16, %c0_63], %117 {strides = array<i32>} : memref<208x128xbf16, #tpu.memory_space<vmem>>, vector<180x128xbf16>,
    %c0_i32_64 = arith.constant 0 : i32
    %121 = arith.cmpi eq, %arg1, %c0_i32_64 : i32
    %122 = arith.extui %121 : i1 to i32
    %c0_i32_65 = arith.constant 0 : i32
    %123 = arith.cmpi ne, %122, %c0_i32_65 : i32
    scf.if %123 {
      %cst_124 = arith.constant 0.000000e+00 : bf16
      %188 = vector.broadcast %cst_124 : bf16 to vector<18x128xbf16>
      %c16_125 = arith.constant 16 : index
      %c0_126 = arith.constant 0 : index
      %189 = vector.load %arg11[%c16_125, %c0_126] : memref<208x128xbf16, #tpu.memory_space<vmem>>, vector<18x128xbf16>
      tpu.vector_store %arg11[%c16_125, %c0_126], %188 {strides = array<i32>} : memref<208x128xbf16, #tpu.memory_space<vmem>>, vector<18x128xbf16>,
    } else {
    }
    %c1_i32_66 = arith.constant 1 : i32
    %124 = arith.cmpi eq, %arg1, %c1_i32_66 : i32
    %125 = arith.extui %124 : i1 to i32
    %c0_i32_67 = arith.constant 0 : i32
    %126 = arith.cmpi ne, %125, %c0_i32_67 : i32
    scf.if %126 {
      %cst_124 = arith.constant 0.000000e+00 : bf16
      %188 = vector.broadcast %cst_124 : bf16 to vector<18x128xbf16>
      %c178 = arith.constant 178 : index
      %c0_125 = arith.constant 0 : index
      %189 = vector.load %arg11[%c178, %c0_125] : memref<208x128xbf16, #tpu.memory_space<vmem>>, vector<18x128xbf16>
      tpu.vector_store %arg11[%c178, %c0_125], %188 {strides = array<i32>} : memref<208x128xbf16, #tpu.memory_space<vmem>>, vector<18x128xbf16>,
    } else {
    }
    %c15 = arith.constant 15 : index
    %c0_68 = arith.constant 0 : index
    %127 = vector.load %arg11[%c15, %c0_68] : memref<208x128xbf16, #tpu.memory_space<vmem>>, vector<144x128xbf16>
    %c0_69 = arith.constant 0 : index
    %c0_70 = arith.constant 0 : index
    %c0_71 = arith.constant 0 : index
    %128 = vector.load %arg6[%c0_69, %c0_70, %c0_71] : memref<9x128x128xbf16, #tpu.memory_space<vmem>>, vector<1x128x128xbf16>
    %129 = vector.shape_cast %128 : vector<1x128x128xbf16> to vector<128x128xbf16>
    %cst_72 = arith.constant dense<0.000000e+00> : vector<144x128xf32>
    %130 = tpu.matmul %127, %129, %cst_72 {dimension_numbers = #tpu.dot_dimension_numbers<[1], [0], [0], [1], [0, 0, 1, 1], [], []>} : vector<144x128xbf16>, vector<128x128xbf16>, vector<144x128xf32> -> vector<144x128xf32>
    %c16_73 = arith.constant 16 : index
    %c0_74 = arith.constant 0 : index
    %131 = vector.load %arg11[%c16_73, %c0_74] : memref<208x128xbf16, #tpu.memory_space<vmem>>, vector<144x128xbf16>
    %c1_75 = arith.constant 1 : index
    %c0_76 = arith.constant 0 : index
    %c0_77 = arith.constant 0 : index
    %132 = vector.load %arg6[%c1_75, %c0_76, %c0_77] : memref<9x128x128xbf16, #tpu.memory_space<vmem>>, vector<1x128x128xbf16>
    %133 = vector.shape_cast %132 : vector<1x128x128xbf16> to vector<128x128xbf16>
    %cst_78 = arith.constant dense<0.000000e+00> : vector<144x128xf32>
    %134 = tpu.matmul %131, %133, %cst_78 {dimension_numbers = #tpu.dot_dimension_numbers<[1], [0], [0], [1], [0, 0, 1, 1], [], []>} : vector<144x128xbf16>, vector<128x128xbf16>, vector<144x128xf32> -> vector<144x128xf32>
    %135 = arith.addf %130, %134 : vector<144x128xf32>
    %c17 = arith.constant 17 : index
    %c0_79 = arith.constant 0 : index
    %136 = vector.load %arg11[%c17, %c0_79] : memref<208x128xbf16, #tpu.memory_space<vmem>>, vector<144x128xbf16>
    %c2_80 = arith.constant 2 : index
    %c0_81 = arith.constant 0 : index
    %c0_82 = arith.constant 0 : index
    %137 = vector.load %arg6[%c2_80, %c0_81, %c0_82] : memref<9x128x128xbf16, #tpu.memory_space<vmem>>, vector<1x128x128xbf16>
    %138 = vector.shape_cast %137 : vector<1x128x128xbf16> to vector<128x128xbf16>
    %cst_83 = arith.constant dense<0.000000e+00> : vector<144x128xf32>
    %139 = tpu.matmul %136, %138, %cst_83 {dimension_numbers = #tpu.dot_dimension_numbers<[1], [0], [0], [1], [0, 0, 1, 1], [], []>} : vector<144x128xbf16>, vector<128x128xbf16>, vector<144x128xf32> -> vector<144x128xf32>
    %140 = arith.addf %135, %139 : vector<144x128xf32>
    %c33 = arith.constant 33 : index
    %c0_84 = arith.constant 0 : index
    %141 = vector.load %arg11[%c33, %c0_84] : memref<208x128xbf16, #tpu.memory_space<vmem>>, vector<144x128xbf16>
    %c3_85 = arith.constant 3 : index
    %c0_86 = arith.constant 0 : index
    %c0_87 = arith.constant 0 : index
    %142 = vector.load %arg6[%c3_85, %c0_86, %c0_87] : memref<9x128x128xbf16, #tpu.memory_space<vmem>>, vector<1x128x128xbf16>
    %143 = vector.shape_cast %142 : vector<1x128x128xbf16> to vector<128x128xbf16>
    %cst_88 = arith.constant dense<0.000000e+00> : vector<144x128xf32>
    %144 = tpu.matmul %141, %143, %cst_88 {dimension_numbers = #tpu.dot_dimension_numbers<[1], [0], [0], [1], [0, 0, 1, 1], [], []>} : vector<144x128xbf16>, vector<128x128xbf16>, vector<144x128xf32> -> vector<144x128xf32>
    %145 = arith.addf %140, %144 : vector<144x128xf32>
    %c34 = arith.constant 34 : index
    %c0_89 = arith.constant 0 : index
    %146 = vector.load %arg11[%c34, %c0_89] : memref<208x128xbf16, #tpu.memory_space<vmem>>, vector<144x128xbf16>
    %c4_90 = arith.constant 4 : index
    %c0_91 = arith.constant 0 : index
    %c0_92 = arith.constant 0 : index
    %147 = vector.load %arg6[%c4_90, %c0_91, %c0_92] : memref<9x128x128xbf16, #tpu.memory_space<vmem>>, vector<1x128x128xbf16>
    %148 = vector.shape_cast %147 : vector<1x128x128xbf16> to vector<128x128xbf16>
    %cst_93 = arith.constant dense<0.000000e+00> : vector<144x128xf32>
    %149 = tpu.matmul %146, %148, %cst_93 {dimension_numbers = #tpu.dot_dimension_numbers<[1], [0], [0], [1], [0, 0, 1, 1], [], []>} : vector<144x128xbf16>, vector<128x128xbf16>, vector<144x128xf32> -> vector<144x128xf32>
    %150 = arith.addf %145, %149 : vector<144x128xf32>
    %c35 = arith.constant 35 : index
    %c0_94 = arith.constant 0 : index
    %151 = vector.load %arg11[%c35, %c0_94] : memref<208x128xbf16, #tpu.memory_space<vmem>>, vector<144x128xbf16>
    %c5_95 = arith.constant 5 : index
    %c0_96 = arith.constant 0 : index
    %c0_97 = arith.constant 0 : index
    %152 = vector.load %arg6[%c5_95, %c0_96, %c0_97] : memref<9x128x128xbf16, #tpu.memory_space<vmem>>, vector<1x128x128xbf16>
    %153 = vector.shape_cast %152 : vector<1x128x128xbf16> to vector<128x128xbf16>
    %cst_98 = arith.constant dense<0.000000e+00> : vector<144x128xf32>
    %154 = tpu.matmul %151, %153, %cst_98 {dimension_numbers = #tpu.dot_dimension_numbers<[1], [0], [0], [1], [0, 0, 1, 1], [], []>} : vector<144x128xbf16>, vector<128x128xbf16>, vector<144x128xf32> -> vector<144x128xf32>
    %155 = arith.addf %150, %154 : vector<144x128xf32>
    %c51 = arith.constant 51 : index
    %c0_99 = arith.constant 0 : index
    %156 = vector.load %arg11[%c51, %c0_99] : memref<208x128xbf16, #tpu.memory_space<vmem>>, vector<144x128xbf16>
    %c6_100 = arith.constant 6 : index
    %c0_101 = arith.constant 0 : index
    %c0_102 = arith.constant 0 : index
    %157 = vector.load %arg6[%c6_100, %c0_101, %c0_102] : memref<9x128x128xbf16, #tpu.memory_space<vmem>>, vector<1x128x128xbf16>
    %158 = vector.shape_cast %157 : vector<1x128x128xbf16> to vector<128x128xbf16>
    %cst_103 = arith.constant dense<0.000000e+00> : vector<144x128xf32>
    %159 = tpu.matmul %156, %158, %cst_103 {dimension_numbers = #tpu.dot_dimension_numbers<[1], [0], [0], [1], [0, 0, 1, 1], [], []>} : vector<144x128xbf16>, vector<128x128xbf16>, vector<144x128xf32> -> vector<144x128xf32>
    %160 = arith.addf %155, %159 : vector<144x128xf32>
    %c52 = arith.constant 52 : index
    %c0_104 = arith.constant 0 : index
    %161 = vector.load %arg11[%c52, %c0_104] : memref<208x128xbf16, #tpu.memory_space<vmem>>, vector<144x128xbf16>
    %c7_105 = arith.constant 7 : index
    %c0_106 = arith.constant 0 : index
    %c0_107 = arith.constant 0 : index
    %162 = vector.load %arg6[%c7_105, %c0_106, %c0_107] : memref<9x128x128xbf16, #tpu.memory_space<vmem>>, vector<1x128x128xbf16>
    %163 = vector.shape_cast %162 : vector<1x128x128xbf16> to vector<128x128xbf16>
    %cst_108 = arith.constant dense<0.000000e+00> : vector<144x128xf32>
    %164 = tpu.matmul %161, %163, %cst_108 {dimension_numbers = #tpu.dot_dimension_numbers<[1], [0], [0], [1], [0, 0, 1, 1], [], []>} : vector<144x128xbf16>, vector<128x128xbf16>, vector<144x128xf32> -> vector<144x128xf32>
    %165 = arith.addf %160, %164 : vector<144x128xf32>
    %c53 = arith.constant 53 : index
    %c0_109 = arith.constant 0 : index
    %166 = vector.load %arg11[%c53, %c0_109] : memref<208x128xbf16, #tpu.memory_space<vmem>>, vector<144x128xbf16>
    %c8_110 = arith.constant 8 : index
    %c0_111 = arith.constant 0 : index
    %c0_112 = arith.constant 0 : index
    %167 = vector.load %arg6[%c8_110, %c0_111, %c0_112] : memref<9x128x128xbf16, #tpu.memory_space<vmem>>, vector<1x128x128xbf16>
    %168 = vector.shape_cast %167 : vector<1x128x128xbf16> to vector<128x128xbf16>
    %cst_113 = arith.constant dense<0.000000e+00> : vector<144x128xf32>
    %169 = tpu.matmul %166, %168, %cst_113 {dimension_numbers = #tpu.dot_dimension_numbers<[1], [0], [0], [1], [0, 0, 1, 1], [], []>} : vector<144x128xbf16>, vector<128x128xbf16>, vector<144x128xf32> -> vector<144x128xf32>
    %170 = arith.addf %165, %169 : vector<144x128xf32>
    %171 = arith.index_cast %9 : i32 to index
    %c37_114 = arith.constant 37 : index
    %c0_115 = arith.constant 0 : index
    %172 = vector.load %arg10[%171, %c37_114, %c0_115] : memref<2x224x128xbf16, #tpu.memory_space<vmem>>, vector<1x144x128xbf16>
    %173 = vector.shape_cast %172 : vector<1x144x128xbf16> to vector<144x128xbf16>
    %174 = arith.extf %173 : vector<144x128xbf16> to vector<144x128xf32>
    %c0_116 = arith.constant 0 : index
    %c0_117 = arith.constant 0 : index
    %175 = vector.load %arg7[%c0_116, %c0_117] : memref<1x128xf32, #tpu.memory_space<vmem>>, vector<1x128xf32>
    %176 = vector.broadcast %175 : vector<1x128xf32> to vector<144x128xf32>
    %177 = arith.mulf %170, %176 : vector<144x128xf32>
    %c0_118 = arith.constant 0 : index
    %c0_119 = arith.constant 0 : index
    %178 = vector.load %arg8[%c0_118, %c0_119] : memref<1x128xf32, #tpu.memory_space<vmem>>, vector<1x128xf32>
    %179 = vector.broadcast %178 : vector<1x128xf32> to vector<144x128xf32>
    %180 = arith.addf %177, %179 : vector<144x128xf32>
    %181 = arith.addf %180, %174 : vector<144x128xf32>
    %cst_120 = arith.constant 0.000000e+00 : f32
    %182 = vector.broadcast %cst_120 : f32 to vector<144x128xf32>
    %183 = arith.maximumf %181, %182 : vector<144x128xf32>
    %184 = arith.truncf %183 : vector<144x128xf32> to vector<144x128xbf16>
    %c0_121 = arith.constant 0 : index
    %c0_122 = arith.constant 0 : index
    %c0_123 = arith.constant 0 : index
    %185 = vector.load %arg9[%c0_121, %c0_122, %c0_123] : memref<1x144x128xbf16, #tpu.memory_space<vmem>>, vector<1x144x128xbf16>
    %186 = vector.shape_cast %185 : vector<1x144x128xbf16> to vector<144x128xbf16>
    %187 = vector.shape_cast %184 : vector<144x128xbf16> to vector<1x144x128xbf16>
    tpu.vector_store %arg9[%c0_121, %c0_122, %c0_123], %187 {strides = array<i32>} : memref<1x144x128xbf16, #tpu.memory_space<vmem>>, vector<1x144x128xbf16>,
    return
  }
  func.func @transform_1(%arg0: i32, %arg1: i32) -> (i32, i32, i32) {
    %c0_i32 = arith.constant 0 : i32
    %c0_i32_0 = arith.constant 0 : i32
    %c0_i32_1 = arith.constant 0 : i32
    %c0_i32_2 = arith.constant 0 : i32
    return %c0_i32, %c0_i32_0, %c0_i32_1 : i32, i32, i32
  }
  func.func @transform_2(%arg0: i32, %arg1: i32) -> (i32, i32) {
    %c0_i32 = arith.constant 0 : i32
    %c0_i32_0 = arith.constant 0 : i32
    %c0_i32_1 = arith.constant 0 : i32
    return %c0_i32, %c0_i32_0 : i32, i32
  }
  func.func @transform_3(%arg0: i32, %arg1: i32) -> (i32, i32) {
    %c0_i32 = arith.constant 0 : i32
    %c0_i32_0 = arith.constant 0 : i32
    %c0_i32_1 = arith.constant 0 : i32
    return %c0_i32, %c0_i32_0 : i32, i32
  }
  func.func @transform_4(%arg0: i32, %arg1: i32) -> (i32, i32, i32) {
    %c0_i32 = arith.constant 0 : i32
    %c0_i32_0 = arith.constant 0 : i32
    %c0_i32_1 = arith.constant 0 : i32
    %c0_i32_2 = arith.constant 0 : i32
    return %c0_i32, %c0_i32_0, %c0_i32_1 : i32, i32, i32
  }
  func.func @transform_5(%arg0: i32, %arg1: i32) -> (i32, i32) {
    %c0_i32 = arith.constant 0 : i32
    %c0_i32_0 = arith.constant 0 : i32
    %c0_i32_1 = arith.constant 0 : i32
    return %c0_i32, %c0_i32_0 : i32, i32
  }
  func.func @transform_6(%arg0: i32, %arg1: i32) -> (i32, i32) {
    %c0_i32 = arith.constant 0 : i32
    %c0_i32_0 = arith.constant 0 : i32
    %c0_i32_1 = arith.constant 0 : i32
    return %c0_i32, %c0_i32_0 : i32, i32
  }
  func.func @transform_7(%arg0: i32, %arg1: i32) -> (i32, i32, i32) {
    %c0_i32 = arith.constant 0 : i32
    %c0_i32_0 = arith.constant 0 : i32
    return %arg0, %arg1, %c0_i32 : i32, i32, i32
  }
}

</mosaic_0001>

<llo_original>
// kernel: _lambda_.1
$region0: #{_lambda_.1}
  #allocation0 [shape = 'u32[]', space=smem, size = 0x4, offset = 0x4, fixed_abs, tag = 'smem constant byte address 0x4 - core index']
  #allocation1 [shape = 'u32[144,128]{1,0:T(1,128)}', space=vmem, size = 0x12000, scoped, tag = 'internal scratch']
  #allocation2 [shape = 'bf16[2,224,128]{2,1,0:T(8,128)(2,1)}', space=vmem, size = 0x1c000, scoped, tag = 'scratch operand']
  #allocation3 [shape = 'bf16[208,128]{1,0:T(8,128)(2,1)}', space=vmem, size = 0xd000, scoped, tag = 'scratch operand']
  #allocation4 [shape = 's32[2]{0}', space=sflag, size = 0x8, scoped, tag = 'scratch operand']
  #allocation5 [shape = 's32[]', space=sflag, size = 0x4, offset = 0, fixed_abs, tag = 'sflag constant byte address 0x0 - dummy sync flag']
  #allocation6 [shape = 's32[]', space=sflag, size = 0x4, offset = 0, fixed_abs, tag = 'sflag constant byte address 0x0 - dummy sync flag']
  %s0 = inlined_call_operand.vmem [shape: bf16[2,360,128], index: 0, kind: input, shape index: {}]
  %s1 = inlined_call_operand.vmem [shape: bf16[9,128,128], index: 1, kind: input, shape index: {}]
  %s2 = inlined_call_operand.vmem [shape: f32[1,128], index: 2, kind: input, shape index: {}]
  %s3 = inlined_call_operand.vmem [shape: f32[1,128], index: 3, kind: input, shape index: {}]
  %s4 = inlined_call_operand.vmem [shape: bf16[9,128,128], index: 4, kind: input, shape index: {}]
  %s5 = inlined_call_operand.vmem [shape: f32[1,128], index: 5, kind: input, shape index: {}]
  %s6 = inlined_call_operand.vmem [shape: f32[1,128], index: 6, kind: input, shape index: {}]
  %s7 = inlined_call_operand.vmem [shape: bf16[2,288,128], index: 7, kind: output, shape index: {}]
  %s8 = sld [smem:[#allocation0]]
  $region147: #{_lambda_.1} parent=0
    _
  %s10 = ssub.s32 1, %s8
  %s11 = scalar_select 0, %s10, %s8
  loop: start=0, step=1, limit=6
  $region2: #{_lambda_.1} parent=0 // loop_pre_header
    _
  $region3: #{_lambda_.1} parent=0 // loop_header
    %s13 = sphi 0, %s17
    %p14 = scmp.ge.s32.totalorder %s13, 6
    %s20 = sphi 0, %s32
    %s21 = sphi 0, %s28
    %s22 = sphi 0, %s20
    %s23 = sphi 0, %s21
    %s24 = sphi 0, %s22
    %s25 = sphi 0, %s23
    %s33 = sphi 0, %s33
    %s35 = sphi 0, %s33
    %s36 = sphi 0, %s35
    %s50 = sphi 0, %s36
    %s54 = sphi 0, %s54
    %s56 = sphi 0, %s54
    %s57 = sphi 0, %s56
    %s71 = sphi 0, %s57
    %s75 = sphi 0, %s75
    %s77 = sphi 0, %s75
    %s78 = sphi 0, %s77
    %s92 = sphi 0, %s78
    %s96 = sphi 0, %s96
    %s98 = sphi 0, %s96
    %s99 = sphi 0, %s98
    %s113 = sphi 0, %s99
    %s117 = sphi 0, %s117
    %s119 = sphi 0, %s117
    %s120 = sphi 0, %s119
    %s134 = sphi 0, %s120
    %s138 = sphi 0, %s138
    %s140 = sphi 0, %s138
    %s141 = sphi 0, %s140
    %s155 = sphi 0, %s141
    %s163 = sphi 0, %s165
    %s166 = sphi 0, %s163
    %s167 = sphi 0, %s166
    %s183 = sphi 0, %s167
  $region4: #{_lambda_.1} parent=0 // loop_header_branch
    %16 = sbr.rel (%p14) target = $region8
  $region5: #{_lambda_.1} parent=0 // loop_body
    %s18 = ssub.s32 %s13, 1
    %s19 = ssub.s32 %s13, 2
    %s26 = sadd.s32 1, %s21
    %p27 = scmp.ge.s32.totalorder %s26, 2
    %s28 = scalar_select %p27, 0, %s26
    %s29 = sadd.s32 1, %s20
    %s30 = scalar_select %p27, %s29, %s20
    %p31 = scmp.ge.s32.totalorder %s30, 2
    %s32 = scalar_select %p31, 0, %s30
    %s34 = sadd.s32 %s33, 1
    %p37 = scmp.eq.s32.totalorder %s13, 3
    %p38 = scmp.ne.s32.totalorder %s33, %s35
    %p39 = scmp.eq.s32.totalorder %s13, 0
    %p40 = por %p38, %p39
    %p41 = scmp.ne.s32.totalorder %s33, %s35
    %p42 = scmp.eq.s32.totalorder %s18, 3
    %p43 = por %p41, %p42
    %p44 = scmp.ne.s32.totalorder %s35, %s36
    %p45 = scmp.eq.s32.totalorder %s18, 0
    %p46 = por %p44, %p45
    %p47 = scmp.ne.s32.totalorder %s35, %s36
    %p48 = scmp.eq.s32.totalorder %s19, 3
    %p49 = por %p47, %p48
    %p51 = scmp.ne.s32.totalorder %s36, %s50
    %p52 = scmp.eq.s32.totalorder %s19, 0
    %p53 = por %p51, %p52
    %s55 = sadd.s32 %s54, 1
    %p58 = scmp.eq.s32.totalorder %s13, 3
    %p59 = scmp.ne.s32.totalorder %s54, %s56
    %p60 = scmp.eq.s32.totalorder %s13, 0
    %p61 = por %p59, %p60
    %p62 = scmp.ne.s32.totalorder %s54, %s56
    %p63 = scmp.eq.s32.totalorder %s18, 3
    %p64 = por %p62, %p63
    %p65 = scmp.ne.s32.totalorder %s56, %s57
    %p66 = scmp.eq.s32.totalorder %s18, 0
    %p67 = por %p65, %p66
    %p68 = scmp.ne.s32.totalorder %s56, %s57
    %p69 = scmp.eq.s32.totalorder %s19, 3
    %p70 = por %p68, %p69
    %p72 = scmp.ne.s32.totalorder %s57, %s71
    %p73 = scmp.eq.s32.totalorder %s19, 0
    %p74 = por %p72, %p73
    %s76 = sadd.s32 %s75, 1
    %p79 = scmp.eq.s32.totalorder %s13, 3
    %p80 = scmp.ne.s32.totalorder %s75, %s77
    %p81 = scmp.eq.s32.totalorder %s13, 0
    %p82 = por %p80, %p81
    %p83 = scmp.ne.s32.totalorder %s75, %s77
    %p84 = scmp.eq.s32.totalorder %s18, 3
    %p85 = por %p83, %p84
    %p86 = scmp.ne.s32.totalorder %s77, %s78
    %p87 = scmp.eq.s32.totalorder %s18, 0
    %p88 = por %p86, %p87
    %p89 = scmp.ne.s32.totalorder %s77, %s78
    %p90 = scmp.eq.s32.totalorder %s19, 3
    %p91 = por %p89, %p90
    %p93 = scmp.ne.s32.totalorder %s78, %s92
    %p94 = scmp.eq.s32.totalorder %s19, 0
    %p95 = por %p93, %p94
    %s97 = sadd.s32 %s96, 1
    %p100 = scmp.eq.s32.totalorder %s13, 3
    %p101 = scmp.ne.s32.totalorder %s96, %s98
    %p102 = scmp.eq.s32.totalorder %s13, 0
    %p103 = por %p101, %p102
    %p104 = scmp.ne.s32.totalorder %s96, %s98
    %p105 = scmp.eq.s32.totalorder %s18, 3
    %p106 = por %p104, %p105
    %p107 = scmp.ne.s32.totalorder %s98, %s99
    %p108 = scmp.eq.s32.totalorder %s18, 0
    %p109 = por %p107, %p108
    %p110 = scmp.ne.s32.totalorder %s98, %s99
    %p111 = scmp.eq.s32.totalorder %s19, 3
    %p112 = por %p110, %p111
    %p114 = scmp.ne.s32.totalorder %s99, %s113
    %p115 = scmp.eq.s32.totalorder %s19, 0
    %p116 = por %p114, %p115
    %s118 = sadd.s32 %s117, 1
    %p121 = scmp.eq.s32.totalorder %s13, 3
    %p122 = scmp.ne.s32.totalorder %s117, %s119
    %p123 = scmp.eq.s32.totalorder %s13, 0
    %p124 = por %p122, %p123
    %p125 = scmp.ne.s32.totalorder %s117, %s119
    %p126 = scmp.eq.s32.totalorder %s18, 3
    %p127 = por %p125, %p126
    %p128 = scmp.ne.s32.totalorder %s119, %s120
    %p129 = scmp.eq.s32.totalorder %s18, 0
    %p130 = por %p128, %p129
    %p131 = scmp.ne.s32.totalorder %s119, %s120
    %p132 = scmp.eq.s32.totalorder %s19, 3
    %p133 = por %p131, %p132
    %p135 = scmp.ne.s32.totalorder %s120, %s134
    %p136 = scmp.eq.s32.totalorder %s19, 0
    %p137 = por %p135, %p136
    %s139 = sadd.s32 %s138, 1
    %p142 = scmp.eq.s32.totalorder %s13, 3
    %p143 = scmp.ne.s32.totalorder %s138, %s140
    %p144 = scmp.eq.s32.totalorder %s13, 0
    %p145 = por %p143, %p144
    %p146 = scmp.ne.s32.totalorder %s138, %s140
    %p147 = scmp.eq.s32.totalorder %s18, 3
    %p148 = por %p146, %p147
    %p149 = scmp.ne.s32.totalorder %s140, %s141
    %p150 = scmp.eq.s32.totalorder %s18, 0
    %p151 = por %p149, %p150
    %p152 = scmp.ne.s32.totalorder %s140, %s141
    %p153 = scmp.eq.s32.totalorder %s19, 3
    %p154 = por %p152, %p153
    %p156 = scmp.ne.s32.totalorder %s141, %s155
    %p157 = scmp.eq.s32.totalorder %s19, 0
    %p158 = por %p156, %p157
    %s159 = ssub.s32 %s20, %s32
    %s160 = ssub.s32 %s21, %s28
    %s161 = sor.u32 %s159, %s160
    %p162 = scmp.eq.s32.totalorder %s161, 0
    %s164 = sadd.s32 %s163, 1
    %s165 = scalar_select %p162, %s163, %s164
    %p168 = pneg %p162
    %p169 = scmp.eq.s32.totalorder %s13, 3
    %p170 = por %p168, %p169
    %p171 = scmp.ne.s32.totalorder %s163, %s166
    %p172 = scmp.eq.s32.totalorder %s13, 0
    %p173 = por %p171, %p172
    %p174 = scmp.ne.s32.totalorder %s163, %s166
    %p175 = scmp.eq.s32.totalorder %s18, 3
    %p176 = por %p174, %p175
    %p177 = scmp.ne.s32.totalorder %s166, %s167
    %p178 = scmp.eq.s32.totalorder %s18, 0
    %p179 = por %p177, %p178
    %p180 = scmp.ne.s32.totalorder %s166, %s167
    %p181 = scmp.eq.s32.totalorder %s19, 3
    %p182 = por %p180, %p181
    %p184 = scmp.ne.s32.totalorder %s167, %s183
    %p185 = scmp.eq.s32.totalorder %s19, 0
    %p186 = por %p184, %p185
    %p187 = scmp.le.s32.totalorder 1, %s13
    %p188 = scmp.lt.s32.totalorder %s13, 5
    %p189 = pnand %p187, %p188
    %p190 = pneg %p189
    // Predicated region
    $region9: #{_lambda_.1} parent=5 // pred_check
      _
    $region10: #{_lambda_.1} parent=5 // pred_check_branch
      %192 = sbr.rel (%p189) target = $region12
    $region11: #{_lambda_.1} parent=5 // pred_region
      %s193 = ssub.s32 %s13, 1
      // Predicated region
      $region13: #{_lambda_.1} parent=11 // pred_check
        %p194 = pneg %p46
      $region14: #{_lambda_.1} parent=11 // pred_check_branch
        %196 = sbr.rel (%p194) target = $region16
      $region15: #{_lambda_.1} parent=11 // pred_region
        _
      $region16: #{_lambda_.1} parent=11 // pred_fallthru
        _
      // Predicated region
      $region17: #{_lambda_.1} parent=11 // pred_check
        %p197 = pneg %p67
      $region18: #{_lambda_.1} parent=11 // pred_check_branch
        %199 = sbr.rel (%p197) target = $region20
      $region19: #{_lambda_.1} parent=11 // pred_region
        _
      $region20: #{_lambda_.1} parent=11 // pred_fallthru
        _
      // Predicated region
      $region21: #{_lambda_.1} parent=11 // pred_check
        %p200 = pneg %p88
      $region22: #{_lambda_.1} parent=11 // pred_check_branch
        %202 = sbr.rel (%p200) target = $region24
      $region23: #{_lambda_.1} parent=11 // pred_region
        _
      $region24: #{_lambda_.1} parent=11 // pred_fallthru
        _
      // Predicated region
      $region25: #{_lambda_.1} parent=11 // pred_check
        %p203 = pneg %p109
      $region26: #{_lambda_.1} parent=11 // pred_check_branch
        %205 = sbr.rel (%p203) target = $region28
      $region27: #{_lambda_.1} parent=11 // pred_region
        _
      $region28: #{_lambda_.1} parent=11 // pred_fallthru
        _
      // Predicated region
      $region29: #{_lambda_.1} parent=11 // pred_check
        %p206 = pneg %p130
      $region30: #{_lambda_.1} parent=11 // pred_check_branch
        %208 = sbr.rel (%p206) target = $region32
      $region31: #{_lambda_.1} parent=11 // pred_region
        _
      $region32: #{_lambda_.1} parent=11 // pred_fallthru
        _
      // Predicated region
      $region33: #{_lambda_.1} parent=11 // pred_check
        %p209 = pneg %p151
      $region34: #{_lambda_.1} parent=11 // pred_check_branch
        %211 = sbr.rel (%p209) target = $region36
      $region35: #{_lambda_.1} parent=11 // pred_region
        _
      $region36: #{_lambda_.1} parent=11 // pred_fallthru
        _
    $region12: #{_lambda_.1} parent=5 // pred_fallthru
      _
    %p212 = scmp.lt.s32.totalorder %s13, 4
    // Predicated region
    $region37: #{_lambda_.1} parent=5 // pred_check
      %p213 = pneg %p212
    $region38: #{_lambda_.1} parent=5 // pred_check_branch
      %215 = sbr.rel (%p213) target = $region40
    $region39: #{_lambda_.1} parent=5 // pred_region
      _
    $region40: #{_lambda_.1} parent=5 // pred_fallthru
      _
    %p216 = scmp.le.s32.totalorder 1, %s13
    %p217 = scmp.lt.s32.totalorder %s13, 5
    %p218 = pnand %p216, %p217
    %p219 = pneg %p218
    // Predicated region
    $region41: #{_lambda_.1} parent=5 // pred_check
      _
    $region42: #{_lambda_.1} parent=5 // pred_check_branch
      %221 = sbr.rel (%p218) target = $region44
    $region43: #{_lambda_.1} parent=5 // pred_region
      %s222 = ssub.s32 %s13, 1
      %p223 = pneg %p46
      %p224 = pneg %p43
      %p225 = pneg %p67
      %p226 = pneg %p64
      %p227 = pneg %p88
      %p228 = pneg %p85
      %p229 = pneg %p109
      %p230 = pneg %p106
      %p231 = pneg %p130
      %p232 = pneg %p127
      %p233 = pneg %p151
      %p234 = pneg %p148
      %p235 = pneg %p179
      %p236 = pneg %p176
      %s237 = smul.u32 18, %s23
      %p238 = scmp.lt.s32.totalorder %s22, 1
      %s239 = scalar_select %p238, %s22, 1
      %p240 = scmp.lt.s32.totalorder %s237, 35
      %s241 = scalar_select %p240, %s237, 35
      %s242 = smul.addr %s239, 36
      %s243 = sadd.s32 %s241, %s242
      %s244 = smul.addr %s243, 4
      %s245 = scalar_lea.vmem %s7, %s244
      %s246 = smul.u32 18, %s23
      %p247 = scmp.lt.s32.totalorder %s22, 1
      %s248 = scalar_select %p247, %s22, 1
      %p249 = scmp.lt.s32.totalorder %s246, 35
      %s250 = scalar_select %p249, %s246, 35
      %s251 = smul.addr %s248, 36
      %s252 = sadd.s32 %s250, %s251
      %s253 = smul.addr %s252, 4
      %s254 = scalar_lea.vmem %s7, %s253
      %s255 = smul.u32 18, %s23
      %p257 = scmp.lt.s32.totalorder %s23, 0
      %s258 = ssub.s32 0, %s23
      %s259 = scalar_select %p257, %s258, %s23
      %s260 = sand.u32 %s259, 1
      %s261 = ssub.s32 0, %s260
      %s262 = scalar_select %p257, %s261, %s260
      %p263 = scmp.ne.s32.totalorder %s262, 0
      %p264 = scmp.lt.s32.totalorder %s262, 0
      %p265 = pnand %p264, %p263
      %p266 = pneg %p265
      %s267 = sadd.s32 %s262, 2
      %s268 = scalar_select %p266, %s267, %s262
      %p269 = scmp.eq.s32.totalorder %s23, 0
      // Predicated region
      $region45: #{_lambda_.1} parent=43 // pred_check
        %p270 = pneg %p269
      $region46: #{_lambda_.1} parent=43 // pred_check_branch
        %272 = sbr.rel (%p270) target = $region48
      $region47: #{_lambda_.1} parent=43 // pred_region
        %s273 = smul.u32 %s22, 45
        %s274 = smul.addr %s273, 4
        %s275 = scalar_lea.vmem %s0, %s274
        %p277 = scmp.lt.u32.totalorder 108, 8
        %p278 = pneg %p277
        // Predicated region
        $region49: #{_lambda_.1} parent=47 // pred_check
          _
        $region50: #{_lambda_.1} parent=47 // pred_check_branch
          %280 = sbr.rel (%p277) target = $region52
        $region51: #{_lambda_.1} parent=47 // pred_region
          %s296 = sand.u32 108, 7
          %p297 = scmp.eq.s32.totalorder %s296, 0
          %p298 = pneg %p297
          // Predicated region
          $region64: #{_lambda_.1} parent=51 // pred_check
            _
          $region65: #{_lambda_.1} parent=51 // pred_check_branch
            %300 = sbr.rel (%p297) target = $region67
          $region66: #{_lambda_.1} parent=51 // pred_region
            %s301 = sand.u32 108, 7
            %s302 = ssub.s32 108, %s301
            %s303 = scalar_lea.vmem %s275, %s302
            %s304 = ssub.s32 108, %s301
            %s305 = scalar_lea.vmem [#allocation2], %s304
            loop: start=0, step=1, limit=1
            $region68: #{_lambda_.1} parent=66 // loop_pre_header
              _
            $region69: #{_lambda_.1} parent=66 // loop_header
              %s307 = sphi 0, %s311
              %p308 = scmp.ge.s32.totalorder %s307, 1
              %s312 = sphi %s275, %s275
              %s313 = sphi [#allocation2], [#allocation2]
            $region70: #{_lambda_.1} parent=66 // loop_header_branch
              %310 = sbr.rel (%p308) target = $region74
            $region71: #{_lambda_.1} parent=66 // loop_body
              %v314 = vld [vmem:[%s312] sm:$0xff]
              %315 = vst [vmem:[%s313] sm:$0xff] %v314
              %v316 = vld [vmem:[%s312 + $0x8] sm:$0xff]
              %317 = vst [vmem:[%s313 + $0x8] sm:$0xff] %v316
              %v318 = vld [vmem:[%s312 + $0x10] sm:$0xff]
              %319 = vst [vmem:[%s313 + $0x10] sm:$0xff] %v318
              %v320 = vld [vmem:[%s312 + $0x18] sm:$0xff]
              %321 = vst [vmem:[%s313 + $0x18] sm:$0xff] %v320
              %v322 = vld [vmem:[%s312 + $0x20] sm:$0xff]
              %323 = vst [vmem:[%s313 + $0x20] sm:$0xff] %v322
              %v324 = vld [vmem:[%s312 + $0x28] sm:$0xff]
              %325 = vst [vmem:[%s313 + $0x28] sm:$0xff] %v324
              %v326 = vld [vmem:[%s312 + $0x30] sm:$0xff]
              %327 = vst [vmem:[%s313 + $0x30] sm:$0xff] %v326
              %v328 = vld [vmem:[%s312 + $0x38] sm:$0xff]
              %329 = vst [vmem:[%s313 + $0x38] sm:$0xff] %v328
              %v330 = vld [vmem:[%s312 + $0x40] sm:$0xff]
              %331 = vst [vmem:[%s313 + $0x40] sm:$0xff] %v330
              %v332 = vld [vmem:[%s312 + $0x48] sm:$0xff]
              %333 = vst [vmem:[%s313 + $0x48] sm:$0xff] %v332
              %v334 = vld [vmem:[%s312 + $0x50] sm:$0xff]
              %335 = vst [vmem:[%s313 + $0x50] sm:$0xff] %v334
              %v336 = vld [vmem:[%s312 + $0x58] sm:$0xff]
              %337 = vst [vmem:[%s313 + $0x58] sm:$0xff] %v336
              %v338 = vld [vmem:[%s312 + $0x60] sm:$0xff]
              %339 = vst [vmem:[%s313 + $0x60] sm:$0xff] %v338
            $region72: #{_lambda_.1} parent=66 // loop_footer
              %s311 = sadd.s32 1, %s307
            $region73: #{_lambda_.1} parent=66 // loop_footer_branch
              %306 = sbr.rel target = $region69
            $region74: #{_lambda_.1} parent=66 // loop_exit
              _
            %s340 = sshll.u32 1, %s301
            %s341 = ssub.s32 %s340, 1
            loop: start=0, step=1, limit=1
            $region75: #{_lambda_.1} parent=66 // loop_pre_header
              _
            $region76: #{_lambda_.1} parent=66 // loop_header
              %s343 = sphi 0, %s347
              %p344 = scmp.ge.s32.totalorder %s343, 1
              %s348 = sphi %s303, %s303
              %s349 = sphi %s305, %s305
            $region77: #{_lambda_.1} parent=66 // loop_header_branch
              %346 = sbr.rel (%p344) target = $region81
            $region78: #{_lambda_.1} parent=66 // loop_body
              %v350 = vld [vmem:[%s348] sm:%s341]
              %351 = vst [vmem:[%s349] sm:%s341] %v350
            $region79: #{_lambda_.1} parent=66 // loop_footer
              %s347 = sadd.s32 1, %s343
            $region80: #{_lambda_.1} parent=66 // loop_footer_branch
              %342 = sbr.rel target = $region76
            $region81: #{_lambda_.1} parent=66 // loop_exit
              _
          $region67: #{_lambda_.1} parent=51 // pred_fallthru
            _
        $region52: #{_lambda_.1} parent=47 // pred_fallthru
          _
        // Predicated region
        $region53: #{_lambda_.1} parent=47 // pred_check
          %p281 = pneg %p277
        $region54: #{_lambda_.1} parent=47 // pred_check_branch
          %283 = sbr.rel (%p281) target = $region56
        $region55: #{_lambda_.1} parent=47 // pred_region
          %s284 = sshll.u32 1, 108
          %s285 = ssub.s32 %s284, 1
          loop: start=0, step=1, limit=1
          $region57: #{_lambda_.1} parent=55 // loop_pre_header
            _
          $region58: #{_lambda_.1} parent=55 // loop_header
            %s287 = sphi 0, %s291
            %p288 = scmp.ge.s32.totalorder %s287, 1
            %s292 = sphi %s275, %s275
            %s293 = sphi [#allocation2], [#allocation2]
          $region59: #{_lambda_.1} parent=55 // loop_header_branch
            %290 = sbr.rel (%p288) target = $region63
          $region60: #{_lambda_.1} parent=55 // loop_body
            %v294 = vld [vmem:[%s292] sm:%s285]
            %295 = vst [vmem:[%s293] sm:%s285] %v294
          $region61: #{_lambda_.1} parent=55 // loop_footer
            %s291 = sadd.s32 1, %s287
          $region62: #{_lambda_.1} parent=55 // loop_footer_branch
            %286 = sbr.rel target = $region58
          $region63: #{_lambda_.1} parent=55 // loop_exit
            _
        $region56: #{_lambda_.1} parent=47 // pred_fallthru
          _
        // Predicated region
        $region82: #{_lambda_.1} parent=47 // pred_check
          _
        $region83: #{_lambda_.1} parent=47 // pred_check_branch
          %354 = sbr.rel (0) target = $region85
        $region84: #{_lambda_.1} parent=47 // pred_region
          %355 = vsyncadd [#allocation4], 1728
        $region85: #{_lambda_.1} parent=47 // pred_fallthru
          _
      $region48: #{_lambda_.1} parent=43 // pred_fallthru
        _
      %s356 = sadd.s32 %s23, 1
      %p357 = scmp.lt.s32.totalorder %s356, 2
      // Predicated region
      $region86: #{_lambda_.1} parent=43 // pred_check
        %p358 = pneg %p357
      $region87: #{_lambda_.1} parent=43 // pred_check_branch
        %360 = sbr.rel (%p358) target = $region89
      $region88: #{_lambda_.1} parent=43 // pred_region
        %s361 = ssub.s32 1, %s268
        %s362 = smul.u32 %s356, 144
        %s363 = sshra.s32 %s362, 3
        %s364 = sand.u32 %s362, 7
        %s365 = smul.u32 %s22, 45
        %s366 = sadd.s32 %s363, %s365
        %s367 = smul.addr %s366, 4
        %s368 = scalar_lea.vmem %s0, %s367
        %s369 = smul.u32 %s361, 28
        %s370 = smul.addr %s369, 4
        %s371 = scalar_lea.vmem [#allocation2], %s370
        %s372 = scalar_lea.sflag [#allocation4], %s361
        %p374 = scmp.lt.u32.totalorder 108, 8
        %p375 = pneg %p374
        // Predicated region
        $region90: #{_lambda_.1} parent=88 // pred_check
          _
        $region91: #{_lambda_.1} parent=88 // pred_check_branch
          %377 = sbr.rel (%p374) target = $region93
        $region92: #{_lambda_.1} parent=88 // pred_region
          %s393 = sand.u32 108, 7
          %p394 = scmp.eq.s32.totalorder %s393, 0
          %p395 = pneg %p394
          // Predicated region
          $region105: #{_lambda_.1} parent=92 // pred_check
            _
          $region106: #{_lambda_.1} parent=92 // pred_check_branch
            %397 = sbr.rel (%p394) target = $region108
          $region107: #{_lambda_.1} parent=92 // pred_region
            %s398 = sand.u32 108, 7
            %s399 = ssub.s32 108, %s398
            %s400 = scalar_lea.vmem %s368, %s399
            %s401 = ssub.s32 108, %s398
            %s402 = scalar_lea.vmem %s371, %s401 [#allocation2]
            loop: start=0, step=1, limit=1
            $region109: #{_lambda_.1} parent=107 // loop_pre_header
              _
            $region110: #{_lambda_.1} parent=107 // loop_header
              %s404 = sphi 0, %s408
              %p405 = scmp.ge.s32.totalorder %s404, 1
              %s409 = sphi %s368, %s368
              %s410 = sphi %s371, %s371
            $region111: #{_lambda_.1} parent=107 // loop_header_branch
              %407 = sbr.rel (%p405) target = $region115
            $region112: #{_lambda_.1} parent=107 // loop_body
              %v411 = vld [vmem:[%s409] sm:$0xff]
              %412 = vst [vmem:[%s410] sm:$0xff] %v411
              %v413 = vld [vmem:[%s409 + $0x8] sm:$0xff]
              %414 = vst [vmem:[%s410 + $0x8] sm:$0xff] %v413
              %v415 = vld [vmem:[%s409 + $0x10] sm:$0xff]
              %416 = vst [vmem:[%s410 + $0x10] sm:$0xff] %v415
              %v417 = vld [vmem:[%s409 + $0x18] sm:$0xff]
              %418 = vst [vmem:[%s410 + $0x18] sm:$0xff] %v417
              %v419 = vld [vmem:[%s409 + $0x20] sm:$0xff]
              %420 = vst [vmem:[%s410 + $0x20] sm:$0xff] %v419
              %v421 = vld [vmem:[%s409 + $0x28] sm:$0xff]
              %422 = vst [vmem:[%s410 + $0x28] sm:$0xff] %v421
              %v423 = vld [vmem:[%s409 + $0x30] sm:$0xff]
              %424 = vst [vmem:[%s410 + $0x30] sm:$0xff] %v423
              %v425 = vld [vmem:[%s409 + $0x38] sm:$0xff]
              %426 = vst [vmem:[%s410 + $0x38] sm:$0xff] %v425
              %v427 = vld [vmem:[%s409 + $0x40] sm:$0xff]
              %428 = vst [vmem:[%s410 + $0x40] sm:$0xff] %v427
              %v429 = vld [vmem:[%s409 + $0x48] sm:$0xff]
              %430 = vst [vmem:[%s410 + $0x48] sm:$0xff] %v429
              %v431 = vld [vmem:[%s409 + $0x50] sm:$0xff]
              %432 = vst [vmem:[%s410 + $0x50] sm:$0xff] %v431
              %v433 = vld [vmem:[%s409 + $0x58] sm:$0xff]
              %434 = vst [vmem:[%s410 + $0x58] sm:$0xff] %v433
              %v435 = vld [vmem:[%s409 + $0x60] sm:$0xff]
              %436 = vst [vmem:[%s410 + $0x60] sm:$0xff] %v435
            $region113: #{_lambda_.1} parent=107 // loop_footer
              %s408 = sadd.s32 1, %s404
            $region114: #{_lambda_.1} parent=107 // loop_footer_branch
              %403 = sbr.rel target = $region110
            $region115: #{_lambda_.1} parent=107 // loop_exit
              _
            %s437 = sshll.u32 1, %s398
            %s438 = ssub.s32 %s437, 1
            loop: start=0, step=1, limit=1
            $region116: #{_lambda_.1} parent=107 // loop_pre_header
              _
            $region117: #{_lambda_.1} parent=107 // loop_header
              %s440 = sphi 0, %s444
              %p441 = scmp.ge.s32.totalorder %s440, 1
              %s445 = sphi %s400, %s400
              %s446 = sphi %s402, %s402
            $region118: #{_lambda_.1} parent=107 // loop_header_branch
              %443 = sbr.rel (%p441) target = $region122
            $region119: #{_lambda_.1} parent=107 // loop_body
              %v447 = vld [vmem:[%s445] sm:%s438]
              %448 = vst [vmem:[%s446] sm:%s438] %v447
            $region120: #{_lambda_.1} parent=107 // loop_footer
              %s444 = sadd.s32 1, %s440
            $region121: #{_lambda_.1} parent=107 // loop_footer_branch
              %439 = sbr.rel target = $region117
            $region122: #{_lambda_.1} parent=107 // loop_exit
              _
          $region108: #{_lambda_.1} parent=92 // pred_fallthru
            _
        $region93: #{_lambda_.1} parent=88 // pred_fallthru
          _
        // Predicated region
        $region94: #{_lambda_.1} parent=88 // pred_check
          %p378 = pneg %p374
        $region95: #{_lambda_.1} parent=88 // pred_check_branch
          %380 = sbr.rel (%p378) target = $region97
        $region96: #{_lambda_.1} parent=88 // pred_region
          %s381 = sshll.u32 1, 108
          %s382 = ssub.s32 %s381, 1
          loop: start=0, step=1, limit=1
          $region98: #{_lambda_.1} parent=96 // loop_pre_header
            _
          $region99: #{_lambda_.1} parent=96 // loop_header
            %s384 = sphi 0, %s388
            %p385 = scmp.ge.s32.totalorder %s384, 1
            %s389 = sphi %s368, %s368
            %s390 = sphi %s371, %s371
          $region100: #{_lambda_.1} parent=96 // loop_header_branch
            %387 = sbr.rel (%p385) target = $region104
          $region101: #{_lambda_.1} parent=96 // loop_body
            %v391 = vld [vmem:[%s389] sm:%s382]
            %392 = vst [vmem:[%s390] sm:%s382] %v391
          $region102: #{_lambda_.1} parent=96 // loop_footer
            %s388 = sadd.s32 1, %s384
          $region103: #{_lambda_.1} parent=96 // loop_footer_branch
            %383 = sbr.rel target = $region99
          $region104: #{_lambda_.1} parent=96 // loop_exit
            _
        $region97: #{_lambda_.1} parent=88 // pred_fallthru
          _
        // Predicated region
        $region123: #{_lambda_.1} parent=88 // pred_check
          _
        $region124: #{_lambda_.1} parent=88 // pred_check_branch
          %451 = sbr.rel (0) target = $region126
        $region125: #{_lambda_.1} parent=88 // pred_region
          %452 = vsyncadd %s372, 1728
        $region126: #{_lambda_.1} parent=88 // pred_fallthru
          _
      $region89: #{_lambda_.1} parent=43 // pred_fallthru
        _
      %s453 = smul.u32 %s268, 28
      %s454 = smul.addr %s453, 4
      %s455 = scalar_lea.vmem [#allocation2], %s454
      %s456 = scalar_lea.sflag [#allocation4], %s268
      %s457 = smul.u32 4, 27
      %s458 = smul.u32 %s457, 1
      %s459 = sshll.u32 %s458, 4
      %460 = dma.done %s456, %s459
      %v461 = vld [vmem:[%s455] sm:$0xf]
      %v462 = vld [vmem:[%s455 + $0x4] sm:$0xf]
      %v463 = vld [vmem:[%s455 + $0x8] sm:$0xf]
      %v464 = vld [vmem:[%s455 + $0xc] sm:$0xf]
      %v465 = vld [vmem:[%s455 + $0x10] sm:$0xf]
      %v466 = vld [vmem:[%s455 + $0x14] sm:$0xf]
      %v467 = vld [vmem:[%s455 + $0x18] sm:$0xf]
      %v468 = vld [vmem:[%s455 + $0x1c] sm:$0xf]
      %v469 = vld [vmem:[%s455 + $0x20] sm:$0xf]
      %v470 = vld [vmem:[%s455 + $0x24] sm:$0xf]
      %v471 = vld [vmem:[%s455 + $0x28] sm:$0xf]
      %v472 = vld [vmem:[%s455 + $0x2c] sm:$0xf]
      %v473 = vld [vmem:[%s455 + $0x30] sm:$0xf]
      %v474 = vld [vmem:[%s455 + $0x34] sm:$0xf]
      %v475 = vld [vmem:[%s455 + $0x38] sm:$0xf]
      %v476 = vld [vmem:[%s455 + $0x3c] sm:$0xf]
      %v477 = vld [vmem:[%s455 + $0x40] sm:$0xf]
      %v478 = vld [vmem:[%s455 + $0x44] sm:$0xf]
      %v479 = vld [vmem:[%s455 + $0x48] sm:$0xf]
      %v480 = vld [vmem:[%s455 + $0x4c] sm:$0xf]
      %v481 = vld [vmem:[%s455 + $0x50] sm:$0xf]
      %v482 = vld [vmem:[%s455 + $0x54] sm:$0xf]
      %v483 = vld [vmem:[%s455 + $0x58] sm:$0x3]
      %v484 = vld [vmem:[%s1] sm:$0xf]
      %v485 = vld [vmem:[%s1 + $0x4] sm:$0xf]
      %v486 = vld [vmem:[%s1 + $0x8] sm:$0xf]
      %v487 = vld [vmem:[%s1 + $0xc] sm:$0xf]
      %v488 = vld [vmem:[%s1 + $0x10] sm:$0xf]
      %v489 = vld [vmem:[%s1 + $0x14] sm:$0xf]
      %v490 = vld [vmem:[%s1 + $0x18] sm:$0xf]
      %v491 = vld [vmem:[%s1 + $0x1c] sm:$0xf]
      %v492 = vld [vmem:[%s1 + $0x20] sm:$0xf]
      %v493 = vld [vmem:[%s1 + $0x24] sm:$0xf]
      %v494 = vld [vmem:[%s1 + $0x28] sm:$0xf]
      %v495 = vld [vmem:[%s1 + $0x2c] sm:$0xf]
      %v496 = vld [vmem:[%s1 + $0x30] sm:$0xf]
      %v497 = vld [vmem:[%s1 + $0x34] sm:$0xf]
      %v498 = vld [vmem:[%s1 + $0x38] sm:$0xf]
      %v499 = vld [vmem:[%s1 + $0x3c] sm:$0xf]
      %v500 = vld [vmem:[%s455 + $0x58] sm:$0x7]
      %s501 = scalar_lea.vmem %s1, 64
      %v502 = vld [vmem:[%s501] sm:$0xf]
      %v503 = vld [vmem:[%s501 + $0x4] sm:$0xf]
      %v504 = vld [vmem:[%s501 + $0x8] sm:$0xf]
      %v505 = vld [vmem:[%s501 + $0xc] sm:$0xf]
      %v506 = vld [vmem:[%s501 + $0x10] sm:$0xf]
      %v507 = vld [vmem:[%s501 + $0x14] sm:$0xf]
      %v508 = vld [vmem:[%s501 + $0x18] sm:$0xf]
      %v509 = vld [vmem:[%s501 + $0x1c] sm:$0xf]
      %v510 = vld [vmem:[%s501 + $0x20] sm:$0xf]
      %v511 = vld [vmem:[%s501 + $0x24] sm:$0xf]
      %v512 = vld [vmem:[%s501 + $0x28] sm:$0xf]
      %v513 = vld [vmem:[%s501 + $0x2c] sm:$0xf]
      %v514 = vld [vmem:[%s501 + $0x30] sm:$0xf]
      %v515 = vld [vmem:[%s501 + $0x34] sm:$0xf]
      %v516 = vld [vmem:[%s501 + $0x38] sm:$0xf]
      %v517 = vld [vmem:[%s501 + $0x3c] sm:$0xf]
      %v541 = vunpack.c.l.b16 %v461
      %v542 = vunpack.c.l.b16 %v462
      %v543 = vunpack.c.l.b16 %v463
      %v544 = vunpack.c.l.b16 %v464
      %v545 = vunpack.c.l.b16 %v465
      %v546 = vunpack.c.l.b16 %v466
      %v547 = vunpack.c.l.b16 %v467
      %v548 = vunpack.c.l.b16 %v468
      %v549 = vunpack.c.l.b16 %v469
      %v550 = vunpack.c.l.b16 %v470
      %v551 = vunpack.c.l.b16 %v471
      %v552 = vunpack.c.l.b16 %v472
      %v553 = vunpack.c.l.b16 %v473
      %v554 = vunpack.c.l.b16 %v474
      %v555 = vunpack.c.l.b16 %v475
      %v556 = vunpack.c.l.b16 %v476
      %v557 = vunpack.c.l.b16 %v477
      %v558 = vunpack.c.l.b16 %v478
      %v559 = vunpack.c.l.b16 %v479
      %v560 = vunpack.c.l.b16 %v480
      %v561 = vunpack.c.l.b16 %v481
      %v562 = vunpack.c.l.b16 %v482
      %v563 = vunpack.c.l.b16 %v500
      %v564 = vpack.c.b16 %v542, %v541
      %v565 = vpack.c.b16 %v544, %v543
      %v566 = vpack.c.b16 %v546, %v545
      %v567 = vpack.c.b16 %v548, %v547
      %v568 = vpack.c.b16 %v550, %v549
      %v569 = vpack.c.b16 %v552, %v551
      %v570 = vpack.c.b16 %v554, %v553
      %v571 = vpack.c.b16 %v556, %v555
      %v572 = vpack.c.b16 %v558, %v557
      %v573 = vpack.c.b16 %v560, %v559
      %v574 = vpack.c.b16 %v562, %v561
      %v575 = vpack.c.b16 %v563, %v563
      %vm576 = vsmask.f32 7424
      %v578 = vshrl.u32 %v564, 16
      %v580 = vshll.u32 %v564, 16
      %v582 = vrot.slane %v580, 1
      %v583 = vor.u32 %v578, %v582
      %v585 = vshll.u32 %v565, 16
      %v587 = vrot.slane %v585, 1
      %v588 = vsel %vm576, %v583, %v587
      %v589 = vshrl.u32 %v565, 16
      %v591 = vor.u32 %v589, %v587
      %v593 = vshll.u32 %v566, 16
      %v595 = vrot.slane %v593, 1
      %v596 = vsel %vm576, %v591, %v595
      %v597 = vshrl.u32 %v566, 16
      %v599 = vor.u32 %v597, %v595
      %v601 = vshll.u32 %v567, 16
      %v603 = vrot.slane %v601, 1
      %v604 = vsel %vm576, %v599, %v603
      %v605 = vshrl.u32 %v567, 16
      %v607 = vor.u32 %v605, %v603
      %v609 = vshll.u32 %v568, 16
      %v611 = vrot.slane %v609, 1
      %v612 = vsel %vm576, %v607, %v611
      %v613 = vshrl.u32 %v568, 16
      %v615 = vor.u32 %v613, %v611
      %v617 = vshll.u32 %v569, 16
      %v619 = vrot.slane %v617, 1
      %v620 = vsel %vm576, %v615, %v619
      %v621 = vshrl.u32 %v569, 16
      %v623 = vor.u32 %v621, %v619
      %v625 = vshll.u32 %v570, 16
      %v627 = vrot.slane %v625, 1
      %v628 = vsel %vm576, %v623, %v627
      %v629 = vshrl.u32 %v570, 16
      %v631 = vor.u32 %v629, %v627
      %v633 = vshll.u32 %v571, 16
      %v635 = vrot.slane %v633, 1
      %v636 = vsel %vm576, %v631, %v635
      %v637 = vshrl.u32 %v571, 16
      %v639 = vor.u32 %v637, %v635
      %v641 = vshll.u32 %v572, 16
      %v643 = vrot.slane %v641, 1
      %v644 = vsel %vm576, %v639, %v643
      %v645 = vshrl.u32 %v572, 16
      %v647 = vor.u32 %v645, %v643
      %v649 = vshll.u32 %v573, 16
      %v651 = vrot.slane %v649, 1
      %v652 = vsel %vm576, %v647, %v651
      %v653 = vshrl.u32 %v573, 16
      %v655 = vor.u32 %v653, %v651
      %v657 = vshll.u32 %v574, 16
      %v659 = vrot.slane %v657, 1
      %v660 = vsel %vm576, %v655, %v659
      %v661 = vshrl.u32 %v574, 16
      %v663 = vor.u32 %v661, %v659
      %v665 = vshll.u32 %v575, 16
      %v667 = vrot.slane %v665, 1
      %v668 = vsel %vm576, %v663, %v667
      %v669 = vshrl.u32 %v575, 16
      %v671 = vor.u32 %v669, %v667
      %v700 = vunpack.c.l.b16 %v502
      %v701 = vunpack.c.l.b16 %v503
      %v702 = vunpack.c.l.b16 %v504
      %v703 = vunpack.c.l.b16 %v505
      %v704 = vunpack.c.l.b16 %v506
      %v705 = vunpack.c.l.b16 %v507
      %v706 = vunpack.c.l.b16 %v508
      %v707 = vunpack.c.l.b16 %v509
      %v708 = vunpack.c.l.b16 %v510
      %v709 = vunpack.c.l.b16 %v511
      %v710 = vunpack.c.l.b16 %v512
      %v711 = vunpack.c.l.b16 %v513
      %v712 = vunpack.c.l.b16 %v514
      %v713 = vunpack.c.l.b16 %v515
      %v714 = vunpack.c.l.b16 %v516
      %v715 = vunpack.c.l.b16 %v517
      %v716 = vpack.c.b16 %v701, %v700
      %v717 = vpack.c.b16 %v703, %v702
      %v718 = vpack.c.b16 %v705, %v704
      %v719 = vpack.c.b16 %v707, %v706
      %v720 = vpack.c.b16 %v709, %v708
      %v721 = vpack.c.b16 %v711, %v710
      %v722 = vpack.c.b16 %v713, %v712
      %v723 = vpack.c.b16 %v715, %v714
      %732 = vmatprep.subr.bf16.mxu0 0
      %733 = vmatpush1.bf16.msra.mxu0 %v723
      %734 = vmatprep.subr.bf16.mxu0 0
      %735 = vmatpush1.bf16.msra.mxu0 %v722
      %736 = vmatprep.subr.bf16.mxu0 0
      %737 = vmatpush1.bf16.msra.mxu0 %v721
      %738 = vmatprep.subr.bf16.mxu0 0
      %739 = vmatpush1.bf16.msra.mxu0 %v720
      %740 = vmatprep.subr.bf16.mxu0 0
      %741 = vmatpush1.bf16.msra.mxu0 %v719
      %742 = vmatprep.subr.bf16.mxu0 0
      %743 = vmatpush1.bf16.msra.mxu0 %v718
      %744 = vmatprep.subr.bf16.mxu0 0
      %745 = vmatpush1.bf16.msra.mxu0 %v717
      %746 = vmatprep.subr.bf16.mxu0 0
      %747 = vmatpush1.bf16.msra.mxu0 %v716
      %748 = vmatprep.subr.bf16.mxu0 0
      %749 = vmatpush2.bf16.msra.mxu0 0
      %750 = vmatprep.subr.bf16.mxu0 0
      %751 = vmatpush2.bf16.msra.mxu0 0
      %752 = vmatprep.subr.bf16.mxu0 0
      %753 = vmatpush2.bf16.msra.mxu0 0
      %754 = vmatprep.subr.bf16.mxu0 0
      %755 = vmatpush2.bf16.msra.mxu0 0
      %756 = vmatprep.subr.bf16.mxu0 0
      %757 = vmatpush2.bf16.msra.mxu0 0
      %758 = vmatprep.subr.bf16.mxu0 0
      %759 = vmatpush2.bf16.msra.mxu0 0
      %760 = vmatprep.subr.bf16.mxu0 0
      %761 = vmatpush2.bf16.msra.mxu0 0
      %762 = vmatprep.subr.bf16.mxu0 0
      %763 = vmatpush2.bf16.msra.mxu0 0
      %764 = vmatprep.mubr.bf16.mxu0 0
      %765 = vmatmul.mubr.bf16.gmra.mxu0 %v588
      %v766 = vpop.f32.mrf.mxu0
      %v767 = vadd.f32 0.0, %v766
      %v768 = vpop.f32.mrf.mxu0
      %v769 = vpop.f32.mrf.mxu0
      %v770 = vadd.f32 0.0, %v769
      %v771 = vpop.f32.mrf.mxu0
      %772 = vmatprep.mubr.bf16.mxu0 0
      %773 = vmatmul.mubr.bf16.gmra.mxu0 %v596
      %v774 = vpop.f32.mrf.mxu0
      %v775 = vadd.f32 0.0, %v774
      %v776 = vpop.f32.mrf.mxu0
      %v777 = vpop.f32.mrf.mxu0
      %v778 = vadd.f32 0.0, %v777
      %v779 = vpop.f32.mrf.mxu0
      %780 = vmatprep.mubr.bf16.mxu0 0
      %781 = vmatmul.mubr.bf16.gmra.mxu0 %v604
      %v782 = vpop.f32.mrf.mxu0
      %v783 = vadd.f32 0.0, %v782
      %v784 = vpop.f32.mrf.mxu0
      %v785 = vpop.f32.mrf.mxu0
      %v786 = vadd.f32 0.0, %v785
      %v787 = vpop.f32.mrf.mxu0
      %788 = vmatprep.mubr.bf16.mxu0 0
      %789 = vmatmul.mubr.bf16.gmra.mxu0 %v612
      %v790 = vpop.f32.mrf.mxu0
      %v791 = vadd.f32 0.0, %v790
      %v792 = vpop.f32.mrf.mxu0
      %v793 = vpop.f32.mrf.mxu0
      %v794 = vadd.f32 0.0, %v793
      %v795 = vpop.f32.mrf.mxu0
      %796 = vmatprep.mubr.bf16.mxu0 0
      %797 = vmatmul.mubr.bf16.gmra.mxu0 %v620
      %v798 = vpop.f32.mrf.mxu0
      %v799 = vadd.f32 0.0, %v798
      %v800 = vpop.f32.mrf.mxu0
      %v801 = vpop.f32.mrf.mxu0
      %v802 = vadd.f32 0.0, %v801
      %v803 = vpop.f32.mrf.mxu0
      %804 = vmatprep.mubr.bf16.mxu0 0
      %805 = vmatmul.mubr.bf16.gmra.mxu0 %v628
      %v806 = vpop.f32.mrf.mxu0
      %v807 = vadd.f32 0.0, %v806
      %v808 = vpop.f32.mrf.mxu0
      %v809 = vpop.f32.mrf.mxu0
      %v810 = vadd.f32 0.0, %v809
      %v811 = vpop.f32.mrf.mxu0
      %812 = vmatprep.mubr.bf16.mxu0 0
      %813 = vmatmul.mubr.bf16.gmra.mxu0 %v636
      %v814 = vpop.f32.mrf.mxu0
      %v815 = vadd.f32 0.0, %v814
      %v816 = vpop.f32.mrf.mxu0
      %v817 = vpop.f32.mrf.mxu0
      %v818 = vadd.f32 0.0, %v817
      %v819 = vpop.f32.mrf.mxu0
      %820 = vmatprep.mubr.bf16.mxu0 0
      %821 = vmatmul.mubr.bf16.gmra.mxu0 %v644
      %v822 = vpop.f32.mrf.mxu0
      %v823 = vadd.f32 0.0, %v822
      %v824 = vpop.f32.mrf.mxu0
      %v825 = vpop.f32.mrf.mxu0
      %v826 = vadd.f32 0.0, %v825
      %v827 = vpop.f32.mrf.mxu0
      %828 = vmatprep.mubr.bf16.mxu0 0
      %829 = vmatmul.mubr.bf16.gmra.mxu0 %v652
      %v830 = vpop.f32.mrf.mxu0
      %v831 = vadd.f32 0.0, %v830
      %v832 = vpop.f32.mrf.mxu0
      %v833 = vpop.f32.mrf.mxu0
      %v834 = vadd.f32 0.0, %v833
      %v835 = vpop.f32.mrf.mxu0
      %836 = vmatprep.mubr.bf16.mxu0 0
      %837 = vmatmul.mubr.bf16.gmra.mxu0 %v660
      %v838 = vpop.f32.mrf.mxu0
      %v839 = vadd.f32 0.0, %v838
      %v840 = vpop.f32.mrf.mxu0
      %v841 = vpop.f32.mrf.mxu0
      %v842 = vadd.f32 0.0, %v841
      %v843 = vpop.f32.mrf.mxu0
      %844 = vmatprep.mubr.bf16.mxu0 0
      %845 = vmatmul.mubr.bf16.gmra.mxu0 %v668
      %v846 = vpop.f32.mrf.mxu0
      %v847 = vadd.f32 0.0, %v846
      %v848 = vpop.f32.mrf.mxu0
      %v849 = vpop.f32.mrf.mxu0
      %v850 = vadd.f32 0.0, %v849
      %v851 = vpop.f32.mrf.mxu0
      %852 = vmatprep.mubr.bf16.mxu0 0
      %853 = vmatmul.mubr.bf16.gmra.mxu0 %v671
      %v854 = vpop.f32.mrf.mxu0
      %v855 = vadd.f32 0.0, %v854
      %v856 = vpop.f32.mrf.mxu0
      %v857 = vpop.f32.mrf.mxu0
      %v858 = vpop.f32.mrf.mxu0
      %859 = vdwg.mxu0
      %v861 = vunpack.c.l.b16 %v483
      %v862 = vpack.c.b16 %v861, %v861
      %v891 = vunpack.c.l.b16 %v484
      %v892 = vunpack.c.l.b16 %v485
      %v893 = vunpack.c.l.b16 %v486
      %v894 = vunpack.c.l.b16 %v487
      %v895 = vunpack.c.l.b16 %v488
      %v896 = vunpack.c.l.b16 %v489
      %v897 = vunpack.c.l.b16 %v490
      %v898 = vunpack.c.l.b16 %v491
      %v899 = vunpack.c.l.b16 %v492
      %v900 = vunpack.c.l.b16 %v493
      %v901 = vunpack.c.l.b16 %v494
      %v902 = vunpack.c.l.b16 %v495
      %v903 = vunpack.c.l.b16 %v496
      %v904 = vunpack.c.l.b16 %v497
      %v905 = vunpack.c.l.b16 %v498
      %v906 = vunpack.c.l.b16 %v499
      %v907 = vpack.c.b16 %v892, %v891
      %v908 = vpack.c.b16 %v894, %v893
      %v909 = vpack.c.b16 %v896, %v895
      %v910 = vpack.c.b16 %v898, %v897
      %v911 = vpack.c.b16 %v900, %v899
      %v912 = vpack.c.b16 %v902, %v901
      %v913 = vpack.c.b16 %v904, %v903
      %v914 = vpack.c.b16 %v906, %v905
      %923 = vmatprep.subr.bf16.mxu0 0
      %924 = vmatpush1.bf16.msra.mxu0 %v914
      %925 = vmatprep.subr.bf16.mxu0 0
      %926 = vmatpush1.bf16.msra.mxu0 %v913
      %927 = vmatprep.subr.bf16.mxu0 0
      %928 = vmatpush1.bf16.msra.mxu0 %v912
      %929 = vmatprep.subr.bf16.mxu0 0
      %930 = vmatpush1.bf16.msra.mxu0 %v911
      %931 = vmatprep.subr.bf16.mxu0 0
      %932 = vmatpush1.bf16.msra.mxu0 %v910
      %933 = vmatprep.subr.bf16.mxu0 0
      %934 = vmatpush1.bf16.msra.mxu0 %v909
      %935 = vmatprep.subr.bf16.mxu0 0
      %936 = vmatpush1.bf16.msra.mxu0 %v908
      %937 = vmatprep.subr.bf16.mxu0 0
      %938 = vmatpush1.bf16.msra.mxu0 %v907
      %939 = vmatprep.subr.bf16.mxu0 0
      %940 = vmatpush2.bf16.msra.mxu0 0
      %941 = vmatprep.subr.bf16.mxu0 0
      %942 = vmatpush2.bf16.msra.mxu0 0
      %943 = vmatprep.subr.bf16.mxu0 0
      %944 = vmatpush2.bf16.msra.mxu0 0
      %945 = vmatprep.subr.bf16.mxu0 0
      %946 = vmatpush2.bf16.msra.mxu0 0
      %947 = vmatprep.subr.bf16.mxu0 0
      %948 = vmatpush2.bf16.msra.mxu0 0
      %949 = vmatprep.subr.bf16.mxu0 0
      %950 = vmatpush2.bf16.msra.mxu0 0
      %951 = vmatprep.subr.bf16.mxu0 0
      %952 = vmatpush2.bf16.msra.mxu0 0
      %953 = vmatprep.subr.bf16.mxu0 0
      %954 = vmatpush2.bf16.msra.mxu0 0
      %955 = vmatprep.mubr.bf16.mxu0 0
      %956 = vmatmul.mubr.bf16.gmra.mxu0 %v564
      %v957 = vpop.f32.mrf.mxu0
      %v958 = vadd.f32 %v767, %v957
      %v959 = vpop.f32.mrf.mxu0
      %v960 = vpop.f32.mrf.mxu0
      %v961 = vadd.f32 %v770, %v960
      %v962 = vpop.f32.mrf.mxu0
      %963 = vmatprep.mubr.bf16.mxu0 0
      %964 = vmatmul.mubr.bf16.gmra.mxu0 %v565
      %v965 = vpop.f32.mrf.mxu0
      %v966 = vadd.f32 %v775, %v965
      %v967 = vpop.f32.mrf.mxu0
      %v968 = vpop.f32.mrf.mxu0
      %v969 = vadd.f32 %v778, %v968
      %v970 = vpop.f32.mrf.mxu0
      %971 = vmatprep.mubr.bf16.mxu0 0
      %972 = vmatmul.mubr.bf16.gmra.mxu0 %v566
      %v973 = vpop.f32.mrf.mxu0
      %v974 = vadd.f32 %v783, %v973
      %v975 = vpop.f32.mrf.mxu0
      %v976 = vpop.f32.mrf.mxu0
      %v977 = vadd.f32 %v786, %v976
      %v978 = vpop.f32.mrf.mxu0
      %979 = vmatprep.mubr.bf16.mxu0 0
      %980 = vmatmul.mubr.bf16.gmra.mxu0 %v567
      %v981 = vpop.f32.mrf.mxu0
      %v982 = vadd.f32 %v791, %v981
      %v983 = vpop.f32.mrf.mxu0
      %v984 = vpop.f32.mrf.mxu0
      %v985 = vadd.f32 %v794, %v984
      %v986 = vpop.f32.mrf.mxu0
      %987 = vmatprep.mubr.bf16.mxu0 0
      %988 = vmatmul.mubr.bf16.gmra.mxu0 %v568
      %v989 = vpop.f32.mrf.mxu0
      %v990 = vadd.f32 %v799, %v989
      %v991 = vpop.f32.mrf.mxu0
      %v992 = vpop.f32.mrf.mxu0
      %v993 = vadd.f32 %v802, %v992
      %v994 = vpop.f32.mrf.mxu0
      %995 = vmatprep.mubr.bf16.mxu0 0
      %996 = vmatmul.mubr.bf16.gmra.mxu0 %v569
      %v997 = vpop.f32.mrf.mxu0
      %v998 = vadd.f32 %v807, %v997
      %v999 = vpop.f32.mrf.mxu0
      %v1000 = vpop.f32.mrf.mxu0
      %v1001 = vadd.f32 %v810, %v1000
      %v1002 = vpop.f32.mrf.mxu0
      %1003 = vmatprep.mubr.bf16.mxu0 0
      %1004 = vmatmul.mubr.bf16.gmra.mxu0 %v570
      %v1005 = vpop.f32.mrf.mxu0
      %v1006 = vadd.f32 %v815, %v1005
      %v1007 = vpop.f32.mrf.mxu0
      %v1008 = vpop.f32.mrf.mxu0
      %v1009 = vadd.f32 %v818, %v1008
      %v1010 = vpop.f32.mrf.mxu0
      %1011 = vmatprep.mubr.bf16.mxu0 0
      %1012 = vmatmul.mubr.bf16.gmra.mxu0 %v571
      %v1013 = vpop.f32.mrf.mxu0
      %v1014 = vadd.f32 %v823, %v1013
      %v1015 = vpop.f32.mrf.mxu0
      %v1016 = vpop.f32.mrf.mxu0
      %v1017 = vadd.f32 %v826, %v1016
      %v1018 = vpop.f32.mrf.mxu0
      %1019 = vmatprep.mubr.bf16.mxu0 0
      %1020 = vmatmul.mubr.bf16.gmra.mxu0 %v572
      %v1021 = vpop.f32.mrf.mxu0
      %v1022 = vadd.f32 %v831, %v1021
      %v1023 = vpop.f32.mrf.mxu0
      %v1024 = vpop.f32.mrf.mxu0
      %v1025 = vadd.f32 %v834, %v1024
      %v1026 = vpop.f32.mrf.mxu0
      %1027 = vmatprep.mubr.bf16.mxu0 0
      %1028 = vmatmul.mubr.bf16.gmra.mxu0 %v573
      %v1029 = vpop.f32.mrf.mxu0
      %v1030 = vadd.f32 %v839, %v1029
      %v1031 = vpop.f32.mrf.mxu0
      %v1032 = vpop.f32.mrf.mxu0
      %v1033 = vadd.f32 %v842, %v1032
      %v1034 = vpop.f32.mrf.mxu0
      %1035 = vmatprep.mubr.bf16.mxu0 0
      %1036 = vmatmul.mubr.bf16.gmra.mxu0 %v574
      %v1037 = vpop.f32.mrf.mxu0
      %v1038 = vadd.f32 %v847, %v1037
      %v1039 = vpop.f32.mrf.mxu0
      %v1040 = vpop.f32.mrf.mxu0
      %v1041 = vadd.f32 %v850, %v1040
      %v1042 = vpop.f32.mrf.mxu0
      %1043 = vmatprep.mubr.bf16.mxu0 0
      %1044 = vmatmul.mubr.bf16.gmra.mxu0 %v862
      %v1045 = vpop.f32.mrf.mxu0
      %v1046 = vadd.f32 %v855, %v1045
      %v1047 = vpop.f32.mrf.mxu0
      %v1048 = vpop.f32.mrf.mxu0
      %v1049 = vpop.f32.mrf.mxu0
      %1050 = vdwg.mxu0
      %v1051 = vld [vmem:[%s455] sm:$0xe]
      %s1052 = scalar_lea.vmem %s1, 128
      %v1053 = vld [vmem:[%s1052] sm:$0xf]
      %v1054 = vld [vmem:[%s1052 + $0x4] sm:$0xf]
      %v1055 = vld [vmem:[%s1052 + $0x8] sm:$0xf]
      %v1056 = vld [vmem:[%s1052 + $0xc] sm:$0xf]
      %v1057 = vld [vmem:[%s1052 + $0x10] sm:$0xf]
      %v1058 = vld [vmem:[%s1052 + $0x14] sm:$0xf]
      %v1059 = vld [vmem:[%s1052 + $0x18] sm:$0xf]
      %v1060 = vld [vmem:[%s1052 + $0x1c] sm:$0xf]
      %v1061 = vld [vmem:[%s1052 + $0x20] sm:$0xf]
      %v1062 = vld [vmem:[%s1052 + $0x24] sm:$0xf]
      %v1063 = vld [vmem:[%s1052 + $0x28] sm:$0xf]
      %v1064 = vld [vmem:[%s1052 + $0x2c] sm:$0xf]
      %v1065 = vld [vmem:[%s1052 + $0x30] sm:$0xf]
      %v1066 = vld [vmem:[%s1052 + $0x34] sm:$0xf]
      %v1067 = vld [vmem:[%s1052 + $0x38] sm:$0xf]
      %v1068 = vld [vmem:[%s1052 + $0x3c] sm:$0xf]
      %v1070 = vunpack.c.l.b16 %v1051
      %v1071 = vpack.c.b16 %v542, %v1070
      %vm1072 = vcmask 1046528
      %v1073 = vrot.slane %v1071, 1
      %v1074 = vrot.slane %v565, 1
      %v1075 = vsel %vm1072, %v1073, %v1074
      %v1076 = vrot.slane %v566, 1
      %v1077 = vsel %vm1072, %v1074, %v1076
      %v1078 = vrot.slane %v567, 1
      %v1079 = vsel %vm1072, %v1076, %v1078
      %v1080 = vrot.slane %v568, 1
      %v1081 = vsel %vm1072, %v1078, %v1080
      %v1082 = vrot.slane %v569, 1
      %v1083 = vsel %vm1072, %v1080, %v1082
      %v1084 = vrot.slane %v570, 1
      %v1085 = vsel %vm1072, %v1082, %v1084
      %v1086 = vrot.slane %v571, 1
      %v1087 = vsel %vm1072, %v1084, %v1086
      %v1088 = vrot.slane %v572, 1
      %v1089 = vsel %vm1072, %v1086, %v1088
      %v1090 = vrot.slane %v573, 1
      %v1091 = vsel %vm1072, %v1088, %v1090
      %v1092 = vrot.slane %v574, 1
      %v1093 = vsel %vm1072, %v1090, %v1092
      %v1094 = vrot.slane %v575, 1
      %v1095 = vsel %vm1072, %v1092, %v1094
      %v1124 = vunpack.c.l.b16 %v1053
      %v1125 = vunpack.c.l.b16 %v1054
      %v1126 = vunpack.c.l.b16 %v1055
      %v1127 = vunpack.c.l.b16 %v1056
      %v1128 = vunpack.c.l.b16 %v1057
      %v1129 = vunpack.c.l.b16 %v1058
      %v1130 = vunpack.c.l.b16 %v1059
      %v1131 = vunpack.c.l.b16 %v1060
      %v1132 = vunpack.c.l.b16 %v1061
      %v1133 = vunpack.c.l.b16 %v1062
      %v1134 = vunpack.c.l.b16 %v1063
      %v1135 = vunpack.c.l.b16 %v1064
      %v1136 = vunpack.c.l.b16 %v1065
      %v1137 = vunpack.c.l.b16 %v1066
      %v1138 = vunpack.c.l.b16 %v1067
      %v1139 = vunpack.c.l.b16 %v1068
      %v1140 = vpack.c.b16 %v1125, %v1124
      %v1141 = vpack.c.b16 %v1127, %v1126
      %v1142 = vpack.c.b16 %v1129, %v1128
      %v1143 = vpack.c.b16 %v1131, %v1130
      %v1144 = vpack.c.b16 %v1133, %v1132
      %v1145 = vpack.c.b16 %v1135, %v1134
      %v1146 = vpack.c.b16 %v1137, %v1136
      %v1147 = vpack.c.b16 %v1139, %v1138
      %1156 = vmatprep.subr.bf16.mxu0 0
      %1157 = vmatpush1.bf16.msra.mxu0 %v1147
      %1158 = vmatprep.subr.bf16.mxu0 0
      %1159 = vmatpush1.bf16.msra.mxu0 %v1146
      %1160 = vmatprep.subr.bf16.mxu0 0
      %1161 = vmatpush1.bf16.msra.mxu0 %v1145
      %1162 = vmatprep.subr.bf16.mxu0 0
      %1163 = vmatpush1.bf16.msra.mxu0 %v1144
      %1164 = vmatprep.subr.bf16.mxu0 0
      %1165 = vmatpush1.bf16.msra.mxu0 %v1143
      %1166 = vmatprep.subr.bf16.mxu0 0
      %1167 = vmatpush1.bf16.msra.mxu0 %v1142
      %1168 = vmatprep.subr.bf16.mxu0 0
      %1169 = vmatpush1.bf16.msra.mxu0 %v1141
      %1170 = vmatprep.subr.bf16.mxu0 0
      %1171 = vmatpush1.bf16.msra.mxu0 %v1140
      %1172 = vmatprep.subr.bf16.mxu0 0
      %1173 = vmatpush2.bf16.msra.mxu0 0
      %1174 = vmatprep.subr.bf16.mxu0 0
      %1175 = vmatpush2.bf16.msra.mxu0 0
      %1176 = vmatprep.subr.bf16.mxu0 0
      %1177 = vmatpush2.bf16.msra.mxu0 0
      %1178 = vmatprep.subr.bf16.mxu0 0
      %1179 = vmatpush2.bf16.msra.mxu0 0
      %1180 = vmatprep.subr.bf16.mxu0 0
      %1181 = vmatpush2.bf16.msra.mxu0 0
      %1182 = vmatprep.subr.bf16.mxu0 0
      %1183 = vmatpush2.bf16.msra.mxu0 0
      %1184 = vmatprep.subr.bf16.mxu0 0
      %1185 = vmatpush2.bf16.msra.mxu0 0
      %1186 = vmatprep.subr.bf16.mxu0 0
      %1187 = vmatpush2.bf16.msra.mxu0 0
      %1188 = vmatprep.mubr.bf16.mxu0 0
      %1189 = vmatmul.mubr.bf16.gmra.mxu0 %v1075
      %v1190 = vpop.f32.mrf.mxu0
      %v1191 = vadd.f32 0.0, %v1190
      %v1192 = vpop.f32.mrf.mxu0
      %v1193 = vpop.f32.mrf.mxu0
      %v1194 = vadd.f32 0.0, %v1193
      %v1195 = vpop.f32.mrf.mxu0
      %1196 = vmatprep.mubr.bf16.mxu0 0
      %1197 = vmatmul.mubr.bf16.gmra.mxu0 %v1077
      %v1198 = vpop.f32.mrf.mxu0
      %v1199 = vadd.f32 0.0, %v1198
      %v1200 = vpop.f32.mrf.mxu0
      %v1201 = vpop.f32.mrf.mxu0
      %v1202 = vadd.f32 0.0, %v1201
      %v1203 = vpop.f32.mrf.mxu0
      %1204 = vmatprep.mubr.bf16.mxu0 0
      %1205 = vmatmul.mubr.bf16.gmra.mxu0 %v1079
      %v1206 = vpop.f32.mrf.mxu0
      %v1207 = vadd.f32 0.0, %v1206
      %v1208 = vpop.f32.mrf.mxu0
      %v1209 = vpop.f32.mrf.mxu0
      %v1210 = vadd.f32 0.0, %v1209
      %v1211 = vpop.f32.mrf.mxu0
      %1212 = vmatprep.mubr.bf16.mxu0 0
      %1213 = vmatmul.mubr.bf16.gmra.mxu0 %v1081
      %v1214 = vpop.f32.mrf.mxu0
      %v1215 = vadd.f32 0.0, %v1214
      %v1216 = vpop.f32.mrf.mxu0
      %v1217 = vpop.f32.mrf.mxu0
      %v1218 = vadd.f32 0.0, %v1217
      %v1219 = vpop.f32.mrf.mxu0
      %1220 = vmatprep.mubr.bf16.mxu0 0
      %1221 = vmatmul.mubr.bf16.gmra.mxu0 %v1083
      %v1222 = vpop.f32.mrf.mxu0
      %v1223 = vadd.f32 0.0, %v1222
      %v1224 = vpop.f32.mrf.mxu0
      %v1225 = vpop.f32.mrf.mxu0
      %v1226 = vadd.f32 0.0, %v1225
      %v1227 = vpop.f32.mrf.mxu0
      %1228 = vmatprep.mubr.bf16.mxu0 0
      %1229 = vmatmul.mubr.bf16.gmra.mxu0 %v1085
      %v1230 = vpop.f32.mrf.mxu0
      %v1231 = vadd.f32 0.0, %v1230
      %v1232 = vpop.f32.mrf.mxu0
      %v1233 = vpop.f32.mrf.mxu0
      %v1234 = vadd.f32 0.0, %v1233
      %v1235 = vpop.f32.mrf.mxu0
      %1236 = vmatprep.mubr.bf16.mxu0 0
      %1237 = vmatmul.mubr.bf16.gmra.mxu0 %v1087
      %v1238 = vpop.f32.mrf.mxu0
      %v1239 = vadd.f32 0.0, %v1238
      %v1240 = vpop.f32.mrf.mxu0
      %v1241 = vpop.f32.mrf.mxu0
      %v1242 = vadd.f32 0.0, %v1241
      %v1243 = vpop.f32.mrf.mxu0
      %1244 = vmatprep.mubr.bf16.mxu0 0
      %1245 = vmatmul.mubr.bf16.gmra.mxu0 %v1089
      %v1246 = vpop.f32.mrf.mxu0
      %v1247 = vadd.f32 0.0, %v1246
      %v1248 = vpop.f32.mrf.mxu0
      %v1249 = vpop.f32.mrf.mxu0
      %v1250 = vadd.f32 0.0, %v1249
      %v1251 = vpop.f32.mrf.mxu0
      %1252 = vmatprep.mubr.bf16.mxu0 0
      %1253 = vmatmul.mubr.bf16.gmra.mxu0 %v1091
      %v1254 = vpop.f32.mrf.mxu0
      %v1255 = vadd.f32 0.0, %v1254
      %v1256 = vpop.f32.mrf.mxu0
      %v1257 = vpop.f32.mrf.mxu0
      %v1258 = vadd.f32 0.0, %v1257
      %v1259 = vpop.f32.mrf.mxu0
      %1260 = vmatprep.mubr.bf16.mxu0 0
      %1261 = vmatmul.mubr.bf16.gmra.mxu0 %v1093
      %v1262 = vpop.f32.mrf.mxu0
      %v1263 = vadd.f32 0.0, %v1262
      %v1264 = vpop.f32.mrf.mxu0
      %v1265 = vpop.f32.mrf.mxu0
      %v1266 = vadd.f32 0.0, %v1265
      %v1267 = vpop.f32.mrf.mxu0
      %1268 = vmatprep.mubr.bf16.mxu0 0
      %1269 = vmatmul.mubr.bf16.gmra.mxu0 %v1095
      %v1270 = vpop.f32.mrf.mxu0
      %v1271 = vadd.f32 0.0, %v1270
      %v1272 = vpop.f32.mrf.mxu0
      %v1273 = vpop.f32.mrf.mxu0
      %v1274 = vadd.f32 0.0, %v1273
      %v1275 = vpop.f32.mrf.mxu0
      %1276 = vmatprep.mubr.bf16.mxu0 0
      %1277 = vmatmul.mubr.bf16.gmra.mxu0 %v1094
      %v1278 = vpop.f32.mrf.mxu0
      %v1279 = vadd.f32 0.0, %v1278
      %v1280 = vpop.f32.mrf.mxu0
      %v1281 = vpop.f32.mrf.mxu0
      %v1282 = vpop.f32.mrf.mxu0
      %1283 = vdwg.mxu0
      %v1284 = vadd.f32 %v958, %v1191
      %v1285 = vadd.f32 %v961, %v1194
      %v1286 = vadd.f32 %v966, %v1199
      %v1287 = vadd.f32 %v969, %v1202
      %v1288 = vadd.f32 %v974, %v1207
      %v1289 = vadd.f32 %v977, %v1210
      %v1290 = vadd.f32 %v982, %v1215
      %v1291 = vadd.f32 %v985, %v1218
      %v1292 = vadd.f32 %v990, %v1223
      %v1293 = vadd.f32 %v993, %v1226
      %v1294 = vadd.f32 %v998, %v1231
      %v1295 = vadd.f32 %v1001, %v1234
      %v1296 = vadd.f32 %v1006, %v1239
      %v1297 = vadd.f32 %v1009, %v1242
      %v1298 = vadd.f32 %v1014, %v1247
      %v1299 = vadd.f32 %v1017, %v1250
      %v1300 = vadd.f32 %v1022, %v1255
      %v1301 = vadd.f32 %v1025, %v1258
      %v1302 = vadd.f32 %v1030, %v1263
      %v1303 = vadd.f32 %v1033, %v1266
      %v1304 = vadd.f32 %v1038, %v1271
      %v1305 = vadd.f32 %v1041, %v1274
      %v1306 = vadd.f32 %v1046, %v1279
      %v1307 = vld [vmem:[%s455 + $0x8] sm:$0xe]
      %v1308 = vld [vmem:[%s455 + $0xc] sm:$0xf]
      %v1309 = vld [vmem:[%s455 + $0x10] sm:$0xf]
      %v1310 = vld [vmem:[%s455 + $0x14] sm:$0xf]
      %v1311 = vld [vmem:[%s455 + $0x18] sm:$0xf]
      %v1312 = vld [vmem:[%s455 + $0x1c] sm:$0xf]
      %v1313 = vld [vmem:[%s455 + $0x20] sm:$0xf]
      %v1314 = vld [vmem:[%s455 + $0x24] sm:$0xf]
      %v1315 = vld [vmem:[%s455 + $0x28] sm:$0xf]
      %v1316 = vld [vmem:[%s455 + $0x2c] sm:$0xf]
      %v1317 = vld [vmem:[%s455 + $0x30] sm:$0xf]
      %v1318 = vld [vmem:[%s455 + $0x34] sm:$0xf]
      %v1319 = vld [vmem:[%s455 + $0x38] sm:$0xf]
      %v1320 = vld [vmem:[%s455 + $0x3c] sm:$0xf]
      %v1321 = vld [vmem:[%s455 + $0x40] sm:$0xf]
      %v1322 = vld [vmem:[%s455 + $0x44] sm:$0xf]
      %v1323 = vld [vmem:[%s455 + $0x48] sm:$0xf]
      %v1324 = vld [vmem:[%s455 + $0x4c] sm:$0xf]
      %v1325 = vld [vmem:[%s455 + $0x50] sm:$0xf]
      %v1326 = vld [vmem:[%s455 + $0x54] sm:$0xf]
      %v1327 = vld [vmem:[%s455 + $0x58] sm:$0xf]
      %v1328 = vld [vmem:[%s455 + $0x5c] sm:$0xf]
      %v1329 = vld [vmem:[%s455 + $0x60] sm:$0x7]
      %s1330 = scalar_lea.vmem %s1, 192
      %v1331 = vld [vmem:[%s1330] sm:$0xf]
      %v1332 = vld [vmem:[%s1330 + $0x4] sm:$0xf]
      %v1333 = vld [vmem:[%s1330 + $0x8] sm:$0xf]
      %v1334 = vld [vmem:[%s1330 + $0xc] sm:$0xf]
      %v1335 = vld [vmem:[%s1330 + $0x10] sm:$0xf]
      %v1336 = vld [vmem:[%s1330 + $0x14] sm:$0xf]
      %v1337 = vld [vmem:[%s1330 + $0x18] sm:$0xf]
      %v1338 = vld [vmem:[%s1330 + $0x1c] sm:$0xf]
      %v1339 = vld [vmem:[%s1330 + $0x20] sm:$0xf]
      %v1340 = vld [vmem:[%s1330 + $0x24] sm:$0xf]
      %v1341 = vld [vmem:[%s1330 + $0x28] sm:$0xf]
      %v1342 = vld [vmem:[%s1330 + $0x2c] sm:$0xf]
      %v1343 = vld [vmem:[%s1330 + $0x30] sm:$0xf]
      %v1344 = vld [vmem:[%s1330 + $0x34] sm:$0xf]
      %v1345 = vld [vmem:[%s1330 + $0x38] sm:$0xf]
      %v1346 = vld [vmem:[%s1330 + $0x3c] sm:$0xf]
      %v1370 = vunpack.c.l.b16 %v1307
      %v1371 = vunpack.c.l.b16 %v1308
      %v1372 = vunpack.c.l.b16 %v1309
      %v1373 = vunpack.c.l.b16 %v1310
      %v1374 = vunpack.c.l.b16 %v1311
      %v1375 = vunpack.c.l.b16 %v1312
      %v1376 = vunpack.c.l.b16 %v1313
      %v1377 = vunpack.c.l.b16 %v1314
      %v1378 = vunpack.c.l.b16 %v1315
      %v1379 = vunpack.c.l.b16 %v1316
      %v1380 = vunpack.c.l.b16 %v1317
      %v1381 = vunpack.c.l.b16 %v1318
      %v1382 = vunpack.c.l.b16 %v1319
      %v1383 = vunpack.c.l.b16 %v1320
      %v1384 = vunpack.c.l.b16 %v1321
      %v1385 = vunpack.c.l.b16 %v1322
      %v1386 = vunpack.c.l.b16 %v1323
      %v1387 = vunpack.c.l.b16 %v1324
      %v1388 = vunpack.c.l.b16 %v1325
      %v1389 = vunpack.c.l.b16 %v1326
      %v1390 = vunpack.c.l.b16 %v1327
      %v1391 = vunpack.c.l.b16 %v1328
      %v1392 = vunpack.c.l.b16 %v1329
      %v1393 = vpack.c.b16 %v1371, %v1370
      %v1394 = vpack.c.b16 %v1373, %v1372
      %v1395 = vpack.c.b16 %v1375, %v1374
      %v1396 = vpack.c.b16 %v1377, %v1376
      %v1397 = vpack.c.b16 %v1379, %v1378
      %v1398 = vpack.c.b16 %v1381, %v1380
      %v1399 = vpack.c.b16 %v1383, %v1382
      %v1400 = vpack.c.b16 %v1385, %v1384
      %v1401 = vpack.c.b16 %v1387, %v1386
      %v1402 = vpack.c.b16 %v1389, %v1388
      %v1403 = vpack.c.b16 %v1391, %v1390
      %v1404 = vpack.c.b16 %v1392, %v1392
      %v1405 = vrot.slane %v1393, 1
      %v1406 = vrot.slane %v1394, 1
      %v1407 = vsel %vm1072, %v1405, %v1406
      %v1408 = vrot.slane %v1395, 1
      %v1409 = vsel %vm1072, %v1406, %v1408
      %v1410 = vrot.slane %v1396, 1
      %v1411 = vsel %vm1072, %v1408, %v1410
      %v1412 = vrot.slane %v1397, 1
      %v1413 = vsel %vm1072, %v1410, %v1412
      %v1414 = vrot.slane %v1398, 1
      %v1415 = vsel %vm1072, %v1412, %v1414
      %v1416 = vrot.slane %v1399, 1
      %v1417 = vsel %vm1072, %v1414, %v1416
      %v1418 = vrot.slane %v1400, 1
      %v1419 = vsel %vm1072, %v1416, %v1418
      %v1420 = vrot.slane %v1401, 1
      %v1421 = vsel %vm1072, %v1418, %v1420
      %v1422 = vrot.slane %v1402, 1
      %v1423 = vsel %vm1072, %v1420, %v1422
      %v1424 = vrot.slane %v1403, 1
      %v1425 = vsel %vm1072, %v1422, %v1424
      %v1426 = vrot.slane %v1404, 1
      %v1427 = vsel %vm1072, %v1424, %v1426
      %v1456 = vunpack.c.l.b16 %v1331
      %v1457 = vunpack.c.l.b16 %v1332
      %v1458 = vunpack.c.l.b16 %v1333
      %v1459 = vunpack.c.l.b16 %v1334
      %v1460 = vunpack.c.l.b16 %v1335
      %v1461 = vunpack.c.l.b16 %v1336
      %v1462 = vunpack.c.l.b16 %v1337
      %v1463 = vunpack.c.l.b16 %v1338
      %v1464 = vunpack.c.l.b16 %v1339
      %v1465 = vunpack.c.l.b16 %v1340
      %v1466 = vunpack.c.l.b16 %v1341
      %v1467 = vunpack.c.l.b16 %v1342
      %v1468 = vunpack.c.l.b16 %v1343
      %v1469 = vunpack.c.l.b16 %v1344
      %v1470 = vunpack.c.l.b16 %v1345
      %v1471 = vunpack.c.l.b16 %v1346
      %v1472 = vpack.c.b16 %v1457, %v1456
      %v1473 = vpack.c.b16 %v1459, %v1458
      %v1474 = vpack.c.b16 %v1461, %v1460
      %v1475 = vpack.c.b16 %v1463, %v1462
      %v1476 = vpack.c.b16 %v1465, %v1464
      %v1477 = vpack.c.b16 %v1467, %v1466
      %v1478 = vpack.c.b16 %v1469, %v1468
      %v1479 = vpack.c.b16 %v1471, %v1470
      %1488 = vmatprep.subr.bf16.mxu0 0
      %1489 = vmatpush1.bf16.msra.mxu0 %v1479
      %1490 = vmatprep.subr.bf16.mxu0 0
      %1491 = vmatpush1.bf16.msra.mxu0 %v1478
      %1492 = vmatprep.subr.bf16.mxu0 0
      %1493 = vmatpush1.bf16.msra.mxu0 %v1477
      %1494 = vmatprep.subr.bf16.mxu0 0
      %1495 = vmatpush1.bf16.msra.mxu0 %v1476
      %1496 = vmatprep.subr.bf16.mxu0 0
      %1497 = vmatpush1.bf16.msra.mxu0 %v1475
      %1498 = vmatprep.subr.bf16.mxu0 0
      %1499 = vmatpush1.bf16.msra.mxu0 %v1474
      %1500 = vmatprep.subr.bf16.mxu0 0
      %1501 = vmatpush1.bf16.msra.mxu0 %v1473
      %1502 = vmatprep.subr.bf16.mxu0 0
      %1503 = vmatpush1.bf16.msra.mxu0 %v1472
      %1504 = vmatprep.subr.bf16.mxu0 0
      %1505 = vmatpush2.bf16.msra.mxu0 0
      %1506 = vmatprep.subr.bf16.mxu0 0
      %1507 = vmatpush2.bf16.msra.mxu0 0
      %1508 = vmatprep.subr.bf16.mxu0 0
      %1509 = vmatpush2.bf16.msra.mxu0 0
      %1510 = vmatprep.subr.bf16.mxu0 0
      %1511 = vmatpush2.bf16.msra.mxu0 0
      %1512 = vmatprep.subr.bf16.mxu0 0
      %1513 = vmatpush2.bf16.msra.mxu0 0
      %1514 = vmatprep.subr.bf16.mxu0 0
      %1515 = vmatpush2.bf16.msra.mxu0 0
      %1516 = vmatprep.subr.bf16.mxu0 0
      %1517 = vmatpush2.bf16.msra.mxu0 0
      %1518 = vmatprep.subr.bf16.mxu0 0
      %1519 = vmatpush2.bf16.msra.mxu0 0
      %1520 = vmatprep.mubr.bf16.mxu0 0
      %1521 = vmatmul.mubr.bf16.gmra.mxu0 %v1407
      %v1522 = vpop.f32.mrf.mxu0
      %v1523 = vadd.f32 0.0, %v1522
      %v1524 = vpop.f32.mrf.mxu0
      %v1525 = vpop.f32.mrf.mxu0
      %v1526 = vadd.f32 0.0, %v1525
      %v1527 = vpop.f32.mrf.mxu0
      %1528 = vmatprep.mubr.bf16.mxu0 0
      %1529 = vmatmul.mubr.bf16.gmra.mxu0 %v1409
      %v1530 = vpop.f32.mrf.mxu0
      %v1531 = vadd.f32 0.0, %v1530
      %v1532 = vpop.f32.mrf.mxu0
      %v1533 = vpop.f32.mrf.mxu0
      %v1534 = vadd.f32 0.0, %v1533
      %v1535 = vpop.f32.mrf.mxu0
      %1536 = vmatprep.mubr.bf16.mxu0 0
      %1537 = vmatmul.mubr.bf16.gmra.mxu0 %v1411
      %v1538 = vpop.f32.mrf.mxu0
      %v1539 = vadd.f32 0.0, %v1538
      %v1540 = vpop.f32.mrf.mxu0
      %v1541 = vpop.f32.mrf.mxu0
      %v1542 = vadd.f32 0.0, %v1541
      %v1543 = vpop.f32.mrf.mxu0
      %1544 = vmatprep.mubr.bf16.mxu0 0
      %1545 = vmatmul.mubr.bf16.gmra.mxu0 %v1413
      %v1546 = vpop.f32.mrf.mxu0
      %v1547 = vadd.f32 0.0, %v1546
      %v1548 = vpop.f32.mrf.mxu0
      %v1549 = vpop.f32.mrf.mxu0
      %v1550 = vadd.f32 0.0, %v1549
      %v1551 = vpop.f32.mrf.mxu0
      %1552 = vmatprep.mubr.bf16.mxu0 0
      %1553 = vmatmul.mubr.bf16.gmra.mxu0 %v1415
      %v1554 = vpop.f32.mrf.mxu0
      %v1555 = vadd.f32 0.0, %v1554
      %v1556 = vpop.f32.mrf.mxu0
      %v1557 = vpop.f32.mrf.mxu0
      %v1558 = vadd.f32 0.0, %v1557
      %v1559 = vpop.f32.mrf.mxu0
      %1560 = vmatprep.mubr.bf16.mxu0 0
      %1561 = vmatmul.mubr.bf16.gmra.mxu0 %v1417
      %v1562 = vpop.f32.mrf.mxu0
      %v1563 = vadd.f32 0.0, %v1562
      %v1564 = vpop.f32.mrf.mxu0
      %v1565 = vpop.f32.mrf.mxu0
      %v1566 = vadd.f32 0.0, %v1565
      %v1567 = vpop.f32.mrf.mxu0
      %1568 = vmatprep.mubr.bf16.mxu0 0
      %1569 = vmatmul.mubr.bf16.gmra.mxu0 %v1419
      %v1570 = vpop.f32.mrf.mxu0
      %v1571 = vadd.f32 0.0, %v1570
      %v1572 = vpop.f32.mrf.mxu0
      %v1573 = vpop.f32.mrf.mxu0
      %v1574 = vadd.f32 0.0, %v1573
      %v1575 = vpop.f32.mrf.mxu0
      %1576 = vmatprep.mubr.bf16.mxu0 0
      %1577 = vmatmul.mubr.bf16.gmra.mxu0 %v1421
      %v1578 = vpop.f32.mrf.mxu0
      %v1579 = vadd.f32 0.0, %v1578
      %v1580 = vpop.f32.mrf.mxu0
      %v1581 = vpop.f32.mrf.mxu0
      %v1582 = vadd.f32 0.0, %v1581
      %v1583 = vpop.f32.mrf.mxu0
      %1584 = vmatprep.mubr.bf16.mxu0 0
      %1585 = vmatmul.mubr.bf16.gmra.mxu0 %v1423
      %v1586 = vpop.f32.mrf.mxu0
      %v1587 = vadd.f32 0.0, %v1586
      %v1588 = vpop.f32.mrf.mxu0
      %v1589 = vpop.f32.mrf.mxu0
      %v1590 = vadd.f32 0.0, %v1589
      %v1591 = vpop.f32.mrf.mxu0
      %1592 = vmatprep.mubr.bf16.mxu0 0
      %1593 = vmatmul.mubr.bf16.gmra.mxu0 %v1425
      %v1594 = vpop.f32.mrf.mxu0
      %v1595 = vadd.f32 0.0, %v1594
      %v1596 = vpop.f32.mrf.mxu0
      %v1597 = vpop.f32.mrf.mxu0
      %v1598 = vadd.f32 0.0, %v1597
      %v1599 = vpop.f32.mrf.mxu0
      %1600 = vmatprep.mubr.bf16.mxu0 0
      %1601 = vmatmul.mubr.bf16.gmra.mxu0 %v1427
      %v1602 = vpop.f32.mrf.mxu0
      %v1603 = vadd.f32 0.0, %v1602
      %v1604 = vpop.f32.mrf.mxu0
      %v1605 = vpop.f32.mrf.mxu0
      %v1606 = vadd.f32 0.0, %v1605
      %v1607 = vpop.f32.mrf.mxu0
      %1608 = vmatprep.mubr.bf16.mxu0 0
      %1609 = vmatmul.mubr.bf16.gmra.mxu0 %v1426
      %v1610 = vpop.f32.mrf.mxu0
      %v1611 = vadd.f32 0.0, %v1610
      %v1612 = vpop.f32.mrf.mxu0
      %v1613 = vpop.f32.mrf.mxu0
      %v1614 = vpop.f32.mrf.mxu0
      %1615 = vdwg.mxu0
      %v1616 = vadd.f32 %v1284, %v1523
      %v1617 = vadd.f32 %v1285, %v1526
      %v1618 = vadd.f32 %v1286, %v1531
      %v1619 = vadd.f32 %v1287, %v1534
      %v1620 = vadd.f32 %v1288, %v1539
      %v1621 = vadd.f32 %v1289, %v1542
      %v1622 = vadd.f32 %v1290, %v1547
      %v1623 = vadd.f32 %v1291, %v1550
      %v1624 = vadd.f32 %v1292, %v1555
      %v1625 = vadd.f32 %v1293, %v1558
      %v1626 = vadd.f32 %v1294, %v1563
      %v1627 = vadd.f32 %v1295, %v1566
      %v1628 = vadd.f32 %v1296, %v1571
      %v1629 = vadd.f32 %v1297, %v1574
      %v1630 = vadd.f32 %v1298, %v1579
      %v1631 = vadd.f32 %v1299, %v1582
      %v1632 = vadd.f32 %v1300, %v1587
      %v1633 = vadd.f32 %v1301, %v1590
      %v1634 = vadd.f32 %v1302, %v1595
      %v1635 = vadd.f32 %v1303, %v1598
      %v1636 = vadd.f32 %v1304, %v1603
      %v1637 = vadd.f32 %v1305, %v1606
      %v1638 = vadd.f32 %v1306, %v1611
      %v1639 = vld [vmem:[%s455 + $0x60] sm:$0xf]
      %s1640 = scalar_lea.vmem %s1, 256
      %v1641 = vld [vmem:[%s1640] sm:$0xf]
      %v1642 = vld [vmem:[%s1640 + $0x4] sm:$0xf]
      %v1643 = vld [vmem:[%s1640 + $0x8] sm:$0xf]
      %v1644 = vld [vmem:[%s1640 + $0xc] sm:$0xf]
      %v1645 = vld [vmem:[%s1640 + $0x10] sm:$0xf]
      %v1646 = vld [vmem:[%s1640 + $0x14] sm:$0xf]
      %v1647 = vld [vmem:[%s1640 + $0x18] sm:$0xf]
      %v1648 = vld [vmem:[%s1640 + $0x1c] sm:$0xf]
      %v1649 = vld [vmem:[%s1640 + $0x20] sm:$0xf]
      %v1650 = vld [vmem:[%s1640 + $0x24] sm:$0xf]
      %v1651 = vld [vmem:[%s1640 + $0x28] sm:$0xf]
      %v1652 = vld [vmem:[%s1640 + $0x2c] sm:$0xf]
      %v1653 = vld [vmem:[%s1640 + $0x30] sm:$0xf]
      %v1654 = vld [vmem:[%s1640 + $0x34] sm:$0xf]
      %v1655 = vld [vmem:[%s1640 + $0x38] sm:$0xf]
      %v1656 = vld [vmem:[%s1640 + $0x3c] sm:$0xf]
      %v1658 = vunpack.c.l.b16 %v1639
      %v1659 = vpack.c.b16 %v1658, %v1658
      %vm1660 = vsmask.f32 6400
      %v1662 = vshrl.u32 %v1393, 16
      %v1664 = vrot.slane %v1662, 1
      %v1665 = vshll.u32 %v1393, 16
      %v1667 = vrot.slane %v1665, 2
      %v1668 = vor.u32 %v1664, %v1667
      %v1670 = vshrl.u32 %v1394, 16
      %v1672 = vrot.slane %v1670, 1
      %v1673 = vshll.u32 %v1394, 16
      %v1675 = vrot.slane %v1673, 2
      %v1676 = vor.u32 %v1672, %v1675
      %v1677 = vsel %vm1660, %v1668, %v1676
      %v1679 = vshrl.u32 %v1395, 16
      %v1681 = vrot.slane %v1679, 1
      %v1682 = vshll.u32 %v1395, 16
      %v1684 = vrot.slane %v1682, 2
      %v1685 = vor.u32 %v1681, %v1684
      %v1686 = vsel %vm1660, %v1676, %v1685
      %v1688 = vshrl.u32 %v1396, 16
      %v1690 = vrot.slane %v1688, 1
      %v1691 = vshll.u32 %v1396, 16
      %v1693 = vrot.slane %v1691, 2
      %v1694 = vor.u32 %v1690, %v1693
      %v1695 = vsel %vm1660, %v1685, %v1694
      %v1697 = vshrl.u32 %v1397, 16
      %v1699 = vrot.slane %v1697, 1
      %v1700 = vshll.u32 %v1397, 16
      %v1702 = vrot.slane %v1700, 2
      %v1703 = vor.u32 %v1699, %v1702
      %v1704 = vsel %vm1660, %v1694, %v1703
      %v1706 = vshrl.u32 %v1398, 16
      %v1708 = vrot.slane %v1706, 1
      %v1709 = vshll.u32 %v1398, 16
      %v1711 = vrot.slane %v1709, 2
      %v1712 = vor.u32 %v1708, %v1711
      %v1713 = vsel %vm1660, %v1703, %v1712
      %v1715 = vshrl.u32 %v1399, 16
      %v1717 = vrot.slane %v1715, 1
      %v1718 = vshll.u32 %v1399, 16
      %v1720 = vrot.slane %v1718, 2
      %v1721 = vor.u32 %v1717, %v1720
      %v1722 = vsel %vm1660, %v1712, %v1721
      %v1724 = vshrl.u32 %v1400, 16
      %v1726 = vrot.slane %v1724, 1
      %v1727 = vshll.u32 %v1400, 16
      %v1729 = vrot.slane %v1727, 2
      %v1730 = vor.u32 %v1726, %v1729
      %v1731 = vsel %vm1660, %v1721, %v1730
      %v1733 = vshrl.u32 %v1401, 16
      %v1735 = vrot.slane %v1733, 1
      %v1736 = vshll.u32 %v1401, 16
      %v1738 = vrot.slane %v1736, 2
      %v1739 = vor.u32 %v1735, %v1738
      %v1740 = vsel %vm1660, %v1730, %v1739
      %v1742 = vshrl.u32 %v1402, 16
      %v1744 = vrot.slane %v1742, 1
      %v1745 = vshll.u32 %v1402, 16
      %v1747 = vrot.slane %v1745, 2
      %v1748 = vor.u32 %v1744, %v1747
      %v1749 = vsel %vm1660, %v1739, %v1748
      %v1751 = vshrl.u32 %v1403, 16
      %v1753 = vrot.slane %v1751, 1
      %v1754 = vshll.u32 %v1403, 16
      %v1756 = vrot.slane %v1754, 2
      %v1757 = vor.u32 %v1753, %v1756
      %v1758 = vsel %vm1660, %v1748, %v1757
      %v1760 = vshrl.u32 %v1659, 16
      %v1762 = vrot.slane %v1760, 1
      %v1763 = vshll.u32 %v1659, 16
      %v1765 = vrot.slane %v1763, 2
      %v1766 = vor.u32 %v1762, %v1765
      %v1767 = vsel %vm1660, %v1757, %v1766
      %v1796 = vunpack.c.l.b16 %v1641
      %v1797 = vunpack.c.l.b16 %v1642
      %v1798 = vunpack.c.l.b16 %v1643
      %v1799 = vunpack.c.l.b16 %v1644
      %v1800 = vunpack.c.l.b16 %v1645
      %v1801 = vunpack.c.l.b16 %v1646
      %v1802 = vunpack.c.l.b16 %v1647
      %v1803 = vunpack.c.l.b16 %v1648
      %v1804 = vunpack.c.l.b16 %v1649
      %v1805 = vunpack.c.l.b16 %v1650
      %v1806 = vunpack.c.l.b16 %v1651
      %v1807 = vunpack.c.l.b16 %v1652
      %v1808 = vunpack.c.l.b16 %v1653
      %v1809 = vunpack.c.l.b16 %v1654
      %v1810 = vunpack.c.l.b16 %v1655
      %v1811 = vunpack.c.l.b16 %v1656
      %v1812 = vpack.c.b16 %v1797, %v1796
      %v1813 = vpack.c.b16 %v1799, %v1798
      %v1814 = vpack.c.b16 %v1801, %v1800
      %v1815 = vpack.c.b16 %v1803, %v1802
      %v1816 = vpack.c.b16 %v1805, %v1804
      %v1817 = vpack.c.b16 %v1807, %v1806
      %v1818 = vpack.c.b16 %v1809, %v1808
      %v1819 = vpack.c.b16 %v1811, %v1810
      %1828 = vmatprep.subr.bf16.mxu0 0
      %1829 = vmatpush1.bf16.msra.mxu0 %v1819
      %1830 = vmatprep.subr.bf16.mxu0 0
      %1831 = vmatpush1.bf16.msra.mxu0 %v1818
      %1832 = vmatprep.subr.bf16.mxu0 0
      %1833 = vmatpush1.bf16.msra.mxu0 %v1817
      %1834 = vmatprep.subr.bf16.mxu0 0
      %1835 = vmatpush1.bf16.msra.mxu0 %v1816
      %1836 = vmatprep.subr.bf16.mxu0 0
      %1837 = vmatpush1.bf16.msra.mxu0 %v1815
      %1838 = vmatprep.subr.bf16.mxu0 0
      %1839 = vmatpush1.bf16.msra.mxu0 %v1814
      %1840 = vmatprep.subr.bf16.mxu0 0
      %1841 = vmatpush1.bf16.msra.mxu0 %v1813
      %1842 = vmatprep.subr.bf16.mxu0 0
      %1843 = vmatpush1.bf16.msra.mxu0 %v1812
      %1844 = vmatprep.subr.bf16.mxu0 0
      %1845 = vmatpush2.bf16.msra.mxu0 0
      %1846 = vmatprep.subr.bf16.mxu0 0
      %1847 = vmatpush2.bf16.msra.mxu0 0
      %1848 = vmatprep.subr.bf16.mxu0 0
      %1849 = vmatpush2.bf16.msra.mxu0 0
      %1850 = vmatprep.subr.bf16.mxu0 0
      %1851 = vmatpush2.bf16.msra.mxu0 0
      %1852 = vmatprep.subr.bf16.mxu0 0
      %1853 = vmatpush2.bf16.msra.mxu0 0
      %1854 = vmatprep.subr.bf16.mxu0 0
      %1855 = vmatpush2.bf16.msra.mxu0 0
      %1856 = vmatprep.subr.bf16.mxu0 0
      %1857 = vmatpush2.bf16.msra.mxu0 0
      %1858 = vmatprep.subr.bf16.mxu0 0
      %1859 = vmatpush2.bf16.msra.mxu0 0
      %1860 = vmatprep.mubr.bf16.mxu0 0
      %1861 = vmatmul.mubr.bf16.gmra.mxu0 %v1677
      %v1862 = vpop.f32.mrf.mxu0
      %v1863 = vadd.f32 0.0, %v1862
      %v1864 = vpop.f32.mrf.mxu0
      %v1865 = vpop.f32.mrf.mxu0
      %v1866 = vadd.f32 0.0, %v1865
      %v1867 = vpop.f32.mrf.mxu0
      %1868 = vmatprep.mubr.bf16.mxu0 0
      %1869 = vmatmul.mubr.bf16.gmra.mxu0 %v1686
      %v1870 = vpop.f32.mrf.mxu0
      %v1871 = vadd.f32 0.0, %v1870
      %v1872 = vpop.f32.mrf.mxu0
      %v1873 = vpop.f32.mrf.mxu0
      %v1874 = vadd.f32 0.0, %v1873
      %v1875 = vpop.f32.mrf.mxu0
      %1876 = vmatprep.mubr.bf16.mxu0 0
      %1877 = vmatmul.mubr.bf16.gmra.mxu0 %v1695
      %v1878 = vpop.f32.mrf.mxu0
      %v1879 = vadd.f32 0.0, %v1878
      %v1880 = vpop.f32.mrf.mxu0
      %v1881 = vpop.f32.mrf.mxu0
      %v1882 = vadd.f32 0.0, %v1881
      %v1883 = vpop.f32.mrf.mxu0
      %1884 = vmatprep.mubr.bf16.mxu0 0
      %1885 = vmatmul.mubr.bf16.gmra.mxu0 %v1704
      %v1886 = vpop.f32.mrf.mxu0
      %v1887 = vadd.f32 0.0, %v1886
      %v1888 = vpop.f32.mrf.mxu0
      %v1889 = vpop.f32.mrf.mxu0
      %v1890 = vadd.f32 0.0, %v1889
      %v1891 = vpop.f32.mrf.mxu0
      %1892 = vmatprep.mubr.bf16.mxu0 0
      %1893 = vmatmul.mubr.bf16.gmra.mxu0 %v1713
      %v1894 = vpop.f32.mrf.mxu0
      %v1895 = vadd.f32 0.0, %v1894
      %v1896 = vpop.f32.mrf.mxu0
      %v1897 = vpop.f32.mrf.mxu0
      %v1898 = vadd.f32 0.0, %v1897
      %v1899 = vpop.f32.mrf.mxu0
      %1900 = vmatprep.mubr.bf16.mxu0 0
      %1901 = vmatmul.mubr.bf16.gmra.mxu0 %v1722
      %v1902 = vpop.f32.mrf.mxu0
      %v1903 = vadd.f32 0.0, %v1902
      %v1904 = vpop.f32.mrf.mxu0
      %v1905 = vpop.f32.mrf.mxu0
      %v1906 = vadd.f32 0.0, %v1905
      %v1907 = vpop.f32.mrf.mxu0
      %1908 = vmatprep.mubr.bf16.mxu0 0
      %1909 = vmatmul.mubr.bf16.gmra.mxu0 %v1731
      %v1910 = vpop.f32.mrf.mxu0
      %v1911 = vadd.f32 0.0, %v1910
      %v1912 = vpop.f32.mrf.mxu0
      %v1913 = vpop.f32.mrf.mxu0
      %v1914 = vadd.f32 0.0, %v1913
      %v1915 = vpop.f32.mrf.mxu0
      %1916 = vmatprep.mubr.bf16.mxu0 0
      %1917 = vmatmul.mubr.bf16.gmra.mxu0 %v1740
      %v1918 = vpop.f32.mrf.mxu0
      %v1919 = vadd.f32 0.0, %v1918
      %v1920 = vpop.f32.mrf.mxu0
      %v1921 = vpop.f32.mrf.mxu0
      %v1922 = vadd.f32 0.0, %v1921
      %v1923 = vpop.f32.mrf.mxu0
      %1924 = vmatprep.mubr.bf16.mxu0 0
      %1925 = vmatmul.mubr.bf16.gmra.mxu0 %v1749
      %v1926 = vpop.f32.mrf.mxu0
      %v1927 = vadd.f32 0.0, %v1926
      %v1928 = vpop.f32.mrf.mxu0
      %v1929 = vpop.f32.mrf.mxu0
      %v1930 = vadd.f32 0.0, %v1929
      %v1931 = vpop.f32.mrf.mxu0
      %1932 = vmatprep.mubr.bf16.mxu0 0
      %1933 = vmatmul.mubr.bf16.gmra.mxu0 %v1758
      %v1934 = vpop.f32.mrf.mxu0
      %v1935 = vadd.f32 0.0, %v1934
      %v1936 = vpop.f32.mrf.mxu0
      %v1937 = vpop.f32.mrf.mxu0
      %v1938 = vadd.f32 0.0, %v1937
      %v1939 = vpop.f32.mrf.mxu0
      %1940 = vmatprep.mubr.bf16.mxu0 0
      %1941 = vmatmul.mubr.bf16.gmra.mxu0 %v1767
      %v1942 = vpop.f32.mrf.mxu0
      %v1943 = vadd.f32 0.0, %v1942
      %v1944 = vpop.f32.mrf.mxu0
      %v1945 = vpop.f32.mrf.mxu0
      %v1946 = vadd.f32 0.0, %v1945
      %v1947 = vpop.f32.mrf.mxu0
      %1948 = vmatprep.mubr.bf16.mxu0 0
      %1949 = vmatmul.mubr.bf16.gmra.mxu0 %v1766
      %v1950 = vpop.f32.mrf.mxu0
      %v1951 = vadd.f32 0.0, %v1950
      %v1952 = vpop.f32.mrf.mxu0
      %v1953 = vpop.f32.mrf.mxu0
      %v1954 = vpop.f32.mrf.mxu0
      %1955 = vdwg.mxu0
      %v1956 = vadd.f32 %v1616, %v1863
      %v1957 = vadd.f32 %v1617, %v1866
      %v1958 = vadd.f32 %v1618, %v1871
      %v1959 = vadd.f32 %v1619, %v1874
      %v1960 = vadd.f32 %v1620, %v1879
      %v1961 = vadd.f32 %v1621, %v1882
      %v1962 = vadd.f32 %v1622, %v1887
      %v1963 = vadd.f32 %v1623, %v1890
      %v1964 = vadd.f32 %v1624, %v1895
      %v1965 = vadd.f32 %v1625, %v1898
      %v1966 = vadd.f32 %v1626, %v1903
      %v1967 = vadd.f32 %v1627, %v1906
      %v1968 = vadd.f32 %v1628, %v1911
      %v1969 = vadd.f32 %v1629, %v1914
      %v1970 = vadd.f32 %v1630, %v1919
      %v1971 = vadd.f32 %v1631, %v1922
      %v1972 = vadd.f32 %v1632, %v1927
      %v1973 = vadd.f32 %v1633, %v1930
      %v1974 = vadd.f32 %v1634, %v1935
      %v1975 = vadd.f32 %v1635, %v1938
      %v1976 = vadd.f32 %v1636, %v1943
      %v1977 = vadd.f32 %v1637, %v1946
      %v1978 = vadd.f32 %v1638, %v1951
      %v1979 = vld [vmem:[%s455 + $0x8] sm:$0xc]
      %s1980 = scalar_lea.vmem %s1, 320
      %v1981 = vld [vmem:[%s1980] sm:$0xf]
      %v1982 = vld [vmem:[%s1980 + $0x4] sm:$0xf]
      %v1983 = vld [vmem:[%s1980 + $0x8] sm:$0xf]
      %v1984 = vld [vmem:[%s1980 + $0xc] sm:$0xf]
      %v1985 = vld [vmem:[%s1980 + $0x10] sm:$0xf]
      %v1986 = vld [vmem:[%s1980 + $0x14] sm:$0xf]
      %v1987 = vld [vmem:[%s1980 + $0x18] sm:$0xf]
      %v1988 = vld [vmem:[%s1980 + $0x1c] sm:$0xf]
      %v1989 = vld [vmem:[%s1980 + $0x20] sm:$0xf]
      %v1990 = vld [vmem:[%s1980 + $0x24] sm:$0xf]
      %v1991 = vld [vmem:[%s1980 + $0x28] sm:$0xf]
      %v1992 = vld [vmem:[%s1980 + $0x2c] sm:$0xf]
      %v1993 = vld [vmem:[%s1980 + $0x30] sm:$0xf]
      %v1994 = vld [vmem:[%s1980 + $0x34] sm:$0xf]
      %v1995 = vld [vmem:[%s1980 + $0x38] sm:$0xf]
      %v1996 = vld [vmem:[%s1980 + $0x3c] sm:$0xf]
      %v1998 = vunpack.c.l.b16 %v1979
      %v1999 = vpack.c.b16 %v1371, %v1998
      %vm2000 = vcmask 1045504
      %v2001 = vrot.slane %v1999, 2
      %v2002 = vrot.slane %v1394, 2
      %v2003 = vsel %vm2000, %v2001, %v2002
      %v2004 = vrot.slane %v1395, 2
      %v2005 = vsel %vm2000, %v2002, %v2004
      %v2006 = vrot.slane %v1396, 2
      %v2007 = vsel %vm2000, %v2004, %v2006
      %v2008 = vrot.slane %v1397, 2
      %v2009 = vsel %vm2000, %v2006, %v2008
      %v2010 = vrot.slane %v1398, 2
      %v2011 = vsel %vm2000, %v2008, %v2010
      %v2012 = vrot.slane %v1399, 2
      %v2013 = vsel %vm2000, %v2010, %v2012
      %v2014 = vrot.slane %v1400, 2
      %v2015 = vsel %vm2000, %v2012, %v2014
      %v2016 = vrot.slane %v1401, 2
      %v2017 = vsel %vm2000, %v2014, %v2016
      %v2018 = vrot.slane %v1402, 2
      %v2019 = vsel %vm2000, %v2016, %v2018
      %v2020 = vrot.slane %v1403, 2
      %v2021 = vsel %vm2000, %v2018, %v2020
      %v2022 = vrot.slane %v1659, 2
      %v2023 = vsel %vm2000, %v2020, %v2022
      %v2052 = vunpack.c.l.b16 %v1981
      %v2053 = vunpack.c.l.b16 %v1982
      %v2054 = vunpack.c.l.b16 %v1983
      %v2055 = vunpack.c.l.b16 %v1984
      %v2056 = vunpack.c.l.b16 %v1985
      %v2057 = vunpack.c.l.b16 %v1986
      %v2058 = vunpack.c.l.b16 %v1987
      %v2059 = vunpack.c.l.b16 %v1988
      %v2060 = vunpack.c.l.b16 %v1989
      %v2061 = vunpack.c.l.b16 %v1990
      %v2062 = vunpack.c.l.b16 %v1991
      %v2063 = vunpack.c.l.b16 %v1992
      %v2064 = vunpack.c.l.b16 %v1993
      %v2065 = vunpack.c.l.b16 %v1994
      %v2066 = vunpack.c.l.b16 %v1995
      %v2067 = vunpack.c.l.b16 %v1996
      %v2068 = vpack.c.b16 %v2053, %v2052
      %v2069 = vpack.c.b16 %v2055, %v2054
      %v2070 = vpack.c.b16 %v2057, %v2056
      %v2071 = vpack.c.b16 %v2059, %v2058
      %v2072 = vpack.c.b16 %v2061, %v2060
      %v2073 = vpack.c.b16 %v2063, %v2062
      %v2074 = vpack.c.b16 %v2065, %v2064
      %v2075 = vpack.c.b16 %v2067, %v2066
      %2084 = vmatprep.subr.bf16.mxu0 0
      %2085 = vmatpush1.bf16.msra.mxu0 %v2075
      %2086 = vmatprep.subr.bf16.mxu0 0
      %2087 = vmatpush1.bf16.msra.mxu0 %v2074
      %2088 = vmatprep.subr.bf16.mxu0 0
      %2089 = vmatpush1.bf16.msra.mxu0 %v2073
      %2090 = vmatprep.subr.bf16.mxu0 0
      %2091 = vmatpush1.bf16.msra.mxu0 %v2072
      %2092 = vmatprep.subr.bf16.mxu0 0
      %2093 = vmatpush1.bf16.msra.mxu0 %v2071
      %2094 = vmatprep.subr.bf16.mxu0 0
      %2095 = vmatpush1.bf16.msra.mxu0 %v2070
      %2096 = vmatprep.subr.bf16.mxu0 0
      %2097 = vmatpush1.bf16.msra.mxu0 %v2069
      %2098 = vmatprep.subr.bf16.mxu0 0
      %2099 = vmatpush1.bf16.msra.mxu0 %v2068
      %2100 = vmatprep.subr.bf16.mxu0 0
      %2101 = vmatpush2.bf16.msra.mxu0 0
      %2102 = vmatprep.subr.bf16.mxu0 0
      %2103 = vmatpush2.bf16.msra.mxu0 0
      %2104 = vmatprep.subr.bf16.mxu0 0
      %2105 = vmatpush2.bf16.msra.mxu0 0
      %2106 = vmatprep.subr.bf16.mxu0 0
      %2107 = vmatpush2.bf16.msra.mxu0 0
      %2108 = vmatprep.subr.bf16.mxu0 0
      %2109 = vmatpush2.bf16.msra.mxu0 0
      %2110 = vmatprep.subr.bf16.mxu0 0
      %2111 = vmatpush2.bf16.msra.mxu0 0
      %2112 = vmatprep.subr.bf16.mxu0 0
      %2113 = vmatpush2.bf16.msra.mxu0 0
      %2114 = vmatprep.subr.bf16.mxu0 0
      %2115 = vmatpush2.bf16.msra.mxu0 0
      %2116 = vmatprep.mubr.bf16.mxu0 0
      %2117 = vmatmul.mubr.bf16.gmra.mxu0 %v2003
      %v2118 = vpop.f32.mrf.mxu0
      %v2119 = vadd.f32 0.0, %v2118
      %v2120 = vpop.f32.mrf.mxu0
      %v2121 = vpop.f32.mrf.mxu0
      %v2122 = vadd.f32 0.0, %v2121
      %v2123 = vpop.f32.mrf.mxu0
      %2124 = vmatprep.mubr.bf16.mxu0 0
      %2125 = vmatmul.mubr.bf16.gmra.mxu0 %v2005
      %v2126 = vpop.f32.mrf.mxu0
      %v2127 = vadd.f32 0.0, %v2126
      %v2128 = vpop.f32.mrf.mxu0
      %v2129 = vpop.f32.mrf.mxu0
      %v2130 = vadd.f32 0.0, %v2129
      %v2131 = vpop.f32.mrf.mxu0
      %2132 = vmatprep.mubr.bf16.mxu0 0
      %2133 = vmatmul.mubr.bf16.gmra.mxu0 %v2007
      %v2134 = vpop.f32.mrf.mxu0
      %v2135 = vadd.f32 0.0, %v2134
      %v2136 = vpop.f32.mrf.mxu0
      %v2137 = vpop.f32.mrf.mxu0
      %v2138 = vadd.f32 0.0, %v2137
      %v2139 = vpop.f32.mrf.mxu0
      %2140 = vmatprep.mubr.bf16.mxu0 0
      %2141 = vmatmul.mubr.bf16.gmra.mxu0 %v2009
      %v2142 = vpop.f32.mrf.mxu0
      %v2143 = vadd.f32 0.0, %v2142
      %v2144 = vpop.f32.mrf.mxu0
      %v2145 = vpop.f32.mrf.mxu0
      %v2146 = vadd.f32 0.0, %v2145
      %v2147 = vpop.f32.mrf.mxu0
      %2148 = vmatprep.mubr.bf16.mxu0 0
      %2149 = vmatmul.mubr.bf16.gmra.mxu0 %v2011
      %v2150 = vpop.f32.mrf.mxu0
      %v2151 = vadd.f32 0.0, %v2150
      %v2152 = vpop.f32.mrf.mxu0
      %v2153 = vpop.f32.mrf.mxu0
      %v2154 = vadd.f32 0.0, %v2153
      %v2155 = vpop.f32.mrf.mxu0
      %2156 = vmatprep.mubr.bf16.mxu0 0
      %2157 = vmatmul.mubr.bf16.gmra.mxu0 %v2013
      %v2158 = vpop.f32.mrf.mxu0
      %v2159 = vadd.f32 0.0, %v2158
      %v2160 = vpop.f32.mrf.mxu0
      %v2161 = vpop.f32.mrf.mxu0
      %v2162 = vadd.f32 0.0, %v2161
      %v2163 = vpop.f32.mrf.mxu0
      %2164 = vmatprep.mubr.bf16.mxu0 0
      %2165 = vmatmul.mubr.bf16.gmra.mxu0 %v2015
      %v2166 = vpop.f32.mrf.mxu0
      %v2167 = vadd.f32 0.0, %v2166
      %v2168 = vpop.f32.mrf.mxu0
      %v2169 = vpop.f32.mrf.mxu0
      %v2170 = vadd.f32 0.0, %v2169
      %v2171 = vpop.f32.mrf.mxu0
      %2172 = vmatprep.mubr.bf16.mxu0 0
      %2173 = vmatmul.mubr.bf16.gmra.mxu0 %v2017
      %v2174 = vpop.f32.mrf.mxu0
      %v2175 = vadd.f32 0.0, %v2174
      %v2176 = vpop.f32.mrf.mxu0
      %v2177 = vpop.f32.mrf.mxu0
      %v2178 = vadd.f32 0.0, %v2177
      %v2179 = vpop.f32.mrf.mxu0
      %2180 = vmatprep.mubr.bf16.mxu0 0
      %2181 = vmatmul.mubr.bf16.gmra.mxu0 %v2019
      %v2182 = vpop.f32.mrf.mxu0
      %v2183 = vadd.f32 0.0, %v2182
      %v2184 = vpop.f32.mrf.mxu0
      %v2185 = vpop.f32.mrf.mxu0
      %v2186 = vadd.f32 0.0, %v2185
      %v2187 = vpop.f32.mrf.mxu0
      %2188 = vmatprep.mubr.bf16.mxu0 0
      %2189 = vmatmul.mubr.bf16.gmra.mxu0 %v2021
      %v2190 = vpop.f32.mrf.mxu0
      %v2191 = vadd.f32 0.0, %v2190
      %v2192 = vpop.f32.mrf.mxu0
      %v2193 = vpop.f32.mrf.mxu0
      %v2194 = vadd.f32 0.0, %v2193
      %v2195 = vpop.f32.mrf.mxu0
      %2196 = vmatprep.mubr.bf16.mxu0 0
      %2197 = vmatmul.mubr.bf16.gmra.mxu0 %v2023
      %v2198 = vpop.f32.mrf.mxu0
      %v2199 = vadd.f32 0.0, %v2198
      %v2200 = vpop.f32.mrf.mxu0
      %v2201 = vpop.f32.mrf.mxu0
      %v2202 = vadd.f32 0.0, %v2201
      %v2203 = vpop.f32.mrf.mxu0
      %2204 = vmatprep.mubr.bf16.mxu0 0
      %2205 = vmatmul.mubr.bf16.gmra.mxu0 %v2022
      %v2206 = vpop.f32.mrf.mxu0
      %v2207 = vadd.f32 0.0, %v2206
      %v2208 = vpop.f32.mrf.mxu0
      %v2209 = vpop.f32.mrf.mxu0
      %v2210 = vpop.f32.mrf.mxu0
      %2211 = vdwg.mxu0
      %v2212 = vadd.f32 %v1956, %v2119
      %v2213 = vadd.f32 %v1957, %v2122
      %v2214 = vadd.f32 %v1958, %v2127
      %v2215 = vadd.f32 %v1959, %v2130
      %v2216 = vadd.f32 %v1960, %v2135
      %v2217 = vadd.f32 %v1961, %v2138
      %v2218 = vadd.f32 %v1962, %v2143
      %v2219 = vadd.f32 %v1963, %v2146
      %v2220 = vadd.f32 %v1964, %v2151
      %v2221 = vadd.f32 %v1965, %v2154
      %v2222 = vadd.f32 %v1966, %v2159
      %v2223 = vadd.f32 %v1967, %v2162
      %v2224 = vadd.f32 %v1968, %v2167
      %v2225 = vadd.f32 %v1969, %v2170
      %v2226 = vadd.f32 %v1970, %v2175
      %v2227 = vadd.f32 %v1971, %v2178
      %v2228 = vadd.f32 %v1972, %v2183
      %v2229 = vadd.f32 %v1973, %v2186
      %v2230 = vadd.f32 %v1974, %v2191
      %v2231 = vadd.f32 %v1975, %v2194
      %v2232 = vadd.f32 %v1976, %v2199
      %v2233 = vadd.f32 %v1977, %v2202
      %v2234 = vadd.f32 %v1978, %v2207
      %v2235 = vld [vmem:[%s455 + $0x10] sm:$0xc]
      %v2236 = vld [vmem:[%s455 + $0x14] sm:$0xf]
      %v2237 = vld [vmem:[%s455 + $0x18] sm:$0xf]
      %v2238 = vld [vmem:[%s455 + $0x1c] sm:$0xf]
      %v2239 = vld [vmem:[%s455 + $0x20] sm:$0xf]
      %v2240 = vld [vmem:[%s455 + $0x24] sm:$0xf]
      %v2241 = vld [vmem:[%s455 + $0x28] sm:$0xf]
      %v2242 = vld [vmem:[%s455 + $0x2c] sm:$0xf]
      %v2243 = vld [vmem:[%s455 + $0x30] sm:$0xf]
      %v2244 = vld [vmem:[%s455 + $0x34] sm:$0xf]
      %v2245 = vld [vmem:[%s455 + $0x38] sm:$0xf]
      %v2246 = vld [vmem:[%s455 + $0x3c] sm:$0xf]
      %v2247 = vld [vmem:[%s455 + $0x40] sm:$0xf]
      %v2248 = vld [vmem:[%s455 + $0x44] sm:$0xf]
      %v2249 = vld [vmem:[%s455 + $0x48] sm:$0xf]
      %v2250 = vld [vmem:[%s455 + $0x4c] sm:$0xf]
      %v2251 = vld [vmem:[%s455 + $0x50] sm:$0xf]
      %v2252 = vld [vmem:[%s455 + $0x54] sm:$0xf]
      %v2253 = vld [vmem:[%s455 + $0x58] sm:$0xf]
      %v2254 = vld [vmem:[%s455 + $0x5c] sm:$0xf]
      %v2255 = vld [vmem:[%s455 + $0x60] sm:$0xf]
      %v2256 = vld [vmem:[%s455 + $0x64] sm:$0xf]
      %v2257 = vld [vmem:[%s455 + $0x68] sm:$0xf]
      %s2258 = scalar_lea.vmem %s1, 384
      %v2259 = vld [vmem:[%s2258] sm:$0xf]
      %v2260 = vld [vmem:[%s2258 + $0x4] sm:$0xf]
      %v2261 = vld [vmem:[%s2258 + $0x8] sm:$0xf]
      %v2262 = vld [vmem:[%s2258 + $0xc] sm:$0xf]
      %v2263 = vld [vmem:[%s2258 + $0x10] sm:$0xf]
      %v2264 = vld [vmem:[%s2258 + $0x14] sm:$0xf]
      %v2265 = vld [vmem:[%s2258 + $0x18] sm:$0xf]
      %v2266 = vld [vmem:[%s2258 + $0x1c] sm:$0xf]
      %v2267 = vld [vmem:[%s2258 + $0x20] sm:$0xf]
      %v2268 = vld [vmem:[%s2258 + $0x24] sm:$0xf]
      %v2269 = vld [vmem:[%s2258 + $0x28] sm:$0xf]
      %v2270 = vld [vmem:[%s2258 + $0x2c] sm:$0xf]
      %v2271 = vld [vmem:[%s2258 + $0x30] sm:$0xf]
      %v2272 = vld [vmem:[%s2258 + $0x34] sm:$0xf]
      %v2273 = vld [vmem:[%s2258 + $0x38] sm:$0xf]
      %v2274 = vld [vmem:[%s2258 + $0x3c] sm:$0xf]
      %v2298 = vunpack.c.l.b16 %v2235
      %v2299 = vunpack.c.l.b16 %v2236
      %v2300 = vunpack.c.l.b16 %v2237
      %v2301 = vunpack.c.l.b16 %v2238
      %v2302 = vunpack.c.l.b16 %v2239
      %v2303 = vunpack.c.l.b16 %v2240
      %v2304 = vunpack.c.l.b16 %v2241
      %v2305 = vunpack.c.l.b16 %v2242
      %v2306 = vunpack.c.l.b16 %v2243
      %v2307 = vunpack.c.l.b16 %v2244
      %v2308 = vunpack.c.l.b16 %v2245
      %v2309 = vunpack.c.l.b16 %v2246
      %v2310 = vunpack.c.l.b16 %v2247
      %v2311 = vunpack.c.l.b16 %v2248
      %v2312 = vunpack.c.l.b16 %v2249
      %v2313 = vunpack.c.l.b16 %v2250
      %v2314 = vunpack.c.l.b16 %v2251
      %v2315 = vunpack.c.l.b16 %v2252
      %v2316 = vunpack.c.l.b16 %v2253
      %v2317 = vunpack.c.l.b16 %v2254
      %v2318 = vunpack.c.l.b16 %v2255
      %v2319 = vunpack.c.l.b16 %v2256
      %v2320 = vunpack.c.l.b16 %v2257
      %v2321 = vpack.c.b16 %v2299, %v2298
      %v2322 = vpack.c.b16 %v2301, %v2300
      %v2323 = vpack.c.b16 %v2303, %v2302
      %v2324 = vpack.c.b16 %v2305, %v2304
      %v2325 = vpack.c.b16 %v2307, %v2306
      %v2326 = vpack.c.b16 %v2309, %v2308
      %v2327 = vpack.c.b16 %v2311, %v2310
      %v2328 = vpack.c.b16 %v2313, %v2312
      %v2329 = vpack.c.b16 %v2315, %v2314
      %v2330 = vpack.c.b16 %v2317, %v2316
      %v2331 = vpack.c.b16 %v2319, %v2318
      %v2332 = vpack.c.b16 %v2320, %v2320
      %v2333 = vrot.slane %v2321, 2
      %v2334 = vrot.slane %v2322, 2
      %v2335 = vsel %vm2000, %v2333, %v2334
      %v2336 = vrot.slane %v2323, 2
      %v2337 = vsel %vm2000, %v2334, %v2336
      %v2338 = vrot.slane %v2324, 2
      %v2339 = vsel %vm2000, %v2336, %v2338
      %v2340 = vrot.slane %v2325, 2
      %v2341 = vsel %vm2000, %v2338, %v2340
      %v2342 = vrot.slane %v2326, 2
      %v2343 = vsel %vm2000, %v2340, %v2342
      %v2344 = vrot.slane %v2327, 2
      %v2345 = vsel %vm2000, %v2342, %v2344
      %v2346 = vrot.slane %v2328, 2
      %v2347 = vsel %vm2000, %v2344, %v2346
      %v2348 = vrot.slane %v2329, 2
      %v2349 = vsel %vm2000, %v2346, %v2348
      %v2350 = vrot.slane %v2330, 2
      %v2351 = vsel %vm2000, %v2348, %v2350
      %v2352 = vrot.slane %v2331, 2
      %v2353 = vsel %vm2000, %v2350, %v2352
      %v2354 = vrot.slane %v2332, 2
      %v2355 = vsel %vm2000, %v2352, %v2354
      %v2384 = vunpack.c.l.b16 %v2259
      %v2385 = vunpack.c.l.b16 %v2260
      %v2386 = vunpack.c.l.b16 %v2261
      %v2387 = vunpack.c.l.b16 %v2262
      %v2388 = vunpack.c.l.b16 %v2263
      %v2389 = vunpack.c.l.b16 %v2264
      %v2390 = vunpack.c.l.b16 %v2265
      %v2391 = vunpack.c.l.b16 %v2266
      %v2392 = vunpack.c.l.b16 %v2267
      %v2393 = vunpack.c.l.b16 %v2268
      %v2394 = vunpack.c.l.b16 %v2269
      %v2395 = vunpack.c.l.b16 %v2270
      %v2396 = vunpack.c.l.b16 %v2271
      %v2397 = vunpack.c.l.b16 %v2272
      %v2398 = vunpack.c.l.b16 %v2273
      %v2399 = vunpack.c.l.b16 %v2274
      %v2400 = vpack.c.b16 %v2385, %v2384
      %v2401 = vpack.c.b16 %v2387, %v2386
      %v2402 = vpack.c.b16 %v2389, %v2388
      %v2403 = vpack.c.b16 %v2391, %v2390
      %v2404 = vpack.c.b16 %v2393, %v2392
      %v2405 = vpack.c.b16 %v2395, %v2394
      %v2406 = vpack.c.b16 %v2397, %v2396
      %v2407 = vpack.c.b16 %v2399, %v2398
      %2416 = vmatprep.subr.bf16.mxu0 0
      %2417 = vmatpush1.bf16.msra.mxu0 %v2407
      %2418 = vmatprep.subr.bf16.mxu0 0
      %2419 = vmatpush1.bf16.msra.mxu0 %v2406
      %2420 = vmatprep.subr.bf16.mxu0 0
      %2421 = vmatpush1.bf16.msra.mxu0 %v2405
      %2422 = vmatprep.subr.bf16.mxu0 0
      %2423 = vmatpush1.bf16.msra.mxu0 %v2404
      %2424 = vmatprep.subr.bf16.mxu0 0
      %2425 = vmatpush1.bf16.msra.mxu0 %v2403
      %2426 = vmatprep.subr.bf16.mxu0 0
      %2427 = vmatpush1.bf16.msra.mxu0 %v2402
      %2428 = vmatprep.subr.bf16.mxu0 0
      %2429 = vmatpush1.bf16.msra.mxu0 %v2401
      %2430 = vmatprep.subr.bf16.mxu0 0
      %2431 = vmatpush1.bf16.msra.mxu0 %v2400
      %2432 = vmatprep.subr.bf16.mxu0 0
      %2433 = vmatpush2.bf16.msra.mxu0 0
      %2434 = vmatprep.subr.bf16.mxu0 0
      %2435 = vmatpush2.bf16.msra.mxu0 0
      %2436 = vmatprep.subr.bf16.mxu0 0
      %2437 = vmatpush2.bf16.msra.mxu0 0
      %2438 = vmatprep.subr.bf16.mxu0 0
      %2439 = vmatpush2.bf16.msra.mxu0 0
      %2440 = vmatprep.subr.bf16.mxu0 0
      %2441 = vmatpush2.bf16.msra.mxu0 0
      %2442 = vmatprep.subr.bf16.mxu0 0
      %2443 = vmatpush2.bf16.msra.mxu0 0
      %2444 = vmatprep.subr.bf16.mxu0 0
      %2445 = vmatpush2.bf16.msra.mxu0 0
      %2446 = vmatprep.subr.bf16.mxu0 0
      %2447 = vmatpush2.bf16.msra.mxu0 0
      %2448 = vmatprep.mubr.bf16.mxu0 0
      %2449 = vmatmul.mubr.bf16.gmra.mxu0 %v2335
      %v2450 = vpop.f32.mrf.mxu0
      %v2451 = vadd.f32 0.0, %v2450
      %v2452 = vpop.f32.mrf.mxu0
      %v2453 = vpop.f32.mrf.mxu0
      %v2454 = vadd.f32 0.0, %v2453
      %v2455 = vpop.f32.mrf.mxu0
      %2456 = vmatprep.mubr.bf16.mxu0 0
      %2457 = vmatmul.mubr.bf16.gmra.mxu0 %v2337
      %v2458 = vpop.f32.mrf.mxu0
      %v2459 = vadd.f32 0.0, %v2458
      %v2460 = vpop.f32.mrf.mxu0
      %v2461 = vpop.f32.mrf.mxu0
      %v2462 = vadd.f32 0.0, %v2461
      %v2463 = vpop.f32.mrf.mxu0
      %2464 = vmatprep.mubr.bf16.mxu0 0
      %2465 = vmatmul.mubr.bf16.gmra.mxu0 %v2339
      %v2466 = vpop.f32.mrf.mxu0
      %v2467 = vadd.f32 0.0, %v2466
      %v2468 = vpop.f32.mrf.mxu0
      %v2469 = vpop.f32.mrf.mxu0
      %v2470 = vadd.f32 0.0, %v2469
      %v2471 = vpop.f32.mrf.mxu0
      %2472 = vmatprep.mubr.bf16.mxu0 0
      %2473 = vmatmul.mubr.bf16.gmra.mxu0 %v2341
      %v2474 = vpop.f32.mrf.mxu0
      %v2475 = vadd.f32 0.0, %v2474
      %v2476 = vpop.f32.mrf.mxu0
      %v2477 = vpop.f32.mrf.mxu0
      %v2478 = vadd.f32 0.0, %v2477
      %v2479 = vpop.f32.mrf.mxu0
      %2480 = vmatprep.mubr.bf16.mxu0 0
      %2481 = vmatmul.mubr.bf16.gmra.mxu0 %v2343
      %v2482 = vpop.f32.mrf.mxu0
      %v2483 = vadd.f32 0.0, %v2482
      %v2484 = vpop.f32.mrf.mxu0
      %v2485 = vpop.f32.mrf.mxu0
      %v2486 = vadd.f32 0.0, %v2485
      %v2487 = vpop.f32.mrf.mxu0
      %2488 = vmatprep.mubr.bf16.mxu0 0
      %2489 = vmatmul.mubr.bf16.gmra.mxu0 %v2345
      %v2490 = vpop.f32.mrf.mxu0
      %v2491 = vadd.f32 0.0, %v2490
      %v2492 = vpop.f32.mrf.mxu0
      %v2493 = vpop.f32.mrf.mxu0
      %v2494 = vadd.f32 0.0, %v2493
      %v2495 = vpop.f32.mrf.mxu0
      %2496 = vmatprep.mubr.bf16.mxu0 0
      %2497 = vmatmul.mubr.bf16.gmra.mxu0 %v2347
      %v2498 = vpop.f32.mrf.mxu0
      %v2499 = vadd.f32 0.0, %v2498
      %v2500 = vpop.f32.mrf.mxu0
      %v2501 = vpop.f32.mrf.mxu0
      %v2502 = vadd.f32 0.0, %v2501
      %v2503 = vpop.f32.mrf.mxu0
      %2504 = vmatprep.mubr.bf16.mxu0 0
      %2505 = vmatmul.mubr.bf16.gmra.mxu0 %v2349
      %v2506 = vpop.f32.mrf.mxu0
      %v2507 = vadd.f32 0.0, %v2506
      %v2508 = vpop.f32.mrf.mxu0
      %v2509 = vpop.f32.mrf.mxu0
      %v2510 = vadd.f32 0.0, %v2509
      %v2511 = vpop.f32.mrf.mxu0
      %2512 = vmatprep.mubr.bf16.mxu0 0
      %2513 = vmatmul.mubr.bf16.gmra.mxu0 %v2351
      %v2514 = vpop.f32.mrf.mxu0
      %v2515 = vadd.f32 0.0, %v2514
      %v2516 = vpop.f32.mrf.mxu0
      %v2517 = vpop.f32.mrf.mxu0
      %v2518 = vadd.f32 0.0, %v2517
      %v2519 = vpop.f32.mrf.mxu0
      %2520 = vmatprep.mubr.bf16.mxu0 0
      %2521 = vmatmul.mubr.bf16.gmra.mxu0 %v2353
      %v2522 = vpop.f32.mrf.mxu0
      %v2523 = vadd.f32 0.0, %v2522
      %v2524 = vpop.f32.mrf.mxu0
      %v2525 = vpop.f32.mrf.mxu0
      %v2526 = vadd.f32 0.0, %v2525
      %v2527 = vpop.f32.mrf.mxu0
      %2528 = vmatprep.mubr.bf16.mxu0 0
      %2529 = vmatmul.mubr.bf16.gmra.mxu0 %v2355
      %v2530 = vpop.f32.mrf.mxu0
      %v2531 = vadd.f32 0.0, %v2530
      %v2532 = vpop.f32.mrf.mxu0
      %v2533 = vpop.f32.mrf.mxu0
      %v2534 = vadd.f32 0.0, %v2533
      %v2535 = vpop.f32.mrf.mxu0
      %2536 = vmatprep.mubr.bf16.mxu0 0
      %2537 = vmatmul.mubr.bf16.gmra.mxu0 %v2354
      %v2538 = vpop.f32.mrf.mxu0
      %v2539 = vadd.f32 0.0, %v2538
      %v2540 = vpop.f32.mrf.mxu0
      %v2541 = vpop.f32.mrf.mxu0
      %v2542 = vpop.f32.mrf.mxu0
      %2543 = vdwg.mxu0
      %v2544 = vadd.f32 %v2212, %v2451
      %v2545 = vadd.f32 %v2213, %v2454
      %v2546 = vadd.f32 %v2214, %v2459
      %v2547 = vadd.f32 %v2215, %v2462
      %v2548 = vadd.f32 %v2216, %v2467
      %v2549 = vadd.f32 %v2217, %v2470
      %v2550 = vadd.f32 %v2218, %v2475
      %v2551 = vadd.f32 %v2219, %v2478
      %v2552 = vadd.f32 %v2220, %v2483
      %v2553 = vadd.f32 %v2221, %v2486
      %v2554 = vadd.f32 %v2222, %v2491
      %v2555 = vadd.f32 %v2223, %v2494
      %v2556 = vadd.f32 %v2224, %v2499
      %v2557 = vadd.f32 %v2225, %v2502
      %v2558 = vadd.f32 %v2226, %v2507
      %v2559 = vadd.f32 %v2227, %v2510
      %v2560 = vadd.f32 %v2228, %v2515
      %v2561 = vadd.f32 %v2229, %v2518
      %v2562 = vadd.f32 %v2230, %v2523
      %v2563 = vadd.f32 %v2231, %v2526
      %v2564 = vadd.f32 %v2232, %v2531
      %v2565 = vadd.f32 %v2233, %v2534
      %v2566 = vadd.f32 %v2234, %v2539
      %v2567 = vld [vmem:[%s455 + $0x10] sm:$0xc]
      %v2568 = vld [vmem:[%s455 + $0x14] sm:$0xf]
      %v2569 = vld [vmem:[%s455 + $0x18] sm:$0xf]
      %v2570 = vld [vmem:[%s455 + $0x1c] sm:$0xf]
      %v2571 = vld [vmem:[%s455 + $0x20] sm:$0xf]
      %v2572 = vld [vmem:[%s455 + $0x24] sm:$0xf]
      %v2573 = vld [vmem:[%s455 + $0x28] sm:$0xf]
      %v2574 = vld [vmem:[%s455 + $0x2c] sm:$0xf]
      %v2575 = vld [vmem:[%s455 + $0x30] sm:$0xf]
      %v2576 = vld [vmem:[%s455 + $0x34] sm:$0xf]
      %v2577 = vld [vmem:[%s455 + $0x38] sm:$0xf]
      %v2578 = vld [vmem:[%s455 + $0x3c] sm:$0xf]
      %v2579 = vld [vmem:[%s455 + $0x40] sm:$0xf]
      %v2580 = vld [vmem:[%s455 + $0x44] sm:$0xf]
      %v2581 = vld [vmem:[%s455 + $0x48] sm:$0xf]
      %v2582 = vld [vmem:[%s455 + $0x4c] sm:$0xf]
      %v2583 = vld [vmem:[%s455 + $0x50] sm:$0xf]
      %v2584 = vld [vmem:[%s455 + $0x54] sm:$0xf]
      %v2585 = vld [vmem:[%s455 + $0x58] sm:$0xf]
      %v2586 = vld [vmem:[%s455 + $0x5c] sm:$0xf]
      %v2587 = vld [vmem:[%s455 + $0x60] sm:$0xf]
      %v2588 = vld [vmem:[%s455 + $0x64] sm:$0xf]
      %v2589 = vld [vmem:[%s455 + $0x68] sm:$0xf]
      %v2590 = vld [vmem:[%s455 + $0x6c] sm:$0x1]
      %s2591 = scalar_lea.vmem %s1, 448
      %v2592 = vld [vmem:[%s2591] sm:$0xf]
      %v2593 = vld [vmem:[%s2591 + $0x4] sm:$0xf]
      %v2594 = vld [vmem:[%s2591 + $0x8] sm:$0xf]
      %v2595 = vld [vmem:[%s2591 + $0xc] sm:$0xf]
      %v2596 = vld [vmem:[%s2591 + $0x10] sm:$0xf]
      %v2597 = vld [vmem:[%s2591 + $0x14] sm:$0xf]
      %v2598 = vld [vmem:[%s2591 + $0x18] sm:$0xf]
      %v2599 = vld [vmem:[%s2591 + $0x1c] sm:$0xf]
      %v2600 = vld [vmem:[%s2591 + $0x20] sm:$0xf]
      %v2601 = vld [vmem:[%s2591 + $0x24] sm:$0xf]
      %v2602 = vld [vmem:[%s2591 + $0x28] sm:$0xf]
      %v2603 = vld [vmem:[%s2591 + $0x2c] sm:$0xf]
      %v2604 = vld [vmem:[%s2591 + $0x30] sm:$0xf]
      %v2605 = vld [vmem:[%s2591 + $0x34] sm:$0xf]
      %v2606 = vld [vmem:[%s2591 + $0x38] sm:$0xf]
      %v2607 = vld [vmem:[%s2591 + $0x3c] sm:$0xf]
      %v2632 = vunpack.c.l.b16 %v2567
      %v2633 = vunpack.c.l.b16 %v2568
      %v2634 = vunpack.c.l.b16 %v2569
      %v2635 = vunpack.c.l.b16 %v2570
      %v2636 = vunpack.c.l.b16 %v2571
      %v2637 = vunpack.c.l.b16 %v2572
      %v2638 = vunpack.c.l.b16 %v2573
      %v2639 = vunpack.c.l.b16 %v2574
      %v2640 = vunpack.c.l.b16 %v2575
      %v2641 = vunpack.c.l.b16 %v2576
      %v2642 = vunpack.c.l.b16 %v2577
      %v2643 = vunpack.c.l.b16 %v2578
      %v2644 = vunpack.c.l.b16 %v2579
      %v2645 = vunpack.c.l.b16 %v2580
      %v2646 = vunpack.c.l.b16 %v2581
      %v2647 = vunpack.c.l.b16 %v2582
      %v2648 = vunpack.c.l.b16 %v2583
      %v2649 = vunpack.c.l.b16 %v2584
      %v2650 = vunpack.c.l.b16 %v2585
      %v2651 = vunpack.c.l.b16 %v2586
      %v2652 = vunpack.c.l.b16 %v2587
      %v2653 = vunpack.c.l.b16 %v2588
      %v2654 = vunpack.c.l.b16 %v2589
      %v2655 = vunpack.c.l.b16 %v2590
      %v2656 = vpack.c.b16 %v2633, %v2632
      %v2657 = vpack.c.b16 %v2635, %v2634
      %v2658 = vpack.c.b16 %v2637, %v2636
      %v2659 = vpack.c.b16 %v2639, %v2638
      %v2660 = vpack.c.b16 %v2641, %v2640
      %v2661 = vpack.c.b16 %v2643, %v2642
      %v2662 = vpack.c.b16 %v2645, %v2644
      %v2663 = vpack.c.b16 %v2647, %v2646
      %v2664 = vpack.c.b16 %v2649, %v2648
      %v2665 = vpack.c.b16 %v2651, %v2650
      %v2666 = vpack.c.b16 %v2653, %v2652
      %v2667 = vpack.c.b16 %v2655, %v2654
      %vm2668 = vsmask.f32 5376
      %v2670 = vshrl.u32 %v2656, 16
      %v2672 = vrot.slane %v2670, 2
      %v2673 = vshll.u32 %v2656, 16
      %v2675 = vrot.slane %v2673, 3
      %v2676 = vor.u32 %v2672, %v2675
      %v2678 = vshrl.u32 %v2657, 16
      %v2680 = vrot.slane %v2678, 2
      %v2681 = vshll.u32 %v2657, 16
      %v2683 = vrot.slane %v2681, 3
      %v2684 = vor.u32 %v2680, %v2683
      %v2685 = vsel %vm2668, %v2676, %v2684
      %v2687 = vshrl.u32 %v2658, 16
      %v2689 = vrot.slane %v2687, 2
      %v2690 = vshll.u32 %v2658, 16
      %v2692 = vrot.slane %v2690, 3
      %v2693 = vor.u32 %v2689, %v2692
      %v2694 = vsel %vm2668, %v2684, %v2693
      %v2696 = vshrl.u32 %v2659, 16
      %v2698 = vrot.slane %v2696, 2
      %v2699 = vshll.u32 %v2659, 16
      %v2701 = vrot.slane %v2699, 3
      %v2702 = vor.u32 %v2698, %v2701
      %v2703 = vsel %vm2668, %v2693, %v2702
      %v2705 = vshrl.u32 %v2660, 16
      %v2707 = vrot.slane %v2705, 2
      %v2708 = vshll.u32 %v2660, 16
      %v2710 = vrot.slane %v2708, 3
      %v2711 = vor.u32 %v2707, %v2710
      %v2712 = vsel %vm2668, %v2702, %v2711
      %v2714 = vshrl.u32 %v2661, 16
      %v2716 = vrot.slane %v2714, 2
      %v2717 = vshll.u32 %v2661, 16
      %v2719 = vrot.slane %v2717, 3
      %v2720 = vor.u32 %v2716, %v2719
      %v2721 = vsel %vm2668, %v2711, %v2720
      %v2723 = vshrl.u32 %v2662, 16
      %v2725 = vrot.slane %v2723, 2
      %v2726 = vshll.u32 %v2662, 16
      %v2728 = vrot.slane %v2726, 3
      %v2729 = vor.u32 %v2725, %v2728
      %v2730 = vsel %vm2668, %v2720, %v2729
      %v2732 = vshrl.u32 %v2663, 16
      %v2734 = vrot.slane %v2732, 2
      %v2735 = vshll.u32 %v2663, 16
      %v2737 = vrot.slane %v2735, 3
      %v2738 = vor.u32 %v2734, %v2737
      %v2739 = vsel %vm2668, %v2729, %v2738
      %v2741 = vshrl.u32 %v2664, 16
      %v2743 = vrot.slane %v2741, 2
      %v2744 = vshll.u32 %v2664, 16
      %v2746 = vrot.slane %v2744, 3
      %v2747 = vor.u32 %v2743, %v2746
      %v2748 = vsel %vm2668, %v2738, %v2747
      %v2750 = vshrl.u32 %v2665, 16
      %v2752 = vrot.slane %v2750, 2
      %v2753 = vshll.u32 %v2665, 16
      %v2755 = vrot.slane %v2753, 3
      %v2756 = vor.u32 %v2752, %v2755
      %v2757 = vsel %vm2668, %v2747, %v2756
      %v2759 = vshrl.u32 %v2666, 16
      %v2761 = vrot.slane %v2759, 2
      %v2762 = vshll.u32 %v2666, 16
      %v2764 = vrot.slane %v2762, 3
      %v2765 = vor.u32 %v2761, %v2764
      %v2766 = vsel %vm2668, %v2756, %v2765
      %v2768 = vshrl.u32 %v2667, 16
      %v2770 = vrot.slane %v2768, 2
      %v2771 = vshll.u32 %v2667, 16
      %v2773 = vrot.slane %v2771, 3
      %v2774 = vor.u32 %v2770, %v2773
      %v2775 = vsel %vm2668, %v2765, %v2774
      %v2804 = vunpack.c.l.b16 %v2592
      %v2805 = vunpack.c.l.b16 %v2593
      %v2806 = vunpack.c.l.b16 %v2594
      %v2807 = vunpack.c.l.b16 %v2595
      %v2808 = vunpack.c.l.b16 %v2596
      %v2809 = vunpack.c.l.b16 %v2597
      %v2810 = vunpack.c.l.b16 %v2598
      %v2811 = vunpack.c.l.b16 %v2599
      %v2812 = vunpack.c.l.b16 %v2600
      %v2813 = vunpack.c.l.b16 %v2601
      %v2814 = vunpack.c.l.b16 %v2602
      %v2815 = vunpack.c.l.b16 %v2603
      %v2816 = vunpack.c.l.b16 %v2604
      %v2817 = vunpack.c.l.b16 %v2605
      %v2818 = vunpack.c.l.b16 %v2606
      %v2819 = vunpack.c.l.b16 %v2607
      %v2820 = vpack.c.b16 %v2805, %v2804
      %v2821 = vpack.c.b16 %v2807, %v2806
      %v2822 = vpack.c.b16 %v2809, %v2808
      %v2823 = vpack.c.b16 %v2811, %v2810
      %v2824 = vpack.c.b16 %v2813, %v2812
      %v2825 = vpack.c.b16 %v2815, %v2814
      %v2826 = vpack.c.b16 %v2817, %v2816
      %v2827 = vpack.c.b16 %v2819, %v2818
      %2836 = vmatprep.subr.bf16.mxu0 0
      %2837 = vmatpush1.bf16.msra.mxu0 %v2827
      %2838 = vmatprep.subr.bf16.mxu0 0
      %2839 = vmatpush1.bf16.msra.mxu0 %v2826
      %2840 = vmatprep.subr.bf16.mxu0 0
      %2841 = vmatpush1.bf16.msra.mxu0 %v2825
      %2842 = vmatprep.subr.bf16.mxu0 0
      %2843 = vmatpush1.bf16.msra.mxu0 %v2824
      %2844 = vmatprep.subr.bf16.mxu0 0
      %2845 = vmatpush1.bf16.msra.mxu0 %v2823
      %2846 = vmatprep.subr.bf16.mxu0 0
      %2847 = vmatpush1.bf16.msra.mxu0 %v2822
      %2848 = vmatprep.subr.bf16.mxu0 0
      %2849 = vmatpush1.bf16.msra.mxu0 %v2821
      %2850 = vmatprep.subr.bf16.mxu0 0
      %2851 = vmatpush1.bf16.msra.mxu0 %v2820
      %2852 = vmatprep.subr.bf16.mxu0 0
      %2853 = vmatpush2.bf16.msra.mxu0 0
      %2854 = vmatprep.subr.bf16.mxu0 0
      %2855 = vmatpush2.bf16.msra.mxu0 0
      %2856 = vmatprep.subr.bf16.mxu0 0
      %2857 = vmatpush2.bf16.msra.mxu0 0
      %2858 = vmatprep.subr.bf16.mxu0 0
      %2859 = vmatpush2.bf16.msra.mxu0 0
      %2860 = vmatprep.subr.bf16.mxu0 0
      %2861 = vmatpush2.bf16.msra.mxu0 0
      %2862 = vmatprep.subr.bf16.mxu0 0
      %2863 = vmatpush2.bf16.msra.mxu0 0
      %2864 = vmatprep.subr.bf16.mxu0 0
      %2865 = vmatpush2.bf16.msra.mxu0 0
      %2866 = vmatprep.subr.bf16.mxu0 0
      %2867 = vmatpush2.bf16.msra.mxu0 0
      %2868 = vmatprep.mubr.bf16.mxu0 0
      %2869 = vmatmul.mubr.bf16.gmra.mxu0 %v2685
      %v2870 = vpop.f32.mrf.mxu0
      %v2871 = vadd.f32 0.0, %v2870
      %v2872 = vpop.f32.mrf.mxu0
      %v2873 = vpop.f32.mrf.mxu0
      %v2874 = vadd.f32 0.0, %v2873
      %v2875 = vpop.f32.mrf.mxu0
      %2876 = vmatprep.mubr.bf16.mxu0 0
      %2877 = vmatmul.mubr.bf16.gmra.mxu0 %v2694
      %v2878 = vpop.f32.mrf.mxu0
      %v2879 = vadd.f32 0.0, %v2878
      %v2880 = vpop.f32.mrf.mxu0
      %v2881 = vpop.f32.mrf.mxu0
      %v2882 = vadd.f32 0.0, %v2881
      %v2883 = vpop.f32.mrf.mxu0
      %2884 = vmatprep.mubr.bf16.mxu0 0
      %2885 = vmatmul.mubr.bf16.gmra.mxu0 %v2703
      %v2886 = vpop.f32.mrf.mxu0
      %v2887 = vadd.f32 0.0, %v2886
      %v2888 = vpop.f32.mrf.mxu0
      %v2889 = vpop.f32.mrf.mxu0
      %v2890 = vadd.f32 0.0, %v2889
      %v2891 = vpop.f32.mrf.mxu0
      %2892 = vmatprep.mubr.bf16.mxu0 0
      %2893 = vmatmul.mubr.bf16.gmra.mxu0 %v2712
      %v2894 = vpop.f32.mrf.mxu0
      %v2895 = vadd.f32 0.0, %v2894
      %v2896 = vpop.f32.mrf.mxu0
      %v2897 = vpop.f32.mrf.mxu0
      %v2898 = vadd.f32 0.0, %v2897
      %v2899 = vpop.f32.mrf.mxu0
      %2900 = vmatprep.mubr.bf16.mxu0 0
      %2901 = vmatmul.mubr.bf16.gmra.mxu0 %v2721
      %v2902 = vpop.f32.mrf.mxu0
      %v2903 = vadd.f32 0.0, %v2902
      %v2904 = vpop.f32.mrf.mxu0
      %v2905 = vpop.f32.mrf.mxu0
      %v2906 = vadd.f32 0.0, %v2905
      %v2907 = vpop.f32.mrf.mxu0
      %2908 = vmatprep.mubr.bf16.mxu0 0
      %2909 = vmatmul.mubr.bf16.gmra.mxu0 %v2730
      %v2910 = vpop.f32.mrf.mxu0
      %v2911 = vadd.f32 0.0, %v2910
      %v2912 = vpop.f32.mrf.mxu0
      %v2913 = vpop.f32.mrf.mxu0
      %v2914 = vadd.f32 0.0, %v2913
      %v2915 = vpop.f32.mrf.mxu0
      %2916 = vmatprep.mubr.bf16.mxu0 0
      %2917 = vmatmul.mubr.bf16.gmra.mxu0 %v2739
      %v2918 = vpop.f32.mrf.mxu0
      %v2919 = vadd.f32 0.0, %v2918
      %v2920 = vpop.f32.mrf.mxu0
      %v2921 = vpop.f32.mrf.mxu0
      %v2922 = vadd.f32 0.0, %v2921
      %v2923 = vpop.f32.mrf.mxu0
      %2924 = vmatprep.mubr.bf16.mxu0 0
      %2925 = vmatmul.mubr.bf16.gmra.mxu0 %v2748
      %v2926 = vpop.f32.mrf.mxu0
      %v2927 = vadd.f32 0.0, %v2926
      %v2928 = vpop.f32.mrf.mxu0
      %v2929 = vpop.f32.mrf.mxu0
      %v2930 = vadd.f32 0.0, %v2929
      %v2931 = vpop.f32.mrf.mxu0
      %2932 = vmatprep.mubr.bf16.mxu0 0
      %2933 = vmatmul.mubr.bf16.gmra.mxu0 %v2757
      %v2934 = vpop.f32.mrf.mxu0
      %v2935 = vadd.f32 0.0, %v2934
      %v2936 = vpop.f32.mrf.mxu0
      %v2937 = vpop.f32.mrf.mxu0
      %v2938 = vadd.f32 0.0, %v2937
      %v2939 = vpop.f32.mrf.mxu0
      %2940 = vmatprep.mubr.bf16.mxu0 0
      %2941 = vmatmul.mubr.bf16.gmra.mxu0 %v2766
      %v2942 = vpop.f32.mrf.mxu0
      %v2943 = vadd.f32 0.0, %v2942
      %v2944 = vpop.f32.mrf.mxu0
      %v2945 = vpop.f32.mrf.mxu0
      %v2946 = vadd.f32 0.0, %v2945
      %v2947 = vpop.f32.mrf.mxu0
      %2948 = vmatprep.mubr.bf16.mxu0 0
      %2949 = vmatmul.mubr.bf16.gmra.mxu0 %v2775
      %v2950 = vpop.f32.mrf.mxu0
      %v2951 = vadd.f32 0.0, %v2950
      %v2952 = vpop.f32.mrf.mxu0
      %v2953 = vpop.f32.mrf.mxu0
      %v2954 = vadd.f32 0.0, %v2953
      %v2955 = vpop.f32.mrf.mxu0
      %2956 = vmatprep.mubr.bf16.mxu0 0
      %2957 = vmatmul.mubr.bf16.gmra.mxu0 %v2774
      %v2958 = vpop.f32.mrf.mxu0
      %v2959 = vadd.f32 0.0, %v2958
      %v2960 = vpop.f32.mrf.mxu0
      %v2961 = vpop.f32.mrf.mxu0
      %v2962 = vpop.f32.mrf.mxu0
      %2963 = vdwg.mxu0
      %v2964 = vadd.f32 %v2544, %v2871
      %v2965 = vadd.f32 %v2545, %v2874
      %v2966 = vadd.f32 %v2546, %v2879
      %v2967 = vadd.f32 %v2547, %v2882
      %v2968 = vadd.f32 %v2548, %v2887
      %v2969 = vadd.f32 %v2549, %v2890
      %v2970 = vadd.f32 %v2550, %v2895
      %v2971 = vadd.f32 %v2551, %v2898
      %v2972 = vadd.f32 %v2552, %v2903
      %v2973 = vadd.f32 %v2553, %v2906
      %v2974 = vadd.f32 %v2554, %v2911
      %v2975 = vadd.f32 %v2555, %v2914
      %v2976 = vadd.f32 %v2556, %v2919
      %v2977 = vadd.f32 %v2557, %v2922
      %v2978 = vadd.f32 %v2558, %v2927
      %v2979 = vadd.f32 %v2559, %v2930
      %v2980 = vadd.f32 %v2560, %v2935
      %v2981 = vadd.f32 %v2561, %v2938
      %v2982 = vadd.f32 %v2562, %v2943
      %v2983 = vadd.f32 %v2563, %v2946
      %v2984 = vadd.f32 %v2564, %v2951
      %v2985 = vadd.f32 %v2565, %v2954
      %v2986 = vadd.f32 %v2566, %v2959
      %v2987 = vld [vmem:[%s455 + $0x10] sm:$0x8]
      %s2988 = scalar_lea.vmem %s1, 512
      %v2989 = vld [vmem:[%s2988] sm:$0xf]
      %v2990 = vld [vmem:[%s2988 + $0x4] sm:$0xf]
      %v2991 = vld [vmem:[%s2988 + $0x8] sm:$0xf]
      %v2992 = vld [vmem:[%s2988 + $0xc] sm:$0xf]
      %v2993 = vld [vmem:[%s2988 + $0x10] sm:$0xf]
      %v2994 = vld [vmem:[%s2988 + $0x14] sm:$0xf]
      %v2995 = vld [vmem:[%s2988 + $0x18] sm:$0xf]
      %v2996 = vld [vmem:[%s2988 + $0x1c] sm:$0xf]
      %v2997 = vld [vmem:[%s2988 + $0x20] sm:$0xf]
      %v2998 = vld [vmem:[%s2988 + $0x24] sm:$0xf]
      %v2999 = vld [vmem:[%s2988 + $0x28] sm:$0xf]
      %v3000 = vld [vmem:[%s2988 + $0x2c] sm:$0xf]
      %v3001 = vld [vmem:[%s2988 + $0x30] sm:$0xf]
      %v3002 = vld [vmem:[%s2988 + $0x34] sm:$0xf]
      %v3003 = vld [vmem:[%s2988 + $0x38] sm:$0xf]
      %v3004 = vld [vmem:[%s2988 + $0x3c] sm:$0xf]
      %v3006 = vunpack.c.l.b16 %v2987
      %v3007 = vpack.c.b16 %v2633, %v3006
      %vm3008 = vcmask 1044480
      %v3009 = vrot.slane %v3007, 3
      %v3010 = vrot.slane %v2657, 3
      %v3011 = vsel %vm3008, %v3009, %v3010
      %v3012 = vrot.slane %v2658, 3
      %v3013 = vsel %vm3008, %v3010, %v3012
      %v3014 = vrot.slane %v2659, 3
      %v3015 = vsel %vm3008, %v3012, %v3014
      %v3016 = vrot.slane %v2660, 3
      %v3017 = vsel %vm3008, %v3014, %v3016
      %v3018 = vrot.slane %v2661, 3
      %v3019 = vsel %vm3008, %v3016, %v3018
      %v3020 = vrot.slane %v2662, 3
      %v3021 = vsel %vm3008, %v3018, %v3020
      %v3022 = vrot.slane %v2663, 3
      %v3023 = vsel %vm3008, %v3020, %v3022
      %v3024 = vrot.slane %v2664, 3
      %v3025 = vsel %vm3008, %v3022, %v3024
      %v3026 = vrot.slane %v2665, 3
      %v3027 = vsel %vm3008, %v3024, %v3026
      %v3028 = vrot.slane %v2666, 3
      %v3029 = vsel %vm3008, %v3026, %v3028
      %v3030 = vrot.slane %v2667, 3
      %v3031 = vsel %vm3008, %v3028, %v3030
      %v3060 = vunpack.c.l.b16 %v2989
      %v3061 = vunpack.c.l.b16 %v2990
      %v3062 = vunpack.c.l.b16 %v2991
      %v3063 = vunpack.c.l.b16 %v2992
      %v3064 = vunpack.c.l.b16 %v2993
      %v3065 = vunpack.c.l.b16 %v2994
      %v3066 = vunpack.c.l.b16 %v2995
      %v3067 = vunpack.c.l.b16 %v2996
      %v3068 = vunpack.c.l.b16 %v2997
      %v3069 = vunpack.c.l.b16 %v2998
      %v3070 = vunpack.c.l.b16 %v2999
      %v3071 = vunpack.c.l.b16 %v3000
      %v3072 = vunpack.c.l.b16 %v3001
      %v3073 = vunpack.c.l.b16 %v3002
      %v3074 = vunpack.c.l.b16 %v3003
      %v3075 = vunpack.c.l.b16 %v3004
      %v3076 = vpack.c.b16 %v3061, %v3060
      %v3077 = vpack.c.b16 %v3063, %v3062
      %v3078 = vpack.c.b16 %v3065, %v3064
      %v3079 = vpack.c.b16 %v3067, %v3066
      %v3080 = vpack.c.b16 %v3069, %v3068
      %v3081 = vpack.c.b16 %v3071, %v3070
      %v3082 = vpack.c.b16 %v3073, %v3072
      %v3083 = vpack.c.b16 %v3075, %v3074
      %3092 = vmatprep.subr.bf16.mxu0 0
      %3093 = vmatpush1.bf16.msra.mxu0 %v3083
      %3094 = vmatprep.subr.bf16.mxu0 0
      %3095 = vmatpush1.bf16.msra.mxu0 %v3082
      %3096 = vmatprep.subr.bf16.mxu0 0
      %3097 = vmatpush1.bf16.msra.mxu0 %v3081
      %3098 = vmatprep.subr.bf16.mxu0 0
      %3099 = vmatpush1.bf16.msra.mxu0 %v3080
      %3100 = vmatprep.subr.bf16.mxu0 0
      %3101 = vmatpush1.bf16.msra.mxu0 %v3079
      %3102 = vmatprep.subr.bf16.mxu0 0
      %3103 = vmatpush1.bf16.msra.mxu0 %v3078
      %3104 = vmatprep.subr.bf16.mxu0 0
      %3105 = vmatpush1.bf16.msra.mxu0 %v3077
      %3106 = vmatprep.subr.bf16.mxu0 0
      %3107 = vmatpush1.bf16.msra.mxu0 %v3076
      %3108 = vmatprep.subr.bf16.mxu0 0
      %3109 = vmatpush2.bf16.msra.mxu0 0
      %3110 = vmatprep.subr.bf16.mxu0 0
      %3111 = vmatpush2.bf16.msra.mxu0 0
      %3112 = vmatprep.subr.bf16.mxu0 0
      %3113 = vmatpush2.bf16.msra.mxu0 0
      %3114 = vmatprep.subr.bf16.mxu0 0
      %3115 = vmatpush2.bf16.msra.mxu0 0
      %3116 = vmatprep.subr.bf16.mxu0 0
      %3117 = vmatpush2.bf16.msra.mxu0 0
      %3118 = vmatprep.subr.bf16.mxu0 0
      %3119 = vmatpush2.bf16.msra.mxu0 0
      %3120 = vmatprep.subr.bf16.mxu0 0
      %3121 = vmatpush2.bf16.msra.mxu0 0
      %3122 = vmatprep.subr.bf16.mxu0 0
      %3123 = vmatpush2.bf16.msra.mxu0 0
      %3124 = vmatprep.mubr.bf16.mxu0 0
      %3125 = vmatmul.mubr.bf16.gmra.mxu0 %v3011
      %v3126 = vpop.f32.mrf.mxu0
      %v3127 = vadd.f32 0.0, %v3126
      %v3128 = vpop.f32.mrf.mxu0
      %v3129 = vpop.f32.mrf.mxu0
      %v3130 = vadd.f32 0.0, %v3129
      %v3131 = vpop.f32.mrf.mxu0
      %3132 = vmatprep.mubr.bf16.mxu0 0
      %3133 = vmatmul.mubr.bf16.gmra.mxu0 %v3013
      %v3134 = vpop.f32.mrf.mxu0
      %v3135 = vadd.f32 0.0, %v3134
      %v3136 = vpop.f32.mrf.mxu0
      %v3137 = vpop.f32.mrf.mxu0
      %v3138 = vadd.f32 0.0, %v3137
      %v3139 = vpop.f32.mrf.mxu0
      %3140 = vmatprep.mubr.bf16.mxu0 0
      %3141 = vmatmul.mubr.bf16.gmra.mxu0 %v3015
      %v3142 = vpop.f32.mrf.mxu0
      %v3143 = vadd.f32 0.0, %v3142
      %v3144 = vpop.f32.mrf.mxu0
      %v3145 = vpop.f32.mrf.mxu0
      %v3146 = vadd.f32 0.0, %v3145
      %v3147 = vpop.f32.mrf.mxu0
      %3148 = vmatprep.mubr.bf16.mxu0 0
      %3149 = vmatmul.mubr.bf16.gmra.mxu0 %v3017
      %v3150 = vpop.f32.mrf.mxu0
      %v3151 = vadd.f32 0.0, %v3150
      %v3152 = vpop.f32.mrf.mxu0
      %v3153 = vpop.f32.mrf.mxu0
      %v3154 = vadd.f32 0.0, %v3153
      %v3155 = vpop.f32.mrf.mxu0
      %3156 = vmatprep.mubr.bf16.mxu0 0
      %3157 = vmatmul.mubr.bf16.gmra.mxu0 %v3019
      %v3158 = vpop.f32.mrf.mxu0
      %v3159 = vadd.f32 0.0, %v3158
      %v3160 = vpop.f32.mrf.mxu0
      %v3161 = vpop.f32.mrf.mxu0
      %v3162 = vadd.f32 0.0, %v3161
      %v3163 = vpop.f32.mrf.mxu0
      %3164 = vmatprep.mubr.bf16.mxu0 0
      %3165 = vmatmul.mubr.bf16.gmra.mxu0 %v3021
      %v3166 = vpop.f32.mrf.mxu0
      %v3167 = vadd.f32 0.0, %v3166
      %v3168 = vpop.f32.mrf.mxu0
      %v3169 = vpop.f32.mrf.mxu0
      %v3170 = vadd.f32 0.0, %v3169
      %v3171 = vpop.f32.mrf.mxu0
      %3172 = vmatprep.mubr.bf16.mxu0 0
      %3173 = vmatmul.mubr.bf16.gmra.mxu0 %v3023
      %v3174 = vpop.f32.mrf.mxu0
      %v3175 = vadd.f32 0.0, %v3174
      %v3176 = vpop.f32.mrf.mxu0
      %v3177 = vpop.f32.mrf.mxu0
      %v3178 = vadd.f32 0.0, %v3177
      %v3179 = vpop.f32.mrf.mxu0
      %3180 = vmatprep.mubr.bf16.mxu0 0
      %3181 = vmatmul.mubr.bf16.gmra.mxu0 %v3025
      %v3182 = vpop.f32.mrf.mxu0
      %v3183 = vadd.f32 0.0, %v3182
      %v3184 = vpop.f32.mrf.mxu0
      %v3185 = vpop.f32.mrf.mxu0
      %v3186 = vadd.f32 0.0, %v3185
      %v3187 = vpop.f32.mrf.mxu0
      %3188 = vmatprep.mubr.bf16.mxu0 0
      %3189 = vmatmul.mubr.bf16.gmra.mxu0 %v3027
      %v3190 = vpop.f32.mrf.mxu0
      %v3191 = vadd.f32 0.0, %v3190
      %v3192 = vpop.f32.mrf.mxu0
      %v3193 = vpop.f32.mrf.mxu0
      %v3194 = vadd.f32 0.0, %v3193
      %v3195 = vpop.f32.mrf.mxu0
      %3196 = vmatprep.mubr.bf16.mxu0 0
      %3197 = vmatmul.mubr.bf16.gmra.mxu0 %v3029
      %v3198 = vpop.f32.mrf.mxu0
      %v3199 = vadd.f32 0.0, %v3198
      %v3200 = vpop.f32.mrf.mxu0
      %v3201 = vpop.f32.mrf.mxu0
      %v3202 = vadd.f32 0.0, %v3201
      %v3203 = vpop.f32.mrf.mxu0
      %3204 = vmatprep.mubr.bf16.mxu0 0
      %3205 = vmatmul.mubr.bf16.gmra.mxu0 %v3031
      %v3206 = vpop.f32.mrf.mxu0
      %v3207 = vadd.f32 0.0, %v3206
      %v3208 = vpop.f32.mrf.mxu0
      %v3209 = vpop.f32.mrf.mxu0
      %v3210 = vadd.f32 0.0, %v3209
      %v3211 = vpop.f32.mrf.mxu0
      %3212 = vmatprep.mubr.bf16.mxu0 0
      %3213 = vmatmul.mubr.bf16.gmra.mxu0 %v3030
      %v3214 = vpop.f32.mrf.mxu0
      %v3215 = vadd.f32 0.0, %v3214
      %v3216 = vpop.f32.mrf.mxu0
      %v3217 = vpop.f32.mrf.mxu0
      %v3218 = vpop.f32.mrf.mxu0
      %3219 = vdwg.mxu0
      %v3220 = vadd.f32 %v2964, %v3127
      %v3221 = vadd.f32 %v2965, %v3130
      %v3222 = vadd.f32 %v2966, %v3135
      %v3223 = vadd.f32 %v2967, %v3138
      %v3224 = vadd.f32 %v2968, %v3143
      %v3225 = vadd.f32 %v2969, %v3146
      %v3226 = vadd.f32 %v2970, %v3151
      %v3227 = vadd.f32 %v2971, %v3154
      %v3228 = vadd.f32 %v2972, %v3159
      %v3229 = vadd.f32 %v2973, %v3162
      %v3230 = vadd.f32 %v2974, %v3167
      %v3231 = vadd.f32 %v2975, %v3170
      %v3232 = vadd.f32 %v2976, %v3175
      %v3233 = vadd.f32 %v2977, %v3178
      %v3234 = vadd.f32 %v2978, %v3183
      %v3235 = vadd.f32 %v2979, %v3186
      %v3236 = vadd.f32 %v2980, %v3191
      %v3237 = vadd.f32 %v2981, %v3194
      %v3238 = vadd.f32 %v2982, %v3199
      %v3239 = vadd.f32 %v2983, %v3202
      %v3240 = vadd.f32 %v2984, %v3207
      %v3241 = vadd.f32 %v2985, %v3210
      %v3242 = vadd.f32 %v2986, %v3215
      %v3243 = vlaneseq
      %v3244 = vshrl.u32 %v3243, 7
      %v3245 = vadd.s32 %v3244, 8
      %v3246 = vadd.s32 %v3244, 16
      %v3247 = vadd.s32 %v3244, 24
      %v3248 = vadd.s32 %v3244, 32
      %v3249 = vadd.s32 %v3244, 40
      %v3250 = vadd.s32 %v3244, 48
      %v3251 = vadd.s32 %v3244, 56
      %v3252 = vadd.s32 %v3244, 64
      %v3253 = vadd.s32 %v3244, 72
      %v3254 = vadd.s32 %v3244, 80
      %v3255 = vadd.s32 %v3244, 88
      %v3256 = vadd.s32 %v3244, 96
      %v3257 = vadd.s32 %v3244, 104
      %v3258 = vadd.s32 %v3244, 112
      %v3259 = vadd.s32 %v3244, 120
      %v3260 = vadd.s32 %v3244, 128
      %v3261 = vadd.s32 %v3244, 136
      %v3262 = vadd.s32 %v3244, 144
      %v3263 = vadd.s32 %v3244, 152
      %v3264 = vadd.s32 %v3244, 160
      %v3265 = vadd.s32 %v3244, 168
      %v3266 = vadd.s32 %v3244, 176
      %vm3267 = vcmp.lt.s32.totalorder %v3244, 0
      %v3268 = vsub.s32 0, %v3244
      %v3269 = vsel %vm3267, %v3268, %v3244
      %v3270 = vmul.u32.u64.compose %v3269, 3817748708
      %v3271 = vextract.low.u32 %v3270
      %v3272 = vextract.high.u32 %v3270
      %v3273 = vshrl.u32 %v3272, 4
      %v3274 = vmul.u32 %v3273, 18
      %v3275 = vsub.s32 %v3269, %v3274
      %v3276 = vsub.s32 0, %v3275
      %v3277 = vsel %vm3267, %v3276, %v3275
      %vm3278 = vcmp.lt.s32.totalorder %v3245, 0
      %v3279 = vsub.s32 0, %v3245
      %v3280 = vsel %vm3278, %v3279, %v3245
      %v3281 = vmul.u32.u64.compose %v3280, 3817748708
      %v3282 = vextract.low.u32 %v3281
      %v3283 = vextract.high.u32 %v3281
      %v3284 = vshrl.u32 %v3283, 4
      %v3285 = vmul.u32 %v3284, 18
      %v3286 = vsub.s32 %v3280, %v3285
      %v3287 = vsub.s32 0, %v3286
      %v3288 = vsel %vm3278, %v3287, %v3286
      %vm3289 = vcmp.lt.s32.totalorder %v3246, 0
      %v3290 = vsub.s32 0, %v3246
      %v3291 = vsel %vm3289, %v3290, %v3246
      %v3292 = vmul.u32.u64.compose %v3291, 3817748708
      %v3293 = vextract.low.u32 %v3292
      %v3294 = vextract.high.u32 %v3292
      %v3295 = vshrl.u32 %v3294, 4
      %v3296 = vmul.u32 %v3295, 18
      %v3297 = vsub.s32 %v3291, %v3296
      %v3298 = vsub.s32 0, %v3297
      %v3299 = vsel %vm3289, %v3298, %v3297
      %vm3300 = vcmp.lt.s32.totalorder %v3247, 0
      %v3301 = vsub.s32 0, %v3247
      %v3302 = vsel %vm3300, %v3301, %v3247
      %v3303 = vmul.u32.u64.compose %v3302, 3817748708
      %v3304 = vextract.low.u32 %v3303
      %v3305 = vextract.high.u32 %v3303
      %v3306 = vshrl.u32 %v3305, 4
      %v3307 = vmul.u32 %v3306, 18
      %v3308 = vsub.s32 %v3302, %v3307
      %v3309 = vsub.s32 0, %v3308
      %v3310 = vsel %vm3300, %v3309, %v3308
      %vm3311 = vcmp.lt.s32.totalorder %v3248, 0
      %v3312 = vsub.s32 0, %v3248
      %v3313 = vsel %vm3311, %v3312, %v3248
      %v3314 = vmul.u32.u64.compose %v3313, 3817748708
      %v3315 = vextract.low.u32 %v3314
      %v3316 = vextract.high.u32 %v3314
      %v3317 = vshrl.u32 %v3316, 4
      %v3318 = vmul.u32 %v3317, 18
      %v3319 = vsub.s32 %v3313, %v3318
      %v3320 = vsub.s32 0, %v3319
      %v3321 = vsel %vm3311, %v3320, %v3319
      %vm3322 = vcmp.lt.s32.totalorder %v3249, 0
      %v3323 = vsub.s32 0, %v3249
      %v3324 = vsel %vm3322, %v3323, %v3249
      %v3325 = vmul.u32.u64.compose %v3324, 3817748708
      %v3326 = vextract.low.u32 %v3325
      %v3327 = vextract.high.u32 %v3325
      %v3328 = vshrl.u32 %v3327, 4
      %v3329 = vmul.u32 %v3328, 18
      %v3330 = vsub.s32 %v3324, %v3329
      %v3331 = vsub.s32 0, %v3330
      %v3332 = vsel %vm3322, %v3331, %v3330
      %vm3333 = vcmp.lt.s32.totalorder %v3250, 0
      %v3334 = vsub.s32 0, %v3250
      %v3335 = vsel %vm3333, %v3334, %v3250
      %v3336 = vmul.u32.u64.compose %v3335, 3817748708
      %v3337 = vextract.low.u32 %v3336
      %v3338 = vextract.high.u32 %v3336
      %v3339 = vshrl.u32 %v3338, 4
      %v3340 = vmul.u32 %v3339, 18
      %v3341 = vsub.s32 %v3335, %v3340
      %v3342 = vsub.s32 0, %v3341
      %v3343 = vsel %vm3333, %v3342, %v3341
      %vm3344 = vcmp.lt.s32.totalorder %v3251, 0
      %v3345 = vsub.s32 0, %v3251
      %v3346 = vsel %vm3344, %v3345, %v3251
      %v3347 = vmul.u32.u64.compose %v3346, 3817748708
      %v3348 = vextract.low.u32 %v3347
      %v3349 = vextract.high.u32 %v3347
      %v3350 = vshrl.u32 %v3349, 4
      %v3351 = vmul.u32 %v3350, 18
      %v3352 = vsub.s32 %v3346, %v3351
      %v3353 = vsub.s32 0, %v3352
      %v3354 = vsel %vm3344, %v3353, %v3352
      %vm3355 = vcmp.lt.s32.totalorder %v3252, 0
      %v3356 = vsub.s32 0, %v3252
      %v3357 = vsel %vm3355, %v3356, %v3252
      %v3358 = vmul.u32.u64.compose %v3357, 3817748708
      %v3359 = vextract.low.u32 %v3358
      %v3360 = vextract.high.u32 %v3358
      %v3361 = vshrl.u32 %v3360, 4
      %v3362 = vmul.u32 %v3361, 18
      %v3363 = vsub.s32 %v3357, %v3362
      %v3364 = vsub.s32 0, %v3363
      %v3365 = vsel %vm3355, %v3364, %v3363
      %vm3366 = vcmp.lt.s32.totalorder %v3253, 0
      %v3367 = vsub.s32 0, %v3253
      %v3368 = vsel %vm3366, %v3367, %v3253
      %v3369 = vmul.u32.u64.compose %v3368, 3817748708
      %v3370 = vextract.low.u32 %v3369
      %v3371 = vextract.high.u32 %v3369
      %v3372 = vshrl.u32 %v3371, 4
      %v3373 = vmul.u32 %v3372, 18
      %v3374 = vsub.s32 %v3368, %v3373
      %v3375 = vsub.s32 0, %v3374
      %v3376 = vsel %vm3366, %v3375, %v3374
      %vm3377 = vcmp.lt.s32.totalorder %v3254, 0
      %v3378 = vsub.s32 0, %v3254
      %v3379 = vsel %vm3377, %v3378, %v3254
      %v3380 = vmul.u32.u64.compose %v3379, 3817748708
      %v3381 = vextract.low.u32 %v3380
      %v3382 = vextract.high.u32 %v3380
      %v3383 = vshrl.u32 %v3382, 4
      %v3384 = vmul.u32 %v3383, 18
      %v3385 = vsub.s32 %v3379, %v3384
      %v3386 = vsub.s32 0, %v3385
      %v3387 = vsel %vm3377, %v3386, %v3385
      %vm3388 = vcmp.lt.s32.totalorder %v3255, 0
      %v3389 = vsub.s32 0, %v3255
      %v3390 = vsel %vm3388, %v3389, %v3255
      %v3391 = vmul.u32.u64.compose %v3390, 3817748708
      %v3392 = vextract.low.u32 %v3391
      %v3393 = vextract.high.u32 %v3391
      %v3394 = vshrl.u32 %v3393, 4
      %v3395 = vmul.u32 %v3394, 18
      %v3396 = vsub.s32 %v3390, %v3395
      %v3397 = vsub.s32 0, %v3396
      %v3398 = vsel %vm3388, %v3397, %v3396
      %vm3399 = vcmp.lt.s32.totalorder %v3256, 0
      %v3400 = vsub.s32 0, %v3256
      %v3401 = vsel %vm3399, %v3400, %v3256
      %v3402 = vmul.u32.u64.compose %v3401, 3817748708
      %v3403 = vextract.low.u32 %v3402
      %v3404 = vextract.high.u32 %v3402
      %v3405 = vshrl.u32 %v3404, 4
      %v3406 = vmul.u32 %v3405, 18
      %v3407 = vsub.s32 %v3401, %v3406
      %v3408 = vsub.s32 0, %v3407
      %v3409 = vsel %vm3399, %v3408, %v3407
      %vm3410 = vcmp.lt.s32.totalorder %v3257, 0
      %v3411 = vsub.s32 0, %v3257
      %v3412 = vsel %vm3410, %v3411, %v3257
      %v3413 = vmul.u32.u64.compose %v3412, 3817748708
      %v3414 = vextract.low.u32 %v3413
      %v3415 = vextract.high.u32 %v3413
      %v3416 = vshrl.u32 %v3415, 4
      %v3417 = vmul.u32 %v3416, 18
      %v3418 = vsub.s32 %v3412, %v3417
      %v3419 = vsub.s32 0, %v3418
      %v3420 = vsel %vm3410, %v3419, %v3418
      %vm3421 = vcmp.lt.s32.totalorder %v3258, 0
      %v3422 = vsub.s32 0, %v3258
      %v3423 = vsel %vm3421, %v3422, %v3258
      %v3424 = vmul.u32.u64.compose %v3423, 3817748708
      %v3425 = vextract.low.u32 %v3424
      %v3426 = vextract.high.u32 %v3424
      %v3427 = vshrl.u32 %v3426, 4
      %v3428 = vmul.u32 %v3427, 18
      %v3429 = vsub.s32 %v3423, %v3428
      %v3430 = vsub.s32 0, %v3429
      %v3431 = vsel %vm3421, %v3430, %v3429
      %vm3432 = vcmp.lt.s32.totalorder %v3259, 0
      %v3433 = vsub.s32 0, %v3259
      %v3434 = vsel %vm3432, %v3433, %v3259
      %v3435 = vmul.u32.u64.compose %v3434, 3817748708
      %v3436 = vextract.low.u32 %v3435
      %v3437 = vextract.high.u32 %v3435
      %v3438 = vshrl.u32 %v3437, 4
      %v3439 = vmul.u32 %v3438, 18
      %v3440 = vsub.s32 %v3434, %v3439
      %v3441 = vsub.s32 0, %v3440
      %v3442 = vsel %vm3432, %v3441, %v3440
      %vm3443 = vcmp.lt.s32.totalorder %v3260, 0
      %v3444 = vsub.s32 0, %v3260
      %v3445 = vsel %vm3443, %v3444, %v3260
      %v3446 = vmul.u32.u64.compose %v3445, 3817748708
      %v3447 = vextract.low.u32 %v3446
      %v3448 = vextract.high.u32 %v3446
      %v3449 = vshrl.u32 %v3448, 4
      %v3450 = vmul.u32 %v3449, 18
      %v3451 = vsub.s32 %v3445, %v3450
      %v3452 = vsub.s32 0, %v3451
      %v3453 = vsel %vm3443, %v3452, %v3451
      %vm3454 = vcmp.lt.s32.totalorder %v3261, 0
      %v3455 = vsub.s32 0, %v3261
      %v3456 = vsel %vm3454, %v3455, %v3261
      %v3457 = vmul.u32.u64.compose %v3456, 3817748708
      %v3458 = vextract.low.u32 %v3457
      %v3459 = vextract.high.u32 %v3457
      %v3460 = vshrl.u32 %v3459, 4
      %v3461 = vmul.u32 %v3460, 18
      %v3462 = vsub.s32 %v3456, %v3461
      %v3463 = vsub.s32 0, %v3462
      %v3464 = vsel %vm3454, %v3463, %v3462
      %vm3465 = vcmp.lt.s32.totalorder %v3262, 0
      %v3466 = vsub.s32 0, %v3262
      %v3467 = vsel %vm3465, %v3466, %v3262
      %v3468 = vmul.u32.u64.compose %v3467, 3817748708
      %v3469 = vextract.low.u32 %v3468
      %v3470 = vextract.high.u32 %v3468
      %v3471 = vshrl.u32 %v3470, 4
      %v3472 = vmul.u32 %v3471, 18
      %v3473 = vsub.s32 %v3467, %v3472
      %v3474 = vsub.s32 0, %v3473
      %v3475 = vsel %vm3465, %v3474, %v3473
      %vm3476 = vcmp.lt.s32.totalorder %v3263, 0
      %v3477 = vsub.s32 0, %v3263
      %v3478 = vsel %vm3476, %v3477, %v3263
      %v3479 = vmul.u32.u64.compose %v3478, 3817748708
      %v3480 = vextract.low.u32 %v3479
      %v3481 = vextract.high.u32 %v3479
      %v3482 = vshrl.u32 %v3481, 4
      %v3483 = vmul.u32 %v3482, 18
      %v3484 = vsub.s32 %v3478, %v3483
      %v3485 = vsub.s32 0, %v3484
      %v3486 = vsel %vm3476, %v3485, %v3484
      %vm3487 = vcmp.lt.s32.totalorder %v3264, 0
      %v3488 = vsub.s32 0, %v3264
      %v3489 = vsel %vm3487, %v3488, %v3264
      %v3490 = vmul.u32.u64.compose %v3489, 3817748708
      %v3491 = vextract.low.u32 %v3490
      %v3492 = vextract.high.u32 %v3490
      %v3493 = vshrl.u32 %v3492, 4
      %v3494 = vmul.u32 %v3493, 18
      %v3495 = vsub.s32 %v3489, %v3494
      %v3496 = vsub.s32 0, %v3495
      %v3497 = vsel %vm3487, %v3496, %v3495
      %vm3498 = vcmp.lt.s32.totalorder %v3265, 0
      %v3499 = vsub.s32 0, %v3265
      %v3500 = vsel %vm3498, %v3499, %v3265
      %v3501 = vmul.u32.u64.compose %v3500, 3817748708
      %v3502 = vextract.low.u32 %v3501
      %v3503 = vextract.high.u32 %v3501
      %v3504 = vshrl.u32 %v3503, 4
      %v3505 = vmul.u32 %v3504, 18
      %v3506 = vsub.s32 %v3500, %v3505
      %v3507 = vsub.s32 0, %v3506
      %v3508 = vsel %vm3498, %v3507, %v3506
      %vm3509 = vcmp.lt.s32.totalorder %v3266, 0
      %v3510 = vsub.s32 0, %v3266
      %v3511 = vsel %vm3509, %v3510, %v3266
      %v3512 = vmul.u32.u64.compose %v3511, 3817748708
      %v3513 = vextract.low.u32 %v3512
      %v3514 = vextract.high.u32 %v3512
      %v3515 = vshrl.u32 %v3514, 4
      %v3516 = vmul.u32 %v3515, 18
      %v3517 = vsub.s32 %v3511, %v3516
      %v3518 = vsub.s32 0, %v3517
      %v3519 = vsel %vm3509, %v3518, %v3517
      %vm3520 = vcmp.ne.s32.totalorder %v3277, 0
      %vm3521 = vcmp.ne.s32.totalorder %v3288, 0
      %vm3522 = vcmp.ne.s32.totalorder %v3299, 0
      %vm3523 = vcmp.ne.s32.totalorder %v3310, 0
      %vm3524 = vcmp.ne.s32.totalorder %v3321, 0
      %vm3525 = vcmp.ne.s32.totalorder %v3332, 0
      %vm3526 = vcmp.ne.s32.totalorder %v3343, 0
      %vm3527 = vcmp.ne.s32.totalorder %v3354, 0
      %vm3528 = vcmp.ne.s32.totalorder %v3365, 0
      %vm3529 = vcmp.ne.s32.totalorder %v3376, 0
      %vm3530 = vcmp.ne.s32.totalorder %v3387, 0
      %vm3531 = vcmp.ne.s32.totalorder %v3398, 0
      %vm3532 = vcmp.ne.s32.totalorder %v3409, 0
      %vm3533 = vcmp.ne.s32.totalorder %v3420, 0
      %vm3534 = vcmp.ne.s32.totalorder %v3431, 0
      %vm3535 = vcmp.ne.s32.totalorder %v3442, 0
      %vm3536 = vcmp.ne.s32.totalorder %v3453, 0
      %vm3537 = vcmp.ne.s32.totalorder %v3464, 0
      %vm3538 = vcmp.ne.s32.totalorder %v3475, 0
      %vm3539 = vcmp.ne.s32.totalorder %v3486, 0
      %vm3540 = vcmp.ne.s32.totalorder %v3497, 0
      %vm3541 = vcmp.ne.s32.totalorder %v3508, 0
      %vm3542 = vcmp.ne.s32.totalorder %v3519, 0
      %vm3543 = vcmp.lt.s32.totalorder %v3277, 0
      %vm3544 = vcmp.lt.s32.totalorder %v3288, 0
      %vm3545 = vcmp.lt.s32.totalorder %v3299, 0
      %vm3546 = vcmp.lt.s32.totalorder %v3310, 0
      %vm3547 = vcmp.lt.s32.totalorder %v3321, 0
      %vm3548 = vcmp.lt.s32.totalorder %v3332, 0
      %vm3549 = vcmp.lt.s32.totalorder %v3343, 0
      %vm3550 = vcmp.lt.s32.totalorder %v3354, 0
      %vm3551 = vcmp.lt.s32.totalorder %v3365, 0
      %vm3552 = vcmp.lt.s32.totalorder %v3376, 0
      %vm3553 = vcmp.lt.s32.totalorder %v3387, 0
      %vm3554 = vcmp.lt.s32.totalorder %v3398, 0
      %vm3555 = vcmp.lt.s32.totalorder %v3409, 0
      %vm3556 = vcmp.lt.s32.totalorder %v3420, 0
      %vm3557 = vcmp.lt.s32.totalorder %v3431, 0
      %vm3558 = vcmp.lt.s32.totalorder %v3442, 0
      %vm3559 = vcmp.lt.s32.totalorder %v3453, 0
      %vm3560 = vcmp.lt.s32.totalorder %v3464, 0
      %vm3561 = vcmp.lt.s32.totalorder %v3475, 0
      %vm3562 = vcmp.lt.s32.totalorder %v3486, 0
      %vm3563 = vcmp.lt.s32.totalorder %v3497, 0
      %vm3564 = vcmp.lt.s32.totalorder %v3508, 0
      %vm3565 = vcmp.lt.s32.totalorder %v3519, 0
      %vm3566 = vmand %vm3543, %vm3520
      %vm3567 = vmand %vm3544, %vm3521
      %vm3568 = vmand %vm3545, %vm3522
      %vm3569 = vmand %vm3546, %vm3523
      %vm3570 = vmand %vm3547, %vm3524
      %vm3571 = vmand %vm3548, %vm3525
      %vm3572 = vmand %vm3549, %vm3526
      %vm3573 = vmand %vm3550, %vm3527
      %vm3574 = vmand %vm3551, %vm3528
      %vm3575 = vmand %vm3552, %vm3529
      %vm3576 = vmand %vm3553, %vm3530
      %vm3577 = vmand %vm3554, %vm3531
      %vm3578 = vmand %vm3555, %vm3532
      %vm3579 = vmand %vm3556, %vm3533
      %vm3580 = vmand %vm3557, %vm3534
      %vm3581 = vmand %vm3558, %vm3535
      %vm3582 = vmand %vm3559, %vm3536
      %vm3583 = vmand %vm3560, %vm3537
      %vm3584 = vmand %vm3561, %vm3538
      %vm3585 = vmand %vm3562, %vm3539
      %vm3586 = vmand %vm3563, %vm3540
      %vm3587 = vmand %vm3564, %vm3541
      %vm3588 = vmand %vm3565, %vm3542
      %v3589 = vadd.s32 %v3277, 18
      %v3590 = vadd.s32 %v3288, 18
      %v3591 = vadd.s32 %v3299, 18
      %v3592 = vadd.s32 %v3310, 18
      %v3593 = vadd.s32 %v3321, 18
      %v3594 = vadd.s32 %v3332, 18
      %v3595 = vadd.s32 %v3343, 18
      %v3596 = vadd.s32 %v3354, 18
      %v3597 = vadd.s32 %v3365, 18
      %v3598 = vadd.s32 %v3376, 18
      %v3599 = vadd.s32 %v3387, 18
      %v3600 = vadd.s32 %v3398, 18
      %v3601 = vadd.s32 %v3409, 18
      %v3602 = vadd.s32 %v3420, 18
      %v3603 = vadd.s32 %v3431, 18
      %v3604 = vadd.s32 %v3442, 18
      %v3605 = vadd.s32 %v3453, 18
      %v3606 = vadd.s32 %v3464, 18
      %v3607 = vadd.s32 %v3475, 18
      %v3608 = vadd.s32 %v3486, 18
      %v3609 = vadd.s32 %v3497, 18
      %v3610 = vadd.s32 %v3508, 18
      %v3611 = vadd.s32 %v3519, 18
      %v3612 = vsel %vm3566, %v3589, %v3277
      %v3613 = vsel %vm3567, %v3590, %v3288
      %v3614 = vsel %vm3568, %v3591, %v3299
      %v3615 = vsel %vm3569, %v3592, %v3310
      %v3616 = vsel %vm3570, %v3593, %v3321
      %v3617 = vsel %vm3571, %v3594, %v3332
      %v3618 = vsel %vm3572, %v3595, %v3343
      %v3619 = vsel %vm3573, %v3596, %v3354
      %v3620 = vsel %vm3574, %v3597, %v3365
      %v3621 = vsel %vm3575, %v3598, %v3376
      %v3622 = vsel %vm3576, %v3599, %v3387
      %v3623 = vsel %vm3577, %v3600, %v3398
      %v3624 = vsel %vm3578, %v3601, %v3409
      %v3625 = vsel %vm3579, %v3602, %v3420
      %v3626 = vsel %vm3580, %v3603, %v3431
      %v3627 = vsel %vm3581, %v3604, %v3442
      %v3628 = vsel %vm3582, %v3605, %v3453
      %v3629 = vsel %vm3583, %v3606, %v3464
      %v3630 = vsel %vm3584, %v3607, %v3475
      %v3631 = vsel %vm3585, %v3608, %v3486
      %v3632 = vsel %vm3586, %v3609, %v3497
      %v3633 = vsel %vm3587, %v3610, %v3508
      %v3634 = vsel %vm3588, %v3611, %v3519
      %v3635 = vld [vmem:[%s2] sm:$0x1]
      %v3637 = vlaneseq
      %v3638 = vshrl.u32 %v3637, 7
      %v3639 = vsub.s32 0, %v3638
      %v3640 = vrot.slane %v3635, %v3639
      %v3642 = vmul.f32 %v3220, %v3640
      %v3643 = vmul.f32 %v3221, %v3640
      %v3644 = vmul.f32 %v3222, %v3640
      %v3645 = vmul.f32 %v3223, %v3640
      %v3646 = vmul.f32 %v3224, %v3640
      %v3647 = vmul.f32 %v3225, %v3640
      %v3648 = vmul.f32 %v3226, %v3640
      %v3649 = vmul.f32 %v3227, %v3640
      %v3650 = vmul.f32 %v3228, %v3640
      %v3651 = vmul.f32 %v3229, %v3640
      %v3652 = vmul.f32 %v3230, %v3640
      %v3653 = vmul.f32 %v3231, %v3640
      %v3654 = vmul.f32 %v3232, %v3640
      %v3655 = vmul.f32 %v3233, %v3640
      %v3656 = vmul.f32 %v3234, %v3640
      %v3657 = vmul.f32 %v3235, %v3640
      %v3658 = vmul.f32 %v3236, %v3640
      %v3659 = vmul.f32 %v3237, %v3640
      %v3660 = vmul.f32 %v3238, %v3640
      %v3661 = vmul.f32 %v3239, %v3640
      %v3662 = vmul.f32 %v3240, %v3640
      %v3663 = vmul.f32 %v3241, %v3640
      %v3664 = vmul.f32 %v3242, %v3640
      %v3665 = vld [vmem:[%s3] sm:$0x1]
      %v3667 = vlaneseq
      %v3668 = vshrl.u32 %v3667, 7
      %v3669 = vsub.s32 0, %v3668
      %v3670 = vrot.slane %v3665, %v3669
      %v3672 = vadd.f32 %v3642, %v3670
      %v3673 = vadd.f32 %v3643, %v3670
      %v3674 = vadd.f32 %v3644, %v3670
      %v3675 = vadd.f32 %v3645, %v3670
      %v3676 = vadd.f32 %v3646, %v3670
      %v3677 = vadd.f32 %v3647, %v3670
      %v3678 = vadd.f32 %v3648, %v3670
      %v3679 = vadd.f32 %v3649, %v3670
      %v3680 = vadd.f32 %v3650, %v3670
      %v3681 = vadd.f32 %v3651, %v3670
      %v3682 = vadd.f32 %v3652, %v3670
      %v3683 = vadd.f32 %v3653, %v3670
      %v3684 = vadd.f32 %v3654, %v3670
      %v3685 = vadd.f32 %v3655, %v3670
      %v3686 = vadd.f32 %v3656, %v3670
      %v3687 = vadd.f32 %v3657, %v3670
      %v3688 = vadd.f32 %v3658, %v3670
      %v3689 = vadd.f32 %v3659, %v3670
      %v3690 = vadd.f32 %v3660, %v3670
      %v3691 = vadd.f32 %v3661, %v3670
      %v3692 = vadd.f32 %v3662, %v3670
      %v3693 = vadd.f32 %v3663, %v3670
      %v3694 = vadd.f32 %v3664, %v3670
      %v3695 = vmax.f32 %v3672, 0.0
      %v3696 = vmax.f32 %v3673, 0.0
      %v3697 = vmax.f32 %v3674, 0.0
      %v3698 = vmax.f32 %v3675, 0.0
      %v3699 = vmax.f32 %v3676, 0.0
      %v3700 = vmax.f32 %v3677, 0.0
      %v3701 = vmax.f32 %v3678, 0.0
      %v3702 = vmax.f32 %v3679, 0.0
      %v3703 = vmax.f32 %v3680, 0.0
      %v3704 = vmax.f32 %v3681, 0.0
      %v3705 = vmax.f32 %v3682, 0.0
      %v3706 = vmax.f32 %v3683, 0.0
      %v3707 = vmax.f32 %v3684, 0.0
      %v3708 = vmax.f32 %v3685, 0.0
      %v3709 = vmax.f32 %v3686, 0.0
      %v3710 = vmax.f32 %v3687, 0.0
      %v3711 = vmax.f32 %v3688, 0.0
      %v3712 = vmax.f32 %v3689, 0.0
      %v3713 = vmax.f32 %v3690, 0.0
      %v3714 = vmax.f32 %v3691, 0.0
      %v3715 = vmax.f32 %v3692, 0.0
      %v3716 = vmax.f32 %v3693, 0.0
      %v3717 = vmax.f32 %v3694, 0.0
      %vm3718 = vcmp.lt.s32.totalorder %v3612, 16
      %vm3719 = vcmp.lt.s32.totalorder %v3613, 16
      %vm3720 = vcmp.lt.s32.totalorder %v3614, 16
      %vm3721 = vcmp.lt.s32.totalorder %v3615, 16
      %vm3722 = vcmp.lt.s32.totalorder %v3616, 16
      %vm3723 = vcmp.lt.s32.totalorder %v3617, 16
      %vm3724 = vcmp.lt.s32.totalorder %v3618, 16
      %vm3725 = vcmp.lt.s32.totalorder %v3619, 16
      %vm3726 = vcmp.lt.s32.totalorder %v3620, 16
      %vm3727 = vcmp.lt.s32.totalorder %v3621, 16
      %vm3728 = vcmp.lt.s32.totalorder %v3622, 16
      %vm3729 = vcmp.lt.s32.totalorder %v3623, 16
      %vm3730 = vcmp.lt.s32.totalorder %v3624, 16
      %vm3731 = vcmp.lt.s32.totalorder %v3625, 16
      %vm3732 = vcmp.lt.s32.totalorder %v3626, 16
      %vm3733 = vcmp.lt.s32.totalorder %v3627, 16
      %vm3734 = vcmp.lt.s32.totalorder %v3628, 16
      %vm3735 = vcmp.lt.s32.totalorder %v3629, 16
      %vm3736 = vcmp.lt.s32.totalorder %v3630, 16
      %vm3737 = vcmp.lt.s32.totalorder %v3631, 16
      %vm3738 = vcmp.lt.s32.totalorder %v3632, 16
      %vm3739 = vcmp.lt.s32.totalorder %v3633, 16
      %vm3740 = vcmp.lt.s32.totalorder %v3634, 16
      %v3741 = vsel %vm3718, 1, 0
      %v3742 = vsel %vm3719, 1, 0
      %v3743 = vsel %vm3720, 1, 0
      %v3744 = vsel %vm3721, 1, 0
      %v3745 = vsel %vm3722, 1, 0
      %v3746 = vsel %vm3723, 1, 0
      %v3747 = vsel %vm3724, 1, 0
      %v3748 = vsel %vm3725, 1, 0
      %v3749 = vsel %vm3726, 1, 0
      %v3750 = vsel %vm3727, 1, 0
      %v3751 = vsel %vm3728, 1, 0
      %v3752 = vsel %vm3729, 1, 0
      %v3753 = vsel %vm3730, 1, 0
      %v3754 = vsel %vm3731, 1, 0
      %v3755 = vsel %vm3732, 1, 0
      %v3756 = vsel %vm3733, 1, 0
      %v3757 = vsel %vm3734, 1, 0
      %v3758 = vsel %vm3735, 1, 0
      %v3759 = vsel %vm3736, 1, 0
      %v3760 = vsel %vm3737, 1, 0
      %v3761 = vsel %vm3738, 1, 0
      %v3762 = vsel %vm3739, 1, 0
      %v3763 = vsel %vm3740, 1, 0
      %vm3764 = vcmp.eq.s32.totalorder %v3741, 1
      %vm3765 = vcmp.eq.s32.totalorder %v3742, 1
      %vm3766 = vcmp.eq.s32.totalorder %v3743, 1
      %vm3767 = vcmp.eq.s32.totalorder %v3744, 1
      %vm3768 = vcmp.eq.s32.totalorder %v3745, 1
      %vm3769 = vcmp.eq.s32.totalorder %v3746, 1
      %vm3770 = vcmp.eq.s32.totalorder %v3747, 1
      %vm3771 = vcmp.eq.s32.totalorder %v3748, 1
      %vm3772 = vcmp.eq.s32.totalorder %v3749, 1
      %vm3773 = vcmp.eq.s32.totalorder %v3750, 1
      %vm3774 = vcmp.eq.s32.totalorder %v3751, 1
      %vm3775 = vcmp.eq.s32.totalorder %v3752, 1
      %vm3776 = vcmp.eq.s32.totalorder %v3753, 1
      %vm3777 = vcmp.eq.s32.totalorder %v3754, 1
      %vm3778 = vcmp.eq.s32.totalorder %v3755, 1
      %vm3779 = vcmp.eq.s32.totalorder %v3756, 1
      %vm3780 = vcmp.eq.s32.totalorder %v3757, 1
      %vm3781 = vcmp.eq.s32.totalorder %v3758, 1
      %vm3782 = vcmp.eq.s32.totalorder %v3759, 1
      %vm3783 = vcmp.eq.s32.totalorder %v3760, 1
      %vm3784 = vcmp.eq.s32.totalorder %v3761, 1
      %vm3785 = vcmp.eq.s32.totalorder %v3762, 1
      %vm3786 = vcmp.eq.s32.totalorder %v3763, 1
      %v3787 = vsel %vm3764, %v3695, 0.0
      %v3788 = vsel %vm3765, %v3696, 0.0
      %v3789 = vsel %vm3766, %v3697, 0.0
      %v3790 = vsel %vm3767, %v3698, 0.0
      %v3791 = vsel %vm3768, %v3699, 0.0
      %v3792 = vsel %vm3769, %v3700, 0.0
      %v3793 = vsel %vm3770, %v3701, 0.0
      %v3794 = vsel %vm3771, %v3702, 0.0
      %v3795 = vsel %vm3772, %v3703, 0.0
      %v3796 = vsel %vm3773, %v3704, 0.0
      %v3797 = vsel %vm3774, %v3705, 0.0
      %v3798 = vsel %vm3775, %v3706, 0.0
      %v3799 = vsel %vm3776, %v3707, 0.0
      %v3800 = vsel %vm3777, %v3708, 0.0
      %v3801 = vsel %vm3778, %v3709, 0.0
      %v3802 = vsel %vm3779, %v3710, 0.0
      %v3803 = vsel %vm3780, %v3711, 0.0
      %v3804 = vsel %vm3781, %v3712, 0.0
      %v3805 = vsel %vm3782, %v3713, 0.0
      %v3806 = vsel %vm3783, %v3714, 0.0
      %v3807 = vsel %vm3784, %v3715, 0.0
      %v3808 = vsel %vm3785, %v3716, 0.0
      %v3809 = vsel %vm3786, %v3717, 0.0
      %v3810 = vpack.c.bf16 %v3788, %v3787
      %v3811 = vpack.c.bf16 %v3790, %v3789
      %v3812 = vpack.c.bf16 %v3792, %v3791
      %v3813 = vpack.c.bf16 %v3794, %v3793
      %v3814 = vpack.c.bf16 %v3796, %v3795
      %v3815 = vpack.c.bf16 %v3798, %v3797
      %v3816 = vpack.c.bf16 %v3800, %v3799
      %v3817 = vpack.c.bf16 %v3802, %v3801
      %v3818 = vpack.c.bf16 %v3804, %v3803
      %v3819 = vpack.c.bf16 %v3806, %v3805
      %v3820 = vpack.c.bf16 %v3808, %v3807
      %v3821 = vpack.c.bf16 %v3809, %v3809
      %3822 = vst [vmem:[#allocation3] sm:$0xf] 0
      %3823 = vst [vmem:[#allocation3 + $0x4] sm:$0xf] 0
      %v3836 = vunpack.c.l.b16 %v3810
      %v3837 = vunpack.c.h.b16 %v3810
      %v3838 = vunpack.c.l.b16 %v3811
      %v3839 = vunpack.c.h.b16 %v3811
      %v3840 = vunpack.c.l.b16 %v3812
      %v3841 = vunpack.c.h.b16 %v3812
      %v3842 = vunpack.c.l.b16 %v3813
      %v3843 = vunpack.c.h.b16 %v3813
      %v3844 = vunpack.c.l.b16 %v3814
      %v3845 = vunpack.c.h.b16 %v3814
      %v3846 = vunpack.c.l.b16 %v3815
      %v3847 = vunpack.c.h.b16 %v3815
      %v3848 = vunpack.c.l.b16 %v3816
      %v3849 = vunpack.c.h.b16 %v3816
      %v3850 = vunpack.c.l.b16 %v3817
      %v3851 = vunpack.c.h.b16 %v3817
      %v3852 = vunpack.c.l.b16 %v3818
      %v3853 = vunpack.c.h.b16 %v3818
      %v3854 = vunpack.c.l.b16 %v3819
      %v3855 = vunpack.c.h.b16 %v3819
      %v3856 = vunpack.c.l.b16 %v3820
      %v3857 = vunpack.c.h.b16 %v3820
      %v3858 = vunpack.c.l.b16 %v3821
      %v3859 = vpack.c.b16 %v3836, %v3836
      %v3860 = vpack.c.b16 %v3837, %v3837
      %v3861 = vpack.c.b16 %v3838, %v3838
      %v3862 = vpack.c.b16 %v3839, %v3839
      %v3863 = vpack.c.b16 %v3840, %v3840
      %v3864 = vpack.c.b16 %v3841, %v3841
      %v3865 = vpack.c.b16 %v3842, %v3842
      %v3866 = vpack.c.b16 %v3843, %v3843
      %v3867 = vpack.c.b16 %v3844, %v3844
      %v3868 = vpack.c.b16 %v3845, %v3845
      %v3869 = vpack.c.b16 %v3846, %v3846
      %v3870 = vpack.c.b16 %v3847, %v3847
      %v3871 = vpack.c.b16 %v3848, %v3848
      %v3872 = vpack.c.b16 %v3849, %v3849
      %v3873 = vpack.c.b16 %v3850, %v3850
      %v3874 = vpack.c.b16 %v3851, %v3851
      %v3875 = vpack.c.b16 %v3852, %v3852
      %v3876 = vpack.c.b16 %v3853, %v3853
      %v3877 = vpack.c.b16 %v3854, %v3854
      %v3878 = vpack.c.b16 %v3855, %v3855
      %v3879 = vpack.c.b16 %v3856, %v3856
      %v3880 = vpack.c.b16 %v3857, %v3857
      %v3881 = vpack.c.b16 %v3858, %v3858
      %3905 = vst [vmem:[#allocation3 + $0x8] sm:$0xf] %v3859
      %3906 = vst [vmem:[#allocation3 + $0xc] sm:$0xf] %v3860
      %3907 = vst [vmem:[#allocation3 + $0x10] sm:$0xf] %v3861
      %3908 = vst [vmem:[#allocation3 + $0x14] sm:$0xf] %v3862
      %3909 = vst [vmem:[#allocation3 + $0x18] sm:$0xf] %v3863
      %3910 = vst [vmem:[#allocation3 + $0x1c] sm:$0xf] %v3864
      %3911 = vst [vmem:[#allocation3 + $0x20] sm:$0xf] %v3865
      %3912 = vst [vmem:[#allocation3 + $0x24] sm:$0xf] %v3866
      %3913 = vst [vmem:[#allocation3 + $0x28] sm:$0xf] %v3867
      %3914 = vst [vmem:[#allocation3 + $0x2c] sm:$0xf] %v3868
      %3915 = vst [vmem:[#allocation3 + $0x30] sm:$0xf] %v3869
      %3916 = vst [vmem:[#allocation3 + $0x34] sm:$0xf] %v3870
      %3917 = vst [vmem:[#allocation3 + $0x38] sm:$0xf] %v3871
      %3918 = vst [vmem:[#allocation3 + $0x3c] sm:$0xf] %v3872
      %3919 = vst [vmem:[#allocation3 + $0x40] sm:$0xf] %v3873
      %3920 = vst [vmem:[#allocation3 + $0x44] sm:$0xf] %v3874
      %3921 = vst [vmem:[#allocation3 + $0x48] sm:$0xf] %v3875
      %3922 = vst [vmem:[#allocation3 + $0x4c] sm:$0xf] %v3876
      %3923 = vst [vmem:[#allocation3 + $0x50] sm:$0xf] %v3877
      %3924 = vst [vmem:[#allocation3 + $0x54] sm:$0xf] %v3878
      %3925 = vst [vmem:[#allocation3 + $0x58] sm:$0xf] %v3879
      %3926 = vst [vmem:[#allocation3 + $0x5c] sm:$0xf] %v3880
      %3927 = vst [vmem:[#allocation3 + $0x60] sm:$0x3] %v3881
      // Predicated region
      $region127: #{_lambda_.1} parent=43 // pred_check
        %p3928 = pneg %p269
      $region128: #{_lambda_.1} parent=43 // pred_check_branch
        %3930 = sbr.rel (%p3928) target = $region130
      $region129: #{_lambda_.1} parent=43 // pred_region
        %3931 = vst [vmem:[#allocation3 + $0x8] sm:$0xf] 0
        %3932 = vst [vmem:[#allocation3 + $0xc] sm:$0xf] 0
        %3933 = vst [vmem:[#allocation3 + $0x10] sm:$0x1] 0
      $region130: #{_lambda_.1} parent=43 // pred_fallthru
        _
      %p3934 = scmp.eq.s32.totalorder %s23, 1
      // Predicated region
      $region131: #{_lambda_.1} parent=43 // pred_check
        %p3935 = pneg %p3934
      $region132: #{_lambda_.1} parent=43 // pred_check_branch
        %3937 = sbr.rel (%p3935) target = $region134
      $region133: #{_lambda_.1} parent=43 // pred_region
        %3938 = vst [vmem:[#allocation3 + $0x58] sm:$0xe] 0
        %3939 = vst [vmem:[#allocation3 + $0x5c] sm:$0xf] 0
        %3940 = vst [vmem:[#allocation3 + $0x60] sm:$0x3] 0
      $region134: #{_lambda_.1} parent=43 // pred_fallthru
        _
      %v3941 = vld [vmem:[#allocation3 + $0x4] sm:$0x8]
      %v3942 = vld [vmem:[#allocation3 + $0x8] sm:$0xf]
      %v3943 = vld [vmem:[#allocation3 + $0xc] sm:$0xf]
      %v3944 = vld [vmem:[#allocation3 + $0x10] sm:$0xf]
      %v3945 = vld [vmem:[#allocation3 + $0x14] sm:$0xf]
      %v3946 = vld [vmem:[#allocation3 + $0x18] sm:$0xf]
      %v3947 = vld [vmem:[#allocation3 + $0x1c] sm:$0xf]
      %v3948 = vld [vmem:[#allocation3 + $0x20] sm:$0xf]
      %v3949 = vld [vmem:[#allocation3 + $0x24] sm:$0xf]
      %v3950 = vld [vmem:[#allocation3 + $0x28] sm:$0xf]
      %v3951 = vld [vmem:[#allocation3 + $0x2c] sm:$0xf]
      %v3952 = vld [vmem:[#allocation3 + $0x30] sm:$0xf]
      %v3953 = vld [vmem:[#allocation3 + $0x34] sm:$0xf]
      %v3954 = vld [vmem:[#allocation3 + $0x38] sm:$0xf]
      %v3955 = vld [vmem:[#allocation3 + $0x3c] sm:$0xf]
      %v3956 = vld [vmem:[#allocation3 + $0x40] sm:$0xf]
      %v3957 = vld [vmem:[#allocation3 + $0x44] sm:$0xf]
      %v3958 = vld [vmem:[#allocation3 + $0x48] sm:$0xf]
      %v3959 = vld [vmem:[#allocation3 + $0x4c] sm:$0xf]
      %v3960 = vld [vmem:[%s4] sm:$0xf]
      %v3961 = vld [vmem:[%s4 + $0x4] sm:$0xf]
      %v3962 = vld [vmem:[%s4 + $0x8] sm:$0xf]
      %v3963 = vld [vmem:[%s4 + $0xc] sm:$0xf]
      %v3964 = vld [vmem:[%s4 + $0x10] sm:$0xf]
      %v3965 = vld [vmem:[%s4 + $0x14] sm:$0xf]
      %v3966 = vld [vmem:[%s4 + $0x18] sm:$0xf]
      %v3967 = vld [vmem:[%s4 + $0x1c] sm:$0xf]
      %v3968 = vld [vmem:[%s4 + $0x20] sm:$0xf]
      %v3969 = vld [vmem:[%s4 + $0x24] sm:$0xf]
      %v3970 = vld [vmem:[%s4 + $0x28] sm:$0xf]
      %v3971 = vld [vmem:[%s4 + $0x2c] sm:$0xf]
      %v3972 = vld [vmem:[%s4 + $0x30] sm:$0xf]
      %v3973 = vld [vmem:[%s4 + $0x34] sm:$0xf]
      %v3974 = vld [vmem:[%s4 + $0x38] sm:$0xf]
      %v3975 = vld [vmem:[%s4 + $0x3c] sm:$0xf]
      %s3976 = scalar_lea.vmem %s4, 64
      %v3977 = vld [vmem:[%s3976] sm:$0xf]
      %v3978 = vld [vmem:[%s3976 + $0x4] sm:$0xf]
      %v3979 = vld [vmem:[%s3976 + $0x8] sm:$0xf]
      %v3980 = vld [vmem:[%s3976 + $0xc] sm:$0xf]
      %v3981 = vld [vmem:[%s3976 + $0x10] sm:$0xf]
      %v3982 = vld [vmem:[%s3976 + $0x14] sm:$0xf]
      %v3983 = vld [vmem:[%s3976 + $0x18] sm:$0xf]
      %v3984 = vld [vmem:[%s3976 + $0x1c] sm:$0xf]
      %v3985 = vld [vmem:[%s3976 + $0x20] sm:$0xf]
      %v3986 = vld [vmem:[%s3976 + $0x24] sm:$0xf]
      %v3987 = vld [vmem:[%s3976 + $0x28] sm:$0xf]
      %v3988 = vld [vmem:[%s3976 + $0x2c] sm:$0xf]
      %v3989 = vld [vmem:[%s3976 + $0x30] sm:$0xf]
      %v3990 = vld [vmem:[%s3976 + $0x34] sm:$0xf]
      %v3991 = vld [vmem:[%s3976 + $0x38] sm:$0xf]
      %v3992 = vld [vmem:[%s3976 + $0x3c] sm:$0xf]
      %v4011 = vunpack.c.l.b16 %v3942
      %v4012 = vunpack.c.l.b16 %v3943
      %v4013 = vunpack.c.l.b16 %v3944
      %v4014 = vunpack.c.l.b16 %v3945
      %v4015 = vunpack.c.l.b16 %v3946
      %v4016 = vunpack.c.l.b16 %v3947
      %v4017 = vunpack.c.l.b16 %v3948
      %v4018 = vunpack.c.l.b16 %v3949
      %v4019 = vunpack.c.l.b16 %v3950
      %v4020 = vunpack.c.l.b16 %v3951
      %v4021 = vunpack.c.l.b16 %v3952
      %v4022 = vunpack.c.l.b16 %v3953
      %v4023 = vunpack.c.l.b16 %v3954
      %v4024 = vunpack.c.l.b16 %v3955
      %v4025 = vunpack.c.l.b16 %v3956
      %v4026 = vunpack.c.l.b16 %v3957
      %v4027 = vunpack.c.l.b16 %v3958
      %v4028 = vunpack.c.l.b16 %v3959
      %v4029 = vpack.c.b16 %v4012, %v4011
      %v4030 = vpack.c.b16 %v4014, %v4013
      %v4031 = vpack.c.b16 %v4016, %v4015
      %v4032 = vpack.c.b16 %v4018, %v4017
      %v4033 = vpack.c.b16 %v4020, %v4019
      %v4034 = vpack.c.b16 %v4022, %v4021
      %v4035 = vpack.c.b16 %v4024, %v4023
      %v4036 = vpack.c.b16 %v4026, %v4025
      %v4037 = vpack.c.b16 %v4028, %v4027
      %v4063 = vunpack.c.l.b16 %v3977
      %v4064 = vunpack.c.l.b16 %v3978
      %v4065 = vunpack.c.l.b16 %v3979
      %v4066 = vunpack.c.l.b16 %v3980
      %v4067 = vunpack.c.l.b16 %v3981
      %v4068 = vunpack.c.l.b16 %v3982
      %v4069 = vunpack.c.l.b16 %v3983
      %v4070 = vunpack.c.l.b16 %v3984
      %v4071 = vunpack.c.l.b16 %v3985
      %v4072 = vunpack.c.l.b16 %v3986
      %v4073 = vunpack.c.l.b16 %v3987
      %v4074 = vunpack.c.l.b16 %v3988
      %v4075 = vunpack.c.l.b16 %v3989
      %v4076 = vunpack.c.l.b16 %v3990
      %v4077 = vunpack.c.l.b16 %v3991
      %v4078 = vunpack.c.l.b16 %v3992
      %v4079 = vpack.c.b16 %v4064, %v4063
      %v4080 = vpack.c.b16 %v4066, %v4065
      %v4081 = vpack.c.b16 %v4068, %v4067
      %v4082 = vpack.c.b16 %v4070, %v4069
      %v4083 = vpack.c.b16 %v4072, %v4071
      %v4084 = vpack.c.b16 %v4074, %v4073
      %v4085 = vpack.c.b16 %v4076, %v4075
      %v4086 = vpack.c.b16 %v4078, %v4077
      %4095 = vmatprep.subr.bf16.mxu0 0
      %4096 = vmatpush1.bf16.msra.mxu0 %v4086
      %4097 = vmatprep.subr.bf16.mxu0 0
      %4098 = vmatpush1.bf16.msra.mxu0 %v4085
      %4099 = vmatprep.subr.bf16.mxu0 0
      %4100 = vmatpush1.bf16.msra.mxu0 %v4084
      %4101 = vmatprep.subr.bf16.mxu0 0
      %4102 = vmatpush1.bf16.msra.mxu0 %v4083
      %4103 = vmatprep.subr.bf16.mxu0 0
      %4104 = vmatpush1.bf16.msra.mxu0 %v4082
      %4105 = vmatprep.subr.bf16.mxu0 0
      %4106 = vmatpush1.bf16.msra.mxu0 %v4081
      %4107 = vmatprep.subr.bf16.mxu0 0
      %4108 = vmatpush1.bf16.msra.mxu0 %v4080
      %4109 = vmatprep.subr.bf16.mxu0 0
      %4110 = vmatpush1.bf16.msra.mxu0 %v4079
      %4111 = vmatprep.subr.bf16.mxu0 0
      %4112 = vmatpush2.bf16.msra.mxu0 0
      %4113 = vmatprep.subr.bf16.mxu0 0
      %4114 = vmatpush2.bf16.msra.mxu0 0
      %4115 = vmatprep.subr.bf16.mxu0 0
      %4116 = vmatpush2.bf16.msra.mxu0 0
      %4117 = vmatprep.subr.bf16.mxu0 0
      %4118 = vmatpush2.bf16.msra.mxu0 0
      %4119 = vmatprep.subr.bf16.mxu0 0
      %4120 = vmatpush2.bf16.msra.mxu0 0
      %4121 = vmatprep.subr.bf16.mxu0 0
      %4122 = vmatpush2.bf16.msra.mxu0 0
      %4123 = vmatprep.subr.bf16.mxu0 0
      %4124 = vmatpush2.bf16.msra.mxu0 0
      %4125 = vmatprep.subr.bf16.mxu0 0
      %4126 = vmatpush2.bf16.msra.mxu0 0
      %4127 = vmatprep.mubr.bf16.mxu0 0
      %4128 = vmatmul.mubr.bf16.gmra.mxu0 %v4029
      %v4129 = vpop.f32.mrf.mxu0
      %v4130 = vadd.f32 0.0, %v4129
      %v4131 = vpop.f32.mrf.mxu0
      %v4132 = vpop.f32.mrf.mxu0
      %v4133 = vadd.f32 0.0, %v4132
      %v4134 = vpop.f32.mrf.mxu0
      %4135 = vmatprep.mubr.bf16.mxu0 0
      %4136 = vmatmul.mubr.bf16.gmra.mxu0 %v4030
      %v4137 = vpop.f32.mrf.mxu0
      %v4138 = vadd.f32 0.0, %v4137
      %v4139 = vpop.f32.mrf.mxu0
      %v4140 = vpop.f32.mrf.mxu0
      %v4141 = vadd.f32 0.0, %v4140
      %v4142 = vpop.f32.mrf.mxu0
      %4143 = vmatprep.mubr.bf16.mxu0 0
      %4144 = vmatmul.mubr.bf16.gmra.mxu0 %v4031
      %v4145 = vpop.f32.mrf.mxu0
      %v4146 = vadd.f32 0.0, %v4145
      %v4147 = vpop.f32.mrf.mxu0
      %v4148 = vpop.f32.mrf.mxu0
      %v4149 = vadd.f32 0.0, %v4148
      %v4150 = vpop.f32.mrf.mxu0
      %4151 = vmatprep.mubr.bf16.mxu0 0
      %4152 = vmatmul.mubr.bf16.gmra.mxu0 %v4032
      %v4153 = vpop.f32.mrf.mxu0
      %v4154 = vadd.f32 0.0, %v4153
      %v4155 = vpop.f32.mrf.mxu0
      %v4156 = vpop.f32.mrf.mxu0
      %v4157 = vadd.f32 0.0, %v4156
      %v4158 = vpop.f32.mrf.mxu0
      %4159 = vmatprep.mubr.bf16.mxu0 0
      %4160 = vmatmul.mubr.bf16.gmra.mxu0 %v4033
      %v4161 = vpop.f32.mrf.mxu0
      %v4162 = vadd.f32 0.0, %v4161
      %v4163 = vpop.f32.mrf.mxu0
      %v4164 = vpop.f32.mrf.mxu0
      %v4165 = vadd.f32 0.0, %v4164
      %v4166 = vpop.f32.mrf.mxu0
      %4167 = vmatprep.mubr.bf16.mxu0 0
      %4168 = vmatmul.mubr.bf16.gmra.mxu0 %v4034
      %v4169 = vpop.f32.mrf.mxu0
      %v4170 = vadd.f32 0.0, %v4169
      %v4171 = vpop.f32.mrf.mxu0
      %v4172 = vpop.f32.mrf.mxu0
      %v4173 = vadd.f32 0.0, %v4172
      %v4174 = vpop.f32.mrf.mxu0
      %4175 = vmatprep.mubr.bf16.mxu0 0
      %4176 = vmatmul.mubr.bf16.gmra.mxu0 %v4035
      %v4177 = vpop.f32.mrf.mxu0
      %v4178 = vadd.f32 0.0, %v4177
      %v4179 = vpop.f32.mrf.mxu0
      %v4180 = vpop.f32.mrf.mxu0
      %v4181 = vadd.f32 0.0, %v4180
      %v4182 = vpop.f32.mrf.mxu0
      %4183 = vmatprep.mubr.bf16.mxu0 0
      %4184 = vmatmul.mubr.bf16.gmra.mxu0 %v4036
      %v4185 = vpop.f32.mrf.mxu0
      %v4186 = vadd.f32 0.0, %v4185
      %v4187 = vpop.f32.mrf.mxu0
      %v4188 = vpop.f32.mrf.mxu0
      %v4189 = vadd.f32 0.0, %v4188
      %v4190 = vpop.f32.mrf.mxu0
      %4191 = vmatprep.mubr.bf16.mxu0 0
      %4192 = vmatmul.mubr.bf16.gmra.mxu0 %v4037
      %v4193 = vpop.f32.mrf.mxu0
      %v4194 = vadd.f32 0.0, %v4193
      %v4195 = vpop.f32.mrf.mxu0
      %v4196 = vpop.f32.mrf.mxu0
      %v4197 = vadd.f32 0.0, %v4196
      %v4198 = vpop.f32.mrf.mxu0
      %4199 = vdwg.mxu0
      %v4201 = vunpack.c.l.b16 %v3941
      %v4202 = vpack.c.b16 %v4011, %v4201
      %v4203 = vpack.c.b16 %v4013, %v4012
      %v4204 = vpack.c.b16 %v4015, %v4014
      %v4205 = vpack.c.b16 %v4017, %v4016
      %v4206 = vpack.c.b16 %v4019, %v4018
      %v4207 = vpack.c.b16 %v4021, %v4020
      %v4208 = vpack.c.b16 %v4023, %v4022
      %v4209 = vpack.c.b16 %v4025, %v4024
      %v4210 = vpack.c.b16 %v4027, %v4026
      %v4211 = vpack.c.b16 %v4028, %v4028
      %vm4212 = vsmask.f32 4352
      %v4214 = vshrl.u32 %v4202, 16
      %v4216 = vrot.slane %v4214, 3
      %v4217 = vshll.u32 %v4202, 16
      %v4219 = vrot.slane %v4217, 4
      %v4220 = vor.u32 %v4216, %v4219
      %v4222 = vshrl.u32 %v4203, 16
      %v4224 = vrot.slane %v4222, 3
      %v4225 = vshll.u32 %v4203, 16
      %v4227 = vrot.slane %v4225, 4
      %v4228 = vor.u32 %v4224, %v4227
      %v4229 = vsel %vm4212, %v4220, %v4228
      %v4231 = vshrl.u32 %v4204, 16
      %v4233 = vrot.slane %v4231, 3
      %v4234 = vshll.u32 %v4204, 16
      %v4236 = vrot.slane %v4234, 4
      %v4237 = vor.u32 %v4233, %v4236
      %v4238 = vsel %vm4212, %v4228, %v4237
      %v4240 = vshrl.u32 %v4205, 16
      %v4242 = vrot.slane %v4240, 3
      %v4243 = vshll.u32 %v4205, 16
      %v4245 = vrot.slane %v4243, 4
      %v4246 = vor.u32 %v4242, %v4245
      %v4247 = vsel %vm4212, %v4237, %v4246
      %v4249 = vshrl.u32 %v4206, 16
      %v4251 = vrot.slane %v4249, 3
      %v4252 = vshll.u32 %v4206, 16
      %v4254 = vrot.slane %v4252, 4
      %v4255 = vor.u32 %v4251, %v4254
      %v4256 = vsel %vm4212, %v4246, %v4255
      %v4258 = vshrl.u32 %v4207, 16
      %v4260 = vrot.slane %v4258, 3
      %v4261 = vshll.u32 %v4207, 16
      %v4263 = vrot.slane %v4261, 4
      %v4264 = vor.u32 %v4260, %v4263
      %v4265 = vsel %vm4212, %v4255, %v4264
      %v4267 = vshrl.u32 %v4208, 16
      %v4269 = vrot.slane %v4267, 3
      %v4270 = vshll.u32 %v4208, 16
      %v4272 = vrot.slane %v4270, 4
      %v4273 = vor.u32 %v4269, %v4272
      %v4274 = vsel %vm4212, %v4264, %v4273
      %v4276 = vshrl.u32 %v4209, 16
      %v4278 = vrot.slane %v4276, 3
      %v4279 = vshll.u32 %v4209, 16
      %v4281 = vrot.slane %v4279, 4
      %v4282 = vor.u32 %v4278, %v4281
      %v4283 = vsel %vm4212, %v4273, %v4282
      %v4285 = vshrl.u32 %v4210, 16
      %v4287 = vrot.slane %v4285, 3
      %v4288 = vshll.u32 %v4210, 16
      %v4290 = vrot.slane %v4288, 4
      %v4291 = vor.u32 %v4287, %v4290
      %v4292 = vsel %vm4212, %v4282, %v4291
      %v4294 = vshrl.u32 %v4211, 16
      %v4296 = vrot.slane %v4294, 3
      %v4297 = vshll.u32 %v4211, 16
      %v4299 = vrot.slane %v4297, 4
      %v4300 = vor.u32 %v4296, %v4299
      %v4301 = vsel %vm4212, %v4291, %v4300
      %v4327 = vunpack.c.l.b16 %v3960
      %v4328 = vunpack.c.l.b16 %v3961
      %v4329 = vunpack.c.l.b16 %v3962
      %v4330 = vunpack.c.l.b16 %v3963
      %v4331 = vunpack.c.l.b16 %v3964
      %v4332 = vunpack.c.l.b16 %v3965
      %v4333 = vunpack.c.l.b16 %v3966
      %v4334 = vunpack.c.l.b16 %v3967
      %v4335 = vunpack.c.l.b16 %v3968
      %v4336 = vunpack.c.l.b16 %v3969
      %v4337 = vunpack.c.l.b16 %v3970
      %v4338 = vunpack.c.l.b16 %v3971
      %v4339 = vunpack.c.l.b16 %v3972
      %v4340 = vunpack.c.l.b16 %v3973
      %v4341 = vunpack.c.l.b16 %v3974
      %v4342 = vunpack.c.l.b16 %v3975
      %v4343 = vpack.c.b16 %v4328, %v4327
      %v4344 = vpack.c.b16 %v4330, %v4329
      %v4345 = vpack.c.b16 %v4332, %v4331
      %v4346 = vpack.c.b16 %v4334, %v4333
      %v4347 = vpack.c.b16 %v4336, %v4335
      %v4348 = vpack.c.b16 %v4338, %v4337
      %v4349 = vpack.c.b16 %v4340, %v4339
      %v4350 = vpack.c.b16 %v4342, %v4341
      %4359 = vmatprep.subr.bf16.mxu0 0
      %4360 = vmatpush1.bf16.msra.mxu0 %v4350
      %4361 = vmatprep.subr.bf16.mxu0 0
      %4362 = vmatpush1.bf16.msra.mxu0 %v4349
      %4363 = vmatprep.subr.bf16.mxu0 0
      %4364 = vmatpush1.bf16.msra.mxu0 %v4348
      %4365 = vmatprep.subr.bf16.mxu0 0
      %4366 = vmatpush1.bf16.msra.mxu0 %v4347
      %4367 = vmatprep.subr.bf16.mxu0 0
      %4368 = vmatpush1.bf16.msra.mxu0 %v4346
      %4369 = vmatprep.subr.bf16.mxu0 0
      %4370 = vmatpush1.bf16.msra.mxu0 %v4345
      %4371 = vmatprep.subr.bf16.mxu0 0
      %4372 = vmatpush1.bf16.msra.mxu0 %v4344
      %4373 = vmatprep.subr.bf16.mxu0 0
      %4374 = vmatpush1.bf16.msra.mxu0 %v4343
      %4375 = vmatprep.subr.bf16.mxu0 0
      %4376 = vmatpush2.bf16.msra.mxu0 0
      %4377 = vmatprep.subr.bf16.mxu0 0
      %4378 = vmatpush2.bf16.msra.mxu0 0
      %4379 = vmatprep.subr.bf16.mxu0 0
      %4380 = vmatpush2.bf16.msra.mxu0 0
      %4381 = vmatprep.subr.bf16.mxu0 0
      %4382 = vmatpush2.bf16.msra.mxu0 0
      %4383 = vmatprep.subr.bf16.mxu0 0
      %4384 = vmatpush2.bf16.msra.mxu0 0
      %4385 = vmatprep.subr.bf16.mxu0 0
      %4386 = vmatpush2.bf16.msra.mxu0 0
      %4387 = vmatprep.subr.bf16.mxu0 0
      %4388 = vmatpush2.bf16.msra.mxu0 0
      %4389 = vmatprep.subr.bf16.mxu0 0
      %4390 = vmatpush2.bf16.msra.mxu0 0
      %4391 = vmatprep.mubr.bf16.mxu0 0
      %4392 = vmatmul.mubr.bf16.gmra.mxu0 %v4229
      %v4393 = vpop.f32.mrf.mxu0
      %v4394 = vadd.f32 %v4130, %v4393
      %v4395 = vpop.f32.mrf.mxu0
      %v4396 = vpop.f32.mrf.mxu0
      %v4397 = vadd.f32 %v4133, %v4396
      %v4398 = vpop.f32.mrf.mxu0
      %4399 = vmatprep.mubr.bf16.mxu0 0
      %4400 = vmatmul.mubr.bf16.gmra.mxu0 %v4238
      %v4401 = vpop.f32.mrf.mxu0
      %v4402 = vadd.f32 %v4138, %v4401
      %v4403 = vpop.f32.mrf.mxu0
      %v4404 = vpop.f32.mrf.mxu0
      %v4405 = vadd.f32 %v4141, %v4404
      %v4406 = vpop.f32.mrf.mxu0
      %4407 = vmatprep.mubr.bf16.mxu0 0
      %4408 = vmatmul.mubr.bf16.gmra.mxu0 %v4247
      %v4409 = vpop.f32.mrf.mxu0
      %v4410 = vadd.f32 %v4146, %v4409
      %v4411 = vpop.f32.mrf.mxu0
      %v4412 = vpop.f32.mrf.mxu0
      %v4413 = vadd.f32 %v4149, %v4412
      %v4414 = vpop.f32.mrf.mxu0
      %4415 = vmatprep.mubr.bf16.mxu0 0
      %4416 = vmatmul.mubr.bf16.gmra.mxu0 %v4256
      %v4417 = vpop.f32.mrf.mxu0
      %v4418 = vadd.f32 %v4154, %v4417
      %v4419 = vpop.f32.mrf.mxu0
      %v4420 = vpop.f32.mrf.mxu0
      %v4421 = vadd.f32 %v4157, %v4420
      %v4422 = vpop.f32.mrf.mxu0
      %4423 = vmatprep.mubr.bf16.mxu0 0
      %4424 = vmatmul.mubr.bf16.gmra.mxu0 %v4265
      %v4425 = vpop.f32.mrf.mxu0
      %v4426 = vadd.f32 %v4162, %v4425
      %v4427 = vpop.f32.mrf.mxu0
      %v4428 = vpop.f32.mrf.mxu0
      %v4429 = vadd.f32 %v4165, %v4428
      %v4430 = vpop.f32.mrf.mxu0
      %4431 = vmatprep.mubr.bf16.mxu0 0
      %4432 = vmatmul.mubr.bf16.gmra.mxu0 %v4274
      %v4433 = vpop.f32.mrf.mxu0
      %v4434 = vadd.f32 %v4170, %v4433
      %v4435 = vpop.f32.mrf.mxu0
      %v4436 = vpop.f32.mrf.mxu0
      %v4437 = vadd.f32 %v4173, %v4436
      %v4438 = vpop.f32.mrf.mxu0
      %4439 = vmatprep.mubr.bf16.mxu0 0
      %4440 = vmatmul.mubr.bf16.gmra.mxu0 %v4283
      %v4441 = vpop.f32.mrf.mxu0
      %v4442 = vadd.f32 %v4178, %v4441
      %v4443 = vpop.f32.mrf.mxu0
      %v4444 = vpop.f32.mrf.mxu0
      %v4445 = vadd.f32 %v4181, %v4444
      %v4446 = vpop.f32.mrf.mxu0
      %4447 = vmatprep.mubr.bf16.mxu0 0
      %4448 = vmatmul.mubr.bf16.gmra.mxu0 %v4292
      %v4449 = vpop.f32.mrf.mxu0
      %v4450 = vadd.f32 %v4186, %v4449
      %v4451 = vpop.f32.mrf.mxu0
      %v4452 = vpop.f32.mrf.mxu0
      %v4453 = vadd.f32 %v4189, %v4452
      %v4454 = vpop.f32.mrf.mxu0
      %4455 = vmatprep.mubr.bf16.mxu0 0
      %4456 = vmatmul.mubr.bf16.gmra.mxu0 %v4301
      %v4457 = vpop.f32.mrf.mxu0
      %v4458 = vadd.f32 %v4194, %v4457
      %v4459 = vpop.f32.mrf.mxu0
      %v4460 = vpop.f32.mrf.mxu0
      %v4461 = vadd.f32 %v4197, %v4460
      %v4462 = vpop.f32.mrf.mxu0
      %4463 = vdwg.mxu0
      %v4464 = vld [vmem:[#allocation3 + $0x8] sm:$0xf]
      %v4465 = vld [vmem:[#allocation3 + $0xc] sm:$0xf]
      %v4466 = vld [vmem:[#allocation3 + $0x10] sm:$0xf]
      %v4467 = vld [vmem:[#allocation3 + $0x14] sm:$0xf]
      %v4468 = vld [vmem:[#allocation3 + $0x18] sm:$0xf]
      %v4469 = vld [vmem:[#allocation3 + $0x1c] sm:$0xf]
      %v4470 = vld [vmem:[#allocation3 + $0x20] sm:$0xf]
      %v4471 = vld [vmem:[#allocation3 + $0x24] sm:$0xf]
      %v4472 = vld [vmem:[#allocation3 + $0x28] sm:$0xf]
      %v4473 = vld [vmem:[#allocation3 + $0x2c] sm:$0xf]
      %v4474 = vld [vmem:[#allocation3 + $0x30] sm:$0xf]
      %v4475 = vld [vmem:[#allocation3 + $0x34] sm:$0xf]
      %v4476 = vld [vmem:[#allocation3 + $0x38] sm:$0xf]
      %v4477 = vld [vmem:[#allocation3 + $0x3c] sm:$0xf]
      %v4478 = vld [vmem:[#allocation3 + $0x40] sm:$0xf]
      %v4479 = vld [vmem:[#allocation3 + $0x44] sm:$0xf]
      %v4480 = vld [vmem:[#allocation3 + $0x48] sm:$0xf]
      %v4481 = vld [vmem:[#allocation3 + $0x4c] sm:$0xf]
      %v4482 = vld [vmem:[#allocation3 + $0x50] sm:$0x1]
      %s4483 = scalar_lea.vmem %s4, 128
      %v4484 = vld [vmem:[%s4483] sm:$0xf]
      %v4485 = vld [vmem:[%s4483 + $0x4] sm:$0xf]
      %v4486 = vld [vmem:[%s4483 + $0x8] sm:$0xf]
      %v4487 = vld [vmem:[%s4483 + $0xc] sm:$0xf]
      %v4488 = vld [vmem:[%s4483 + $0x10] sm:$0xf]
      %v4489 = vld [vmem:[%s4483 + $0x14] sm:$0xf]
      %v4490 = vld [vmem:[%s4483 + $0x18] sm:$0xf]
      %v4491 = vld [vmem:[%s4483 + $0x1c] sm:$0xf]
      %v4492 = vld [vmem:[%s4483 + $0x20] sm:$0xf]
      %v4493 = vld [vmem:[%s4483 + $0x24] sm:$0xf]
      %v4494 = vld [vmem:[%s4483 + $0x28] sm:$0xf]
      %v4495 = vld [vmem:[%s4483 + $0x2c] sm:$0xf]
      %v4496 = vld [vmem:[%s4483 + $0x30] sm:$0xf]
      %v4497 = vld [vmem:[%s4483 + $0x34] sm:$0xf]
      %v4498 = vld [vmem:[%s4483 + $0x38] sm:$0xf]
      %v4499 = vld [vmem:[%s4483 + $0x3c] sm:$0xf]
      %v4519 = vunpack.c.l.b16 %v4464
      %v4520 = vunpack.c.l.b16 %v4465
      %v4521 = vunpack.c.l.b16 %v4466
      %v4522 = vunpack.c.l.b16 %v4467
      %v4523 = vunpack.c.l.b16 %v4468
      %v4524 = vunpack.c.l.b16 %v4469
      %v4525 = vunpack.c.l.b16 %v4470
      %v4526 = vunpack.c.l.b16 %v4471
      %v4527 = vunpack.c.l.b16 %v4472
      %v4528 = vunpack.c.l.b16 %v4473
      %v4529 = vunpack.c.l.b16 %v4474
      %v4530 = vunpack.c.l.b16 %v4475
      %v4531 = vunpack.c.l.b16 %v4476
      %v4532 = vunpack.c.l.b16 %v4477
      %v4533 = vunpack.c.l.b16 %v4478
      %v4534 = vunpack.c.l.b16 %v4479
      %v4535 = vunpack.c.l.b16 %v4480
      %v4536 = vunpack.c.l.b16 %v4481
      %v4537 = vunpack.c.l.b16 %v4482
      %v4538 = vpack.c.b16 %v4520, %v4519
      %v4539 = vpack.c.b16 %v4522, %v4521
      %v4540 = vpack.c.b16 %v4524, %v4523
      %v4541 = vpack.c.b16 %v4526, %v4525
      %v4542 = vpack.c.b16 %v4528, %v4527
      %v4543 = vpack.c.b16 %v4530, %v4529
      %v4544 = vpack.c.b16 %v4532, %v4531
      %v4545 = vpack.c.b16 %v4534, %v4533
      %v4546 = vpack.c.b16 %v4536, %v4535
      %v4547 = vpack.c.b16 %v4537, %v4537
      %v4549 = vshrl.u32 %v4538, 16
      %v4551 = vshll.u32 %v4538, 16
      %v4553 = vrot.slane %v4551, 1
      %v4554 = vor.u32 %v4549, %v4553
      %v4556 = vshll.u32 %v4539, 16
      %v4558 = vrot.slane %v4556, 1
      %v4559 = vsel %vm576, %v4554, %v4558
      %v4560 = vshrl.u32 %v4539, 16
      %v4562 = vor.u32 %v4560, %v4558
      %v4564 = vshll.u32 %v4540, 16
      %v4566 = vrot.slane %v4564, 1
      %v4567 = vsel %vm576, %v4562, %v4566
      %v4568 = vshrl.u32 %v4540, 16
      %v4570 = vor.u32 %v4568, %v4566
      %v4572 = vshll.u32 %v4541, 16
      %v4574 = vrot.slane %v4572, 1
      %v4575 = vsel %vm576, %v4570, %v4574
      %v4576 = vshrl.u32 %v4541, 16
      %v4578 = vor.u32 %v4576, %v4574
      %v4580 = vshll.u32 %v4542, 16
      %v4582 = vrot.slane %v4580, 1
      %v4583 = vsel %vm576, %v4578, %v4582
      %v4584 = vshrl.u32 %v4542, 16
      %v4586 = vor.u32 %v4584, %v4582
      %v4588 = vshll.u32 %v4543, 16
      %v4590 = vrot.slane %v4588, 1
      %v4591 = vsel %vm576, %v4586, %v4590
      %v4592 = vshrl.u32 %v4543, 16
      %v4594 = vor.u32 %v4592, %v4590
      %v4596 = vshll.u32 %v4544, 16
      %v4598 = vrot.slane %v4596, 1
      %v4599 = vsel %vm576, %v4594, %v4598
      %v4600 = vshrl.u32 %v4544, 16
      %v4602 = vor.u32 %v4600, %v4598
      %v4604 = vshll.u32 %v4545, 16
      %v4606 = vrot.slane %v4604, 1
      %v4607 = vsel %vm576, %v4602, %v4606
      %v4608 = vshrl.u32 %v4545, 16
      %v4610 = vor.u32 %v4608, %v4606
      %v4612 = vshll.u32 %v4546, 16
      %v4614 = vrot.slane %v4612, 1
      %v4615 = vsel %vm576, %v4610, %v4614
      %v4616 = vshrl.u32 %v4546, 16
      %v4618 = vor.u32 %v4616, %v4614
      %v4620 = vshll.u32 %v4547, 16
      %v4622 = vrot.slane %v4620, 1
      %v4623 = vsel %vm576, %v4618, %v4622
      %v4649 = vunpack.c.l.b16 %v4484
      %v4650 = vunpack.c.l.b16 %v4485
      %v4651 = vunpack.c.l.b16 %v4486
      %v4652 = vunpack.c.l.b16 %v4487
      %v4653 = vunpack.c.l.b16 %v4488
      %v4654 = vunpack.c.l.b16 %v4489
      %v4655 = vunpack.c.l.b16 %v4490
      %v4656 = vunpack.c.l.b16 %v4491
      %v4657 = vunpack.c.l.b16 %v4492
      %v4658 = vunpack.c.l.b16 %v4493
      %v4659 = vunpack.c.l.b16 %v4494
      %v4660 = vunpack.c.l.b16 %v4495
      %v4661 = vunpack.c.l.b16 %v4496
      %v4662 = vunpack.c.l.b16 %v4497
      %v4663 = vunpack.c.l.b16 %v4498
      %v4664 = vunpack.c.l.b16 %v4499
      %v4665 = vpack.c.b16 %v4650, %v4649
      %v4666 = vpack.c.b16 %v4652, %v4651
      %v4667 = vpack.c.b16 %v4654, %v4653
      %v4668 = vpack.c.b16 %v4656, %v4655
      %v4669 = vpack.c.b16 %v4658, %v4657
      %v4670 = vpack.c.b16 %v4660, %v4659
      %v4671 = vpack.c.b16 %v4662, %v4661
      %v4672 = vpack.c.b16 %v4664, %v4663
      %4681 = vmatprep.subr.bf16.mxu0 0
      %4682 = vmatpush1.bf16.msra.mxu0 %v4672
      %4683 = vmatprep.subr.bf16.mxu0 0
      %4684 = vmatpush1.bf16.msra.mxu0 %v4671
      %4685 = vmatprep.subr.bf16.mxu0 0
      %4686 = vmatpush1.bf16.msra.mxu0 %v4670
      %4687 = vmatprep.subr.bf16.mxu0 0
      %4688 = vmatpush1.bf16.msra.mxu0 %v4669
      %4689 = vmatprep.subr.bf16.mxu0 0
      %4690 = vmatpush1.bf16.msra.mxu0 %v4668
      %4691 = vmatprep.subr.bf16.mxu0 0
      %4692 = vmatpush1.bf16.msra.mxu0 %v4667
      %4693 = vmatprep.subr.bf16.mxu0 0
      %4694 = vmatpush1.bf16.msra.mxu0 %v4666
      %4695 = vmatprep.subr.bf16.mxu0 0
      %4696 = vmatpush1.bf16.msra.mxu0 %v4665
      %4697 = vmatprep.subr.bf16.mxu0 0
      %4698 = vmatpush2.bf16.msra.mxu0 0
      %4699 = vmatprep.subr.bf16.mxu0 0
      %4700 = vmatpush2.bf16.msra.mxu0 0
      %4701 = vmatprep.subr.bf16.mxu0 0
      %4702 = vmatpush2.bf16.msra.mxu0 0
      %4703 = vmatprep.subr.bf16.mxu0 0
      %4704 = vmatpush2.bf16.msra.mxu0 0
      %4705 = vmatprep.subr.bf16.mxu0 0
      %4706 = vmatpush2.bf16.msra.mxu0 0
      %4707 = vmatprep.subr.bf16.mxu0 0
      %4708 = vmatpush2.bf16.msra.mxu0 0
      %4709 = vmatprep.subr.bf16.mxu0 0
      %4710 = vmatpush2.bf16.msra.mxu0 0
      %4711 = vmatprep.subr.bf16.mxu0 0
      %4712 = vmatpush2.bf16.msra.mxu0 0
      %4713 = vmatprep.mubr.bf16.mxu0 0
      %4714 = vmatmul.mubr.bf16.gmra.mxu0 %v4559
      %v4715 = vpop.f32.mrf.mxu0
      %v4716 = vadd.f32 0.0, %v4715
      %v4717 = vpop.f32.mrf.mxu0
      %v4718 = vpop.f32.mrf.mxu0
      %v4719 = vadd.f32 0.0, %v4718
      %v4720 = vpop.f32.mrf.mxu0
      %4721 = vmatprep.mubr.bf16.mxu0 0
      %4722 = vmatmul.mubr.bf16.gmra.mxu0 %v4567
      %v4723 = vpop.f32.mrf.mxu0
      %v4724 = vadd.f32 0.0, %v4723
      %v4725 = vpop.f32.mrf.mxu0
      %v4726 = vpop.f32.mrf.mxu0
      %v4727 = vadd.f32 0.0, %v4726
      %v4728 = vpop.f32.mrf.mxu0
      %4729 = vmatprep.mubr.bf16.mxu0 0
      %4730 = vmatmul.mubr.bf16.gmra.mxu0 %v4575
      %v4731 = vpop.f32.mrf.mxu0
      %v4732 = vadd.f32 0.0, %v4731
      %v4733 = vpop.f32.mrf.mxu0
      %v4734 = vpop.f32.mrf.mxu0
      %v4735 = vadd.f32 0.0, %v4734
      %v4736 = vpop.f32.mrf.mxu0
      %4737 = vmatprep.mubr.bf16.mxu0 0
      %4738 = vmatmul.mubr.bf16.gmra.mxu0 %v4583
      %v4739 = vpop.f32.mrf.mxu0
      %v4740 = vadd.f32 0.0, %v4739
      %v4741 = vpop.f32.mrf.mxu0
      %v4742 = vpop.f32.mrf.mxu0
      %v4743 = vadd.f32 0.0, %v4742
      %v4744 = vpop.f32.mrf.mxu0
      %4745 = vmatprep.mubr.bf16.mxu0 0
      %4746 = vmatmul.mubr.bf16.gmra.mxu0 %v4591
      %v4747 = vpop.f32.mrf.mxu0
      %v4748 = vadd.f32 0.0, %v4747
      %v4749 = vpop.f32.mrf.mxu0
      %v4750 = vpop.f32.mrf.mxu0
      %v4751 = vadd.f32 0.0, %v4750
      %v4752 = vpop.f32.mrf.mxu0
      %4753 = vmatprep.mubr.bf16.mxu0 0
      %4754 = vmatmul.mubr.bf16.gmra.mxu0 %v4599
      %v4755 = vpop.f32.mrf.mxu0
      %v4756 = vadd.f32 0.0, %v4755
      %v4757 = vpop.f32.mrf.mxu0
      %v4758 = vpop.f32.mrf.mxu0
      %v4759 = vadd.f32 0.0, %v4758
      %v4760 = vpop.f32.mrf.mxu0
      %4761 = vmatprep.mubr.bf16.mxu0 0
      %4762 = vmatmul.mubr.bf16.gmra.mxu0 %v4607
      %v4763 = vpop.f32.mrf.mxu0
      %v4764 = vadd.f32 0.0, %v4763
      %v4765 = vpop.f32.mrf.mxu0
      %v4766 = vpop.f32.mrf.mxu0
      %v4767 = vadd.f32 0.0, %v4766
      %v4768 = vpop.f32.mrf.mxu0
      %4769 = vmatprep.mubr.bf16.mxu0 0
      %4770 = vmatmul.mubr.bf16.gmra.mxu0 %v4615
      %v4771 = vpop.f32.mrf.mxu0
      %v4772 = vadd.f32 0.0, %v4771
      %v4773 = vpop.f32.mrf.mxu0
      %v4774 = vpop.f32.mrf.mxu0
      %v4775 = vadd.f32 0.0, %v4774
      %v4776 = vpop.f32.mrf.mxu0
      %4777 = vmatprep.mubr.bf16.mxu0 0
      %4778 = vmatmul.mubr.bf16.gmra.mxu0 %v4623
      %v4779 = vpop.f32.mrf.mxu0
      %v4780 = vadd.f32 0.0, %v4779
      %v4781 = vpop.f32.mrf.mxu0
      %v4782 = vpop.f32.mrf.mxu0
      %v4783 = vadd.f32 0.0, %v4782
      %v4784 = vpop.f32.mrf.mxu0
      %4785 = vdwg.mxu0
      %v4786 = vadd.f32 %v4394, %v4716
      %v4787 = vadd.f32 %v4397, %v4719
      %v4788 = vadd.f32 %v4402, %v4724
      %v4789 = vadd.f32 %v4405, %v4727
      %v4790 = vadd.f32 %v4410, %v4732
      %v4791 = vadd.f32 %v4413, %v4735
      %v4792 = vadd.f32 %v4418, %v4740
      %v4793 = vadd.f32 %v4421, %v4743
      %v4794 = vadd.f32 %v4426, %v4748
      %v4795 = vadd.f32 %v4429, %v4751
      %v4796 = vadd.f32 %v4434, %v4756
      %v4797 = vadd.f32 %v4437, %v4759
      %v4798 = vadd.f32 %v4442, %v4764
      %v4799 = vadd.f32 %v4445, %v4767
      %v4800 = vadd.f32 %v4450, %v4772
      %v4801 = vadd.f32 %v4453, %v4775
      %v4802 = vadd.f32 %v4458, %v4780
      %v4803 = vadd.f32 %v4461, %v4783
      %v4804 = vld [vmem:[#allocation3 + $0x10] sm:$0xf]
      %v4805 = vld [vmem:[#allocation3 + $0x14] sm:$0xf]
      %v4806 = vld [vmem:[#allocation3 + $0x18] sm:$0xf]
      %v4807 = vld [vmem:[#allocation3 + $0x1c] sm:$0xf]
      %v4808 = vld [vmem:[#allocation3 + $0x20] sm:$0xf]
      %v4809 = vld [vmem:[#allocation3 + $0x24] sm:$0xf]
      %v4810 = vld [vmem:[#allocation3 + $0x28] sm:$0xf]
      %v4811 = vld [vmem:[#allocation3 + $0x2c] sm:$0xf]
      %v4812 = vld [vmem:[#allocation3 + $0x30] sm:$0xf]
      %v4813 = vld [vmem:[#allocation3 + $0x34] sm:$0xf]
      %v4814 = vld [vmem:[#allocation3 + $0x38] sm:$0xf]
      %v4815 = vld [vmem:[#allocation3 + $0x3c] sm:$0xf]
      %v4816 = vld [vmem:[#allocation3 + $0x40] sm:$0xf]
      %v4817 = vld [vmem:[#allocation3 + $0x44] sm:$0xf]
      %v4818 = vld [vmem:[#allocation3 + $0x48] sm:$0xf]
      %v4819 = vld [vmem:[#allocation3 + $0x4c] sm:$0xf]
      %v4820 = vld [vmem:[#allocation3 + $0x50] sm:$0xf]
      %v4821 = vld [vmem:[#allocation3 + $0x54] sm:$0xf]
      %v4822 = vld [vmem:[#allocation3 + $0x58] sm:$0x1]
      %s4823 = scalar_lea.vmem %s4, 192
      %v4824 = vld [vmem:[%s4823] sm:$0xf]
      %v4825 = vld [vmem:[%s4823 + $0x4] sm:$0xf]
      %v4826 = vld [vmem:[%s4823 + $0x8] sm:$0xf]
      %v4827 = vld [vmem:[%s4823 + $0xc] sm:$0xf]
      %v4828 = vld [vmem:[%s4823 + $0x10] sm:$0xf]
      %v4829 = vld [vmem:[%s4823 + $0x14] sm:$0xf]
      %v4830 = vld [vmem:[%s4823 + $0x18] sm:$0xf]
      %v4831 = vld [vmem:[%s4823 + $0x1c] sm:$0xf]
      %v4832 = vld [vmem:[%s4823 + $0x20] sm:$0xf]
      %v4833 = vld [vmem:[%s4823 + $0x24] sm:$0xf]
      %v4834 = vld [vmem:[%s4823 + $0x28] sm:$0xf]
      %v4835 = vld [vmem:[%s4823 + $0x2c] sm:$0xf]
      %v4836 = vld [vmem:[%s4823 + $0x30] sm:$0xf]
      %v4837 = vld [vmem:[%s4823 + $0x34] sm:$0xf]
      %v4838 = vld [vmem:[%s4823 + $0x38] sm:$0xf]
      %v4839 = vld [vmem:[%s4823 + $0x3c] sm:$0xf]
      %v4859 = vunpack.c.l.b16 %v4804
      %v4860 = vunpack.c.l.b16 %v4805
      %v4861 = vunpack.c.l.b16 %v4806
      %v4862 = vunpack.c.l.b16 %v4807
      %v4863 = vunpack.c.l.b16 %v4808
      %v4864 = vunpack.c.l.b16 %v4809
      %v4865 = vunpack.c.l.b16 %v4810
      %v4866 = vunpack.c.l.b16 %v4811
      %v4867 = vunpack.c.l.b16 %v4812
      %v4868 = vunpack.c.l.b16 %v4813
      %v4869 = vunpack.c.l.b16 %v4814
      %v4870 = vunpack.c.l.b16 %v4815
      %v4871 = vunpack.c.l.b16 %v4816
      %v4872 = vunpack.c.l.b16 %v4817
      %v4873 = vunpack.c.l.b16 %v4818
      %v4874 = vunpack.c.l.b16 %v4819
      %v4875 = vunpack.c.l.b16 %v4820
      %v4876 = vunpack.c.l.b16 %v4821
      %v4877 = vunpack.c.l.b16 %v4822
      %v4878 = vpack.c.b16 %v4860, %v4859
      %v4879 = vpack.c.b16 %v4862, %v4861
      %v4880 = vpack.c.b16 %v4864, %v4863
      %v4881 = vpack.c.b16 %v4866, %v4865
      %v4882 = vpack.c.b16 %v4868, %v4867
      %v4883 = vpack.c.b16 %v4870, %v4869
      %v4884 = vpack.c.b16 %v4872, %v4871
      %v4885 = vpack.c.b16 %v4874, %v4873
      %v4886 = vpack.c.b16 %v4876, %v4875
      %v4887 = vpack.c.b16 %v4877, %v4877
      %v4889 = vshrl.u32 %v4878, 16
      %v4891 = vshll.u32 %v4878, 16
      %v4893 = vrot.slane %v4891, 1
      %v4894 = vor.u32 %v4889, %v4893
      %v4896 = vshll.u32 %v4879, 16
      %v4898 = vrot.slane %v4896, 1
      %v4899 = vsel %vm576, %v4894, %v4898
      %v4900 = vshrl.u32 %v4879, 16
      %v4902 = vor.u32 %v4900, %v4898
      %v4904 = vshll.u32 %v4880, 16
      %v4906 = vrot.slane %v4904, 1
      %v4907 = vsel %vm576, %v4902, %v4906
      %v4908 = vshrl.u32 %v4880, 16
      %v4910 = vor.u32 %v4908, %v4906
      %v4912 = vshll.u32 %v4881, 16
      %v4914 = vrot.slane %v4912, 1
      %v4915 = vsel %vm576, %v4910, %v4914
      %v4916 = vshrl.u32 %v4881, 16
      %v4918 = vor.u32 %v4916, %v4914
      %v4920 = vshll.u32 %v4882, 16
      %v4922 = vrot.slane %v4920, 1
      %v4923 = vsel %vm576, %v4918, %v4922
      %v4924 = vshrl.u32 %v4882, 16
      %v4926 = vor.u32 %v4924, %v4922
      %v4928 = vshll.u32 %v4883, 16
      %v4930 = vrot.slane %v4928, 1
      %v4931 = vsel %vm576, %v4926, %v4930
      %v4932 = vshrl.u32 %v4883, 16
      %v4934 = vor.u32 %v4932, %v4930
      %v4936 = vshll.u32 %v4884, 16
      %v4938 = vrot.slane %v4936, 1
      %v4939 = vsel %vm576, %v4934, %v4938
      %v4940 = vshrl.u32 %v4884, 16
      %v4942 = vor.u32 %v4940, %v4938
      %v4944 = vshll.u32 %v4885, 16
      %v4946 = vrot.slane %v4944, 1
      %v4947 = vsel %vm576, %v4942, %v4946
      %v4948 = vshrl.u32 %v4885, 16
      %v4950 = vor.u32 %v4948, %v4946
      %v4952 = vshll.u32 %v4886, 16
      %v4954 = vrot.slane %v4952, 1
      %v4955 = vsel %vm576, %v4950, %v4954
      %v4956 = vshrl.u32 %v4886, 16
      %v4958 = vor.u32 %v4956, %v4954
      %v4960 = vshll.u32 %v4887, 16
      %v4962 = vrot.slane %v4960, 1
      %v4963 = vsel %vm576, %v4958, %v4962
      %v4989 = vunpack.c.l.b16 %v4824
      %v4990 = vunpack.c.l.b16 %v4825
      %v4991 = vunpack.c.l.b16 %v4826
      %v4992 = vunpack.c.l.b16 %v4827
      %v4993 = vunpack.c.l.b16 %v4828
      %v4994 = vunpack.c.l.b16 %v4829
      %v4995 = vunpack.c.l.b16 %v4830
      %v4996 = vunpack.c.l.b16 %v4831
      %v4997 = vunpack.c.l.b16 %v4832
      %v4998 = vunpack.c.l.b16 %v4833
      %v4999 = vunpack.c.l.b16 %v4834
      %v5000 = vunpack.c.l.b16 %v4835
      %v5001 = vunpack.c.l.b16 %v4836
      %v5002 = vunpack.c.l.b16 %v4837
      %v5003 = vunpack.c.l.b16 %v4838
      %v5004 = vunpack.c.l.b16 %v4839
      %v5005 = vpack.c.b16 %v4990, %v4989
      %v5006 = vpack.c.b16 %v4992, %v4991
      %v5007 = vpack.c.b16 %v4994, %v4993
      %v5008 = vpack.c.b16 %v4996, %v4995
      %v5009 = vpack.c.b16 %v4998, %v4997
      %v5010 = vpack.c.b16 %v5000, %v4999
      %v5011 = vpack.c.b16 %v5002, %v5001
      %v5012 = vpack.c.b16 %v5004, %v5003
      %5021 = vmatprep.subr.bf16.mxu0 0
      %5022 = vmatpush1.bf16.msra.mxu0 %v5012
      %5023 = vmatprep.subr.bf16.mxu0 0
      %5024 = vmatpush1.bf16.msra.mxu0 %v5011
      %5025 = vmatprep.subr.bf16.mxu0 0
      %5026 = vmatpush1.bf16.msra.mxu0 %v5010
      %5027 = vmatprep.subr.bf16.mxu0 0
      %5028 = vmatpush1.bf16.msra.mxu0 %v5009
      %5029 = vmatprep.subr.bf16.mxu0 0
      %5030 = vmatpush1.bf16.msra.mxu0 %v5008
      %5031 = vmatprep.subr.bf16.mxu0 0
      %5032 = vmatpush1.bf16.msra.mxu0 %v5007
      %5033 = vmatprep.subr.bf16.mxu0 0
      %5034 = vmatpush1.bf16.msra.mxu0 %v5006
      %5035 = vmatprep.subr.bf16.mxu0 0
      %5036 = vmatpush1.bf16.msra.mxu0 %v5005
      %5037 = vmatprep.subr.bf16.mxu0 0
      %5038 = vmatpush2.bf16.msra.mxu0 0
      %5039 = vmatprep.subr.bf16.mxu0 0
      %5040 = vmatpush2.bf16.msra.mxu0 0
      %5041 = vmatprep.subr.bf16.mxu0 0
      %5042 = vmatpush2.bf16.msra.mxu0 0
      %5043 = vmatprep.subr.bf16.mxu0 0
      %5044 = vmatpush2.bf16.msra.mxu0 0
      %5045 = vmatprep.subr.bf16.mxu0 0
      %5046 = vmatpush2.bf16.msra.mxu0 0
      %5047 = vmatprep.subr.bf16.mxu0 0
      %5048 = vmatpush2.bf16.msra.mxu0 0
      %5049 = vmatprep.subr.bf16.mxu0 0
      %5050 = vmatpush2.bf16.msra.mxu0 0
      %5051 = vmatprep.subr.bf16.mxu0 0
      %5052 = vmatpush2.bf16.msra.mxu0 0
      %5053 = vmatprep.mubr.bf16.mxu0 0
      %5054 = vmatmul.mubr.bf16.gmra.mxu0 %v4899
      %v5055 = vpop.f32.mrf.mxu0
      %v5056 = vadd.f32 0.0, %v5055
      %v5057 = vpop.f32.mrf.mxu0
      %v5058 = vpop.f32.mrf.mxu0
      %v5059 = vadd.f32 0.0, %v5058
      %v5060 = vpop.f32.mrf.mxu0
      %5061 = vmatprep.mubr.bf16.mxu0 0
      %5062 = vmatmul.mubr.bf16.gmra.mxu0 %v4907
      %v5063 = vpop.f32.mrf.mxu0
      %v5064 = vadd.f32 0.0, %v5063
      %v5065 = vpop.f32.mrf.mxu0
      %v5066 = vpop.f32.mrf.mxu0
      %v5067 = vadd.f32 0.0, %v5066
      %v5068 = vpop.f32.mrf.mxu0
      %5069 = vmatprep.mubr.bf16.mxu0 0
      %5070 = vmatmul.mubr.bf16.gmra.mxu0 %v4915
      %v5071 = vpop.f32.mrf.mxu0
      %v5072 = vadd.f32 0.0, %v5071
      %v5073 = vpop.f32.mrf.mxu0
      %v5074 = vpop.f32.mrf.mxu0
      %v5075 = vadd.f32 0.0, %v5074
      %v5076 = vpop.f32.mrf.mxu0
      %5077 = vmatprep.mubr.bf16.mxu0 0
      %5078 = vmatmul.mubr.bf16.gmra.mxu0 %v4923
      %v5079 = vpop.f32.mrf.mxu0
      %v5080 = vadd.f32 0.0, %v5079
      %v5081 = vpop.f32.mrf.mxu0
      %v5082 = vpop.f32.mrf.mxu0
      %v5083 = vadd.f32 0.0, %v5082
      %v5084 = vpop.f32.mrf.mxu0
      %5085 = vmatprep.mubr.bf16.mxu0 0
      %5086 = vmatmul.mubr.bf16.gmra.mxu0 %v4931
      %v5087 = vpop.f32.mrf.mxu0
      %v5088 = vadd.f32 0.0, %v5087
      %v5089 = vpop.f32.mrf.mxu0
      %v5090 = vpop.f32.mrf.mxu0
      %v5091 = vadd.f32 0.0, %v5090
      %v5092 = vpop.f32.mrf.mxu0
      %5093 = vmatprep.mubr.bf16.mxu0 0
      %5094 = vmatmul.mubr.bf16.gmra.mxu0 %v4939
      %v5095 = vpop.f32.mrf.mxu0
      %v5096 = vadd.f32 0.0, %v5095
      %v5097 = vpop.f32.mrf.mxu0
      %v5098 = vpop.f32.mrf.mxu0
      %v5099 = vadd.f32 0.0, %v5098
      %v5100 = vpop.f32.mrf.mxu0
      %5101 = vmatprep.mubr.bf16.mxu0 0
      %5102 = vmatmul.mubr.bf16.gmra.mxu0 %v4947
      %v5103 = vpop.f32.mrf.mxu0
      %v5104 = vadd.f32 0.0, %v5103
      %v5105 = vpop.f32.mrf.mxu0
      %v5106 = vpop.f32.mrf.mxu0
      %v5107 = vadd.f32 0.0, %v5106
      %v5108 = vpop.f32.mrf.mxu0
      %5109 = vmatprep.mubr.bf16.mxu0 0
      %5110 = vmatmul.mubr.bf16.gmra.mxu0 %v4955
      %v5111 = vpop.f32.mrf.mxu0
      %v5112 = vadd.f32 0.0, %v5111
      %v5113 = vpop.f32.mrf.mxu0
      %v5114 = vpop.f32.mrf.mxu0
      %v5115 = vadd.f32 0.0, %v5114
      %v5116 = vpop.f32.mrf.mxu0
      %5117 = vmatprep.mubr.bf16.mxu0 0
      %5118 = vmatmul.mubr.bf16.gmra.mxu0 %v4963
      %v5119 = vpop.f32.mrf.mxu0
      %v5120 = vadd.f32 0.0, %v5119
      %v5121 = vpop.f32.mrf.mxu0
      %v5122 = vpop.f32.mrf.mxu0
      %v5123 = vadd.f32 0.0, %v5122
      %v5124 = vpop.f32.mrf.mxu0
      %5125 = vdwg.mxu0
      %v5126 = vadd.f32 %v4786, %v5056
      %v5127 = vadd.f32 %v4787, %v5059
      %v5128 = vadd.f32 %v4788, %v5064
      %v5129 = vadd.f32 %v4789, %v5067
      %v5130 = vadd.f32 %v4790, %v5072
      %v5131 = vadd.f32 %v4791, %v5075
      %v5132 = vadd.f32 %v4792, %v5080
      %v5133 = vadd.f32 %v4793, %v5083
      %v5134 = vadd.f32 %v4794, %v5088
      %v5135 = vadd.f32 %v4795, %v5091
      %v5136 = vadd.f32 %v4796, %v5096
      %v5137 = vadd.f32 %v4797, %v5099
      %v5138 = vadd.f32 %v4798, %v5104
      %v5139 = vadd.f32 %v4799, %v5107
      %v5140 = vadd.f32 %v4800, %v5112
      %v5141 = vadd.f32 %v4801, %v5115
      %v5142 = vadd.f32 %v4802, %v5120
      %v5143 = vadd.f32 %v4803, %v5123
      %v5144 = vld [vmem:[#allocation3 + $0x10] sm:$0xe]
      %s5145 = scalar_lea.vmem %s4, 256
      %v5146 = vld [vmem:[%s5145] sm:$0xf]
      %v5147 = vld [vmem:[%s5145 + $0x4] sm:$0xf]
      %v5148 = vld [vmem:[%s5145 + $0x8] sm:$0xf]
      %v5149 = vld [vmem:[%s5145 + $0xc] sm:$0xf]
      %v5150 = vld [vmem:[%s5145 + $0x10] sm:$0xf]
      %v5151 = vld [vmem:[%s5145 + $0x14] sm:$0xf]
      %v5152 = vld [vmem:[%s5145 + $0x18] sm:$0xf]
      %v5153 = vld [vmem:[%s5145 + $0x1c] sm:$0xf]
      %v5154 = vld [vmem:[%s5145 + $0x20] sm:$0xf]
      %v5155 = vld [vmem:[%s5145 + $0x24] sm:$0xf]
      %v5156 = vld [vmem:[%s5145 + $0x28] sm:$0xf]
      %v5157 = vld [vmem:[%s5145 + $0x2c] sm:$0xf]
      %v5158 = vld [vmem:[%s5145 + $0x30] sm:$0xf]
      %v5159 = vld [vmem:[%s5145 + $0x34] sm:$0xf]
      %v5160 = vld [vmem:[%s5145 + $0x38] sm:$0xf]
      %v5161 = vld [vmem:[%s5145 + $0x3c] sm:$0xf]
      %v5163 = vunpack.c.l.b16 %v5144
      %v5164 = vpack.c.b16 %v4860, %v5163
      %v5165 = vrot.slane %v5164, 1
      %v5166 = vrot.slane %v4879, 1
      %v5167 = vsel %vm1072, %v5165, %v5166
      %v5168 = vrot.slane %v4880, 1
      %v5169 = vsel %vm1072, %v5166, %v5168
      %v5170 = vrot.slane %v4881, 1
      %v5171 = vsel %vm1072, %v5168, %v5170
      %v5172 = vrot.slane %v4882, 1
      %v5173 = vsel %vm1072, %v5170, %v5172
      %v5174 = vrot.slane %v4883, 1
      %v5175 = vsel %vm1072, %v5172, %v5174
      %v5176 = vrot.slane %v4884, 1
      %v5177 = vsel %vm1072, %v5174, %v5176
      %v5178 = vrot.slane %v4885, 1
      %v5179 = vsel %vm1072, %v5176, %v5178
      %v5180 = vrot.slane %v4886, 1
      %v5181 = vsel %vm1072, %v5178, %v5180
      %v5182 = vrot.slane %v4887, 1
      %v5183 = vsel %vm1072, %v5180, %v5182
      %v5209 = vunpack.c.l.b16 %v5146
      %v5210 = vunpack.c.l.b16 %v5147
      %v5211 = vunpack.c.l.b16 %v5148
      %v5212 = vunpack.c.l.b16 %v5149
      %v5213 = vunpack.c.l.b16 %v5150
      %v5214 = vunpack.c.l.b16 %v5151
      %v5215 = vunpack.c.l.b16 %v5152
      %v5216 = vunpack.c.l.b16 %v5153
      %v5217 = vunpack.c.l.b16 %v5154
      %v5218 = vunpack.c.l.b16 %v5155
      %v5219 = vunpack.c.l.b16 %v5156
      %v5220 = vunpack.c.l.b16 %v5157
      %v5221 = vunpack.c.l.b16 %v5158
      %v5222 = vunpack.c.l.b16 %v5159
      %v5223 = vunpack.c.l.b16 %v5160
      %v5224 = vunpack.c.l.b16 %v5161
      %v5225 = vpack.c.b16 %v5210, %v5209
      %v5226 = vpack.c.b16 %v5212, %v5211
      %v5227 = vpack.c.b16 %v5214, %v5213
      %v5228 = vpack.c.b16 %v5216, %v5215
      %v5229 = vpack.c.b16 %v5218, %v5217
      %v5230 = vpack.c.b16 %v5220, %v5219
      %v5231 = vpack.c.b16 %v5222, %v5221
      %v5232 = vpack.c.b16 %v5224, %v5223
      %5241 = vmatprep.subr.bf16.mxu0 0
      %5242 = vmatpush1.bf16.msra.mxu0 %v5232
      %5243 = vmatprep.subr.bf16.mxu0 0
      %5244 = vmatpush1.bf16.msra.mxu0 %v5231
      %5245 = vmatprep.subr.bf16.mxu0 0
      %5246 = vmatpush1.bf16.msra.mxu0 %v5230
      %5247 = vmatprep.subr.bf16.mxu0 0
      %5248 = vmatpush1.bf16.msra.mxu0 %v5229
      %5249 = vmatprep.subr.bf16.mxu0 0
      %5250 = vmatpush1.bf16.msra.mxu0 %v5228
      %5251 = vmatprep.subr.bf16.mxu0 0
      %5252 = vmatpush1.bf16.msra.mxu0 %v5227
      %5253 = vmatprep.subr.bf16.mxu0 0
      %5254 = vmatpush1.bf16.msra.mxu0 %v5226
      %5255 = vmatprep.subr.bf16.mxu0 0
      %5256 = vmatpush1.bf16.msra.mxu0 %v5225
      %5257 = vmatprep.subr.bf16.mxu0 0
      %5258 = vmatpush2.bf16.msra.mxu0 0
      %5259 = vmatprep.subr.bf16.mxu0 0
      %5260 = vmatpush2.bf16.msra.mxu0 0
      %5261 = vmatprep.subr.bf16.mxu0 0
      %5262 = vmatpush2.bf16.msra.mxu0 0
      %5263 = vmatprep.subr.bf16.mxu0 0
      %5264 = vmatpush2.bf16.msra.mxu0 0
      %5265 = vmatprep.subr.bf16.mxu0 0
      %5266 = vmatpush2.bf16.msra.mxu0 0
      %5267 = vmatprep.subr.bf16.mxu0 0
      %5268 = vmatpush2.bf16.msra.mxu0 0
      %5269 = vmatprep.subr.bf16.mxu0 0
      %5270 = vmatpush2.bf16.msra.mxu0 0
      %5271 = vmatprep.subr.bf16.mxu0 0
      %5272 = vmatpush2.bf16.msra.mxu0 0
      %5273 = vmatprep.mubr.bf16.mxu0 0
      %5274 = vmatmul.mubr.bf16.gmra.mxu0 %v5167
      %v5275 = vpop.f32.mrf.mxu0
      %v5276 = vadd.f32 0.0, %v5275
      %v5277 = vpop.f32.mrf.mxu0
      %v5278 = vpop.f32.mrf.mxu0
      %v5279 = vadd.f32 0.0, %v5278
      %v5280 = vpop.f32.mrf.mxu0
      %5281 = vmatprep.mubr.bf16.mxu0 0
      %5282 = vmatmul.mubr.bf16.gmra.mxu0 %v5169
      %v5283 = vpop.f32.mrf.mxu0
      %v5284 = vadd.f32 0.0, %v5283
      %v5285 = vpop.f32.mrf.mxu0
      %v5286 = vpop.f32.mrf.mxu0
      %v5287 = vadd.f32 0.0, %v5286
      %v5288 = vpop.f32.mrf.mxu0
      %5289 = vmatprep.mubr.bf16.mxu0 0
      %5290 = vmatmul.mubr.bf16.gmra.mxu0 %v5171
      %v5291 = vpop.f32.mrf.mxu0
      %v5292 = vadd.f32 0.0, %v5291
      %v5293 = vpop.f32.mrf.mxu0
      %v5294 = vpop.f32.mrf.mxu0
      %v5295 = vadd.f32 0.0, %v5294
      %v5296 = vpop.f32.mrf.mxu0
      %5297 = vmatprep.mubr.bf16.mxu0 0
      %5298 = vmatmul.mubr.bf16.gmra.mxu0 %v5173
      %v5299 = vpop.f32.mrf.mxu0
      %v5300 = vadd.f32 0.0, %v5299
      %v5301 = vpop.f32.mrf.mxu0
      %v5302 = vpop.f32.mrf.mxu0
      %v5303 = vadd.f32 0.0, %v5302
      %v5304 = vpop.f32.mrf.mxu0
      %5305 = vmatprep.mubr.bf16.mxu0 0
      %5306 = vmatmul.mubr.bf16.gmra.mxu0 %v5175
      %v5307 = vpop.f32.mrf.mxu0
      %v5308 = vadd.f32 0.0, %v5307
      %v5309 = vpop.f32.mrf.mxu0
      %v5310 = vpop.f32.mrf.mxu0
      %v5311 = vadd.f32 0.0, %v5310
      %v5312 = vpop.f32.mrf.mxu0
      %5313 = vmatprep.mubr.bf16.mxu0 0
      %5314 = vmatmul.mubr.bf16.gmra.mxu0 %v5177
      %v5315 = vpop.f32.mrf.mxu0
      %v5316 = vadd.f32 0.0, %v5315
      %v5317 = vpop.f32.mrf.mxu0
      %v5318 = vpop.f32.mrf.mxu0
      %v5319 = vadd.f32 0.0, %v5318
      %v5320 = vpop.f32.mrf.mxu0
      %5321 = vmatprep.mubr.bf16.mxu0 0
      %5322 = vmatmul.mubr.bf16.gmra.mxu0 %v5179
      %v5323 = vpop.f32.mrf.mxu0
      %v5324 = vadd.f32 0.0, %v5323
      %v5325 = vpop.f32.mrf.mxu0
      %v5326 = vpop.f32.mrf.mxu0
      %v5327 = vadd.f32 0.0, %v5326
      %v5328 = vpop.f32.mrf.mxu0
      %5329 = vmatprep.mubr.bf16.mxu0 0
      %5330 = vmatmul.mubr.bf16.gmra.mxu0 %v5181
      %v5331 = vpop.f32.mrf.mxu0
      %v5332 = vadd.f32 0.0, %v5331
      %v5333 = vpop.f32.mrf.mxu0
      %v5334 = vpop.f32.mrf.mxu0
      %v5335 = vadd.f32 0.0, %v5334
      %v5336 = vpop.f32.mrf.mxu0
      %5337 = vmatprep.mubr.bf16.mxu0 0
      %5338 = vmatmul.mubr.bf16.gmra.mxu0 %v5183
      %v5339 = vpop.f32.mrf.mxu0
      %v5340 = vadd.f32 0.0, %v5339
      %v5341 = vpop.f32.mrf.mxu0
      %v5342 = vpop.f32.mrf.mxu0
      %v5343 = vadd.f32 0.0, %v5342
      %v5344 = vpop.f32.mrf.mxu0
      %5345 = vdwg.mxu0
      %v5346 = vadd.f32 %v5126, %v5276
      %v5347 = vadd.f32 %v5127, %v5279
      %v5348 = vadd.f32 %v5128, %v5284
      %v5349 = vadd.f32 %v5129, %v5287
      %v5350 = vadd.f32 %v5130, %v5292
      %v5351 = vadd.f32 %v5131, %v5295
      %v5352 = vadd.f32 %v5132, %v5300
      %v5353 = vadd.f32 %v5133, %v5303
      %v5354 = vadd.f32 %v5134, %v5308
      %v5355 = vadd.f32 %v5135, %v5311
      %v5356 = vadd.f32 %v5136, %v5316
      %v5357 = vadd.f32 %v5137, %v5319
      %v5358 = vadd.f32 %v5138, %v5324
      %v5359 = vadd.f32 %v5139, %v5327
      %v5360 = vadd.f32 %v5140, %v5332
      %v5361 = vadd.f32 %v5141, %v5335
      %v5362 = vadd.f32 %v5142, %v5340
      %v5363 = vadd.f32 %v5143, %v5343
      %v5364 = vld [vmem:[#allocation3 + $0x58] sm:$0x3]
      %s5365 = scalar_lea.vmem %s4, 320
      %v5366 = vld [vmem:[%s5365] sm:$0xf]
      %v5367 = vld [vmem:[%s5365 + $0x4] sm:$0xf]
      %v5368 = vld [vmem:[%s5365 + $0x8] sm:$0xf]
      %v5369 = vld [vmem:[%s5365 + $0xc] sm:$0xf]
      %v5370 = vld [vmem:[%s5365 + $0x10] sm:$0xf]
      %v5371 = vld [vmem:[%s5365 + $0x14] sm:$0xf]
      %v5372 = vld [vmem:[%s5365 + $0x18] sm:$0xf]
      %v5373 = vld [vmem:[%s5365 + $0x1c] sm:$0xf]
      %v5374 = vld [vmem:[%s5365 + $0x20] sm:$0xf]
      %v5375 = vld [vmem:[%s5365 + $0x24] sm:$0xf]
      %v5376 = vld [vmem:[%s5365 + $0x28] sm:$0xf]
      %v5377 = vld [vmem:[%s5365 + $0x2c] sm:$0xf]
      %v5378 = vld [vmem:[%s5365 + $0x30] sm:$0xf]
      %v5379 = vld [vmem:[%s5365 + $0x34] sm:$0xf]
      %v5380 = vld [vmem:[%s5365 + $0x38] sm:$0xf]
      %v5381 = vld [vmem:[%s5365 + $0x3c] sm:$0xf]
      %v5383 = vunpack.c.l.b16 %v5364
      %v5384 = vpack.c.b16 %v5383, %v5383
      %v5386 = vshrl.u32 %v5164, 16
      %v5388 = vrot.slane %v5386, 1
      %v5389 = vshll.u32 %v5164, 16
      %v5391 = vrot.slane %v5389, 2
      %v5392 = vor.u32 %v5388, %v5391
      %v5393 = vrot.slane %v4900, 1
      %v5394 = vrot.slane %v4896, 2
      %v5395 = vor.u32 %v5393, %v5394
      %v5396 = vsel %vm1660, %v5392, %v5395
      %v5397 = vrot.slane %v4908, 1
      %v5398 = vrot.slane %v4904, 2
      %v5399 = vor.u32 %v5397, %v5398
      %v5400 = vsel %vm1660, %v5395, %v5399
      %v5401 = vrot.slane %v4916, 1
      %v5402 = vrot.slane %v4912, 2
      %v5403 = vor.u32 %v5401, %v5402
      %v5404 = vsel %vm1660, %v5399, %v5403
      %v5405 = vrot.slane %v4924, 1
      %v5406 = vrot.slane %v4920, 2
      %v5407 = vor.u32 %v5405, %v5406
      %v5408 = vsel %vm1660, %v5403, %v5407
      %v5409 = vrot.slane %v4932, 1
      %v5410 = vrot.slane %v4928, 2
      %v5411 = vor.u32 %v5409, %v5410
      %v5412 = vsel %vm1660, %v5407, %v5411
      %v5413 = vrot.slane %v4940, 1
      %v5414 = vrot.slane %v4936, 2
      %v5415 = vor.u32 %v5413, %v5414
      %v5416 = vsel %vm1660, %v5411, %v5415
      %v5417 = vrot.slane %v4948, 1
      %v5418 = vrot.slane %v4944, 2
      %v5419 = vor.u32 %v5417, %v5418
      %v5420 = vsel %vm1660, %v5415, %v5419
      %v5421 = vrot.slane %v4956, 1
      %v5422 = vrot.slane %v4952, 2
      %v5423 = vor.u32 %v5421, %v5422
      %v5424 = vsel %vm1660, %v5419, %v5423
      %v5426 = vshrl.u32 %v5384, 16
      %v5428 = vrot.slane %v5426, 1
      %v5429 = vshll.u32 %v5384, 16
      %v5431 = vrot.slane %v5429, 2
      %v5432 = vor.u32 %v5428, %v5431
      %v5433 = vsel %vm1660, %v5423, %v5432
      %v5459 = vunpack.c.l.b16 %v5366
      %v5460 = vunpack.c.l.b16 %v5367
      %v5461 = vunpack.c.l.b16 %v5368
      %v5462 = vunpack.c.l.b16 %v5369
      %v5463 = vunpack.c.l.b16 %v5370
      %v5464 = vunpack.c.l.b16 %v5371
      %v5465 = vunpack.c.l.b16 %v5372
      %v5466 = vunpack.c.l.b16 %v5373
      %v5467 = vunpack.c.l.b16 %v5374
      %v5468 = vunpack.c.l.b16 %v5375
      %v5469 = vunpack.c.l.b16 %v5376
      %v5470 = vunpack.c.l.b16 %v5377
      %v5471 = vunpack.c.l.b16 %v5378
      %v5472 = vunpack.c.l.b16 %v5379
      %v5473 = vunpack.c.l.b16 %v5380
      %v5474 = vunpack.c.l.b16 %v5381
      %v5475 = vpack.c.b16 %v5460, %v5459
      %v5476 = vpack.c.b16 %v5462, %v5461
      %v5477 = vpack.c.b16 %v5464, %v5463
      %v5478 = vpack.c.b16 %v5466, %v5465
      %v5479 = vpack.c.b16 %v5468, %v5467
      %v5480 = vpack.c.b16 %v5470, %v5469
      %v5481 = vpack.c.b16 %v5472, %v5471
      %v5482 = vpack.c.b16 %v5474, %v5473
      %5491 = vmatprep.subr.bf16.mxu0 0
      %5492 = vmatpush1.bf16.msra.mxu0 %v5482
      %5493 = vmatprep.subr.bf16.mxu0 0
      %5494 = vmatpush1.bf16.msra.mxu0 %v5481
      %5495 = vmatprep.subr.bf16.mxu0 0
      %5496 = vmatpush1.bf16.msra.mxu0 %v5480
      %5497 = vmatprep.subr.bf16.mxu0 0
      %5498 = vmatpush1.bf16.msra.mxu0 %v5479
      %5499 = vmatprep.subr.bf16.mxu0 0
      %5500 = vmatpush1.bf16.msra.mxu0 %v5478
      %5501 = vmatprep.subr.bf16.mxu0 0
      %5502 = vmatpush1.bf16.msra.mxu0 %v5477
      %5503 = vmatprep.subr.bf16.mxu0 0
      %5504 = vmatpush1.bf16.msra.mxu0 %v5476
      %5505 = vmatprep.subr.bf16.mxu0 0
      %5506 = vmatpush1.bf16.msra.mxu0 %v5475
      %5507 = vmatprep.subr.bf16.mxu0 0
      %5508 = vmatpush2.bf16.msra.mxu0 0
      %5509 = vmatprep.subr.bf16.mxu0 0
      %5510 = vmatpush2.bf16.msra.mxu0 0
      %5511 = vmatprep.subr.bf16.mxu0 0
      %5512 = vmatpush2.bf16.msra.mxu0 0
      %5513 = vmatprep.subr.bf16.mxu0 0
      %5514 = vmatpush2.bf16.msra.mxu0 0
      %5515 = vmatprep.subr.bf16.mxu0 0
      %5516 = vmatpush2.bf16.msra.mxu0 0
      %5517 = vmatprep.subr.bf16.mxu0 0
      %5518 = vmatpush2.bf16.msra.mxu0 0
      %5519 = vmatprep.subr.bf16.mxu0 0
      %5520 = vmatpush2.bf16.msra.mxu0 0
      %5521 = vmatprep.subr.bf16.mxu0 0
      %5522 = vmatpush2.bf16.msra.mxu0 0
      %5523 = vmatprep.mubr.bf16.mxu0 0
      %5524 = vmatmul.mubr.bf16.gmra.mxu0 %v5396
      %v5525 = vpop.f32.mrf.mxu0
      %v5526 = vadd.f32 0.0, %v5525
      %v5527 = vpop.f32.mrf.mxu0
      %v5528 = vpop.f32.mrf.mxu0
      %v5529 = vadd.f32 0.0, %v5528
      %v5530 = vpop.f32.mrf.mxu0
      %5531 = vmatprep.mubr.bf16.mxu0 0
      %5532 = vmatmul.mubr.bf16.gmra.mxu0 %v5400
      %v5533 = vpop.f32.mrf.mxu0
      %v5534 = vadd.f32 0.0, %v5533
      %v5535 = vpop.f32.mrf.mxu0
      %v5536 = vpop.f32.mrf.mxu0
      %v5537 = vadd.f32 0.0, %v5536
      %v5538 = vpop.f32.mrf.mxu0
      %5539 = vmatprep.mubr.bf16.mxu0 0
      %5540 = vmatmul.mubr.bf16.gmra.mxu0 %v5404
      %v5541 = vpop.f32.mrf.mxu0
      %v5542 = vadd.f32 0.0, %v5541
      %v5543 = vpop.f32.mrf.mxu0
      %v5544 = vpop.f32.mrf.mxu0
      %v5545 = vadd.f32 0.0, %v5544
      %v5546 = vpop.f32.mrf.mxu0
      %5547 = vmatprep.mubr.bf16.mxu0 0
      %5548 = vmatmul.mubr.bf16.gmra.mxu0 %v5408
      %v5549 = vpop.f32.mrf.mxu0
      %v5550 = vadd.f32 0.0, %v5549
      %v5551 = vpop.f32.mrf.mxu0
      %v5552 = vpop.f32.mrf.mxu0
      %v5553 = vadd.f32 0.0, %v5552
      %v5554 = vpop.f32.mrf.mxu0
      %5555 = vmatprep.mubr.bf16.mxu0 0
      %5556 = vmatmul.mubr.bf16.gmra.mxu0 %v5412
      %v5557 = vpop.f32.mrf.mxu0
      %v5558 = vadd.f32 0.0, %v5557
      %v5559 = vpop.f32.mrf.mxu0
      %v5560 = vpop.f32.mrf.mxu0
      %v5561 = vadd.f32 0.0, %v5560
      %v5562 = vpop.f32.mrf.mxu0
      %5563 = vmatprep.mubr.bf16.mxu0 0
      %5564 = vmatmul.mubr.bf16.gmra.mxu0 %v5416
      %v5565 = vpop.f32.mrf.mxu0
      %v5566 = vadd.f32 0.0, %v5565
      %v5567 = vpop.f32.mrf.mxu0
      %v5568 = vpop.f32.mrf.mxu0
      %v5569 = vadd.f32 0.0, %v5568
      %v5570 = vpop.f32.mrf.mxu0
      %5571 = vmatprep.mubr.bf16.mxu0 0
      %5572 = vmatmul.mubr.bf16.gmra.mxu0 %v5420
      %v5573 = vpop.f32.mrf.mxu0
      %v5574 = vadd.f32 0.0, %v5573
      %v5575 = vpop.f32.mrf.mxu0
      %v5576 = vpop.f32.mrf.mxu0
      %v5577 = vadd.f32 0.0, %v5576
      %v5578 = vpop.f32.mrf.mxu0
      %5579 = vmatprep.mubr.bf16.mxu0 0
      %5580 = vmatmul.mubr.bf16.gmra.mxu0 %v5424
      %v5581 = vpop.f32.mrf.mxu0
      %v5582 = vadd.f32 0.0, %v5581
      %v5583 = vpop.f32.mrf.mxu0
      %v5584 = vpop.f32.mrf.mxu0
      %v5585 = vadd.f32 0.0, %v5584
      %v5586 = vpop.f32.mrf.mxu0
      %5587 = vmatprep.mubr.bf16.mxu0 0
      %5588 = vmatmul.mubr.bf16.gmra.mxu0 %v5433
      %v5589 = vpop.f32.mrf.mxu0
      %v5590 = vadd.f32 0.0, %v5589
      %v5591 = vpop.f32.mrf.mxu0
      %v5592 = vpop.f32.mrf.mxu0
      %v5593 = vadd.f32 0.0, %v5592
      %v5594 = vpop.f32.mrf.mxu0
      %5595 = vdwg.mxu0
      %v5596 = vadd.f32 %v5346, %v5526
      %v5597 = vadd.f32 %v5347, %v5529
      %v5598 = vadd.f32 %v5348, %v5534
      %v5599 = vadd.f32 %v5349, %v5537
      %v5600 = vadd.f32 %v5350, %v5542
      %v5601 = vadd.f32 %v5351, %v5545
      %v5602 = vadd.f32 %v5352, %v5550
      %v5603 = vadd.f32 %v5353, %v5553
      %v5604 = vadd.f32 %v5354, %v5558
      %v5605 = vadd.f32 %v5355, %v5561
      %v5606 = vadd.f32 %v5356, %v5566
      %v5607 = vadd.f32 %v5357, %v5569
      %v5608 = vadd.f32 %v5358, %v5574
      %v5609 = vadd.f32 %v5359, %v5577
      %v5610 = vadd.f32 %v5360, %v5582
      %v5611 = vadd.f32 %v5361, %v5585
      %v5612 = vadd.f32 %v5362, %v5590
      %v5613 = vadd.f32 %v5363, %v5593
      %v5614 = vld [vmem:[#allocation3 + $0x18] sm:$0xe]
      %v5615 = vld [vmem:[#allocation3 + $0x1c] sm:$0xf]
      %v5616 = vld [vmem:[#allocation3 + $0x20] sm:$0xf]
      %v5617 = vld [vmem:[#allocation3 + $0x24] sm:$0xf]
      %v5618 = vld [vmem:[#allocation3 + $0x28] sm:$0xf]
      %v5619 = vld [vmem:[#allocation3 + $0x2c] sm:$0xf]
      %v5620 = vld [vmem:[#allocation3 + $0x30] sm:$0xf]
      %v5621 = vld [vmem:[#allocation3 + $0x34] sm:$0xf]
      %v5622 = vld [vmem:[#allocation3 + $0x38] sm:$0xf]
      %v5623 = vld [vmem:[#allocation3 + $0x3c] sm:$0xf]
      %v5624 = vld [vmem:[#allocation3 + $0x40] sm:$0xf]
      %v5625 = vld [vmem:[#allocation3 + $0x44] sm:$0xf]
      %v5626 = vld [vmem:[#allocation3 + $0x48] sm:$0xf]
      %v5627 = vld [vmem:[#allocation3 + $0x4c] sm:$0xf]
      %v5628 = vld [vmem:[#allocation3 + $0x50] sm:$0xf]
      %v5629 = vld [vmem:[#allocation3 + $0x54] sm:$0xf]
      %v5630 = vld [vmem:[#allocation3 + $0x58] sm:$0xf]
      %v5631 = vld [vmem:[#allocation3 + $0x5c] sm:$0xf]
      %v5632 = vld [vmem:[#allocation3 + $0x60] sm:$0x3]
      %s5633 = scalar_lea.vmem %s4, 384
      %v5634 = vld [vmem:[%s5633] sm:$0xf]
      %v5635 = vld [vmem:[%s5633 + $0x4] sm:$0xf]
      %v5636 = vld [vmem:[%s5633 + $0x8] sm:$0xf]
      %v5637 = vld [vmem:[%s5633 + $0xc] sm:$0xf]
      %v5638 = vld [vmem:[%s5633 + $0x10] sm:$0xf]
      %v5639 = vld [vmem:[%s5633 + $0x14] sm:$0xf]
      %v5640 = vld [vmem:[%s5633 + $0x18] sm:$0xf]
      %v5641 = vld [vmem:[%s5633 + $0x1c] sm:$0xf]
      %v5642 = vld [vmem:[%s5633 + $0x20] sm:$0xf]
      %v5643 = vld [vmem:[%s5633 + $0x24] sm:$0xf]
      %v5644 = vld [vmem:[%s5633 + $0x28] sm:$0xf]
      %v5645 = vld [vmem:[%s5633 + $0x2c] sm:$0xf]
      %v5646 = vld [vmem:[%s5633 + $0x30] sm:$0xf]
      %v5647 = vld [vmem:[%s5633 + $0x34] sm:$0xf]
      %v5648 = vld [vmem:[%s5633 + $0x38] sm:$0xf]
      %v5649 = vld [vmem:[%s5633 + $0x3c] sm:$0xf]
      %v5669 = vunpack.c.l.b16 %v5614
      %v5670 = vunpack.c.l.b16 %v5615
      %v5671 = vunpack.c.l.b16 %v5616
      %v5672 = vunpack.c.l.b16 %v5617
      %v5673 = vunpack.c.l.b16 %v5618
      %v5674 = vunpack.c.l.b16 %v5619
      %v5675 = vunpack.c.l.b16 %v5620
      %v5676 = vunpack.c.l.b16 %v5621
      %v5677 = vunpack.c.l.b16 %v5622
      %v5678 = vunpack.c.l.b16 %v5623
      %v5679 = vunpack.c.l.b16 %v5624
      %v5680 = vunpack.c.l.b16 %v5625
      %v5681 = vunpack.c.l.b16 %v5626
      %v5682 = vunpack.c.l.b16 %v5627
      %v5683 = vunpack.c.l.b16 %v5628
      %v5684 = vunpack.c.l.b16 %v5629
      %v5685 = vunpack.c.l.b16 %v5630
      %v5686 = vunpack.c.l.b16 %v5631
      %v5687 = vunpack.c.l.b16 %v5632
      %v5688 = vpack.c.b16 %v5670, %v5669
      %v5689 = vpack.c.b16 %v5672, %v5671
      %v5690 = vpack.c.b16 %v5674, %v5673
      %v5691 = vpack.c.b16 %v5676, %v5675
      %v5692 = vpack.c.b16 %v5678, %v5677
      %v5693 = vpack.c.b16 %v5680, %v5679
      %v5694 = vpack.c.b16 %v5682, %v5681
      %v5695 = vpack.c.b16 %v5684, %v5683
      %v5696 = vpack.c.b16 %v5686, %v5685
      %v5697 = vpack.c.b16 %v5687, %v5687
      %v5699 = vshrl.u32 %v5688, 16
      %v5701 = vrot.slane %v5699, 1
      %v5702 = vshll.u32 %v5688, 16
      %v5704 = vrot.slane %v5702, 2
      %v5705 = vor.u32 %v5701, %v5704
      %v5707 = vshrl.u32 %v5689, 16
      %v5709 = vrot.slane %v5707, 1
      %v5710 = vshll.u32 %v5689, 16
      %v5712 = vrot.slane %v5710, 2
      %v5713 = vor.u32 %v5709, %v5712
      %v5714 = vsel %vm1660, %v5705, %v5713
      %v5716 = vshrl.u32 %v5690, 16
      %v5718 = vrot.slane %v5716, 1
      %v5719 = vshll.u32 %v5690, 16
      %v5721 = vrot.slane %v5719, 2
      %v5722 = vor.u32 %v5718, %v5721
      %v5723 = vsel %vm1660, %v5713, %v5722
      %v5725 = vshrl.u32 %v5691, 16
      %v5727 = vrot.slane %v5725, 1
      %v5728 = vshll.u32 %v5691, 16
      %v5730 = vrot.slane %v5728, 2
      %v5731 = vor.u32 %v5727, %v5730
      %v5732 = vsel %vm1660, %v5722, %v5731
      %v5734 = vshrl.u32 %v5692, 16
      %v5736 = vrot.slane %v5734, 1
      %v5737 = vshll.u32 %v5692, 16
      %v5739 = vrot.slane %v5737, 2
      %v5740 = vor.u32 %v5736, %v5739
      %v5741 = vsel %vm1660, %v5731, %v5740
      %v5743 = vshrl.u32 %v5693, 16
      %v5745 = vrot.slane %v5743, 1
      %v5746 = vshll.u32 %v5693, 16
      %v5748 = vrot.slane %v5746, 2
      %v5749 = vor.u32 %v5745, %v5748
      %v5750 = vsel %vm1660, %v5740, %v5749
      %v5752 = vshrl.u32 %v5694, 16
      %v5754 = vrot.slane %v5752, 1
      %v5755 = vshll.u32 %v5694, 16
      %v5757 = vrot.slane %v5755, 2
      %v5758 = vor.u32 %v5754, %v5757
      %v5759 = vsel %vm1660, %v5749, %v5758
      %v5761 = vshrl.u32 %v5695, 16
      %v5763 = vrot.slane %v5761, 1
      %v5764 = vshll.u32 %v5695, 16
      %v5766 = vrot.slane %v5764, 2
      %v5767 = vor.u32 %v5763, %v5766
      %v5768 = vsel %vm1660, %v5758, %v5767
      %v5770 = vshrl.u32 %v5696, 16
      %v5772 = vrot.slane %v5770, 1
      %v5773 = vshll.u32 %v5696, 16
      %v5775 = vrot.slane %v5773, 2
      %v5776 = vor.u32 %v5772, %v5775
      %v5777 = vsel %vm1660, %v5767, %v5776
      %v5779 = vshrl.u32 %v5697, 16
      %v5781 = vrot.slane %v5779, 1
      %v5782 = vshll.u32 %v5697, 16
      %v5784 = vrot.slane %v5782, 2
      %v5785 = vor.u32 %v5781, %v5784
      %v5786 = vsel %vm1660, %v5776, %v5785
      %v5812 = vunpack.c.l.b16 %v5634
      %v5813 = vunpack.c.l.b16 %v5635
      %v5814 = vunpack.c.l.b16 %v5636
      %v5815 = vunpack.c.l.b16 %v5637
      %v5816 = vunpack.c.l.b16 %v5638
      %v5817 = vunpack.c.l.b16 %v5639
      %v5818 = vunpack.c.l.b16 %v5640
      %v5819 = vunpack.c.l.b16 %v5641
      %v5820 = vunpack.c.l.b16 %v5642
      %v5821 = vunpack.c.l.b16 %v5643
      %v5822 = vunpack.c.l.b16 %v5644
      %v5823 = vunpack.c.l.b16 %v5645
      %v5824 = vunpack.c.l.b16 %v5646
      %v5825 = vunpack.c.l.b16 %v5647
      %v5826 = vunpack.c.l.b16 %v5648
      %v5827 = vunpack.c.l.b16 %v5649
      %v5828 = vpack.c.b16 %v5813, %v5812
      %v5829 = vpack.c.b16 %v5815, %v5814
      %v5830 = vpack.c.b16 %v5817, %v5816
      %v5831 = vpack.c.b16 %v5819, %v5818
      %v5832 = vpack.c.b16 %v5821, %v5820
      %v5833 = vpack.c.b16 %v5823, %v5822
      %v5834 = vpack.c.b16 %v5825, %v5824
      %v5835 = vpack.c.b16 %v5827, %v5826
      %5844 = vmatprep.subr.bf16.mxu0 0
      %5845 = vmatpush1.bf16.msra.mxu0 %v5835
      %5846 = vmatprep.subr.bf16.mxu0 0
      %5847 = vmatpush1.bf16.msra.mxu0 %v5834
      %5848 = vmatprep.subr.bf16.mxu0 0
      %5849 = vmatpush1.bf16.msra.mxu0 %v5833
      %5850 = vmatprep.subr.bf16.mxu0 0
      %5851 = vmatpush1.bf16.msra.mxu0 %v5832
      %5852 = vmatprep.subr.bf16.mxu0 0
      %5853 = vmatpush1.bf16.msra.mxu0 %v5831
      %5854 = vmatprep.subr.bf16.mxu0 0
      %5855 = vmatpush1.bf16.msra.mxu0 %v5830
      %5856 = vmatprep.subr.bf16.mxu0 0
      %5857 = vmatpush1.bf16.msra.mxu0 %v5829
      %5858 = vmatprep.subr.bf16.mxu0 0
      %5859 = vmatpush1.bf16.msra.mxu0 %v5828
      %5860 = vmatprep.subr.bf16.mxu0 0
      %5861 = vmatpush2.bf16.msra.mxu0 0
      %5862 = vmatprep.subr.bf16.mxu0 0
      %5863 = vmatpush2.bf16.msra.mxu0 0
      %5864 = vmatprep.subr.bf16.mxu0 0
      %5865 = vmatpush2.bf16.msra.mxu0 0
      %5866 = vmatprep.subr.bf16.mxu0 0
      %5867 = vmatpush2.bf16.msra.mxu0 0
      %5868 = vmatprep.subr.bf16.mxu0 0
      %5869 = vmatpush2.bf16.msra.mxu0 0
      %5870 = vmatprep.subr.bf16.mxu0 0
      %5871 = vmatpush2.bf16.msra.mxu0 0
      %5872 = vmatprep.subr.bf16.mxu0 0
      %5873 = vmatpush2.bf16.msra.mxu0 0
      %5874 = vmatprep.subr.bf16.mxu0 0
      %5875 = vmatpush2.bf16.msra.mxu0 0
      %5876 = vmatprep.mubr.bf16.mxu0 0
      %5877 = vmatmul.mubr.bf16.gmra.mxu0 %v5714
      %v5878 = vpop.f32.mrf.mxu0
      %v5879 = vadd.f32 0.0, %v5878
      %v5880 = vpop.f32.mrf.mxu0
      %v5881 = vpop.f32.mrf.mxu0
      %v5882 = vadd.f32 0.0, %v5881
      %v5883 = vpop.f32.mrf.mxu0
      %5884 = vmatprep.mubr.bf16.mxu0 0
      %5885 = vmatmul.mubr.bf16.gmra.mxu0 %v5723
      %v5886 = vpop.f32.mrf.mxu0
      %v5887 = vadd.f32 0.0, %v5886
      %v5888 = vpop.f32.mrf.mxu0
      %v5889 = vpop.f32.mrf.mxu0
      %v5890 = vadd.f32 0.0, %v5889
      %v5891 = vpop.f32.mrf.mxu0
      %5892 = vmatprep.mubr.bf16.mxu0 0
      %5893 = vmatmul.mubr.bf16.gmra.mxu0 %v5732
      %v5894 = vpop.f32.mrf.mxu0
      %v5895 = vadd.f32 0.0, %v5894
      %v5896 = vpop.f32.mrf.mxu0
      %v5897 = vpop.f32.mrf.mxu0
      %v5898 = vadd.f32 0.0, %v5897
      %v5899 = vpop.f32.mrf.mxu0
      %5900 = vmatprep.mubr.bf16.mxu0 0
      %5901 = vmatmul.mubr.bf16.gmra.mxu0 %v5741
      %v5902 = vpop.f32.mrf.mxu0
      %v5903 = vadd.f32 0.0, %v5902
      %v5904 = vpop.f32.mrf.mxu0
      %v5905 = vpop.f32.mrf.mxu0
      %v5906 = vadd.f32 0.0, %v5905
      %v5907 = vpop.f32.mrf.mxu0
      %5908 = vmatprep.mubr.bf16.mxu0 0
      %5909 = vmatmul.mubr.bf16.gmra.mxu0 %v5750
      %v5910 = vpop.f32.mrf.mxu0
      %v5911 = vadd.f32 0.0, %v5910
      %v5912 = vpop.f32.mrf.mxu0
      %v5913 = vpop.f32.mrf.mxu0
      %v5914 = vadd.f32 0.0, %v5913
      %v5915 = vpop.f32.mrf.mxu0
      %5916 = vmatprep.mubr.bf16.mxu0 0
      %5917 = vmatmul.mubr.bf16.gmra.mxu0 %v5759
      %v5918 = vpop.f32.mrf.mxu0
      %v5919 = vadd.f32 0.0, %v5918
      %v5920 = vpop.f32.mrf.mxu0
      %v5921 = vpop.f32.mrf.mxu0
      %v5922 = vadd.f32 0.0, %v5921
      %v5923 = vpop.f32.mrf.mxu0
      %5924 = vmatprep.mubr.bf16.mxu0 0
      %5925 = vmatmul.mubr.bf16.gmra.mxu0 %v5768
      %v5926 = vpop.f32.mrf.mxu0
      %v5927 = vadd.f32 0.0, %v5926
      %v5928 = vpop.f32.mrf.mxu0
      %v5929 = vpop.f32.mrf.mxu0
      %v5930 = vadd.f32 0.0, %v5929
      %v5931 = vpop.f32.mrf.mxu0
      %5932 = vmatprep.mubr.bf16.mxu0 0
      %5933 = vmatmul.mubr.bf16.gmra.mxu0 %v5777
      %v5934 = vpop.f32.mrf.mxu0
      %v5935 = vadd.f32 0.0, %v5934
      %v5936 = vpop.f32.mrf.mxu0
      %v5937 = vpop.f32.mrf.mxu0
      %v5938 = vadd.f32 0.0, %v5937
      %v5939 = vpop.f32.mrf.mxu0
      %5940 = vmatprep.mubr.bf16.mxu0 0
      %5941 = vmatmul.mubr.bf16.gmra.mxu0 %v5786
      %v5942 = vpop.f32.mrf.mxu0
      %v5943 = vadd.f32 0.0, %v5942
      %v5944 = vpop.f32.mrf.mxu0
      %v5945 = vpop.f32.mrf.mxu0
      %v5946 = vadd.f32 0.0, %v5945
      %v5947 = vpop.f32.mrf.mxu0
      %5948 = vdwg.mxu0
      %v5949 = vadd.f32 %v5596, %v5879
      %v5950 = vadd.f32 %v5597, %v5882
      %v5951 = vadd.f32 %v5598, %v5887
      %v5952 = vadd.f32 %v5599, %v5890
      %v5953 = vadd.f32 %v5600, %v5895
      %v5954 = vadd.f32 %v5601, %v5898
      %v5955 = vadd.f32 %v5602, %v5903
      %v5956 = vadd.f32 %v5603, %v5906
      %v5957 = vadd.f32 %v5604, %v5911
      %v5958 = vadd.f32 %v5605, %v5914
      %v5959 = vadd.f32 %v5606, %v5919
      %v5960 = vadd.f32 %v5607, %v5922
      %v5961 = vadd.f32 %v5608, %v5927
      %v5962 = vadd.f32 %v5609, %v5930
      %v5963 = vadd.f32 %v5610, %v5935
      %v5964 = vadd.f32 %v5611, %v5938
      %v5965 = vadd.f32 %v5612, %v5943
      %v5966 = vadd.f32 %v5613, %v5946
      %v5967 = vld [vmem:[#allocation3 + $0x18] sm:$0xc]
      %s5968 = scalar_lea.vmem %s4, 448
      %v5969 = vld [vmem:[%s5968] sm:$0xf]
      %v5970 = vld [vmem:[%s5968 + $0x4] sm:$0xf]
      %v5971 = vld [vmem:[%s5968 + $0x8] sm:$0xf]
      %v5972 = vld [vmem:[%s5968 + $0xc] sm:$0xf]
      %v5973 = vld [vmem:[%s5968 + $0x10] sm:$0xf]
      %v5974 = vld [vmem:[%s5968 + $0x14] sm:$0xf]
      %v5975 = vld [vmem:[%s5968 + $0x18] sm:$0xf]
      %v5976 = vld [vmem:[%s5968 + $0x1c] sm:$0xf]
      %v5977 = vld [vmem:[%s5968 + $0x20] sm:$0xf]
      %v5978 = vld [vmem:[%s5968 + $0x24] sm:$0xf]
      %v5979 = vld [vmem:[%s5968 + $0x28] sm:$0xf]
      %v5980 = vld [vmem:[%s5968 + $0x2c] sm:$0xf]
      %v5981 = vld [vmem:[%s5968 + $0x30] sm:$0xf]
      %v5982 = vld [vmem:[%s5968 + $0x34] sm:$0xf]
      %v5983 = vld [vmem:[%s5968 + $0x38] sm:$0xf]
      %v5984 = vld [vmem:[%s5968 + $0x3c] sm:$0xf]
      %v5986 = vunpack.c.l.b16 %v5967
      %v5987 = vpack.c.b16 %v5670, %v5986
      %v5988 = vrot.slane %v5987, 2
      %v5989 = vrot.slane %v5689, 2
      %v5990 = vsel %vm2000, %v5988, %v5989
      %v5991 = vrot.slane %v5690, 2
      %v5992 = vsel %vm2000, %v5989, %v5991
      %v5993 = vrot.slane %v5691, 2
      %v5994 = vsel %vm2000, %v5991, %v5993
      %v5995 = vrot.slane %v5692, 2
      %v5996 = vsel %vm2000, %v5993, %v5995
      %v5997 = vrot.slane %v5693, 2
      %v5998 = vsel %vm2000, %v5995, %v5997
      %v5999 = vrot.slane %v5694, 2
      %v6000 = vsel %vm2000, %v5997, %v5999
      %v6001 = vrot.slane %v5695, 2
      %v6002 = vsel %vm2000, %v5999, %v6001
      %v6003 = vrot.slane %v5696, 2
      %v6004 = vsel %vm2000, %v6001, %v6003
      %v6005 = vrot.slane %v5697, 2
      %v6006 = vsel %vm2000, %v6003, %v6005
      %v6032 = vunpack.c.l.b16 %v5969
      %v6033 = vunpack.c.l.b16 %v5970
      %v6034 = vunpack.c.l.b16 %v5971
      %v6035 = vunpack.c.l.b16 %v5972
      %v6036 = vunpack.c.l.b16 %v5973
      %v6037 = vunpack.c.l.b16 %v5974
      %v6038 = vunpack.c.l.b16 %v5975
      %v6039 = vunpack.c.l.b16 %v5976
      %v6040 = vunpack.c.l.b16 %v5977
      %v6041 = vunpack.c.l.b16 %v5978
      %v6042 = vunpack.c.l.b16 %v5979
      %v6043 = vunpack.c.l.b16 %v5980
      %v6044 = vunpack.c.l.b16 %v5981
      %v6045 = vunpack.c.l.b16 %v5982
      %v6046 = vunpack.c.l.b16 %v5983
      %v6047 = vunpack.c.l.b16 %v5984
      %v6048 = vpack.c.b16 %v6033, %v6032
      %v6049 = vpack.c.b16 %v6035, %v6034
      %v6050 = vpack.c.b16 %v6037, %v6036
      %v6051 = vpack.c.b16 %v6039, %v6038
      %v6052 = vpack.c.b16 %v6041, %v6040
      %v6053 = vpack.c.b16 %v6043, %v6042
      %v6054 = vpack.c.b16 %v6045, %v6044
      %v6055 = vpack.c.b16 %v6047, %v6046
      %6064 = vmatprep.subr.bf16.mxu0 0
      %6065 = vmatpush1.bf16.msra.mxu0 %v6055
      %6066 = vmatprep.subr.bf16.mxu0 0
      %6067 = vmatpush1.bf16.msra.mxu0 %v6054
      %6068 = vmatprep.subr.bf16.mxu0 0
      %6069 = vmatpush1.bf16.msra.mxu0 %v6053
      %6070 = vmatprep.subr.bf16.mxu0 0
      %6071 = vmatpush1.bf16.msra.mxu0 %v6052
      %6072 = vmatprep.subr.bf16.mxu0 0
      %6073 = vmatpush1.bf16.msra.mxu0 %v6051
      %6074 = vmatprep.subr.bf16.mxu0 0
      %6075 = vmatpush1.bf16.msra.mxu0 %v6050
      %6076 = vmatprep.subr.bf16.mxu0 0
      %6077 = vmatpush1.bf16.msra.mxu0 %v6049
      %6078 = vmatprep.subr.bf16.mxu0 0
      %6079 = vmatpush1.bf16.msra.mxu0 %v6048
      %6080 = vmatprep.subr.bf16.mxu0 0
      %6081 = vmatpush2.bf16.msra.mxu0 0
      %6082 = vmatprep.subr.bf16.mxu0 0
      %6083 = vmatpush2.bf16.msra.mxu0 0
      %6084 = vmatprep.subr.bf16.mxu0 0
      %6085 = vmatpush2.bf16.msra.mxu0 0
      %6086 = vmatprep.subr.bf16.mxu0 0
      %6087 = vmatpush2.bf16.msra.mxu0 0
      %6088 = vmatprep.subr.bf16.mxu0 0
      %6089 = vmatpush2.bf16.msra.mxu0 0
      %6090 = vmatprep.subr.bf16.mxu0 0
      %6091 = vmatpush2.bf16.msra.mxu0 0
      %6092 = vmatprep.subr.bf16.mxu0 0
      %6093 = vmatpush2.bf16.msra.mxu0 0
      %6094 = vmatprep.subr.bf16.mxu0 0
      %6095 = vmatpush2.bf16.msra.mxu0 0
      %6096 = vmatprep.mubr.bf16.mxu0 0
      %6097 = vmatmul.mubr.bf16.gmra.mxu0 %v5990
      %v6098 = vpop.f32.mrf.mxu0
      %v6099 = vadd.f32 0.0, %v6098
      %v6100 = vpop.f32.mrf.mxu0
      %v6101 = vpop.f32.mrf.mxu0
      %v6102 = vadd.f32 0.0, %v6101
      %v6103 = vpop.f32.mrf.mxu0
      %6104 = vmatprep.mubr.bf16.mxu0 0
      %6105 = vmatmul.mubr.bf16.gmra.mxu0 %v5992
      %v6106 = vpop.f32.mrf.mxu0
      %v6107 = vadd.f32 0.0, %v6106
      %v6108 = vpop.f32.mrf.mxu0
      %v6109 = vpop.f32.mrf.mxu0
      %v6110 = vadd.f32 0.0, %v6109
      %v6111 = vpop.f32.mrf.mxu0
      %6112 = vmatprep.mubr.bf16.mxu0 0
      %6113 = vmatmul.mubr.bf16.gmra.mxu0 %v5994
      %v6114 = vpop.f32.mrf.mxu0
      %v6115 = vadd.f32 0.0, %v6114
      %v6116 = vpop.f32.mrf.mxu0
      %v6117 = vpop.f32.mrf.mxu0
      %v6118 = vadd.f32 0.0, %v6117
      %v6119 = vpop.f32.mrf.mxu0
      %6120 = vmatprep.mubr.bf16.mxu0 0
      %6121 = vmatmul.mubr.bf16.gmra.mxu0 %v5996
      %v6122 = vpop.f32.mrf.mxu0
      %v6123 = vadd.f32 0.0, %v6122
      %v6124 = vpop.f32.mrf.mxu0
      %v6125 = vpop.f32.mrf.mxu0
      %v6126 = vadd.f32 0.0, %v6125
      %v6127 = vpop.f32.mrf.mxu0
      %6128 = vmatprep.mubr.bf16.mxu0 0
      %6129 = vmatmul.mubr.bf16.gmra.mxu0 %v5998
      %v6130 = vpop.f32.mrf.mxu0
      %v6131 = vadd.f32 0.0, %v6130
      %v6132 = vpop.f32.mrf.mxu0
      %v6133 = vpop.f32.mrf.mxu0
      %v6134 = vadd.f32 0.0, %v6133
      %v6135 = vpop.f32.mrf.mxu0
      %6136 = vmatprep.mubr.bf16.mxu0 0
      %6137 = vmatmul.mubr.bf16.gmra.mxu0 %v6000
      %v6138 = vpop.f32.mrf.mxu0
      %v6139 = vadd.f32 0.0, %v6138
      %v6140 = vpop.f32.mrf.mxu0
      %v6141 = vpop.f32.mrf.mxu0
      %v6142 = vadd.f32 0.0, %v6141
      %v6143 = vpop.f32.mrf.mxu0
      %6144 = vmatprep.mubr.bf16.mxu0 0
      %6145 = vmatmul.mubr.bf16.gmra.mxu0 %v6002
      %v6146 = vpop.f32.mrf.mxu0
      %v6147 = vadd.f32 0.0, %v6146
      %v6148 = vpop.f32.mrf.mxu0
      %v6149 = vpop.f32.mrf.mxu0
      %v6150 = vadd.f32 0.0, %v6149
      %v6151 = vpop.f32.mrf.mxu0
      %6152 = vmatprep.mubr.bf16.mxu0 0
      %6153 = vmatmul.mubr.bf16.gmra.mxu0 %v6004
      %v6154 = vpop.f32.mrf.mxu0
      %v6155 = vadd.f32 0.0, %v6154
      %v6156 = vpop.f32.mrf.mxu0
      %v6157 = vpop.f32.mrf.mxu0
      %v6158 = vadd.f32 0.0, %v6157
      %v6159 = vpop.f32.mrf.mxu0
      %6160 = vmatprep.mubr.bf16.mxu0 0
      %6161 = vmatmul.mubr.bf16.gmra.mxu0 %v6006
      %v6162 = vpop.f32.mrf.mxu0
      %v6163 = vadd.f32 0.0, %v6162
      %v6164 = vpop.f32.mrf.mxu0
      %v6165 = vpop.f32.mrf.mxu0
      %v6166 = vadd.f32 0.0, %v6165
      %v6167 = vpop.f32.mrf.mxu0
      %6168 = vdwg.mxu0
      %v6169 = vadd.f32 %v5949, %v6099
      %v6170 = vadd.f32 %v5950, %v6102
      %v6171 = vadd.f32 %v5951, %v6107
      %v6172 = vadd.f32 %v5952, %v6110
      %v6173 = vadd.f32 %v5953, %v6115
      %v6174 = vadd.f32 %v5954, %v6118
      %v6175 = vadd.f32 %v5955, %v6123
      %v6176 = vadd.f32 %v5956, %v6126
      %v6177 = vadd.f32 %v5957, %v6131
      %v6178 = vadd.f32 %v5958, %v6134
      %v6179 = vadd.f32 %v5959, %v6139
      %v6180 = vadd.f32 %v5960, %v6142
      %v6181 = vadd.f32 %v5961, %v6147
      %v6182 = vadd.f32 %v5962, %v6150
      %v6183 = vadd.f32 %v5963, %v6155
      %v6184 = vadd.f32 %v5964, %v6158
      %v6185 = vadd.f32 %v5965, %v6163
      %v6186 = vadd.f32 %v5966, %v6166
      %v6187 = vld [vmem:[#allocation3 + $0x60] sm:$0x7]
      %s6188 = scalar_lea.vmem %s4, 512
      %v6189 = vld [vmem:[%s6188] sm:$0xf]
      %v6190 = vld [vmem:[%s6188 + $0x4] sm:$0xf]
      %v6191 = vld [vmem:[%s6188 + $0x8] sm:$0xf]
      %v6192 = vld [vmem:[%s6188 + $0xc] sm:$0xf]
      %v6193 = vld [vmem:[%s6188 + $0x10] sm:$0xf]
      %v6194 = vld [vmem:[%s6188 + $0x14] sm:$0xf]
      %v6195 = vld [vmem:[%s6188 + $0x18] sm:$0xf]
      %v6196 = vld [vmem:[%s6188 + $0x1c] sm:$0xf]
      %v6197 = vld [vmem:[%s6188 + $0x20] sm:$0xf]
      %v6198 = vld [vmem:[%s6188 + $0x24] sm:$0xf]
      %v6199 = vld [vmem:[%s6188 + $0x28] sm:$0xf]
      %v6200 = vld [vmem:[%s6188 + $0x2c] sm:$0xf]
      %v6201 = vld [vmem:[%s6188 + $0x30] sm:$0xf]
      %v6202 = vld [vmem:[%s6188 + $0x34] sm:$0xf]
      %v6203 = vld [vmem:[%s6188 + $0x38] sm:$0xf]
      %v6204 = vld [vmem:[%s6188 + $0x3c] sm:$0xf]
      %v6206 = vunpack.c.l.b16 %v6187
      %v6207 = vpack.c.b16 %v6206, %v6206
      %v6209 = vshrl.u32 %v5987, 16
      %v6211 = vrot.slane %v6209, 2
      %v6212 = vshll.u32 %v5987, 16
      %v6214 = vrot.slane %v6212, 3
      %v6215 = vor.u32 %v6211, %v6214
      %v6216 = vrot.slane %v5707, 2
      %v6217 = vrot.slane %v5710, 3
      %v6218 = vor.u32 %v6216, %v6217
      %v6219 = vsel %vm2668, %v6215, %v6218
      %v6220 = vrot.slane %v5716, 2
      %v6221 = vrot.slane %v5719, 3
      %v6222 = vor.u32 %v6220, %v6221
      %v6223 = vsel %vm2668, %v6218, %v6222
      %v6224 = vrot.slane %v5725, 2
      %v6225 = vrot.slane %v5728, 3
      %v6226 = vor.u32 %v6224, %v6225
      %v6227 = vsel %vm2668, %v6222, %v6226
      %v6228 = vrot.slane %v5734, 2
      %v6229 = vrot.slane %v5737, 3
      %v6230 = vor.u32 %v6228, %v6229
      %v6231 = vsel %vm2668, %v6226, %v6230
      %v6232 = vrot.slane %v5743, 2
      %v6233 = vrot.slane %v5746, 3
      %v6234 = vor.u32 %v6232, %v6233
      %v6235 = vsel %vm2668, %v6230, %v6234
      %v6236 = vrot.slane %v5752, 2
      %v6237 = vrot.slane %v5755, 3
      %v6238 = vor.u32 %v6236, %v6237
      %v6239 = vsel %vm2668, %v6234, %v6238
      %v6240 = vrot.slane %v5761, 2
      %v6241 = vrot.slane %v5764, 3
      %v6242 = vor.u32 %v6240, %v6241
      %v6243 = vsel %vm2668, %v6238, %v6242
      %v6244 = vrot.slane %v5770, 2
      %v6245 = vrot.slane %v5773, 3
      %v6246 = vor.u32 %v6244, %v6245
      %v6247 = vsel %vm2668, %v6242, %v6246
      %v6249 = vshrl.u32 %v6207, 16
      %v6251 = vrot.slane %v6249, 2
      %v6252 = vshll.u32 %v6207, 16
      %v6254 = vrot.slane %v6252, 3
      %v6255 = vor.u32 %v6251, %v6254
      %v6256 = vsel %vm2668, %v6246, %v6255
      %v6282 = vunpack.c.l.b16 %v6189
      %v6283 = vunpack.c.l.b16 %v6190
      %v6284 = vunpack.c.l.b16 %v6191
      %v6285 = vunpack.c.l.b16 %v6192
      %v6286 = vunpack.c.l.b16 %v6193
      %v6287 = vunpack.c.l.b16 %v6194
      %v6288 = vunpack.c.l.b16 %v6195
      %v6289 = vunpack.c.l.b16 %v6196
      %v6290 = vunpack.c.l.b16 %v6197
      %v6291 = vunpack.c.l.b16 %v6198
      %v6292 = vunpack.c.l.b16 %v6199
      %v6293 = vunpack.c.l.b16 %v6200
      %v6294 = vunpack.c.l.b16 %v6201
      %v6295 = vunpack.c.l.b16 %v6202
      %v6296 = vunpack.c.l.b16 %v6203
      %v6297 = vunpack.c.l.b16 %v6204
      %v6298 = vpack.c.b16 %v6283, %v6282
      %v6299 = vpack.c.b16 %v6285, %v6284
      %v6300 = vpack.c.b16 %v6287, %v6286
      %v6301 = vpack.c.b16 %v6289, %v6288
      %v6302 = vpack.c.b16 %v6291, %v6290
      %v6303 = vpack.c.b16 %v6293, %v6292
      %v6304 = vpack.c.b16 %v6295, %v6294
      %v6305 = vpack.c.b16 %v6297, %v6296
      %6314 = vmatprep.subr.bf16.mxu0 0
      %6315 = vmatpush1.bf16.msra.mxu0 %v6305
      %6316 = vmatprep.subr.bf16.mxu0 0
      %6317 = vmatpush1.bf16.msra.mxu0 %v6304
      %6318 = vmatprep.subr.bf16.mxu0 0
      %6319 = vmatpush1.bf16.msra.mxu0 %v6303
      %6320 = vmatprep.subr.bf16.mxu0 0
      %6321 = vmatpush1.bf16.msra.mxu0 %v6302
      %6322 = vmatprep.subr.bf16.mxu0 0
      %6323 = vmatpush1.bf16.msra.mxu0 %v6301
      %6324 = vmatprep.subr.bf16.mxu0 0
      %6325 = vmatpush1.bf16.msra.mxu0 %v6300
      %6326 = vmatprep.subr.bf16.mxu0 0
      %6327 = vmatpush1.bf16.msra.mxu0 %v6299
      %6328 = vmatprep.subr.bf16.mxu0 0
      %6329 = vmatpush1.bf16.msra.mxu0 %v6298
      %6330 = vmatprep.subr.bf16.mxu0 0
      %6331 = vmatpush2.bf16.msra.mxu0 0
      %6332 = vmatprep.subr.bf16.mxu0 0
      %6333 = vmatpush2.bf16.msra.mxu0 0
      %6334 = vmatprep.subr.bf16.mxu0 0
      %6335 = vmatpush2.bf16.msra.mxu0 0
      %6336 = vmatprep.subr.bf16.mxu0 0
      %6337 = vmatpush2.bf16.msra.mxu0 0
      %6338 = vmatprep.subr.bf16.mxu0 0
      %6339 = vmatpush2.bf16.msra.mxu0 0
      %6340 = vmatprep.subr.bf16.mxu0 0
      %6341 = vmatpush2.bf16.msra.mxu0 0
      %6342 = vmatprep.subr.bf16.mxu0 0
      %6343 = vmatpush2.bf16.msra.mxu0 0
      %6344 = vmatprep.subr.bf16.mxu0 0
      %6345 = vmatpush2.bf16.msra.mxu0 0
      %6346 = vmatprep.mubr.bf16.mxu0 0
      %6347 = vmatmul.mubr.bf16.gmra.mxu0 %v6219
      %v6348 = vpop.f32.mrf.mxu0
      %v6349 = vadd.f32 0.0, %v6348
      %v6350 = vpop.f32.mrf.mxu0
      %v6351 = vpop.f32.mrf.mxu0
      %v6352 = vadd.f32 0.0, %v6351
      %v6353 = vpop.f32.mrf.mxu0
      %6354 = vmatprep.mubr.bf16.mxu0 0
      %6355 = vmatmul.mubr.bf16.gmra.mxu0 %v6223
      %v6356 = vpop.f32.mrf.mxu0
      %v6357 = vadd.f32 0.0, %v6356
      %v6358 = vpop.f32.mrf.mxu0
      %v6359 = vpop.f32.mrf.mxu0
      %v6360 = vadd.f32 0.0, %v6359
      %v6361 = vpop.f32.mrf.mxu0
      %6362 = vmatprep.mubr.bf16.mxu0 0
      %6363 = vmatmul.mubr.bf16.gmra.mxu0 %v6227
      %v6364 = vpop.f32.mrf.mxu0
      %v6365 = vadd.f32 0.0, %v6364
      %v6366 = vpop.f32.mrf.mxu0
      %v6367 = vpop.f32.mrf.mxu0
      %v6368 = vadd.f32 0.0, %v6367
      %v6369 = vpop.f32.mrf.mxu0
      %6370 = vmatprep.mubr.bf16.mxu0 0
      %6371 = vmatmul.mubr.bf16.gmra.mxu0 %v6231
      %v6372 = vpop.f32.mrf.mxu0
      %v6373 = vadd.f32 0.0, %v6372
      %v6374 = vpop.f32.mrf.mxu0
      %v6375 = vpop.f32.mrf.mxu0
      %v6376 = vadd.f32 0.0, %v6375
      %v6377 = vpop.f32.mrf.mxu0
      %6378 = vmatprep.mubr.bf16.mxu0 0
      %6379 = vmatmul.mubr.bf16.gmra.mxu0 %v6235
      %v6380 = vpop.f32.mrf.mxu0
      %v6381 = vadd.f32 0.0, %v6380
      %v6382 = vpop.f32.mrf.mxu0
      %v6383 = vpop.f32.mrf.mxu0
      %v6384 = vadd.f32 0.0, %v6383
      %v6385 = vpop.f32.mrf.mxu0
      %6386 = vmatprep.mubr.bf16.mxu0 0
      %6387 = vmatmul.mubr.bf16.gmra.mxu0 %v6239
      %v6388 = vpop.f32.mrf.mxu0
      %v6389 = vadd.f32 0.0, %v6388
      %v6390 = vpop.f32.mrf.mxu0
      %v6391 = vpop.f32.mrf.mxu0
      %v6392 = vadd.f32 0.0, %v6391
      %v6393 = vpop.f32.mrf.mxu0
      %6394 = vmatprep.mubr.bf16.mxu0 0
      %6395 = vmatmul.mubr.bf16.gmra.mxu0 %v6243
      %v6396 = vpop.f32.mrf.mxu0
      %v6397 = vadd.f32 0.0, %v6396
      %v6398 = vpop.f32.mrf.mxu0
      %v6399 = vpop.f32.mrf.mxu0
      %v6400 = vadd.f32 0.0, %v6399
      %v6401 = vpop.f32.mrf.mxu0
      %6402 = vmatprep.mubr.bf16.mxu0 0
      %6403 = vmatmul.mubr.bf16.gmra.mxu0 %v6247
      %v6404 = vpop.f32.mrf.mxu0
      %v6405 = vadd.f32 0.0, %v6404
      %v6406 = vpop.f32.mrf.mxu0
      %v6407 = vpop.f32.mrf.mxu0
      %v6408 = vadd.f32 0.0, %v6407
      %v6409 = vpop.f32.mrf.mxu0
      %6410 = vmatprep.mubr.bf16.mxu0 0
      %6411 = vmatmul.mubr.bf16.gmra.mxu0 %v6256
      %v6412 = vpop.f32.mrf.mxu0
      %v6413 = vadd.f32 0.0, %v6412
      %v6414 = vpop.f32.mrf.mxu0
      %v6415 = vpop.f32.mrf.mxu0
      %v6416 = vadd.f32 0.0, %v6415
      %v6417 = vpop.f32.mrf.mxu0
      %6418 = vdwg.mxu0
      %v6419 = vadd.f32 %v6169, %v6349
      %v6420 = vadd.f32 %v6170, %v6352
      %v6421 = vadd.f32 %v6171, %v6357
      %v6422 = vadd.f32 %v6172, %v6360
      %v6423 = vadd.f32 %v6173, %v6365
      %v6424 = vadd.f32 %v6174, %v6368
      %v6425 = vadd.f32 %v6175, %v6373
      %v6426 = vadd.f32 %v6176, %v6376
      %v6427 = vadd.f32 %v6177, %v6381
      %v6428 = vadd.f32 %v6178, %v6384
      %v6429 = vadd.f32 %v6179, %v6389
      %v6430 = vadd.f32 %v6180, %v6392
      %v6431 = vadd.f32 %v6181, %v6397
      %v6432 = vadd.f32 %v6182, %v6400
      %v6433 = vadd.f32 %v6183, %v6405
      %v6434 = vadd.f32 %v6184, %v6408
      %v6435 = vadd.f32 %v6185, %v6413
      %v6436 = vadd.f32 %v6186, %v6416
      %v6437 = vld [vmem:[%s455 + $0x10] sm:$0xc]
      %v6438 = vld [vmem:[%s455 + $0x14] sm:$0xf]
      %v6439 = vld [vmem:[%s455 + $0x18] sm:$0xf]
      %v6440 = vld [vmem:[%s455 + $0x1c] sm:$0xf]
      %v6441 = vld [vmem:[%s455 + $0x20] sm:$0xf]
      %v6442 = vld [vmem:[%s455 + $0x24] sm:$0xf]
      %v6443 = vld [vmem:[%s455 + $0x28] sm:$0xf]
      %v6444 = vld [vmem:[%s455 + $0x2c] sm:$0xf]
      %v6445 = vld [vmem:[%s455 + $0x30] sm:$0xf]
      %v6446 = vld [vmem:[%s455 + $0x34] sm:$0xf]
      %v6447 = vld [vmem:[%s455 + $0x38] sm:$0xf]
      %v6448 = vld [vmem:[%s455 + $0x3c] sm:$0xf]
      %v6449 = vld [vmem:[%s455 + $0x40] sm:$0xf]
      %v6450 = vld [vmem:[%s455 + $0x44] sm:$0xf]
      %v6451 = vld [vmem:[%s455 + $0x48] sm:$0xf]
      %v6452 = vld [vmem:[%s455 + $0x4c] sm:$0xf]
      %v6453 = vld [vmem:[%s455 + $0x50] sm:$0xf]
      %v6454 = vld [vmem:[%s455 + $0x54] sm:$0xf]
      %v6455 = vld [vmem:[%s455 + $0x58] sm:$0x7]
      %v6456 = vunpack.c.l.bf16 %v6437
      %v6457 = vunpack.c.l.bf16 %v6438
      %v6458 = vunpack.c.l.bf16 %v6439
      %v6459 = vunpack.c.l.bf16 %v6440
      %v6460 = vunpack.c.l.bf16 %v6441
      %v6461 = vunpack.c.l.bf16 %v6442
      %v6462 = vunpack.c.l.bf16 %v6443
      %v6463 = vunpack.c.l.bf16 %v6444
      %v6464 = vunpack.c.l.bf16 %v6445
      %v6465 = vunpack.c.l.bf16 %v6446
      %v6466 = vunpack.c.l.bf16 %v6447
      %v6467 = vunpack.c.l.bf16 %v6448
      %v6468 = vunpack.c.l.bf16 %v6449
      %v6469 = vunpack.c.l.bf16 %v6450
      %v6470 = vunpack.c.l.bf16 %v6451
      %v6471 = vunpack.c.l.bf16 %v6452
      %v6472 = vunpack.c.l.bf16 %v6453
      %v6473 = vunpack.c.l.bf16 %v6454
      %v6474 = vunpack.c.l.bf16 %v6455
      %v6475 = vld [vmem:[%s5] sm:$0x1]
      %v6477 = vlaneseq
      %v6478 = vshrl.u32 %v6477, 7
      %v6479 = vsub.s32 0, %v6478
      %v6480 = vrot.slane %v6475, %v6479
      %v6482 = vmul.f32 %v6419, %v6480
      %v6483 = vmul.f32 %v6420, %v6480
      %v6484 = vmul.f32 %v6421, %v6480
      %v6485 = vmul.f32 %v6422, %v6480
      %v6486 = vmul.f32 %v6423, %v6480
      %v6487 = vmul.f32 %v6424, %v6480
      %v6488 = vmul.f32 %v6425, %v6480
      %v6489 = vmul.f32 %v6426, %v6480
      %v6490 = vmul.f32 %v6427, %v6480
      %v6491 = vmul.f32 %v6428, %v6480
      %v6492 = vmul.f32 %v6429, %v6480
      %v6493 = vmul.f32 %v6430, %v6480
      %v6494 = vmul.f32 %v6431, %v6480
      %v6495 = vmul.f32 %v6432, %v6480
      %v6496 = vmul.f32 %v6433, %v6480
      %v6497 = vmul.f32 %v6434, %v6480
      %v6498 = vmul.f32 %v6435, %v6480
      %v6499 = vmul.f32 %v6436, %v6480
      %v6500 = vld [vmem:[%s6] sm:$0x1]
      %v6502 = vlaneseq
      %v6503 = vshrl.u32 %v6502, 7
      %v6504 = vsub.s32 0, %v6503
      %v6505 = vrot.slane %v6500, %v6504
      %v6507 = vadd.f32 %v6482, %v6505
      %v6508 = vadd.f32 %v6483, %v6505
      %v6509 = vadd.f32 %v6484, %v6505
      %v6510 = vadd.f32 %v6485, %v6505
      %v6511 = vadd.f32 %v6486, %v6505
      %v6512 = vadd.f32 %v6487, %v6505
      %v6513 = vadd.f32 %v6488, %v6505
      %v6514 = vadd.f32 %v6489, %v6505
      %v6515 = vadd.f32 %v6490, %v6505
      %v6516 = vadd.f32 %v6491, %v6505
      %v6517 = vadd.f32 %v6492, %v6505
      %v6518 = vadd.f32 %v6493, %v6505
      %v6519 = vadd.f32 %v6494, %v6505
      %v6520 = vadd.f32 %v6495, %v6505
      %v6521 = vadd.f32 %v6496, %v6505
      %v6522 = vadd.f32 %v6497, %v6505
      %v6523 = vadd.f32 %v6498, %v6505
      %v6524 = vadd.f32 %v6499, %v6505
      %vm6544 = vcmask 1042432
      %v6545 = vrot.slane %v6456, 5
      %v6546 = vrot.slane %v6457, 5
      %v6547 = vsel %vm6544, %v6545, %v6546
      %v6548 = vrot.slane %v6458, 5
      %v6549 = vsel %vm6544, %v6546, %v6548
      %v6550 = vrot.slane %v6459, 5
      %v6551 = vsel %vm6544, %v6548, %v6550
      %v6552 = vrot.slane %v6460, 5
      %v6553 = vsel %vm6544, %v6550, %v6552
      %v6554 = vrot.slane %v6461, 5
      %v6555 = vsel %vm6544, %v6552, %v6554
      %v6556 = vrot.slane %v6462, 5
      %v6557 = vsel %vm6544, %v6554, %v6556
      %v6558 = vrot.slane %v6463, 5
      %v6559 = vsel %vm6544, %v6556, %v6558
      %v6560 = vrot.slane %v6464, 5
      %v6561 = vsel %vm6544, %v6558, %v6560
      %v6562 = vrot.slane %v6465, 5
      %v6563 = vsel %vm6544, %v6560, %v6562
      %v6564 = vrot.slane %v6466, 5
      %v6565 = vsel %vm6544, %v6562, %v6564
      %v6566 = vrot.slane %v6467, 5
      %v6567 = vsel %vm6544, %v6564, %v6566
      %v6568 = vrot.slane %v6468, 5
      %v6569 = vsel %vm6544, %v6566, %v6568
      %v6570 = vrot.slane %v6469, 5
      %v6571 = vsel %vm6544, %v6568, %v6570
      %v6572 = vrot.slane %v6470, 5
      %v6573 = vsel %vm6544, %v6570, %v6572
      %v6574 = vrot.slane %v6471, 5
      %v6575 = vsel %vm6544, %v6572, %v6574
      %v6576 = vrot.slane %v6472, 5
      %v6577 = vsel %vm6544, %v6574, %v6576
      %v6578 = vrot.slane %v6473, 5
      %v6579 = vsel %vm6544, %v6576, %v6578
      %v6580 = vrot.slane %v6474, 5
      %v6581 = vsel %vm6544, %v6578, %v6580
      %v6600 = vadd.f32 %v6507, %v6547
      %v6601 = vadd.f32 %v6508, %v6549
      %v6602 = vadd.f32 %v6509, %v6551
      %v6603 = vadd.f32 %v6510, %v6553
      %v6604 = vadd.f32 %v6511, %v6555
      %v6605 = vadd.f32 %v6512, %v6557
      %v6606 = vadd.f32 %v6513, %v6559
      %v6607 = vadd.f32 %v6514, %v6561
      %v6608 = vadd.f32 %v6515, %v6563
      %v6609 = vadd.f32 %v6516, %v6565
      %v6610 = vadd.f32 %v6517, %v6567
      %v6611 = vadd.f32 %v6518, %v6569
      %v6612 = vadd.f32 %v6519, %v6571
      %v6613 = vadd.f32 %v6520, %v6573
      %v6614 = vadd.f32 %v6521, %v6575
      %v6615 = vadd.f32 %v6522, %v6577
      %v6616 = vadd.f32 %v6523, %v6579
      %v6617 = vadd.f32 %v6524, %v6581
      %v6618 = vmax.f32 %v6600, 0.0
      %v6619 = vmax.f32 %v6601, 0.0
      %v6620 = vmax.f32 %v6602, 0.0
      %v6621 = vmax.f32 %v6603, 0.0
      %v6622 = vmax.f32 %v6604, 0.0
      %v6623 = vmax.f32 %v6605, 0.0
      %v6624 = vmax.f32 %v6606, 0.0
      %v6625 = vmax.f32 %v6607, 0.0
      %v6626 = vmax.f32 %v6608, 0.0
      %v6627 = vmax.f32 %v6609, 0.0
      %v6628 = vmax.f32 %v6610, 0.0
      %v6629 = vmax.f32 %v6611, 0.0
      %v6630 = vmax.f32 %v6612, 0.0
      %v6631 = vmax.f32 %v6613, 0.0
      %v6632 = vmax.f32 %v6614, 0.0
      %v6633 = vmax.f32 %v6615, 0.0
      %v6634 = vmax.f32 %v6616, 0.0
      %v6635 = vmax.f32 %v6617, 0.0
      %v6636 = vpack.c.bf16 %v6619, %v6618
      %v6637 = vpack.c.bf16 %v6621, %v6620
      %v6638 = vpack.c.bf16 %v6623, %v6622
      %v6639 = vpack.c.bf16 %v6625, %v6624
      %v6640 = vpack.c.bf16 %v6627, %v6626
      %v6641 = vpack.c.bf16 %v6629, %v6628
      %v6642 = vpack.c.bf16 %v6631, %v6630
      %v6643 = vpack.c.bf16 %v6633, %v6632
      %v6644 = vpack.c.bf16 %v6635, %v6634
      %v6654 = vunpack.c.l.b16 %v6636
      %v6655 = vunpack.c.h.b16 %v6636
      %v6656 = vunpack.c.l.b16 %v6637
      %v6657 = vunpack.c.h.b16 %v6637
      %v6658 = vunpack.c.l.b16 %v6638
      %v6659 = vunpack.c.h.b16 %v6638
      %v6660 = vunpack.c.l.b16 %v6639
      %v6661 = vunpack.c.h.b16 %v6639
      %v6662 = vunpack.c.l.b16 %v6640
      %v6663 = vunpack.c.h.b16 %v6640
      %v6664 = vunpack.c.l.b16 %v6641
      %v6665 = vunpack.c.h.b16 %v6641
      %v6666 = vunpack.c.l.b16 %v6642
      %v6667 = vunpack.c.h.b16 %v6642
      %v6668 = vunpack.c.l.b16 %v6643
      %v6669 = vunpack.c.h.b16 %v6643
      %v6670 = vunpack.c.l.b16 %v6644
      %v6671 = vunpack.c.h.b16 %v6644
      %v6672 = vpack.c.b16 %v6654, %v6654
      %v6673 = vpack.c.b16 %v6655, %v6655
      %v6674 = vpack.c.b16 %v6656, %v6656
      %v6675 = vpack.c.b16 %v6657, %v6657
      %v6676 = vpack.c.b16 %v6658, %v6658
      %v6677 = vpack.c.b16 %v6659, %v6659
      %v6678 = vpack.c.b16 %v6660, %v6660
      %v6679 = vpack.c.b16 %v6661, %v6661
      %v6680 = vpack.c.b16 %v6662, %v6662
      %v6681 = vpack.c.b16 %v6663, %v6663
      %v6682 = vpack.c.b16 %v6664, %v6664
      %v6683 = vpack.c.b16 %v6665, %v6665
      %v6684 = vpack.c.b16 %v6666, %v6666
      %v6685 = vpack.c.b16 %v6667, %v6667
      %v6686 = vpack.c.b16 %v6668, %v6668
      %v6687 = vpack.c.b16 %v6669, %v6669
      %v6688 = vpack.c.b16 %v6670, %v6670
      %v6689 = vpack.c.b16 %v6671, %v6671
      %6708 = vst [vmem:[%s254] sm:$0xf] %v6672
      %6709 = vst [vmem:[%s254 + $0x4] sm:$0xf] %v6673
      %6710 = vst [vmem:[%s254 + $0x8] sm:$0xf] %v6674
      %6711 = vst [vmem:[%s254 + $0xc] sm:$0xf] %v6675
      %6712 = vst [vmem:[%s254 + $0x10] sm:$0xf] %v6676
      %6713 = vst [vmem:[%s254 + $0x14] sm:$0xf] %v6677
      %6714 = vst [vmem:[%s254 + $0x18] sm:$0xf] %v6678
      %6715 = vst [vmem:[%s254 + $0x1c] sm:$0xf] %v6679
      %6716 = vst [vmem:[%s254 + $0x20] sm:$0xf] %v6680
      %6717 = vst [vmem:[%s254 + $0x24] sm:$0xf] %v6681
      %6718 = vst [vmem:[%s254 + $0x28] sm:$0xf] %v6682
      %6719 = vst [vmem:[%s254 + $0x2c] sm:$0xf] %v6683
      %6720 = vst [vmem:[%s254 + $0x30] sm:$0xf] %v6684
      %6721 = vst [vmem:[%s254 + $0x34] sm:$0xf] %v6685
      %6722 = vst [vmem:[%s254 + $0x38] sm:$0xf] %v6686
      %6723 = vst [vmem:[%s254 + $0x3c] sm:$0xf] %v6687
      %6724 = vst [vmem:[%s254 + $0x40] sm:$0xf] %v6688
      %6725 = vst [vmem:[%s254 + $0x44] sm:$0xf] %v6689
      %s6726 = smul.u32 18, %s23
      %p6727 = scmp.lt.s32.totalorder %s22, 1
      %s6728 = scalar_select %p6727, %s22, 1
      %p6729 = scmp.lt.s32.totalorder %s6726, 35
      %s6730 = scalar_select %p6729, %s6726, 35
      %s6731 = smul.addr %s6728, 36
      %s6732 = sadd.s32 %s6730, %s6731
      %s6733 = smul.addr %s6732, 4
      %s6734 = scalar_lea.vmem %s7, %s6733
      // Predicated region
      $region135: #{_lambda_.1} parent=43 // pred_check
        %p6735 = pneg %p176
      $region136: #{_lambda_.1} parent=43 // pred_check_branch
        %6737 = sbr.rel (%p6735) target = $region138
      $region137: #{_lambda_.1} parent=43 // pred_region
        %s6738 = smul.u32 18, %s23
      $region138: #{_lambda_.1} parent=43 // pred_fallthru
        _
    $region44: #{_lambda_.1} parent=5 // pred_fallthru
      _
    %p6739 = scmp.le.s32.totalorder 2, %s13
    // Predicated region
    $region139: #{_lambda_.1} parent=5 // pred_check
      %p6740 = pneg %p6739
    $region140: #{_lambda_.1} parent=5 // pred_check_branch
      %6742 = sbr.rel (%p6740) target = $region142
    $region141: #{_lambda_.1} parent=5 // pred_region
      %s6743 = ssub.s32 %s13, 2
      // Predicated region
      $region143: #{_lambda_.1} parent=141 // pred_check
        %p6744 = pneg %p182
      $region144: #{_lambda_.1} parent=141 // pred_check_branch
        %6746 = sbr.rel (%p6744) target = $region146
      $region145: #{_lambda_.1} parent=141 // pred_region
        %s6747 = smul.u32 18, %s25
        %p6748 = scmp.lt.s32.totalorder %s24, 1
        %s6749 = scalar_select %p6748, %s24, 1
        %p6750 = scmp.lt.s32.totalorder %s6747, 35
        %s6751 = scalar_select %p6750, %s6747, 35
        %s6752 = smul.addr %s6749, 36
        %s6753 = sadd.s32 %s6751, %s6752
        %s6754 = smul.addr %s6753, 4
        %s6755 = scalar_lea.vmem %s7, %s6754
      $region146: #{_lambda_.1} parent=141 // pred_fallthru
        _
    $region142: #{_lambda_.1} parent=5 // pred_fallthru
      _
  $region6: #{_lambda_.1} parent=0 // loop_footer
    %s17 = sadd.s32 1, %s13
  $region7: #{_lambda_.1} parent=0 // loop_footer_branch
    %12 = sbr.rel target = $region3
  $region8: #{_lambda_.1} parent=0 // loop_exit
    _
  %6756 = vsyncmov [#allocation4]
  %s6757 = vpop.sfrf %6756
  %p6758 = scmp.eq.s32.totalorder %s6757, 0
  %p6759 = pneg %p6758
  %6761 = shalt.err (%p6759)
  %s6762 = scalar_lea.sflag [#allocation4], 1
  %6763 = vsyncmov %s6762
  %s6764 = vpop.sfrf %6763
  %p6765 = scmp.eq.s32.totalorder %s6764, 0
  %p6766 = pneg %p6765
  %6768 = shalt.err (%p6766)

</llo_original>
